<compile_context>
chip_gen: v6e
topology: v6e:2x2x1
jax: 0.10.0
libtpu: 0.0.40
codegen_flags: <defaults>
</compile_context>

<pallas_src>
import functools

import numpy as np
import jax
import jax.numpy as jnp
from jax import lax
from jax.experimental import pallas as pl
from jax.experimental.pallas import tpu as pltpu

# ----------------------------- configuration --------------------------------
SEQ_LEN = 2            # T
IN_CH = 4              # C
EMBED = 32             # E  (d_model)
HEADS = 4
LAYERS = 2
PATCH = 4
IMG = 16
N_CLASSES = 3
WEATHER_DIM = 5
FFN = 2048             # PyTorch TransformerEncoderLayer default dim_feedforward

NUM_PATCHES = (IMG // PATCH) ** 2                    # 16
TOTAL_TOKENS = SEQ_LEN * NUM_PATCHES + SEQ_LEN       # 34
KDIM = IN_CH * PATCH * PATCH                         # 64  (im2col width)
EMB_IN = KDIM + WEATHER_DIM + 2                      # 71  (block-diag embed input)
EMB_IN_PAD = 72                                      # pad K to a multiple of 8
CPAD = 128                                           # lane-padded classifier width
FFN_CHUNK = 256                                      # FFN first-matmul lane chunk

LAYER_KEYS = ("wqkv", "bqkv", "wout", "bout", "ln1w", "ln1b",
              "w1", "b1", "w2", "b2", "ln2w", "ln2b")


# ------------------------------ fused Pallas kernel ---------------------------
def _fused_kernel(inp_ref, emb_w_ref, pos_ref, mask_ref, mean_ref,
                  wqkv_ref, bqkv_ref, wout_ref, bout_ref, ln1w_ref, ln1b_ref,
                  w1_ref, b1_ref, w2_ref, b2_ref, ln2w_ref, ln2b_ref,
                  cls_w_ref, cls_b_ref,
                  out_ref,
                  x_scr, h_scr,
                  *, num_heads, ffn_chunk):
    layer = pl.program_id(0)
    last = pl.num_programs(0) - 1

    # ---- step 0: fused patch+weather embedding (block-diag matmul) + pos ----
    @pl.when(layer == 0)
    def _():
        x0 = jnp.dot(inp_ref[...], emb_w_ref[...],
                     preferred_element_type=jnp.float32)
        x_scr[...] = x0 + pos_ref[...]

    x = x_scr[...]                                   # (R, E) f32, carried across grid
    R, E = x.shape
    hd = E // num_heads
    scale = 1.0 / float(hd) ** 0.5
    neg_mask = mask_ref[...]                         # (R, R) block-diagonal, host-built

    # ---------------- self-attention (post-norm encoder layer) ----------------
    # TODO(synk): training-mode dropout (p=0.1) not implemented (eval identity).
    xb = x.astype(jnp.bfloat16)
    qkv = (jnp.dot(xb, wqkv_ref[...], preferred_element_type=jnp.float32)
           + bqkv_ref[...])                          # (R, 3E) f32

    ctx_heads = []
    for h in range(num_heads):                       # static unroll (4 heads)
        lo = h * hd
        qh = (qkv[:, lo:lo + hd] * scale).astype(jnp.bfloat16)
        kh = qkv[:, E + lo:E + lo + hd].astype(jnp.bfloat16)
        vh = qkv[:, 2 * E + lo:2 * E + lo + hd].astype(jnp.bfloat16)
        s = lax.dot_general(qh, kh, (((1,), (1,)), ((), ())),
                            preferred_element_type=jnp.float32)      # (R, R)
        s = s + neg_mask
        p = jnp.exp(s - jnp.max(s, axis=-1, keepdims=True))          # unnormalized
        inv = pl.reciprocal(jnp.sum(p, axis=-1, keepdims=True), approx=True)
        ctx = jnp.dot(p.astype(jnp.bfloat16), vh,
                      preferred_element_type=jnp.float32)             # (R, hd)
        ctx_heads.append(ctx * inv)                  # normalize after PV (EUP recip)
    ctx_all = jnp.concatenate(ctx_heads, axis=-1)    # (R, E) — single out-proj matmul
    attn = (jnp.dot(ctx_all.astype(jnp.bfloat16), wout_ref[...],
                    preferred_element_type=jnp.float32)
            + bout_ref[...])

    # residual + LayerNorm 1
    x = x + attn
    mu = jnp.mean(x, axis=-1, keepdims=True)
    var = jnp.mean(jnp.square(x - mu), axis=-1, keepdims=True)
    x = (x - mu) * lax.rsqrt(var + 1e-5) * ln1w_ref[...] + ln1b_ref[...]

    # ---------------- FFN (ReLU), bf16 hidden staged in VMEM scratch ----------
    # First matmul chunked (256 lanes keeps the f32 transient in-register even on
    # v5e); second matmul is one deep K=FFN dot from the bf16 scratch.
    xb = x.astype(jnp.bfloat16)
    F = h_scr.shape[1]
    for c in range(0, F, ffn_chunk):                 # static unroll
        h1 = jnp.dot(xb, w1_ref[:, c:c + ffn_chunk],
                     preferred_element_type=jnp.float32)
        h1 = jnp.maximum(h1 + b1_ref[:, c:c + ffn_chunk], 0.0)
        h_scr[:, c:c + ffn_chunk] = h1.astype(jnp.bfloat16)
    ff = jnp.dot(h_scr[...], w2_ref[...], preferred_element_type=jnp.float32)
    x = x + ff + b2_ref[...]

    # LayerNorm 2
    mu = jnp.mean(x, axis=-1, keepdims=True)
    var = jnp.mean(jnp.square(x - mu), axis=-1, keepdims=True)
    x = (x - mu) * lax.rsqrt(var + 1e-5) * ln2w_ref[...] + ln2b_ref[...]
    x_scr[...] = x

    # ---- last step: mean over tokens per batch element + classifier ----------
    @pl.when(layer == last)
    def _():
        m = jnp.dot(mean_ref[...], x, preferred_element_type=jnp.float32)   # (B, E)
        out_ref[...] = (jnp.dot(m.astype(jnp.bfloat16), cls_w_ref[...],
                                preferred_element_type=jnp.float32)
                        + cls_b_ref[...])                                    # (B, CPAD)


def _fused_forward_call(inp, emb_w, pos, mask, mean_mat, stacked, cls_w, cls_b,
                        batch):
    r_pad = inp.shape[0]
    kernel = functools.partial(_fused_kernel, num_heads=HEADS, ffn_chunk=FFN_CHUNK)

    def const_spec(a):
        return pl.BlockSpec(a.shape, lambda l: (0,) * a.ndim)

    def layer_spec(a):
        return pl.BlockSpec((None,) + a.shape[1:], lambda l: (l, 0, 0))

    in_specs = ([const_spec(inp), const_spec(emb_w), const_spec(pos),
                 const_spec(mask), const_spec(mean_mat)]
                + [layer_spec(stacked[k]) for k in LAYER_KEYS]
                + [const_spec(cls_w), const_spec(cls_b)])
    args = ([inp, emb_w, pos, mask, mean_mat]
            + [stacked[k] for k in LAYER_KEYS]
            + [cls_w, cls_b])

    return pl.pallas_call(
        kernel,
        out_shape=jax.ShapeDtypeStruct((batch, CPAD), jnp.float32),
        grid=(LAYERS,),
        in_specs=in_specs,
        out_specs=pl.BlockSpec((batch, CPAD), lambda l: (0, 0)),
        scratch_shapes=[
            pltpu.VMEM((r_pad, EMBED), jnp.float32),     # token activations (carry)
            pltpu.VMEM((r_pad, FFN), jnp.bfloat16),      # FFN hidden staging
        ],
        compiler_params=pltpu.CompilerParams(
            dimension_semantics=("arbitrary",)),
    )(*args)


# ------------------------------ JAX glue --------------------------------------
def extract_patches(x, patch):
    """(B, T, C, H, W) -> (B, T*P, C*patch*patch); im2col for stride=patch conv."""
    B, T, C, H, W = x.shape
    Hp, Wp = H // patch, W // patch
    x = x.reshape(B, T, C, Hp, patch, Wp, patch)
    x = x.transpose(0, 1, 3, 5, 2, 4, 6)            # (B, T, Hp, Wp, C, ph, pw)
    return x.reshape(B, T * Hp * Wp, C * patch * patch)


def build_embedding_inputs(x, weather, r_pad):
    """(B*S_pad, EMB_IN_PAD) bf16 token-input rows for the block-diag embedding:
       patch rows = [pixels, 0..0, 1, 0, 0], weather rows = [0..0, weather, 0, 1, 0]."""
    B = x.shape[0]
    patches = extract_patches(x, PATCH).astype(jnp.float32)          # (B, T*P, KDIM)
    TP = SEQ_LEN * NUM_PATCHES
    patch_rows = jnp.concatenate([
        patches,
        jnp.zeros((B, TP, WEATHER_DIM), jnp.float32),
        jnp.ones((B, TP, 1), jnp.float32),
        jnp.zeros((B, TP, 1), jnp.float32),
    ], axis=-1)
    wf = weather.reshape(B, SEQ_LEN, WEATHER_DIM).astype(jnp.float32)
    weather_rows = jnp.concatenate([
        jnp.zeros((B, SEQ_LEN, KDIM), jnp.float32),
        wf,
        jnp.zeros((B, SEQ_LEN, 1), jnp.float32),
        jnp.ones((B, SEQ_LEN, 1), jnp.float32),
    ], axis=-1)
    rows = jnp.concatenate([patch_rows, weather_rows], axis=1)       # (B, S, EMB_IN)
    rows = rows.reshape(B * TOTAL_TOKENS, EMB_IN)
    rows = jnp.pad(rows, ((0, r_pad - rows.shape[0]),
                          (0, EMB_IN_PAD - EMB_IN)))
    return rows.astype(jnp.bfloat16)


def build_mask_and_mean(batch, r_pad):
    """Block-diagonal attention mask and per-batch mean-pool matrix (host consts)."""
    S = TOTAL_TOKENS
    bid = np.full((r_pad,), batch, np.int32)         # pad tokens get a phantom id
    bid[:batch * S] = np.repeat(np.arange(batch, dtype=np.int32), S)
    same = bid[:, None] == bid[None, :]
    neg_mask = np.where(same, 0.0, -1e30).astype(np.float32)
    mean_mat = np.zeros((batch, r_pad), np.float32)
    for b in range(batch):
        mean_mat[b, b * S:(b + 1) * S] = 1.0 / S
    return jnp.asarray(neg_mask), jnp.asarray(mean_mat)


def fire_transformer_forward(params, x, weather):
    B = x.shape[0]
    r = B * TOTAL_TOKENS
    r_pad = ((r + 7) // 8) * 8

    inp = build_embedding_inputs(x, weather, r_pad)                   # (R_pad, 72) bf16

    # combined embedding weight: [patch_w ; weather_w ; patch_b ; weather_b ; 0-row]
    emb_w = jnp.concatenate([
        params["patch_w"], params["weather_w"],
        params["patch_b"][None, :], params["weather_b"][None, :],
        jnp.zeros((EMB_IN_PAD - EMB_IN, EMBED), jnp.float32)], axis=0)
    emb_w = emb_w.astype(jnp.bfloat16)

    pos = jnp.tile(params["pos"][0], (B, 1))                          # (B*S, E)
    pos = jnp.pad(pos, ((0, r_pad - r), (0, 0))).astype(jnp.float32)

    mask, mean_mat = build_mask_and_mean(B, r_pad)

    cls_w = jnp.zeros((EMBED, CPAD), jnp.float32).at[:, :N_CLASSES].set(
        params["cls_w"]).astype(jnp.bfloat16)
    cls_b = jnp.zeros((1, CPAD), jnp.float32).at[0, :N_CLASSES].set(params["cls_b"])

    # stack per-layer params on a leading LAYERS axis; bf16 for matmul weights
    stacked = {}
    for k in LAYER_KEYS:
        arr = jnp.stack([lp[k] for lp in params["layers"]], axis=0)
        if k in ("wqkv", "wout", "w1", "w2"):
            arr = arr.astype(jnp.bfloat16)
        stacked[k] = arr

    out = _fused_forward_call(inp, emb_w, pos, mask, mean_mat, stacked,
                              cls_w, cls_b, B)                        # (B, CPAD)
    return out[:, :N_CLASSES]


def init_params(key):
    E, F = EMBED, FFN
    keys = jax.random.split(key, 8 + 8 * LAYERS)
    it = iter(keys)

    def nrm(shape, s=0.02):
        return (s * jax.random.normal(next(it), shape)).astype(jnp.float32)

    params = {
        "patch_w": nrm((KDIM, E)),                  # Conv2d weight, (E,C,ps,ps).T form
        "patch_b": jnp.zeros((E,), jnp.float32),
        "weather_w": nrm((WEATHER_DIM, E)),
        "weather_b": jnp.zeros((E,), jnp.float32),
        "pos": nrm((1, TOTAL_TOKENS, E)),
        "cls_w": nrm((E, N_CLASSES)),
        "cls_b": jnp.zeros((N_CLASSES,), jnp.float32),
        "layers": [],
    }
    for _ in range(LAYERS):
        params["layers"].append({
            # fused in-proj (x @ W form): columns [Q | K | V]; wout = out_proj.weight.T
            "wqkv": nrm((E, 3 * E)),
            "bqkv": jnp.zeros((1, 3 * E), jnp.float32),
            "wout": nrm((E, E)),
            "bout": jnp.zeros((1, E), jnp.float32),
            "ln1w": jnp.ones((1, E), jnp.float32),
            "ln1b": jnp.zeros((1, E), jnp.float32),
            "w1": nrm((E, F)),                      # linear1.weight.T (x @ W form)
            "b1": jnp.zeros((1, F), jnp.float32),
            "w2": nrm((F, E)),                      # linear2.weight.T (x @ W form)
            "b2": jnp.zeros((1, E), jnp.float32),
            "ln2w": jnp.ones((1, E), jnp.float32),
            "ln2b": jnp.zeros((1, E), jnp.float32),
        })
    return params


if __name__ == "__main__":
    key = jax.random.PRNGKey(0)
    kx, kw, kp = jax.random.split(key, 3)
    B = 2
    x = jax.random.normal(kx, (B, SEQ_LEN, IN_CH, IMG, IMG), dtype=jnp.float32)
    weather = jax.random.normal(kw, (B, SEQ_LEN, WEATHER_DIM), dtype=jnp.float32)
    params = init_params(kp)

    out = jax.jit(fire_transformer_forward)(params, x, weather)
    out = jax.block_until_ready(out)
    assert out.shape == (B, N_CLASSES), out.shape
    assert jnp.all(jnp.isfinite(out))
    print("KERNEL_OK")
</pallas_src>

<mosaic_0001>
module attributes {stable_mosaic.version = 11 : i64} {
  func.func @_fused_kernel(%arg0: i32, %arg1: memref<72x72xbf16, #tpu.memory_space<vmem>>, %arg2: memref<72x32xbf16, #tpu.memory_space<vmem>>, %arg3: memref<72x32xf32, #tpu.memory_space<vmem>>, %arg4: memref<72x72xf32, #tpu.memory_space<vmem>>, %arg5: memref<2x72xf32, #tpu.memory_space<vmem>>, %arg6: memref<1x32x96xbf16, #tpu.memory_space<vmem>>, %arg7: memref<1x1x96xf32, #tpu.memory_space<vmem>>, %arg8: memref<1x32x32xbf16, #tpu.memory_space<vmem>>, %arg9: memref<1x1x32xf32, #tpu.memory_space<vmem>>, %arg10: memref<1x1x32xf32, #tpu.memory_space<vmem>>, %arg11: memref<1x1x32xf32, #tpu.memory_space<vmem>>, %arg12: memref<1x32x2048xbf16, #tpu.memory_space<vmem>>, %arg13: memref<1x1x2048xf32, #tpu.memory_space<vmem>>, %arg14: memref<1x2048x32xbf16, #tpu.memory_space<vmem>>, %arg15: memref<1x1x32xf32, #tpu.memory_space<vmem>>, %arg16: memref<1x1x32xf32, #tpu.memory_space<vmem>>, %arg17: memref<1x1x32xf32, #tpu.memory_space<vmem>>, %arg18: memref<32x128xbf16, #tpu.memory_space<vmem>>, %arg19: memref<1x128xf32, #tpu.memory_space<vmem>>, %arg20: memref<2x128xf32, #tpu.memory_space<vmem>>, %arg21: memref<72x32xf32, #tpu.memory_space<vmem>>, %arg22: memref<72x2048xbf16, #tpu.memory_space<vmem>>) attributes {dimension_semantics = [#tpu.dimension_semantics<arbitrary>], iteration_bounds = array<i64: 2>, scalar_prefetch = 0 : i64, scratch_operands = 2 : i64, tpu.core_type = #tpu.core_type<tc>, window_params = [{pipeline_mode = #tpu.pipeline_mode<synchronous>, transform_indices = @transform_0, window_bounds = array<i64: 72, 72>}, {pipeline_mode = #tpu.pipeline_mode<synchronous>, transform_indices = @transform_1, window_bounds = array<i64: 72, 32>}, {pipeline_mode = #tpu.pipeline_mode<synchronous>, transform_indices = @transform_2, window_bounds = array<i64: 72, 32>}, {pipeline_mode = #tpu.pipeline_mode<synchronous>, transform_indices = @transform_3, window_bounds = array<i64: 72, 72>}, {pipeline_mode = #tpu.pipeline_mode<synchronous>, transform_indices = @transform_4, window_bounds = array<i64: 2, 72>}, {transform_indices = @transform_5, window_bounds = array<i64: 1, 32, 96>}, {transform_indices = @transform_6, window_bounds = array<i64: 1, 1, 96>}, {transform_indices = @transform_7, window_bounds = array<i64: 1, 32, 32>}, {transform_indices = @transform_8, window_bounds = array<i64: 1, 1, 32>}, {transform_indices = @transform_9, window_bounds = array<i64: 1, 1, 32>}, {transform_indices = @transform_10, window_bounds = array<i64: 1, 1, 32>}, {transform_indices = @transform_11, window_bounds = array<i64: 1, 32, 2048>}, {transform_indices = @transform_12, window_bounds = array<i64: 1, 1, 2048>}, {transform_indices = @transform_13, window_bounds = array<i64: 1, 2048, 32>}, {transform_indices = @transform_14, window_bounds = array<i64: 1, 1, 32>}, {transform_indices = @transform_15, window_bounds = array<i64: 1, 1, 32>}, {transform_indices = @transform_16, window_bounds = array<i64: 1, 1, 32>}, {pipeline_mode = #tpu.pipeline_mode<synchronous>, transform_indices = @transform_17, window_bounds = array<i64: 32, 128>}, {pipeline_mode = #tpu.pipeline_mode<synchronous>, transform_indices = @transform_18, window_bounds = array<i64: 1, 128>}, {pipeline_mode = #tpu.pipeline_mode<synchronous>, transform_indices = @transform_19, window_bounds = array<i64: 2, 128>}]} {
    %c0_i32 = arith.constant 0 : i32
    %0 = arith.cmpi eq, %arg0, %c0_i32 : i32
    %1 = arith.extui %0 : i1 to i32
    %c0_i32_0 = arith.constant 0 : i32
    %2 = arith.cmpi ne, %1, %c0_i32_0 : i32
    scf.if %2 {
      %c0_144 = arith.constant 0 : index
      %c0_145 = arith.constant 0 : index
      %265 = vector.load %arg1[%c0_144, %c0_145] : memref<72x72xbf16, #tpu.memory_space<vmem>>, vector<72x72xbf16>
      %c0_146 = arith.constant 0 : index
      %c0_147 = arith.constant 0 : index
      %266 = vector.load %arg2[%c0_146, %c0_147] : memref<72x32xbf16, #tpu.memory_space<vmem>>, vector<72x32xbf16>
      %cst_148 = arith.constant dense<0.000000e+00> : vector<72x32xf32>
      %267 = tpu.matmul %265, %266, %cst_148 {dimension_numbers = #tpu.dot_dimension_numbers<[1], [0], [0], [1], [0, 0, 1, 1], [], []>} : vector<72x72xbf16>, vector<72x32xbf16>, vector<72x32xf32> -> vector<72x32xf32>
      %c0_149 = arith.constant 0 : index
      %c0_150 = arith.constant 0 : index
      %268 = vector.load %arg3[%c0_149, %c0_150] : memref<72x32xf32, #tpu.memory_space<vmem>>, vector<72x32xf32>
      %269 = arith.addf %267, %268 : vector<72x32xf32>
      %c0_151 = arith.constant 0 : index
      %c0_152 = arith.constant 0 : index
      %270 = vector.load %arg21[%c0_151, %c0_152] : memref<72x32xf32, #tpu.memory_space<vmem>>, vector<72x32xf32>
      tpu.vector_store %arg21[%c0_151, %c0_152], %269 {strides = array<i32>} : memref<72x32xf32, #tpu.memory_space<vmem>>, vector<72x32xf32>,
    } else {
    }
    %c0 = arith.constant 0 : index
    %c0_1 = arith.constant 0 : index
    %3 = vector.load %arg21[%c0, %c0_1] : memref<72x32xf32, #tpu.memory_space<vmem>>, vector<72x32xf32>
    %c0_2 = arith.constant 0 : index
    %c0_3 = arith.constant 0 : index
    %4 = vector.load %arg4[%c0_2, %c0_3] : memref<72x72xf32, #tpu.memory_space<vmem>>, vector<72x72xf32>
    %5 = arith.truncf %3 : vector<72x32xf32> to vector<72x32xbf16>
    %c0_4 = arith.constant 0 : index
    %c0_5 = arith.constant 0 : index
    %c0_6 = arith.constant 0 : index
    %6 = vector.load %arg6[%c0_4, %c0_5, %c0_6] : memref<1x32x96xbf16, #tpu.memory_space<vmem>>, vector<1x32x96xbf16>
    %7 = vector.shape_cast %6 : vector<1x32x96xbf16> to vector<32x96xbf16>
    %cst = arith.constant dense<0.000000e+00> : vector<72x96xf32>
    %8 = tpu.matmul %5, %7, %cst {dimension_numbers = #tpu.dot_dimension_numbers<[1], [0], [0], [1], [0, 0, 1, 1], [], []>} : vector<72x32xbf16>, vector<32x96xbf16>, vector<72x96xf32> -> vector<72x96xf32>
    %c0_7 = arith.constant 0 : index
    %c0_8 = arith.constant 0 : index
    %c0_9 = arith.constant 0 : index
    %9 = vector.load %arg7[%c0_7, %c0_8, %c0_9] : memref<1x1x96xf32, #tpu.memory_space<vmem>>, vector<1x1x96xf32>
    %10 = vector.shape_cast %9 : vector<1x1x96xf32> to vector<1x96xf32>
    %11 = vector.broadcast %10 : vector<1x96xf32> to vector<72x96xf32>
    %12 = arith.addf %8, %11 : vector<72x96xf32>
    %13 = vector.extract_strided_slice %12 {offsets = [0, 0], sizes = [72, 8], strides = [1, 1]} : vector<72x96xf32> to vector<72x8xf32>
    %cst_10 = arith.constant 0.353553385 : f32
    %14 = vector.broadcast %cst_10 : f32 to vector<72x8xf32>
    %15 = arith.mulf %13, %14 : vector<72x8xf32>
    %16 = arith.truncf %15 : vector<72x8xf32> to vector<72x8xbf16>
    %17 = vector.extract_strided_slice %12 {offsets = [0, 32], sizes = [72, 8], strides = [1, 1]} : vector<72x96xf32> to vector<72x8xf32>
    %18 = arith.truncf %17 : vector<72x8xf32> to vector<72x8xbf16>
    %19 = vector.extract_strided_slice %12 {offsets = [0, 64], sizes = [72, 8], strides = [1, 1]} : vector<72x96xf32> to vector<72x8xf32>
    %20 = arith.truncf %19 : vector<72x8xf32> to vector<72x8xbf16>
    %cst_11 = arith.constant dense<0.000000e+00> : vector<72x72xf32>
    %21 = tpu.matmul %16, %18, %cst_11 {dimension_numbers = #tpu.dot_dimension_numbers<[1], [1], [0], [0], [0, 0, 1, 0], [], []>} : vector<72x8xbf16>, vector<72x8xbf16>, vector<72x72xf32> -> vector<72x72xf32>
    %22 = arith.addf %21, %4 : vector<72x72xf32>
    %cst_12 = arith.constant dense<0xFF800000> : vector<72xf32>
    %23 = vector.multi_reduction <maximumf>, %22, %cst_12 [1] : vector<72x72xf32> to vector<72xf32>
    %24 = vector.shape_cast %23 : vector<72xf32> to vector<72x1xf32>
    %25 = vector.broadcast %24 : vector<72x1xf32> to vector<72x72xf32>
    %26 = arith.subf %22, %25 : vector<72x72xf32>
    %27 = math.exp %26 : vector<72x72xf32>
    %cst_13 = arith.constant dense<0.000000e+00> : vector<72xf32>
    %28 = vector.multi_reduction <add>, %27, %cst_13 [1] : vector<72x72xf32> to vector<72xf32>
    %29 = vector.shape_cast %28 : vector<72xf32> to vector<72x1xf32>
    %30 = tpu.reciprocal %29 {approx = true} : vector<72x1xf32> -> vector<72x1xf32>
    %31 = arith.truncf %27 : vector<72x72xf32> to vector<72x72xbf16>
    %cst_14 = arith.constant dense<0.000000e+00> : vector<72x8xf32>
    %32 = tpu.matmul %31, %20, %cst_14 {dimension_numbers = #tpu.dot_dimension_numbers<[1], [0], [0], [1], [0, 0, 1, 1], [], []>} : vector<72x72xbf16>, vector<72x8xbf16>, vector<72x8xf32> -> vector<72x8xf32>
    %33 = vector.broadcast %30 : vector<72x1xf32> to vector<72x8xf32>
    %34 = arith.mulf %32, %33 : vector<72x8xf32>
    %35 = vector.extract_strided_slice %12 {offsets = [0, 8], sizes = [72, 8], strides = [1, 1]} : vector<72x96xf32> to vector<72x8xf32>
    %cst_15 = arith.constant 0.353553385 : f32
    %36 = vector.broadcast %cst_15 : f32 to vector<72x8xf32>
    %37 = arith.mulf %35, %36 : vector<72x8xf32>
    %38 = arith.truncf %37 : vector<72x8xf32> to vector<72x8xbf16>
    %39 = vector.extract_strided_slice %12 {offsets = [0, 40], sizes = [72, 8], strides = [1, 1]} : vector<72x96xf32> to vector<72x8xf32>
    %40 = arith.truncf %39 : vector<72x8xf32> to vector<72x8xbf16>
    %41 = vector.extract_strided_slice %12 {offsets = [0, 72], sizes = [72, 8], strides = [1, 1]} : vector<72x96xf32> to vector<72x8xf32>
    %42 = arith.truncf %41 : vector<72x8xf32> to vector<72x8xbf16>
    %cst_16 = arith.constant dense<0.000000e+00> : vector<72x72xf32>
    %43 = tpu.matmul %38, %40, %cst_16 {dimension_numbers = #tpu.dot_dimension_numbers<[1], [1], [0], [0], [0, 0, 1, 0], [], []>} : vector<72x8xbf16>, vector<72x8xbf16>, vector<72x72xf32> -> vector<72x72xf32>
    %44 = arith.addf %43, %4 : vector<72x72xf32>
    %cst_17 = arith.constant dense<0xFF800000> : vector<72xf32>
    %45 = vector.multi_reduction <maximumf>, %44, %cst_17 [1] : vector<72x72xf32> to vector<72xf32>
    %46 = vector.shape_cast %45 : vector<72xf32> to vector<72x1xf32>
    %47 = vector.broadcast %46 : vector<72x1xf32> to vector<72x72xf32>
    %48 = arith.subf %44, %47 : vector<72x72xf32>
    %49 = math.exp %48 : vector<72x72xf32>
    %cst_18 = arith.constant dense<0.000000e+00> : vector<72xf32>
    %50 = vector.multi_reduction <add>, %49, %cst_18 [1] : vector<72x72xf32> to vector<72xf32>
    %51 = vector.shape_cast %50 : vector<72xf32> to vector<72x1xf32>
    %52 = tpu.reciprocal %51 {approx = true} : vector<72x1xf32> -> vector<72x1xf32>
    %53 = arith.truncf %49 : vector<72x72xf32> to vector<72x72xbf16>
    %cst_19 = arith.constant dense<0.000000e+00> : vector<72x8xf32>
    %54 = tpu.matmul %53, %42, %cst_19 {dimension_numbers = #tpu.dot_dimension_numbers<[1], [0], [0], [1], [0, 0, 1, 1], [], []>} : vector<72x72xbf16>, vector<72x8xbf16>, vector<72x8xf32> -> vector<72x8xf32>
    %55 = vector.broadcast %52 : vector<72x1xf32> to vector<72x8xf32>
    %56 = arith.mulf %54, %55 : vector<72x8xf32>
    %57 = vector.extract_strided_slice %12 {offsets = [0, 16], sizes = [72, 8], strides = [1, 1]} : vector<72x96xf32> to vector<72x8xf32>
    %cst_20 = arith.constant 0.353553385 : f32
    %58 = vector.broadcast %cst_20 : f32 to vector<72x8xf32>
    %59 = arith.mulf %57, %58 : vector<72x8xf32>
    %60 = arith.truncf %59 : vector<72x8xf32> to vector<72x8xbf16>
    %61 = vector.extract_strided_slice %12 {offsets = [0, 48], sizes = [72, 8], strides = [1, 1]} : vector<72x96xf32> to vector<72x8xf32>
    %62 = arith.truncf %61 : vector<72x8xf32> to vector<72x8xbf16>
    %63 = vector.extract_strided_slice %12 {offsets = [0, 80], sizes = [72, 8], strides = [1, 1]} : vector<72x96xf32> to vector<72x8xf32>
    %64 = arith.truncf %63 : vector<72x8xf32> to vector<72x8xbf16>
    %cst_21 = arith.constant dense<0.000000e+00> : vector<72x72xf32>
    %65 = tpu.matmul %60, %62, %cst_21 {dimension_numbers = #tpu.dot_dimension_numbers<[1], [1], [0], [0], [0, 0, 1, 0], [], []>} : vector<72x8xbf16>, vector<72x8xbf16>, vector<72x72xf32> -> vector<72x72xf32>
    %66 = arith.addf %65, %4 : vector<72x72xf32>
    %cst_22 = arith.constant dense<0xFF800000> : vector<72xf32>
    %67 = vector.multi_reduction <maximumf>, %66, %cst_22 [1] : vector<72x72xf32> to vector<72xf32>
    %68 = vector.shape_cast %67 : vector<72xf32> to vector<72x1xf32>
    %69 = vector.broadcast %68 : vector<72x1xf32> to vector<72x72xf32>
    %70 = arith.subf %66, %69 : vector<72x72xf32>
    %71 = math.exp %70 : vector<72x72xf32>
    %cst_23 = arith.constant dense<0.000000e+00> : vector<72xf32>
    %72 = vector.multi_reduction <add>, %71, %cst_23 [1] : vector<72x72xf32> to vector<72xf32>
    %73 = vector.shape_cast %72 : vector<72xf32> to vector<72x1xf32>
    %74 = tpu.reciprocal %73 {approx = true} : vector<72x1xf32> -> vector<72x1xf32>
    %75 = arith.truncf %71 : vector<72x72xf32> to vector<72x72xbf16>
    %cst_24 = arith.constant dense<0.000000e+00> : vector<72x8xf32>
    %76 = tpu.matmul %75, %64, %cst_24 {dimension_numbers = #tpu.dot_dimension_numbers<[1], [0], [0], [1], [0, 0, 1, 1], [], []>} : vector<72x72xbf16>, vector<72x8xbf16>, vector<72x8xf32> -> vector<72x8xf32>
    %77 = vector.broadcast %74 : vector<72x1xf32> to vector<72x8xf32>
    %78 = arith.mulf %76, %77 : vector<72x8xf32>
    %79 = vector.extract_strided_slice %12 {offsets = [0, 24], sizes = [72, 8], strides = [1, 1]} : vector<72x96xf32> to vector<72x8xf32>
    %cst_25 = arith.constant 0.353553385 : f32
    %80 = vector.broadcast %cst_25 : f32 to vector<72x8xf32>
    %81 = arith.mulf %79, %80 : vector<72x8xf32>
    %82 = arith.truncf %81 : vector<72x8xf32> to vector<72x8xbf16>
    %83 = vector.extract_strided_slice %12 {offsets = [0, 56], sizes = [72, 8], strides = [1, 1]} : vector<72x96xf32> to vector<72x8xf32>
    %84 = arith.truncf %83 : vector<72x8xf32> to vector<72x8xbf16>
    %85 = vector.extract_strided_slice %12 {offsets = [0, 88], sizes = [72, 8], strides = [1, 1]} : vector<72x96xf32> to vector<72x8xf32>
    %86 = arith.truncf %85 : vector<72x8xf32> to vector<72x8xbf16>
    %cst_26 = arith.constant dense<0.000000e+00> : vector<72x72xf32>
    %87 = tpu.matmul %82, %84, %cst_26 {dimension_numbers = #tpu.dot_dimension_numbers<[1], [1], [0], [0], [0, 0, 1, 0], [], []>} : vector<72x8xbf16>, vector<72x8xbf16>, vector<72x72xf32> -> vector<72x72xf32>
    %88 = arith.addf %87, %4 : vector<72x72xf32>
    %cst_27 = arith.constant dense<0xFF800000> : vector<72xf32>
    %89 = vector.multi_reduction <maximumf>, %88, %cst_27 [1] : vector<72x72xf32> to vector<72xf32>
    %90 = vector.shape_cast %89 : vector<72xf32> to vector<72x1xf32>
    %91 = vector.broadcast %90 : vector<72x1xf32> to vector<72x72xf32>
    %92 = arith.subf %88, %91 : vector<72x72xf32>
    %93 = math.exp %92 : vector<72x72xf32>
    %cst_28 = arith.constant dense<0.000000e+00> : vector<72xf32>
    %94 = vector.multi_reduction <add>, %93, %cst_28 [1] : vector<72x72xf32> to vector<72xf32>
    %95 = vector.shape_cast %94 : vector<72xf32> to vector<72x1xf32>
    %96 = tpu.reciprocal %95 {approx = true} : vector<72x1xf32> -> vector<72x1xf32>
    %97 = arith.truncf %93 : vector<72x72xf32> to vector<72x72xbf16>
    %cst_29 = arith.constant dense<0.000000e+00> : vector<72x8xf32>
    %98 = tpu.matmul %97, %86, %cst_29 {dimension_numbers = #tpu.dot_dimension_numbers<[1], [0], [0], [1], [0, 0, 1, 1], [], []>} : vector<72x72xbf16>, vector<72x8xbf16>, vector<72x8xf32> -> vector<72x8xf32>
    %99 = vector.broadcast %96 : vector<72x1xf32> to vector<72x8xf32>
    %100 = arith.mulf %98, %99 : vector<72x8xf32>
    %101 = tpu.concatenate %34, %56, %78, %100 in 1 : vector<72x8xf32>, vector<72x8xf32>, vector<72x8xf32>, vector<72x8xf32> -> vector<72x32xf32>
    %102 = arith.truncf %101 : vector<72x32xf32> to vector<72x32xbf16>
    %c0_30 = arith.constant 0 : index
    %c0_31 = arith.constant 0 : index
    %c0_32 = arith.constant 0 : index
    %103 = vector.load %arg8[%c0_30, %c0_31, %c0_32] : memref<1x32x32xbf16, #tpu.memory_space<vmem>>, vector<1x32x32xbf16>
    %104 = vector.shape_cast %103 : vector<1x32x32xbf16> to vector<32x32xbf16>
    %cst_33 = arith.constant dense<0.000000e+00> : vector<72x32xf32>
    %105 = tpu.matmul %102, %104, %cst_33 {dimension_numbers = #tpu.dot_dimension_numbers<[1], [0], [0], [1], [0, 0, 1, 1], [], []>} : vector<72x32xbf16>, vector<32x32xbf16>, vector<72x32xf32> -> vector<72x32xf32>
    %c0_34 = arith.constant 0 : index
    %c0_35 = arith.constant 0 : index
    %c0_36 = arith.constant 0 : index
    %106 = vector.load %arg9[%c0_34, %c0_35, %c0_36] : memref<1x1x32xf32, #tpu.memory_space<vmem>>, vector<1x1x32xf32>
    %107 = vector.shape_cast %106 : vector<1x1x32xf32> to vector<1x32xf32>
    %108 = vector.broadcast %107 : vector<1x32xf32> to vector<72x32xf32>
    %109 = arith.addf %105, %108 : vector<72x32xf32>
    %110 = arith.addf %3, %109 : vector<72x32xf32>
    %cst_37 = arith.constant dense<0.000000e+00> : vector<72xf32>
    %111 = vector.multi_reduction <add>, %110, %cst_37 [1] : vector<72x32xf32> to vector<72xf32>
    %112 = vector.shape_cast %111 : vector<72xf32> to vector<72x1xf32>
    %cst_38 = arith.constant 3.200000e+01 : f32
    %113 = vector.broadcast %cst_38 : f32 to vector<72x1xf32>
    %114 = arith.divf %112, %113 : vector<72x1xf32>
    %115 = vector.broadcast %114 : vector<72x1xf32> to vector<72x32xf32>
    %116 = arith.subf %110, %115 : vector<72x32xf32>
    %117 = arith.mulf %116, %116 : vector<72x32xf32>
    %cst_39 = arith.constant dense<0.000000e+00> : vector<72xf32>
    %118 = vector.multi_reduction <add>, %117, %cst_39 [1] : vector<72x32xf32> to vector<72xf32>
    %119 = vector.shape_cast %118 : vector<72xf32> to vector<72x1xf32>
    %cst_40 = arith.constant 3.200000e+01 : f32
    %120 = vector.broadcast %cst_40 : f32 to vector<72x1xf32>
    %121 = arith.divf %119, %120 : vector<72x1xf32>
    %122 = vector.broadcast %114 : vector<72x1xf32> to vector<72x32xf32>
    %123 = arith.subf %110, %122 : vector<72x32xf32>
    %cst_41 = arith.constant 9.99999974E-6 : f32
    %124 = vector.broadcast %cst_41 : f32 to vector<72x1xf32>
    %125 = arith.addf %121, %124 : vector<72x1xf32>
    %126 = math.rsqrt %125 : vector<72x1xf32>
    %127 = vector.broadcast %126 : vector<72x1xf32> to vector<72x32xf32>
    %128 = arith.mulf %123, %127 : vector<72x32xf32>
    %c0_42 = arith.constant 0 : index
    %c0_43 = arith.constant 0 : index
    %c0_44 = arith.constant 0 : index
    %129 = vector.load %arg10[%c0_42, %c0_43, %c0_44] : memref<1x1x32xf32, #tpu.memory_space<vmem>>, vector<1x1x32xf32>
    %130 = vector.shape_cast %129 : vector<1x1x32xf32> to vector<1x32xf32>
    %131 = vector.broadcast %130 : vector<1x32xf32> to vector<72x32xf32>
    %132 = arith.mulf %128, %131 : vector<72x32xf32>
    %c0_45 = arith.constant 0 : index
    %c0_46 = arith.constant 0 : index
    %c0_47 = arith.constant 0 : index
    %133 = vector.load %arg11[%c0_45, %c0_46, %c0_47] : memref<1x1x32xf32, #tpu.memory_space<vmem>>, vector<1x1x32xf32>
    %134 = vector.shape_cast %133 : vector<1x1x32xf32> to vector<1x32xf32>
    %135 = vector.broadcast %134 : vector<1x32xf32> to vector<72x32xf32>
    %136 = arith.addf %132, %135 : vector<72x32xf32>
    %137 = arith.truncf %136 : vector<72x32xf32> to vector<72x32xbf16>
    %c0_48 = arith.constant 0 : index
    %c0_49 = arith.constant 0 : index
    %c0_50 = arith.constant 0 : index
    %138 = vector.load %arg12[%c0_48, %c0_49, %c0_50] : memref<1x32x2048xbf16, #tpu.memory_space<vmem>>, vector<1x32x256xbf16>
    %139 = vector.shape_cast %138 : vector<1x32x256xbf16> to vector<32x256xbf16>
    %cst_51 = arith.constant dense<0.000000e+00> : vector<72x256xf32>
    %140 = tpu.matmul %137, %139, %cst_51 {dimension_numbers = #tpu.dot_dimension_numbers<[1], [0], [0], [1], [0, 0, 1, 1], [], []>} : vector<72x32xbf16>, vector<32x256xbf16>, vector<72x256xf32> -> vector<72x256xf32>
    %c0_52 = arith.constant 0 : index
    %c0_53 = arith.constant 0 : index
    %c0_54 = arith.constant 0 : index
    %141 = vector.load %arg13[%c0_52, %c0_53, %c0_54] : memref<1x1x2048xf32, #tpu.memory_space<vmem>>, vector<1x1x256xf32>
    %142 = vector.shape_cast %141 : vector<1x1x256xf32> to vector<1x256xf32>
    %143 = vector.broadcast %142 : vector<1x256xf32> to vector<72x256xf32>
    %144 = arith.addf %140, %143 : vector<72x256xf32>
    %cst_55 = arith.constant 0.000000e+00 : f32
    %145 = vector.broadcast %cst_55 : f32 to vector<72x256xf32>
    %146 = arith.maximumf %144, %145 : vector<72x256xf32>
    %147 = arith.truncf %146 : vector<72x256xf32> to vector<72x256xbf16>
    %c0_56 = arith.constant 0 : index
    %c0_57 = arith.constant 0 : index
    %148 = vector.load %arg22[%c0_56, %c0_57] : memref<72x2048xbf16, #tpu.memory_space<vmem>>, vector<72x256xbf16>
    tpu.vector_store %arg22[%c0_56, %c0_57], %147 {strides = array<i32>} : memref<72x2048xbf16, #tpu.memory_space<vmem>>, vector<72x256xbf16>,
    %c0_58 = arith.constant 0 : index
    %c0_59 = arith.constant 0 : index
    %c256 = arith.constant 256 : index
    %149 = vector.load %arg12[%c0_58, %c0_59, %c256] : memref<1x32x2048xbf16, #tpu.memory_space<vmem>>, vector<1x32x256xbf16>
    %150 = vector.shape_cast %149 : vector<1x32x256xbf16> to vector<32x256xbf16>
    %cst_60 = arith.constant dense<0.000000e+00> : vector<72x256xf32>
    %151 = tpu.matmul %137, %150, %cst_60 {dimension_numbers = #tpu.dot_dimension_numbers<[1], [0], [0], [1], [0, 0, 1, 1], [], []>} : vector<72x32xbf16>, vector<32x256xbf16>, vector<72x256xf32> -> vector<72x256xf32>
    %c0_61 = arith.constant 0 : index
    %c0_62 = arith.constant 0 : index
    %c256_63 = arith.constant 256 : index
    %152 = vector.load %arg13[%c0_61, %c0_62, %c256_63] : memref<1x1x2048xf32, #tpu.memory_space<vmem>>, vector<1x1x256xf32>
    %153 = vector.shape_cast %152 : vector<1x1x256xf32> to vector<1x256xf32>
    %154 = vector.broadcast %153 : vector<1x256xf32> to vector<72x256xf32>
    %155 = arith.addf %151, %154 : vector<72x256xf32>
    %cst_64 = arith.constant 0.000000e+00 : f32
    %156 = vector.broadcast %cst_64 : f32 to vector<72x256xf32>
    %157 = arith.maximumf %155, %156 : vector<72x256xf32>
    %158 = arith.truncf %157 : vector<72x256xf32> to vector<72x256xbf16>
    %c0_65 = arith.constant 0 : index
    %c256_66 = arith.constant 256 : index
    %159 = vector.load %arg22[%c0_65, %c256_66] : memref<72x2048xbf16, #tpu.memory_space<vmem>>, vector<72x256xbf16>
    tpu.vector_store %arg22[%c0_65, %c256_66], %158 {strides = array<i32>} : memref<72x2048xbf16, #tpu.memory_space<vmem>>, vector<72x256xbf16>,
    %c0_67 = arith.constant 0 : index
    %c0_68 = arith.constant 0 : index
    %c512 = arith.constant 512 : index
    %160 = vector.load %arg12[%c0_67, %c0_68, %c512] : memref<1x32x2048xbf16, #tpu.memory_space<vmem>>, vector<1x32x256xbf16>
    %161 = vector.shape_cast %160 : vector<1x32x256xbf16> to vector<32x256xbf16>
    %cst_69 = arith.constant dense<0.000000e+00> : vector<72x256xf32>
    %162 = tpu.matmul %137, %161, %cst_69 {dimension_numbers = #tpu.dot_dimension_numbers<[1], [0], [0], [1], [0, 0, 1, 1], [], []>} : vector<72x32xbf16>, vector<32x256xbf16>, vector<72x256xf32> -> vector<72x256xf32>
    %c0_70 = arith.constant 0 : index
    %c0_71 = arith.constant 0 : index
    %c512_72 = arith.constant 512 : index
    %163 = vector.load %arg13[%c0_70, %c0_71, %c512_72] : memref<1x1x2048xf32, #tpu.memory_space<vmem>>, vector<1x1x256xf32>
    %164 = vector.shape_cast %163 : vector<1x1x256xf32> to vector<1x256xf32>
    %165 = vector.broadcast %164 : vector<1x256xf32> to vector<72x256xf32>
    %166 = arith.addf %162, %165 : vector<72x256xf32>
    %cst_73 = arith.constant 0.000000e+00 : f32
    %167 = vector.broadcast %cst_73 : f32 to vector<72x256xf32>
    %168 = arith.maximumf %166, %167 : vector<72x256xf32>
    %169 = arith.truncf %168 : vector<72x256xf32> to vector<72x256xbf16>
    %c0_74 = arith.constant 0 : index
    %c512_75 = arith.constant 512 : index
    %170 = vector.load %arg22[%c0_74, %c512_75] : memref<72x2048xbf16, #tpu.memory_space<vmem>>, vector<72x256xbf16>
    tpu.vector_store %arg22[%c0_74, %c512_75], %169 {strides = array<i32>} : memref<72x2048xbf16, #tpu.memory_space<vmem>>, vector<72x256xbf16>,
    %c0_76 = arith.constant 0 : index
    %c0_77 = arith.constant 0 : index
    %c768 = arith.constant 768 : index
    %171 = vector.load %arg12[%c0_76, %c0_77, %c768] : memref<1x32x2048xbf16, #tpu.memory_space<vmem>>, vector<1x32x256xbf16>
    %172 = vector.shape_cast %171 : vector<1x32x256xbf16> to vector<32x256xbf16>
    %cst_78 = arith.constant dense<0.000000e+00> : vector<72x256xf32>
    %173 = tpu.matmul %137, %172, %cst_78 {dimension_numbers = #tpu.dot_dimension_numbers<[1], [0], [0], [1], [0, 0, 1, 1], [], []>} : vector<72x32xbf16>, vector<32x256xbf16>, vector<72x256xf32> -> vector<72x256xf32>
    %c0_79 = arith.constant 0 : index
    %c0_80 = arith.constant 0 : index
    %c768_81 = arith.constant 768 : index
    %174 = vector.load %arg13[%c0_79, %c0_80, %c768_81] : memref<1x1x2048xf32, #tpu.memory_space<vmem>>, vector<1x1x256xf32>
    %175 = vector.shape_cast %174 : vector<1x1x256xf32> to vector<1x256xf32>
    %176 = vector.broadcast %175 : vector<1x256xf32> to vector<72x256xf32>
    %177 = arith.addf %173, %176 : vector<72x256xf32>
    %cst_82 = arith.constant 0.000000e+00 : f32
    %178 = vector.broadcast %cst_82 : f32 to vector<72x256xf32>
    %179 = arith.maximumf %177, %178 : vector<72x256xf32>
    %180 = arith.truncf %179 : vector<72x256xf32> to vector<72x256xbf16>
    %c0_83 = arith.constant 0 : index
    %c768_84 = arith.constant 768 : index
    %181 = vector.load %arg22[%c0_83, %c768_84] : memref<72x2048xbf16, #tpu.memory_space<vmem>>, vector<72x256xbf16>
    tpu.vector_store %arg22[%c0_83, %c768_84], %180 {strides = array<i32>} : memref<72x2048xbf16, #tpu.memory_space<vmem>>, vector<72x256xbf16>,
    %c0_85 = arith.constant 0 : index
    %c0_86 = arith.constant 0 : index
    %c1024 = arith.constant 1024 : index
    %182 = vector.load %arg12[%c0_85, %c0_86, %c1024] : memref<1x32x2048xbf16, #tpu.memory_space<vmem>>, vector<1x32x256xbf16>
    %183 = vector.shape_cast %182 : vector<1x32x256xbf16> to vector<32x256xbf16>
    %cst_87 = arith.constant dense<0.000000e+00> : vector<72x256xf32>
    %184 = tpu.matmul %137, %183, %cst_87 {dimension_numbers = #tpu.dot_dimension_numbers<[1], [0], [0], [1], [0, 0, 1, 1], [], []>} : vector<72x32xbf16>, vector<32x256xbf16>, vector<72x256xf32> -> vector<72x256xf32>
    %c0_88 = arith.constant 0 : index
    %c0_89 = arith.constant 0 : index
    %c1024_90 = arith.constant 1024 : index
    %185 = vector.load %arg13[%c0_88, %c0_89, %c1024_90] : memref<1x1x2048xf32, #tpu.memory_space<vmem>>, vector<1x1x256xf32>
    %186 = vector.shape_cast %185 : vector<1x1x256xf32> to vector<1x256xf32>
    %187 = vector.broadcast %186 : vector<1x256xf32> to vector<72x256xf32>
    %188 = arith.addf %184, %187 : vector<72x256xf32>
    %cst_91 = arith.constant 0.000000e+00 : f32
    %189 = vector.broadcast %cst_91 : f32 to vector<72x256xf32>
    %190 = arith.maximumf %188, %189 : vector<72x256xf32>
    %191 = arith.truncf %190 : vector<72x256xf32> to vector<72x256xbf16>
    %c0_92 = arith.constant 0 : index
    %c1024_93 = arith.constant 1024 : index
    %192 = vector.load %arg22[%c0_92, %c1024_93] : memref<72x2048xbf16, #tpu.memory_space<vmem>>, vector<72x256xbf16>
    tpu.vector_store %arg22[%c0_92, %c1024_93], %191 {strides = array<i32>} : memref<72x2048xbf16, #tpu.memory_space<vmem>>, vector<72x256xbf16>,
    %c0_94 = arith.constant 0 : index
    %c0_95 = arith.constant 0 : index
    %c1280 = arith.constant 1280 : index
    %193 = vector.load %arg12[%c0_94, %c0_95, %c1280] : memref<1x32x2048xbf16, #tpu.memory_space<vmem>>, vector<1x32x256xbf16>
    %194 = vector.shape_cast %193 : vector<1x32x256xbf16> to vector<32x256xbf16>
    %cst_96 = arith.constant dense<0.000000e+00> : vector<72x256xf32>
    %195 = tpu.matmul %137, %194, %cst_96 {dimension_numbers = #tpu.dot_dimension_numbers<[1], [0], [0], [1], [0, 0, 1, 1], [], []>} : vector<72x32xbf16>, vector<32x256xbf16>, vector<72x256xf32> -> vector<72x256xf32>
    %c0_97 = arith.constant 0 : index
    %c0_98 = arith.constant 0 : index
    %c1280_99 = arith.constant 1280 : index
    %196 = vector.load %arg13[%c0_97, %c0_98, %c1280_99] : memref<1x1x2048xf32, #tpu.memory_space<vmem>>, vector<1x1x256xf32>
    %197 = vector.shape_cast %196 : vector<1x1x256xf32> to vector<1x256xf32>
    %198 = vector.broadcast %197 : vector<1x256xf32> to vector<72x256xf32>
    %199 = arith.addf %195, %198 : vector<72x256xf32>
    %cst_100 = arith.constant 0.000000e+00 : f32
    %200 = vector.broadcast %cst_100 : f32 to vector<72x256xf32>
    %201 = arith.maximumf %199, %200 : vector<72x256xf32>
    %202 = arith.truncf %201 : vector<72x256xf32> to vector<72x256xbf16>
    %c0_101 = arith.constant 0 : index
    %c1280_102 = arith.constant 1280 : index
    %203 = vector.load %arg22[%c0_101, %c1280_102] : memref<72x2048xbf16, #tpu.memory_space<vmem>>, vector<72x256xbf16>
    tpu.vector_store %arg22[%c0_101, %c1280_102], %202 {strides = array<i32>} : memref<72x2048xbf16, #tpu.memory_space<vmem>>, vector<72x256xbf16>,
    %c0_103 = arith.constant 0 : index
    %c0_104 = arith.constant 0 : index
    %c1536 = arith.constant 1536 : index
    %204 = vector.load %arg12[%c0_103, %c0_104, %c1536] : memref<1x32x2048xbf16, #tpu.memory_space<vmem>>, vector<1x32x256xbf16>
    %205 = vector.shape_cast %204 : vector<1x32x256xbf16> to vector<32x256xbf16>
    %cst_105 = arith.constant dense<0.000000e+00> : vector<72x256xf32>
    %206 = tpu.matmul %137, %205, %cst_105 {dimension_numbers = #tpu.dot_dimension_numbers<[1], [0], [0], [1], [0, 0, 1, 1], [], []>} : vector<72x32xbf16>, vector<32x256xbf16>, vector<72x256xf32> -> vector<72x256xf32>
    %c0_106 = arith.constant 0 : index
    %c0_107 = arith.constant 0 : index
    %c1536_108 = arith.constant 1536 : index
    %207 = vector.load %arg13[%c0_106, %c0_107, %c1536_108] : memref<1x1x2048xf32, #tpu.memory_space<vmem>>, vector<1x1x256xf32>
    %208 = vector.shape_cast %207 : vector<1x1x256xf32> to vector<1x256xf32>
    %209 = vector.broadcast %208 : vector<1x256xf32> to vector<72x256xf32>
    %210 = arith.addf %206, %209 : vector<72x256xf32>
    %cst_109 = arith.constant 0.000000e+00 : f32
    %211 = vector.broadcast %cst_109 : f32 to vector<72x256xf32>
    %212 = arith.maximumf %210, %211 : vector<72x256xf32>
    %213 = arith.truncf %212 : vector<72x256xf32> to vector<72x256xbf16>
    %c0_110 = arith.constant 0 : index
    %c1536_111 = arith.constant 1536 : index
    %214 = vector.load %arg22[%c0_110, %c1536_111] : memref<72x2048xbf16, #tpu.memory_space<vmem>>, vector<72x256xbf16>
    tpu.vector_store %arg22[%c0_110, %c1536_111], %213 {strides = array<i32>} : memref<72x2048xbf16, #tpu.memory_space<vmem>>, vector<72x256xbf16>,
    %c0_112 = arith.constant 0 : index
    %c0_113 = arith.constant 0 : index
    %c1792 = arith.constant 1792 : index
    %215 = vector.load %arg12[%c0_112, %c0_113, %c1792] : memref<1x32x2048xbf16, #tpu.memory_space<vmem>>, vector<1x32x256xbf16>
    %216 = vector.shape_cast %215 : vector<1x32x256xbf16> to vector<32x256xbf16>
    %cst_114 = arith.constant dense<0.000000e+00> : vector<72x256xf32>
    %217 = tpu.matmul %137, %216, %cst_114 {dimension_numbers = #tpu.dot_dimension_numbers<[1], [0], [0], [1], [0, 0, 1, 1], [], []>} : vector<72x32xbf16>, vector<32x256xbf16>, vector<72x256xf32> -> vector<72x256xf32>
    %c0_115 = arith.constant 0 : index
    %c0_116 = arith.constant 0 : index
    %c1792_117 = arith.constant 1792 : index
    %218 = vector.load %arg13[%c0_115, %c0_116, %c1792_117] : memref<1x1x2048xf32, #tpu.memory_space<vmem>>, vector<1x1x256xf32>
    %219 = vector.shape_cast %218 : vector<1x1x256xf32> to vector<1x256xf32>
    %220 = vector.broadcast %219 : vector<1x256xf32> to vector<72x256xf32>
    %221 = arith.addf %217, %220 : vector<72x256xf32>
    %cst_118 = arith.constant 0.000000e+00 : f32
    %222 = vector.broadcast %cst_118 : f32 to vector<72x256xf32>
    %223 = arith.maximumf %221, %222 : vector<72x256xf32>
    %224 = arith.truncf %223 : vector<72x256xf32> to vector<72x256xbf16>
    %c0_119 = arith.constant 0 : index
    %c1792_120 = arith.constant 1792 : index
    %225 = vector.load %arg22[%c0_119, %c1792_120] : memref<72x2048xbf16, #tpu.memory_space<vmem>>, vector<72x256xbf16>
    tpu.vector_store %arg22[%c0_119, %c1792_120], %224 {strides = array<i32>} : memref<72x2048xbf16, #tpu.memory_space<vmem>>, vector<72x256xbf16>,
    %c0_121 = arith.constant 0 : index
    %c0_122 = arith.constant 0 : index
    %226 = vector.load %arg22[%c0_121, %c0_122] : memref<72x2048xbf16, #tpu.memory_space<vmem>>, vector<72x2048xbf16>
    %c0_123 = arith.constant 0 : index
    %c0_124 = arith.constant 0 : index
    %c0_125 = arith.constant 0 : index
    %227 = vector.load %arg14[%c0_123, %c0_124, %c0_125] : memref<1x2048x32xbf16, #tpu.memory_space<vmem>>, vector<1x2048x32xbf16>
    %228 = vector.shape_cast %227 : vector<1x2048x32xbf16> to vector<2048x32xbf16>
    %cst_126 = arith.constant dense<0.000000e+00> : vector<72x32xf32>
    %229 = tpu.matmul %226, %228, %cst_126 {dimension_numbers = #tpu.dot_dimension_numbers<[1], [0], [0], [1], [0, 0, 1, 1], [], []>} : vector<72x2048xbf16>, vector<2048x32xbf16>, vector<72x32xf32> -> vector<72x32xf32>
    %230 = arith.addf %136, %229 : vector<72x32xf32>
    %c0_127 = arith.constant 0 : index
    %c0_128 = arith.constant 0 : index
    %c0_129 = arith.constant 0 : index
    %231 = vector.load %arg15[%c0_127, %c0_128, %c0_129] : memref<1x1x32xf32, #tpu.memory_space<vmem>>, vector<1x1x32xf32>
    %232 = vector.shape_cast %231 : vector<1x1x32xf32> to vector<1x32xf32>
    %233 = vector.broadcast %232 : vector<1x32xf32> to vector<72x32xf32>
    %234 = arith.addf %230, %233 : vector<72x32xf32>
    %cst_130 = arith.constant dense<0.000000e+00> : vector<72xf32>
    %235 = vector.multi_reduction <add>, %234, %cst_130 [1] : vector<72x32xf32> to vector<72xf32>
    %236 = vector.shape_cast %235 : vector<72xf32> to vector<72x1xf32>
    %cst_131 = arith.constant 3.200000e+01 : f32
    %237 = vector.broadcast %cst_131 : f32 to vector<72x1xf32>
    %238 = arith.divf %236, %237 : vector<72x1xf32>
    %239 = vector.broadcast %238 : vector<72x1xf32> to vector<72x32xf32>
    %240 = arith.subf %234, %239 : vector<72x32xf32>
    %241 = arith.mulf %240, %240 : vector<72x32xf32>
    %cst_132 = arith.constant dense<0.000000e+00> : vector<72xf32>
    %242 = vector.multi_reduction <add>, %241, %cst_132 [1] : vector<72x32xf32> to vector<72xf32>
    %243 = vector.shape_cast %242 : vector<72xf32> to vector<72x1xf32>
    %cst_133 = arith.constant 3.200000e+01 : f32
    %244 = vector.broadcast %cst_133 : f32 to vector<72x1xf32>
    %245 = arith.divf %243, %244 : vector<72x1xf32>
    %246 = vector.broadcast %238 : vector<72x1xf32> to vector<72x32xf32>
    %247 = arith.subf %234, %246 : vector<72x32xf32>
    %cst_134 = arith.constant 9.99999974E-6 : f32
    %248 = vector.broadcast %cst_134 : f32 to vector<72x1xf32>
    %249 = arith.addf %245, %248 : vector<72x1xf32>
    %250 = math.rsqrt %249 : vector<72x1xf32>
    %251 = vector.broadcast %250 : vector<72x1xf32> to vector<72x32xf32>
    %252 = arith.mulf %247, %251 : vector<72x32xf32>
    %c0_135 = arith.constant 0 : index
    %c0_136 = arith.constant 0 : index
    %c0_137 = arith.constant 0 : index
    %253 = vector.load %arg16[%c0_135, %c0_136, %c0_137] : memref<1x1x32xf32, #tpu.memory_space<vmem>>, vector<1x1x32xf32>
    %254 = vector.shape_cast %253 : vector<1x1x32xf32> to vector<1x32xf32>
    %255 = vector.broadcast %254 : vector<1x32xf32> to vector<72x32xf32>
    %256 = arith.mulf %252, %255 : vector<72x32xf32>
    %c0_138 = arith.constant 0 : index
    %c0_139 = arith.constant 0 : index
    %c0_140 = arith.constant 0 : index
    %257 = vector.load %arg17[%c0_138, %c0_139, %c0_140] : memref<1x1x32xf32, #tpu.memory_space<vmem>>, vector<1x1x32xf32>
    %258 = vector.shape_cast %257 : vector<1x1x32xf32> to vector<1x32xf32>
    %259 = vector.broadcast %258 : vector<1x32xf32> to vector<72x32xf32>
    %260 = arith.addf %256, %259 : vector<72x32xf32>
    %c0_141 = arith.constant 0 : index
    %c0_142 = arith.constant 0 : index
    %261 = vector.load %arg21[%c0_141, %c0_142] : memref<72x32xf32, #tpu.memory_space<vmem>>, vector<72x32xf32>
    tpu.vector_store %arg21[%c0_141, %c0_142], %260 {strides = array<i32>} : memref<72x32xf32, #tpu.memory_space<vmem>>, vector<72x32xf32>,
    %c1_i32 = arith.constant 1 : i32
    %262 = arith.cmpi eq, %arg0, %c1_i32 : i32
    %263 = arith.extui %262 : i1 to i32
    %c0_i32_143 = arith.constant 0 : i32
    %264 = arith.cmpi ne, %263, %c0_i32_143 : i32
    scf.if %264 {
      %c0_144 = arith.constant 0 : index
      %c0_145 = arith.constant 0 : index
      %265 = vector.load %arg5[%c0_144, %c0_145] : memref<2x72xf32, #tpu.memory_space<vmem>>, vector<2x72xf32>
      %cst_146 = arith.constant dense<0.000000e+00> : vector<2x32xf32>
      %266 = tpu.matmul %265, %260, %cst_146 {dimension_numbers = #tpu.dot_dimension_numbers<[1], [0], [0], [1], [0, 0, 1, 1], [], []>} : vector<2x72xf32>, vector<72x32xf32>, vector<2x32xf32> -> vector<2x32xf32>
      %267 = arith.truncf %266 : vector<2x32xf32> to vector<2x32xbf16>
      %c0_147 = arith.constant 0 : index
      %c0_148 = arith.constant 0 : index
      %268 = vector.load %arg18[%c0_147, %c0_148] : memref<32x128xbf16, #tpu.memory_space<vmem>>, vector<32x128xbf16>
      %cst_149 = arith.constant dense<0.000000e+00> : vector<2x128xf32>
      %269 = tpu.matmul %267, %268, %cst_149 {dimension_numbers = #tpu.dot_dimension_numbers<[1], [0], [0], [1], [0, 0, 1, 1], [], []>} : vector<2x32xbf16>, vector<32x128xbf16>, vector<2x128xf32> -> vector<2x128xf32>
      %c0_150 = arith.constant 0 : index
      %c0_151 = arith.constant 0 : index
      %270 = vector.load %arg19[%c0_150, %c0_151] : memref<1x128xf32, #tpu.memory_space<vmem>>, vector<1x128xf32>
      %271 = vector.broadcast %270 : vector<1x128xf32> to vector<2x128xf32>
      %272 = arith.addf %269, %271 : vector<2x128xf32>
      %c0_152 = arith.constant 0 : index
      %c0_153 = arith.constant 0 : index
      %273 = vector.load %arg20[%c0_152, %c0_153] : memref<2x128xf32, #tpu.memory_space<vmem>>, vector<2x128xf32>
      tpu.vector_store %arg20[%c0_152, %c0_153], %272 {strides = array<i32>} : memref<2x128xf32, #tpu.memory_space<vmem>>, vector<2x128xf32>,
    } else {
    }
    return
  }
  func.func @transform_0(%arg0: i32) -> (i32, i32) {
    %c0_i32 = arith.constant 0 : i32
    %c0_i32_0 = arith.constant 0 : i32
    %c0_i32_1 = arith.constant 0 : i32
    return %c0_i32, %c0_i32_0 : i32, i32
  }
  func.func @transform_1(%arg0: i32) -> (i32, i32) {
    %c0_i32 = arith.constant 0 : i32
    %c0_i32_0 = arith.constant 0 : i32
    %c0_i32_1 = arith.constant 0 : i32
    return %c0_i32, %c0_i32_0 : i32, i32
  }
  func.func @transform_2(%arg0: i32) -> (i32, i32) {
    %c0_i32 = arith.constant 0 : i32
    %c0_i32_0 = arith.constant 0 : i32
    %c0_i32_1 = arith.constant 0 : i32
    return %c0_i32, %c0_i32_0 : i32, i32
  }
  func.func @transform_3(%arg0: i32) -> (i32, i32) {
    %c0_i32 = arith.constant 0 : i32
    %c0_i32_0 = arith.constant 0 : i32
    %c0_i32_1 = arith.constant 0 : i32
    return %c0_i32, %c0_i32_0 : i32, i32
  }
  func.func @transform_4(%arg0: i32) -> (i32, i32) {
    %c0_i32 = arith.constant 0 : i32
    %c0_i32_0 = arith.constant 0 : i32
    %c0_i32_1 = arith.constant 0 : i32
    return %c0_i32, %c0_i32_0 : i32, i32
  }
  func.func @transform_5(%arg0: i32) -> (i32, i32, i32) {
    %c0_i32 = arith.constant 0 : i32
    %c0_i32_0 = arith.constant 0 : i32
    %c0_i32_1 = arith.constant 0 : i32
    return %arg0, %c0_i32, %c0_i32_0 : i32, i32, i32
  }
  func.func @transform_6(%arg0: i32) -> (i32, i32, i32) {
    %c0_i32 = arith.constant 0 : i32
    %c0_i32_0 = arith.constant 0 : i32
    %c0_i32_1 = arith.constant 0 : i32
    return %arg0, %c0_i32, %c0_i32_0 : i32, i32, i32
  }
  func.func @transform_7(%arg0: i32) -> (i32, i32, i32) {
    %c0_i32 = arith.constant 0 : i32
    %c0_i32_0 = arith.constant 0 : i32
    %c0_i32_1 = arith.constant 0 : i32
    return %arg0, %c0_i32, %c0_i32_0 : i32, i32, i32
  }
  func.func @transform_8(%arg0: i32) -> (i32, i32, i32) {
    %c0_i32 = arith.constant 0 : i32
    %c0_i32_0 = arith.constant 0 : i32
    %c0_i32_1 = arith.constant 0 : i32
    return %arg0, %c0_i32, %c0_i32_0 : i32, i32, i32
  }
  func.func @transform_9(%arg0: i32) -> (i32, i32, i32) {
    %c0_i32 = arith.constant 0 : i32
    %c0_i32_0 = arith.constant 0 : i32
    %c0_i32_1 = arith.constant 0 : i32
    return %arg0, %c0_i32, %c0_i32_0 : i32, i32, i32
  }
  func.func @transform_10(%arg0: i32) -> (i32, i32, i32) {
    %c0_i32 = arith.constant 0 : i32
    %c0_i32_0 = arith.constant 0 : i32
    %c0_i32_1 = arith.constant 0 : i32
    return %arg0, %c0_i32, %c0_i32_0 : i32, i32, i32
  }
  func.func @transform_11(%arg0: i32) -> (i32, i32, i32) {
    %c0_i32 = arith.constant 0 : i32
    %c0_i32_0 = arith.constant 0 : i32
    %c0_i32_1 = arith.constant 0 : i32
    return %arg0, %c0_i32, %c0_i32_0 : i32, i32, i32
  }
  func.func @transform_12(%arg0: i32) -> (i32, i32, i32) {
    %c0_i32 = arith.constant 0 : i32
    %c0_i32_0 = arith.constant 0 : i32
    %c0_i32_1 = arith.constant 0 : i32
    return %arg0, %c0_i32, %c0_i32_0 : i32, i32, i32
  }
  func.func @transform_13(%arg0: i32) -> (i32, i32, i32) {
    %c0_i32 = arith.constant 0 : i32
    %c0_i32_0 = arith.constant 0 : i32
    %c0_i32_1 = arith.constant 0 : i32
    return %arg0, %c0_i32, %c0_i32_0 : i32, i32, i32
  }
  func.func @transform_14(%arg0: i32) -> (i32, i32, i32) {
    %c0_i32 = arith.constant 0 : i32
    %c0_i32_0 = arith.constant 0 : i32
    %c0_i32_1 = arith.constant 0 : i32
    return %arg0, %c0_i32, %c0_i32_0 : i32, i32, i32
  }
  func.func @transform_15(%arg0: i32) -> (i32, i32, i32) {
    %c0_i32 = arith.constant 0 : i32
    %c0_i32_0 = arith.constant 0 : i32
    %c0_i32_1 = arith.constant 0 : i32
    return %arg0, %c0_i32, %c0_i32_0 : i32, i32, i32
  }
  func.func @transform_16(%arg0: i32) -> (i32, i32, i32) {
    %c0_i32 = arith.constant 0 : i32
    %c0_i32_0 = arith.constant 0 : i32
    %c0_i32_1 = arith.constant 0 : i32
    return %arg0, %c0_i32, %c0_i32_0 : i32, i32, i32
  }
  func.func @transform_17(%arg0: i32) -> (i32, i32) {
    %c0_i32 = arith.constant 0 : i32
    %c0_i32_0 = arith.constant 0 : i32
    %c0_i32_1 = arith.constant 0 : i32
    return %c0_i32, %c0_i32_0 : i32, i32
  }
  func.func @transform_18(%arg0: i32) -> (i32, i32) {
    %c0_i32 = arith.constant 0 : i32
    %c0_i32_0 = arith.constant 0 : i32
    %c0_i32_1 = arith.constant 0 : i32
    return %c0_i32, %c0_i32_0 : i32, i32
  }
  func.func @transform_19(%arg0: i32) -> (i32, i32) {
    %c0_i32 = arith.constant 0 : i32
    %c0_i32_0 = arith.constant 0 : i32
    %c0_i32_1 = arith.constant 0 : i32
    return %c0_i32, %c0_i32_0 : i32, i32
  }
}

</mosaic_0001>

<llo_original>
// kernel: tile.7
$region0: #{tile.7}
  %s0 = inlined_call_operand.vmem [shape: f32[2,34,32], index: 0, kind: input, shape index: {}]
  %s1 = inlined_call_operand.vmem [shape: f32[68,32], index: 1, kind: output, shape index: {}]
  $region1: #{tile.7} parent=0
    #allocation0 [shape = 'u8[131072]{0}', space=vmem, size = 0x20000, scoped, tag = 'scoped mem for input reshape']
    %s3 = sshll.u32 1, 2
    %s4 = ssub.s32 %s3, 1
    %s5 = smul.addr 2, 31
    %s6 = scalar_lea.vmem %s0, %s5
    %v7 = vld [vmem:[%s6] sm:%s4]
    %s8 = scalar_lea.vmem [#allocation0], 248
    %9 = vst [vmem:[%s8] sm:%s4] %v7
    %s10 = smul.addr 2, 30
    %s11 = scalar_lea.vmem %s0, %s10
    %v12 = vld [vmem:[%s11] sm:%s4]
    %s13 = scalar_lea.vmem [#allocation0], 240
    %14 = vst [vmem:[%s13] sm:%s4] %v12
    %s15 = smul.addr 2, 29
    %s16 = scalar_lea.vmem %s0, %s15
    %v17 = vld [vmem:[%s16] sm:%s4]
    %s18 = scalar_lea.vmem [#allocation0], 232
    %19 = vst [vmem:[%s18] sm:%s4] %v17
    %s20 = smul.addr 2, 28
    %s21 = scalar_lea.vmem %s0, %s20
    %v22 = vld [vmem:[%s21] sm:%s4]
    %s23 = scalar_lea.vmem [#allocation0], 224
    %24 = vst [vmem:[%s23] sm:%s4] %v22
    %s25 = smul.addr 2, 27
    %s26 = scalar_lea.vmem %s0, %s25
    %v27 = vld [vmem:[%s26] sm:%s4]
    %s28 = scalar_lea.vmem [#allocation0], 216
    %29 = vst [vmem:[%s28] sm:%s4] %v27
    %s30 = smul.addr 2, 26
    %s31 = scalar_lea.vmem %s0, %s30
    %v32 = vld [vmem:[%s31] sm:%s4]
    %s33 = scalar_lea.vmem [#allocation0], 208
    %34 = vst [vmem:[%s33] sm:%s4] %v32
    %s35 = smul.addr 2, 25
    %s36 = scalar_lea.vmem %s0, %s35
    %v37 = vld [vmem:[%s36] sm:%s4]
    %s38 = scalar_lea.vmem [#allocation0], 200
    %39 = vst [vmem:[%s38] sm:%s4] %v37
    %s40 = smul.addr 2, 24
    %s41 = scalar_lea.vmem %s0, %s40
    %v42 = vld [vmem:[%s41] sm:%s4]
    %s43 = scalar_lea.vmem [#allocation0], 192
    %44 = vst [vmem:[%s43] sm:%s4] %v42
    %s45 = smul.addr 2, 23
    %s46 = scalar_lea.vmem %s0, %s45
    %v47 = vld [vmem:[%s46] sm:%s4]
    %s48 = scalar_lea.vmem [#allocation0], 184
    %49 = vst [vmem:[%s48] sm:%s4] %v47
    %s50 = smul.addr 2, 22
    %s51 = scalar_lea.vmem %s0, %s50
    %v52 = vld [vmem:[%s51] sm:%s4]
    %s53 = scalar_lea.vmem [#allocation0], 176
    %54 = vst [vmem:[%s53] sm:%s4] %v52
    %s55 = smul.addr 2, 21
    %s56 = scalar_lea.vmem %s0, %s55
    %v57 = vld [vmem:[%s56] sm:%s4]
    %s58 = scalar_lea.vmem [#allocation0], 168
    %59 = vst [vmem:[%s58] sm:%s4] %v57
    %s60 = smul.addr 2, 20
    %s61 = scalar_lea.vmem %s0, %s60
    %v62 = vld [vmem:[%s61] sm:%s4]
    %s63 = scalar_lea.vmem [#allocation0], 160
    %64 = vst [vmem:[%s63] sm:%s4] %v62
    %s65 = smul.addr 2, 19
    %s66 = scalar_lea.vmem %s0, %s65
    %v67 = vld [vmem:[%s66] sm:%s4]
    %s68 = scalar_lea.vmem [#allocation0], 152
    %69 = vst [vmem:[%s68] sm:%s4] %v67
    %s70 = smul.addr 2, 18
    %s71 = scalar_lea.vmem %s0, %s70
    %v72 = vld [vmem:[%s71] sm:%s4]
    %s73 = scalar_lea.vmem [#allocation0], 144
    %74 = vst [vmem:[%s73] sm:%s4] %v72
    %s75 = smul.addr 2, 17
    %s76 = scalar_lea.vmem %s0, %s75
    %v77 = vld [vmem:[%s76] sm:%s4]
    %s78 = scalar_lea.vmem [#allocation0], 136
    %79 = vst [vmem:[%s78] sm:%s4] %v77
    %s80 = smul.addr 2, 16
    %s81 = scalar_lea.vmem %s0, %s80
    %v82 = vld [vmem:[%s81] sm:%s4]
    %s83 = scalar_lea.vmem [#allocation0], 128
    %84 = vst [vmem:[%s83] sm:%s4] %v82
    %s85 = smul.addr 2, 15
    %s86 = scalar_lea.vmem %s0, %s85
    %v87 = vld [vmem:[%s86] sm:%s4]
    %s88 = scalar_lea.vmem [#allocation0], 120
    %89 = vst [vmem:[%s88] sm:%s4] %v87
    %s90 = smul.addr 2, 14
    %s91 = scalar_lea.vmem %s0, %s90
    %v92 = vld [vmem:[%s91] sm:%s4]
    %s93 = scalar_lea.vmem [#allocation0], 112
    %94 = vst [vmem:[%s93] sm:%s4] %v92
    %s95 = smul.addr 2, 13
    %s96 = scalar_lea.vmem %s0, %s95
    %v97 = vld [vmem:[%s96] sm:%s4]
    %s98 = scalar_lea.vmem [#allocation0], 104
    %99 = vst [vmem:[%s98] sm:%s4] %v97
    %s100 = smul.addr 2, 12
    %s101 = scalar_lea.vmem %s0, %s100
    %v102 = vld [vmem:[%s101] sm:%s4]
    %s103 = scalar_lea.vmem [#allocation0], 96
    %104 = vst [vmem:[%s103] sm:%s4] %v102
    %s105 = smul.addr 2, 11
    %s106 = scalar_lea.vmem %s0, %s105
    %v107 = vld [vmem:[%s106] sm:%s4]
    %s108 = scalar_lea.vmem [#allocation0], 88
    %109 = vst [vmem:[%s108] sm:%s4] %v107
    %s110 = smul.addr 2, 10
    %s111 = scalar_lea.vmem %s0, %s110
    %v112 = vld [vmem:[%s111] sm:%s4]
    %s113 = scalar_lea.vmem [#allocation0], 80
    %114 = vst [vmem:[%s113] sm:%s4] %v112
    %s115 = smul.addr 2, 9
    %s116 = scalar_lea.vmem %s0, %s115
    %v117 = vld [vmem:[%s116] sm:%s4]
    %s118 = scalar_lea.vmem [#allocation0], 72
    %119 = vst [vmem:[%s118] sm:%s4] %v117
    %s120 = smul.addr 2, 8
    %s121 = scalar_lea.vmem %s0, %s120
    %v122 = vld [vmem:[%s121] sm:%s4]
    %s123 = scalar_lea.vmem [#allocation0], 64
    %124 = vst [vmem:[%s123] sm:%s4] %v122
    %s125 = smul.addr 2, 7
    %s126 = scalar_lea.vmem %s0, %s125
    %v127 = vld [vmem:[%s126] sm:%s4]
    %s128 = scalar_lea.vmem [#allocation0], 56
    %129 = vst [vmem:[%s128] sm:%s4] %v127
    %s130 = smul.addr 2, 6
    %s131 = scalar_lea.vmem %s0, %s130
    %v132 = vld [vmem:[%s131] sm:%s4]
    %s133 = scalar_lea.vmem [#allocation0], 48
    %134 = vst [vmem:[%s133] sm:%s4] %v132
    %s135 = smul.addr 2, 5
    %s136 = scalar_lea.vmem %s0, %s135
    %v137 = vld [vmem:[%s136] sm:%s4]
    %s138 = scalar_lea.vmem [#allocation0], 40
    %139 = vst [vmem:[%s138] sm:%s4] %v137
    %s140 = smul.addr 2, 4
    %s141 = scalar_lea.vmem %s0, %s140
    %v142 = vld [vmem:[%s141] sm:%s4]
    %s143 = scalar_lea.vmem [#allocation0], 32
    %144 = vst [vmem:[%s143] sm:%s4] %v142
    %s145 = smul.addr 2, 3
    %s146 = scalar_lea.vmem %s0, %s145
    %v147 = vld [vmem:[%s146] sm:%s4]
    %s148 = scalar_lea.vmem [#allocation0], 24
    %149 = vst [vmem:[%s148] sm:%s4] %v147
    %s150 = smul.addr 2, 2
    %s151 = scalar_lea.vmem %s0, %s150
    %v152 = vld [vmem:[%s151] sm:%s4]
    %s153 = scalar_lea.vmem [#allocation0], 16
    %154 = vst [vmem:[%s153] sm:%s4] %v152
    %s155 = scalar_lea.vmem %s0, 2
    %v156 = vld [vmem:[%s155] sm:%s4]
    %s157 = scalar_lea.vmem [#allocation0], 8
    %158 = vst [vmem:[%s157] sm:%s4] %v156
    %v159 = vld [vmem:[%s0] sm:%s4]
    %160 = vst [vmem:[#allocation0] sm:%s4] %v159
    %v161 = vld [vmem:[#allocation0] ss:$8 sm:$0xf]
    %v162 = vld [vmem:[#allocation0] ss:$8 sm:$0xf0]
    %vm163 = vcmask 1047556
    %v164 = vsel %vm163, %v162, %v161
    %vm165 = vcmask 277504
    %166 = vst.msk [vmem:[%s1] sm:$0xff] %vm165, %v164
    %s167 = scalar_lea.vmem [#allocation0], 64
    %v168 = vld [vmem:[%s167] ss:$8 sm:$0xf]
    %s169 = scalar_lea.vmem [#allocation0], 64
    %v170 = vld [vmem:[%s169] ss:$8 sm:$0xf0]
    %vm171 = vcmask 1047556
    %v172 = vsel %vm171, %v170, %v168
    %vm173 = vcmask 277504
    %s174 = scalar_lea.vmem %s1, 8
    %175 = vst.msk [vmem:[%s174] sm:$0xff] %vm173, %v172
    %s176 = scalar_lea.vmem [#allocation0], 128
    %v177 = vld [vmem:[%s176] ss:$8 sm:$0xf]
    %s178 = scalar_lea.vmem [#allocation0], 128
    %v179 = vld [vmem:[%s178] ss:$8 sm:$0xf0]
    %vm180 = vcmask 1047556
    %v181 = vsel %vm180, %v179, %v177
    %vm182 = vcmask 277504
    %s183 = scalar_lea.vmem %s1, 16
    %184 = vst.msk [vmem:[%s183] sm:$0xff] %vm182, %v181
    %s185 = scalar_lea.vmem [#allocation0], 192
    %v186 = vld [vmem:[%s185] ss:$8 sm:$0xf]
    %s187 = scalar_lea.vmem [#allocation0], 192
    %v188 = vld [vmem:[%s187] ss:$8 sm:$0xf0]
    %vm189 = vcmask 1047556
    %v190 = vsel %vm189, %v188, %v186
    %vm191 = vcmask 277504
    %s192 = scalar_lea.vmem %s1, 24
    %193 = vst.msk [vmem:[%s192] sm:$0xff] %vm191, %v190
    %s194 = scalar_lea.vmem [#allocation0], 1
    %v195 = vld [vmem:[%s194] ss:$8 sm:$0xf]
    %s196 = scalar_lea.vmem [#allocation0], 1
    %v197 = vld [vmem:[%s196] ss:$8 sm:$0xf0]
    %vm198 = vcmask 1047556
    %v199 = vsel %vm198, %v197, %v195
    %200 = vrot.lane.b32.xlu0 %v199, 34
    %v201 = vpop.permute.xlu0 %200
    %vm202 = vcmask 556304
    %203 = vst.msk [vmem:[%s1] sm:$0xff] %vm202, %v201
    %s204 = scalar_lea.vmem [#allocation0], 65
    %v205 = vld [vmem:[%s204] ss:$8 sm:$0xf]
    %s206 = scalar_lea.vmem [#allocation0], 65
    %v207 = vld [vmem:[%s206] ss:$8 sm:$0xf0]
    %vm208 = vcmask 1047556
    %v209 = vsel %vm208, %v207, %v205
    %210 = vrot.lane.b32.xlu0 %v209, 34
    %v211 = vpop.permute.xlu0 %210
    %vm212 = vcmask 556304
    %s213 = scalar_lea.vmem %s1, 8
    %214 = vst.msk [vmem:[%s213] sm:$0xff] %vm212, %v211
    %s215 = scalar_lea.vmem [#allocation0], 129
    %v216 = vld [vmem:[%s215] ss:$8 sm:$0xf]
    %s217 = scalar_lea.vmem [#allocation0], 129
    %v218 = vld [vmem:[%s217] ss:$8 sm:$0xf0]
    %vm219 = vcmask 1047556
    %v220 = vsel %vm219, %v218, %v216
    %221 = vrot.lane.b32.xlu0 %v220, 34
    %v222 = vpop.permute.xlu0 %221
    %vm223 = vcmask 556304
    %s224 = scalar_lea.vmem %s1, 16
    %225 = vst.msk [vmem:[%s224] sm:$0xff] %vm223, %v222
    %s226 = scalar_lea.vmem [#allocation0], 193
    %v227 = vld [vmem:[%s226] ss:$8 sm:$0xf]
    %s228 = scalar_lea.vmem [#allocation0], 193
    %v229 = vld [vmem:[%s228] ss:$8 sm:$0xf0]
    %vm230 = vcmask 1047556
    %v231 = vsel %vm230, %v229, %v227
    %232 = vrot.lane.b32.xlu0 %v231, 34
    %v233 = vpop.permute.xlu0 %232
    %vm234 = vcmask 556304
    %s235 = scalar_lea.vmem %s1, 24
    %236 = vst.msk [vmem:[%s235] sm:$0xff] %vm234, %v233

// kernel: fire_transformer_forward.1
$region0: #{fire_transformer_forward.1}
  #allocation0 [shape = 'u32[]', space=smem, size = 0x4, offset = 0x4, fixed_abs, tag = 'smem constant byte address 0x4 - core index']
  #allocation1 [shape = 'u32[144,128]{1,0:T(1,128)}', space=vmem, size = 0x12000, scoped, tag = 'internal scratch']
  #allocation2 [shape = 'f32[72,32]{1,0:T(8,128)}', space=vmem, size = 0x9000, scoped, tag = 'scratch operand']
  #allocation3 [shape = 'bf16[72,2048]{1,0:T(8,128)(2,1)}', space=vmem, size = 0x48000, scoped, tag = 'scratch operand']
  %s0 = inlined_call_operand.vmem [shape: bf16[72,72], index: 0, kind: input, shape index: {}]
  %s1 = inlined_call_operand.vmem [shape: bf16[72,32], index: 1, kind: input, shape index: {}]
  %s2 = inlined_call_operand.vmem [shape: f32[72,32], index: 2, kind: input, shape index: {}]
  %s3 = inlined_call_operand.vmem [shape: f32[72,72], index: 3, kind: input, shape index: {}]
  %s4 = inlined_call_operand.vmem [shape: f32[2,72], index: 4, kind: input, shape index: {}]
  %s5 = inlined_call_operand.vmem [shape: bf16[2,32,96], index: 5, kind: input, shape index: {}]
  %s6 = inlined_call_operand.vmem [shape: f32[2,1,96], index: 6, kind: input, shape index: {}]
  %s7 = inlined_call_operand.vmem [shape: bf16[2,32,32], index: 7, kind: input, shape index: {}]
  %s8 = inlined_call_operand.vmem [shape: f32[2,1,32], index: 8, kind: input, shape index: {}]
  %s9 = inlined_call_operand.vmem [shape: f32[2,1,32], index: 9, kind: input, shape index: {}]
  %s10 = inlined_call_operand.vmem [shape: f32[2,1,32], index: 10, kind: input, shape index: {}]
  %s11 = inlined_call_operand.vmem [shape: bf16[2,32,2048], index: 11, kind: input, shape index: {}]
  %s12 = inlined_call_operand.vmem [shape: f32[2,1,2048], index: 12, kind: input, shape index: {}]
  %s13 = inlined_call_operand.vmem [shape: bf16[2,2048,32], index: 13, kind: input, shape index: {}]
  %s14 = inlined_call_operand.vmem [shape: f32[2,1,32], index: 14, kind: input, shape index: {}]
  %s15 = inlined_call_operand.vmem [shape: f32[2,1,32], index: 15, kind: input, shape index: {}]
  %s16 = inlined_call_operand.vmem [shape: f32[2,1,32], index: 16, kind: input, shape index: {}]
  %s17 = inlined_call_operand.vmem [shape: bf16[32,128], index: 17, kind: input, shape index: {}]
  %s18 = inlined_call_operand.vmem [shape: f32[1,128], index: 18, kind: input, shape index: {}]
  %s19 = inlined_call_operand.hbm [shape: f32[2,128], index: 19, kind: output, shape index: {}]
  %s20 = sld [smem:[#allocation0]]
  $region117: #{fire_transformer_forward.1} parent=0
    _
  %s22 = ssub.s32 1, %s20
  %s23 = scalar_select 0, %s22, %s20
  $region1: #{fire_transformer_forward.1} parent=0
    #allocation4 [shape = 'u8[1024]{0}', space=vmem, size = 0x400, scoped, tag = 'output window, operand 0, single buffered']
    #allocation5 [shape = 's32[2]{0}', space=sflag, size = 0x8, scoped, tag = 'scoped memory for fire_transformer_forward.1']
    %24 = vsyncpa [#allocation5], 0
    loop: start=0, step=1, limit=4
    $region2: #{fire_transformer_forward.1} parent=1 // loop_pre_header
      _
    $region3: #{fire_transformer_forward.1} parent=1 // loop_header
      %s26 = sphi 0, %s30
      %p27 = scmp.ge.s32.totalorder %s26, 4
      %s34 = sphi 0, %s34
      %s36 = sphi 0, %s34
      %s37 = sphi 0, %s36
      %s51 = sphi 0, %s37
      %s55 = sphi 0, %s55
      %s57 = sphi 0, %s55
      %s58 = sphi 0, %s57
      %s72 = sphi 0, %s58
      %s76 = sphi 0, %s76
      %s78 = sphi 0, %s76
      %s79 = sphi 0, %s78
      %s93 = sphi 0, %s79
      %s97 = sphi 0, %s97
      %s99 = sphi 0, %s97
      %s100 = sphi 0, %s99
      %s114 = sphi 0, %s100
      %s118 = sphi 0, %s118
      %s120 = sphi 0, %s118
      %s121 = sphi 0, %s120
      %s135 = sphi 0, %s121
      %s141 = sphi 0, %s143
      %s144 = sphi 0, %s141
      %s145 = sphi 0, %s144
      %s161 = sphi 0, %s145
      %s167 = sphi 0, %s169
      %s170 = sphi 0, %s167
      %s171 = sphi 0, %s170
      %s187 = sphi 0, %s171
      %s193 = sphi 0, %s195
      %s196 = sphi 0, %s193
      %s197 = sphi 0, %s196
      %s213 = sphi 0, %s197
      %s219 = sphi 0, %s221
      %s222 = sphi 0, %s219
      %s223 = sphi 0, %s222
      %s239 = sphi 0, %s223
      %s245 = sphi 0, %s247
      %s248 = sphi 0, %s245
      %s249 = sphi 0, %s248
      %s265 = sphi 0, %s249
      %s271 = sphi 0, %s273
      %s274 = sphi 0, %s271
      %s275 = sphi 0, %s274
      %s291 = sphi 0, %s275
      %s297 = sphi 0, %s299
      %s300 = sphi 0, %s297
      %s301 = sphi 0, %s300
      %s317 = sphi 0, %s301
      %s323 = sphi 0, %s325
      %s326 = sphi 0, %s323
      %s327 = sphi 0, %s326
      %s343 = sphi 0, %s327
      %s349 = sphi 0, %s351
      %s352 = sphi 0, %s349
      %s353 = sphi 0, %s352
      %s369 = sphi 0, %s353
      %s375 = sphi 0, %s377
      %s378 = sphi 0, %s375
      %s379 = sphi 0, %s378
      %s395 = sphi 0, %s379
      %s401 = sphi 0, %s403
      %s404 = sphi 0, %s401
      %s405 = sphi 0, %s404
      %s421 = sphi 0, %s405
      %s427 = sphi 0, %s429
      %s430 = sphi 0, %s427
      %s431 = sphi 0, %s430
      %s447 = sphi 0, %s431
      %s451 = sphi 0, %s451
      %s453 = sphi 0, %s451
      %s454 = sphi 0, %s453
      %s468 = sphi 0, %s454
      %s472 = sphi 0, %s472
      %s474 = sphi 0, %s472
      %s475 = sphi 0, %s474
      %s489 = sphi 0, %s475
      %s493 = sphi 0, %s493
      %s495 = sphi 0, %s493
      %s496 = sphi 0, %s495
      %s510 = sphi 0, %s496
    $region4: #{fire_transformer_forward.1} parent=1 // loop_header_branch
      %29 = sbr.rel (%p27) target = $region8
    $region5: #{fire_transformer_forward.1} parent=1 // loop_body
      %s31 = ssub.s32 %s26, 1
      %s32 = ssub.s32 %s26, 2
      %s33 = sadd.s32 %s26, 1
      %s35 = sadd.s32 %s34, 1
      %p38 = scmp.eq.s32.totalorder %s26, 1
      %p39 = scmp.ne.s32.totalorder %s34, %s36
      %p40 = scmp.eq.s32.totalorder %s26, 0
      %p41 = por %p39, %p40
      %p42 = scmp.ne.s32.totalorder %s34, %s36
      %p43 = scmp.eq.s32.totalorder %s31, 1
      %p44 = por %p42, %p43
      %p45 = scmp.ne.s32.totalorder %s36, %s37
      %p46 = scmp.eq.s32.totalorder %s31, 0
      %p47 = por %p45, %p46
      %p48 = scmp.ne.s32.totalorder %s36, %s37
      %p49 = scmp.eq.s32.totalorder %s32, 1
      %p50 = por %p48, %p49
      %p52 = scmp.ne.s32.totalorder %s37, %s51
      %p53 = scmp.eq.s32.totalorder %s32, 0
      %p54 = por %p52, %p53
      %s56 = sadd.s32 %s55, 1
      %p59 = scmp.eq.s32.totalorder %s26, 1
      %p60 = scmp.ne.s32.totalorder %s55, %s57
      %p61 = scmp.eq.s32.totalorder %s26, 0
      %p62 = por %p60, %p61
      %p63 = scmp.ne.s32.totalorder %s55, %s57
      %p64 = scmp.eq.s32.totalorder %s31, 1
      %p65 = por %p63, %p64
      %p66 = scmp.ne.s32.totalorder %s57, %s58
      %p67 = scmp.eq.s32.totalorder %s31, 0
      %p68 = por %p66, %p67
      %p69 = scmp.ne.s32.totalorder %s57, %s58
      %p70 = scmp.eq.s32.totalorder %s32, 1
      %p71 = por %p69, %p70
      %p73 = scmp.ne.s32.totalorder %s58, %s72
      %p74 = scmp.eq.s32.totalorder %s32, 0
      %p75 = por %p73, %p74
      %s77 = sadd.s32 %s76, 1
      %p80 = scmp.eq.s32.totalorder %s26, 1
      %p81 = scmp.ne.s32.totalorder %s76, %s78
      %p82 = scmp.eq.s32.totalorder %s26, 0
      %p83 = por %p81, %p82
      %p84 = scmp.ne.s32.totalorder %s76, %s78
      %p85 = scmp.eq.s32.totalorder %s31, 1
      %p86 = por %p84, %p85
      %p87 = scmp.ne.s32.totalorder %s78, %s79
      %p88 = scmp.eq.s32.totalorder %s31, 0
      %p89 = por %p87, %p88
      %p90 = scmp.ne.s32.totalorder %s78, %s79
      %p91 = scmp.eq.s32.totalorder %s32, 1
      %p92 = por %p90, %p91
      %p94 = scmp.ne.s32.totalorder %s79, %s93
      %p95 = scmp.eq.s32.totalorder %s32, 0
      %p96 = por %p94, %p95
      %s98 = sadd.s32 %s97, 1
      %p101 = scmp.eq.s32.totalorder %s26, 1
      %p102 = scmp.ne.s32.totalorder %s97, %s99
      %p103 = scmp.eq.s32.totalorder %s26, 0
      %p104 = por %p102, %p103
      %p105 = scmp.ne.s32.totalorder %s97, %s99
      %p106 = scmp.eq.s32.totalorder %s31, 1
      %p107 = por %p105, %p106
      %p108 = scmp.ne.s32.totalorder %s99, %s100
      %p109 = scmp.eq.s32.totalorder %s31, 0
      %p110 = por %p108, %p109
      %p111 = scmp.ne.s32.totalorder %s99, %s100
      %p112 = scmp.eq.s32.totalorder %s32, 1
      %p113 = por %p111, %p112
      %p115 = scmp.ne.s32.totalorder %s100, %s114
      %p116 = scmp.eq.s32.totalorder %s32, 0
      %p117 = por %p115, %p116
      %s119 = sadd.s32 %s118, 1
      %p122 = scmp.eq.s32.totalorder %s26, 1
      %p123 = scmp.ne.s32.totalorder %s118, %s120
      %p124 = scmp.eq.s32.totalorder %s26, 0
      %p125 = por %p123, %p124
      %p126 = scmp.ne.s32.totalorder %s118, %s120
      %p127 = scmp.eq.s32.totalorder %s31, 1
      %p128 = por %p126, %p127
      %p129 = scmp.ne.s32.totalorder %s120, %s121
      %p130 = scmp.eq.s32.totalorder %s31, 0
      %p131 = por %p129, %p130
      %p132 = scmp.ne.s32.totalorder %s120, %s121
      %p133 = scmp.eq.s32.totalorder %s32, 1
      %p134 = por %p132, %p133
      %p136 = scmp.ne.s32.totalorder %s121, %s135
      %p137 = scmp.eq.s32.totalorder %s32, 0
      %p138 = por %p136, %p137
      %s139 = ssub.s32 %s26, %s33
      %p140 = scmp.eq.s32.totalorder %s139, 0
      %s142 = sadd.s32 %s141, 1
      %s143 = scalar_select %p140, %s141, %s142
      %p146 = pneg %p140
      %p147 = scmp.eq.s32.totalorder %s26, 1
      %p148 = por %p146, %p147
      %p149 = scmp.ne.s32.totalorder %s141, %s144
      %p150 = scmp.eq.s32.totalorder %s26, 0
      %p151 = por %p149, %p150
      %p152 = scmp.ne.s32.totalorder %s141, %s144
      %p153 = scmp.eq.s32.totalorder %s31, 1
      %p154 = por %p152, %p153
      %p155 = scmp.ne.s32.totalorder %s144, %s145
      %p156 = scmp.eq.s32.totalorder %s31, 0
      %p157 = por %p155, %p156
      %p158 = scmp.ne.s32.totalorder %s144, %s145
      %p159 = scmp.eq.s32.totalorder %s32, 1
      %p160 = por %p158, %p159
      %p162 = scmp.ne.s32.totalorder %s145, %s161
      %p163 = scmp.eq.s32.totalorder %s32, 0
      %p164 = por %p162, %p163
      %s165 = ssub.s32 %s26, %s33
      %p166 = scmp.eq.s32.totalorder %s165, 0
      %s168 = sadd.s32 %s167, 1
      %s169 = scalar_select %p166, %s167, %s168
      %p172 = pneg %p166
      %p173 = scmp.eq.s32.totalorder %s26, 1
      %p174 = por %p172, %p173
      %p175 = scmp.ne.s32.totalorder %s167, %s170
      %p176 = scmp.eq.s32.totalorder %s26, 0
      %p177 = por %p175, %p176
      %p178 = scmp.ne.s32.totalorder %s167, %s170
      %p179 = scmp.eq.s32.totalorder %s31, 1
      %p180 = por %p178, %p179
      %p181 = scmp.ne.s32.totalorder %s170, %s171
      %p182 = scmp.eq.s32.totalorder %s31, 0
      %p183 = por %p181, %p182
      %p184 = scmp.ne.s32.totalorder %s170, %s171
      %p185 = scmp.eq.s32.totalorder %s32, 1
      %p186 = por %p184, %p185
      %p188 = scmp.ne.s32.totalorder %s171, %s187
      %p189 = scmp.eq.s32.totalorder %s32, 0
      %p190 = por %p188, %p189
      %s191 = ssub.s32 %s26, %s33
      %p192 = scmp.eq.s32.totalorder %s191, 0
      %s194 = sadd.s32 %s193, 1
      %s195 = scalar_select %p192, %s193, %s194
      %p198 = pneg %p192
      %p199 = scmp.eq.s32.totalorder %s26, 1
      %p200 = por %p198, %p199
      %p201 = scmp.ne.s32.totalorder %s193, %s196
      %p202 = scmp.eq.s32.totalorder %s26, 0
      %p203 = por %p201, %p202
      %p204 = scmp.ne.s32.totalorder %s193, %s196
      %p205 = scmp.eq.s32.totalorder %s31, 1
      %p206 = por %p204, %p205
      %p207 = scmp.ne.s32.totalorder %s196, %s197
      %p208 = scmp.eq.s32.totalorder %s31, 0
      %p209 = por %p207, %p208
      %p210 = scmp.ne.s32.totalorder %s196, %s197
      %p211 = scmp.eq.s32.totalorder %s32, 1
      %p212 = por %p210, %p211
      %p214 = scmp.ne.s32.totalorder %s197, %s213
      %p215 = scmp.eq.s32.totalorder %s32, 0
      %p216 = por %p214, %p215
      %s217 = ssub.s32 %s26, %s33
      %p218 = scmp.eq.s32.totalorder %s217, 0
      %s220 = sadd.s32 %s219, 1
      %s221 = scalar_select %p218, %s219, %s220
      %p224 = pneg %p218
      %p225 = scmp.eq.s32.totalorder %s26, 1
      %p226 = por %p224, %p225
      %p227 = scmp.ne.s32.totalorder %s219, %s222
      %p228 = scmp.eq.s32.totalorder %s26, 0
      %p229 = por %p227, %p228
      %p230 = scmp.ne.s32.totalorder %s219, %s222
      %p231 = scmp.eq.s32.totalorder %s31, 1
      %p232 = por %p230, %p231
      %p233 = scmp.ne.s32.totalorder %s222, %s223
      %p234 = scmp.eq.s32.totalorder %s31, 0
      %p235 = por %p233, %p234
      %p236 = scmp.ne.s32.totalorder %s222, %s223
      %p237 = scmp.eq.s32.totalorder %s32, 1
      %p238 = por %p236, %p237
      %p240 = scmp.ne.s32.totalorder %s223, %s239
      %p241 = scmp.eq.s32.totalorder %s32, 0
      %p242 = por %p240, %p241
      %s243 = ssub.s32 %s26, %s33
      %p244 = scmp.eq.s32.totalorder %s243, 0
      %s246 = sadd.s32 %s245, 1
      %s247 = scalar_select %p244, %s245, %s246
      %p250 = pneg %p244
      %p251 = scmp.eq.s32.totalorder %s26, 1
      %p252 = por %p250, %p251
      %p253 = scmp.ne.s32.totalorder %s245, %s248
      %p254 = scmp.eq.s32.totalorder %s26, 0
      %p255 = por %p253, %p254
      %p256 = scmp.ne.s32.totalorder %s245, %s248
      %p257 = scmp.eq.s32.totalorder %s31, 1
      %p258 = por %p256, %p257
      %p259 = scmp.ne.s32.totalorder %s248, %s249
      %p260 = scmp.eq.s32.totalorder %s31, 0
      %p261 = por %p259, %p260
      %p262 = scmp.ne.s32.totalorder %s248, %s249
      %p263 = scmp.eq.s32.totalorder %s32, 1
      %p264 = por %p262, %p263
      %p266 = scmp.ne.s32.totalorder %s249, %s265
      %p267 = scmp.eq.s32.totalorder %s32, 0
      %p268 = por %p266, %p267
      %s269 = ssub.s32 %s26, %s33
      %p270 = scmp.eq.s32.totalorder %s269, 0
      %s272 = sadd.s32 %s271, 1
      %s273 = scalar_select %p270, %s271, %s272
      %p276 = pneg %p270
      %p277 = scmp.eq.s32.totalorder %s26, 1
      %p278 = por %p276, %p277
      %p279 = scmp.ne.s32.totalorder %s271, %s274
      %p280 = scmp.eq.s32.totalorder %s26, 0
      %p281 = por %p279, %p280
      %p282 = scmp.ne.s32.totalorder %s271, %s274
      %p283 = scmp.eq.s32.totalorder %s31, 1
      %p284 = por %p282, %p283
      %p285 = scmp.ne.s32.totalorder %s274, %s275
      %p286 = scmp.eq.s32.totalorder %s31, 0
      %p287 = por %p285, %p286
      %p288 = scmp.ne.s32.totalorder %s274, %s275
      %p289 = scmp.eq.s32.totalorder %s32, 1
      %p290 = por %p288, %p289
      %p292 = scmp.ne.s32.totalorder %s275, %s291
      %p293 = scmp.eq.s32.totalorder %s32, 0
      %p294 = por %p292, %p293
      %s295 = ssub.s32 %s26, %s33
      %p296 = scmp.eq.s32.totalorder %s295, 0
      %s298 = sadd.s32 %s297, 1
      %s299 = scalar_select %p296, %s297, %s298
      %p302 = pneg %p296
      %p303 = scmp.eq.s32.totalorder %s26, 1
      %p304 = por %p302, %p303
      %p305 = scmp.ne.s32.totalorder %s297, %s300
      %p306 = scmp.eq.s32.totalorder %s26, 0
      %p307 = por %p305, %p306
      %p308 = scmp.ne.s32.totalorder %s297, %s300
      %p309 = scmp.eq.s32.totalorder %s31, 1
      %p310 = por %p308, %p309
      %p311 = scmp.ne.s32.totalorder %s300, %s301
      %p312 = scmp.eq.s32.totalorder %s31, 0
      %p313 = por %p311, %p312
      %p314 = scmp.ne.s32.totalorder %s300, %s301
      %p315 = scmp.eq.s32.totalorder %s32, 1
      %p316 = por %p314, %p315
      %p318 = scmp.ne.s32.totalorder %s301, %s317
      %p319 = scmp.eq.s32.totalorder %s32, 0
      %p320 = por %p318, %p319
      %s321 = ssub.s32 %s26, %s33
      %p322 = scmp.eq.s32.totalorder %s321, 0
      %s324 = sadd.s32 %s323, 1
      %s325 = scalar_select %p322, %s323, %s324
      %p328 = pneg %p322
      %p329 = scmp.eq.s32.totalorder %s26, 1
      %p330 = por %p328, %p329
      %p331 = scmp.ne.s32.totalorder %s323, %s326
      %p332 = scmp.eq.s32.totalorder %s26, 0
      %p333 = por %p331, %p332
      %p334 = scmp.ne.s32.totalorder %s323, %s326
      %p335 = scmp.eq.s32.totalorder %s31, 1
      %p336 = por %p334, %p335
      %p337 = scmp.ne.s32.totalorder %s326, %s327
      %p338 = scmp.eq.s32.totalorder %s31, 0
      %p339 = por %p337, %p338
      %p340 = scmp.ne.s32.totalorder %s326, %s327
      %p341 = scmp.eq.s32.totalorder %s32, 1
      %p342 = por %p340, %p341
      %p344 = scmp.ne.s32.totalorder %s327, %s343
      %p345 = scmp.eq.s32.totalorder %s32, 0
      %p346 = por %p344, %p345
      %s347 = ssub.s32 %s26, %s33
      %p348 = scmp.eq.s32.totalorder %s347, 0
      %s350 = sadd.s32 %s349, 1
      %s351 = scalar_select %p348, %s349, %s350
      %p354 = pneg %p348
      %p355 = scmp.eq.s32.totalorder %s26, 1
      %p356 = por %p354, %p355
      %p357 = scmp.ne.s32.totalorder %s349, %s352
      %p358 = scmp.eq.s32.totalorder %s26, 0
      %p359 = por %p357, %p358
      %p360 = scmp.ne.s32.totalorder %s349, %s352
      %p361 = scmp.eq.s32.totalorder %s31, 1
      %p362 = por %p360, %p361
      %p363 = scmp.ne.s32.totalorder %s352, %s353
      %p364 = scmp.eq.s32.totalorder %s31, 0
      %p365 = por %p363, %p364
      %p366 = scmp.ne.s32.totalorder %s352, %s353
      %p367 = scmp.eq.s32.totalorder %s32, 1
      %p368 = por %p366, %p367
      %p370 = scmp.ne.s32.totalorder %s353, %s369
      %p371 = scmp.eq.s32.totalorder %s32, 0
      %p372 = por %p370, %p371
      %s373 = ssub.s32 %s26, %s33
      %p374 = scmp.eq.s32.totalorder %s373, 0
      %s376 = sadd.s32 %s375, 1
      %s377 = scalar_select %p374, %s375, %s376
      %p380 = pneg %p374
      %p381 = scmp.eq.s32.totalorder %s26, 1
      %p382 = por %p380, %p381
      %p383 = scmp.ne.s32.totalorder %s375, %s378
      %p384 = scmp.eq.s32.totalorder %s26, 0
      %p385 = por %p383, %p384
      %p386 = scmp.ne.s32.totalorder %s375, %s378
      %p387 = scmp.eq.s32.totalorder %s31, 1
      %p388 = por %p386, %p387
      %p389 = scmp.ne.s32.totalorder %s378, %s379
      %p390 = scmp.eq.s32.totalorder %s31, 0
      %p391 = por %p389, %p390
      %p392 = scmp.ne.s32.totalorder %s378, %s379
      %p393 = scmp.eq.s32.totalorder %s32, 1
      %p394 = por %p392, %p393
      %p396 = scmp.ne.s32.totalorder %s379, %s395
      %p397 = scmp.eq.s32.totalorder %s32, 0
      %p398 = por %p396, %p397
      %s399 = ssub.s32 %s26, %s33
      %p400 = scmp.eq.s32.totalorder %s399, 0
      %s402 = sadd.s32 %s401, 1
      %s403 = scalar_select %p400, %s401, %s402
      %p406 = pneg %p400
      %p407 = scmp.eq.s32.totalorder %s26, 1
      %p408 = por %p406, %p407
      %p409 = scmp.ne.s32.totalorder %s401, %s404
      %p410 = scmp.eq.s32.totalorder %s26, 0
      %p411 = por %p409, %p410
      %p412 = scmp.ne.s32.totalorder %s401, %s404
      %p413 = scmp.eq.s32.totalorder %s31, 1
      %p414 = por %p412, %p413
      %p415 = scmp.ne.s32.totalorder %s404, %s405
      %p416 = scmp.eq.s32.totalorder %s31, 0
      %p417 = por %p415, %p416
      %p418 = scmp.ne.s32.totalorder %s404, %s405
      %p419 = scmp.eq.s32.totalorder %s32, 1
      %p420 = por %p418, %p419
      %p422 = scmp.ne.s32.totalorder %s405, %s421
      %p423 = scmp.eq.s32.totalorder %s32, 0
      %p424 = por %p422, %p423
      %s425 = ssub.s32 %s26, %s33
      %p426 = scmp.eq.s32.totalorder %s425, 0
      %s428 = sadd.s32 %s427, 1
      %s429 = scalar_select %p426, %s427, %s428
      %p432 = pneg %p426
      %p433 = scmp.eq.s32.totalorder %s26, 1
      %p434 = por %p432, %p433
      %p435 = scmp.ne.s32.totalorder %s427, %s430
      %p436 = scmp.eq.s32.totalorder %s26, 0
      %p437 = por %p435, %p436
      %p438 = scmp.ne.s32.totalorder %s427, %s430
      %p439 = scmp.eq.s32.totalorder %s31, 1
      %p440 = por %p438, %p439
      %p441 = scmp.ne.s32.totalorder %s430, %s431
      %p442 = scmp.eq.s32.totalorder %s31, 0
      %p443 = por %p441, %p442
      %p444 = scmp.ne.s32.totalorder %s430, %s431
      %p445 = scmp.eq.s32.totalorder %s32, 1
      %p446 = por %p444, %p445
      %p448 = scmp.ne.s32.totalorder %s431, %s447
      %p449 = scmp.eq.s32.totalorder %s32, 0
      %p450 = por %p448, %p449
      %s452 = sadd.s32 %s451, 1
      %p455 = scmp.eq.s32.totalorder %s26, 1
      %p456 = scmp.ne.s32.totalorder %s451, %s453
      %p457 = scmp.eq.s32.totalorder %s26, 0
      %p458 = por %p456, %p457
      %p459 = scmp.ne.s32.totalorder %s451, %s453
      %p460 = scmp.eq.s32.totalorder %s31, 1
      %p461 = por %p459, %p460
      %p462 = scmp.ne.s32.totalorder %s453, %s454
      %p463 = scmp.eq.s32.totalorder %s31, 0
      %p464 = por %p462, %p463
      %p465 = scmp.ne.s32.totalorder %s453, %s454
      %p466 = scmp.eq.s32.totalorder %s32, 1
      %p467 = por %p465, %p466
      %p469 = scmp.ne.s32.totalorder %s454, %s468
      %p470 = scmp.eq.s32.totalorder %s32, 0
      %p471 = por %p469, %p470
      %s473 = sadd.s32 %s472, 1
      %p476 = scmp.eq.s32.totalorder %s26, 1
      %p477 = scmp.ne.s32.totalorder %s472, %s474
      %p478 = scmp.eq.s32.totalorder %s26, 0
      %p479 = por %p477, %p478
      %p480 = scmp.ne.s32.totalorder %s472, %s474
      %p481 = scmp.eq.s32.totalorder %s31, 1
      %p482 = por %p480, %p481
      %p483 = scmp.ne.s32.totalorder %s474, %s475
      %p484 = scmp.eq.s32.totalorder %s31, 0
      %p485 = por %p483, %p484
      %p486 = scmp.ne.s32.totalorder %s474, %s475
      %p487 = scmp.eq.s32.totalorder %s32, 1
      %p488 = por %p486, %p487
      %p490 = scmp.ne.s32.totalorder %s475, %s489
      %p491 = scmp.eq.s32.totalorder %s32, 0
      %p492 = por %p490, %p491
      %s494 = sadd.s32 %s493, 1
      %p497 = scmp.eq.s32.totalorder %s26, 1
      %p498 = scmp.ne.s32.totalorder %s493, %s495
      %p499 = scmp.eq.s32.totalorder %s26, 0
      %p500 = por %p498, %p499
      %p501 = scmp.ne.s32.totalorder %s493, %s495
      %p502 = scmp.eq.s32.totalorder %s31, 1
      %p503 = por %p501, %p502
      %p504 = scmp.ne.s32.totalorder %s495, %s496
      %p505 = scmp.eq.s32.totalorder %s31, 0
      %p506 = por %p504, %p505
      %p507 = scmp.ne.s32.totalorder %s495, %s496
      %p508 = scmp.eq.s32.totalorder %s32, 1
      %p509 = por %p507, %p508
      %p511 = scmp.ne.s32.totalorder %s496, %s510
      %p512 = scmp.eq.s32.totalorder %s32, 0
      %p513 = por %p511, %p512
      %p514 = scmp.le.s32.totalorder 1, %s26
      %p515 = scmp.lt.s32.totalorder %s26, 3
      %p516 = pnand %p514, %p515
      %p517 = pneg %p516
      // Predicated region
      $region9: #{fire_transformer_forward.1} parent=5 // pred_check
        _
      $region10: #{fire_transformer_forward.1} parent=5 // pred_check_branch
        %519 = sbr.rel (%p516) target = $region12
      $region11: #{fire_transformer_forward.1} parent=5 // pred_region
        %s520 = ssub.s32 %s26, 1
        // Predicated region
        $region13: #{fire_transformer_forward.1} parent=11 // pred_check
          %p521 = pneg %p47
        $region14: #{fire_transformer_forward.1} parent=11 // pred_check_branch
          %523 = sbr.rel (%p521) target = $region16
        $region15: #{fire_transformer_forward.1} parent=11 // pred_region
          _
        $region16: #{fire_transformer_forward.1} parent=11 // pred_fallthru
          _
        // Predicated region
        $region17: #{fire_transformer_forward.1} parent=11 // pred_check
          %p524 = pneg %p68
        $region18: #{fire_transformer_forward.1} parent=11 // pred_check_branch
          %526 = sbr.rel (%p524) target = $region20
        $region19: #{fire_transformer_forward.1} parent=11 // pred_region
          _
        $region20: #{fire_transformer_forward.1} parent=11 // pred_fallthru
          _
        // Predicated region
        $region21: #{fire_transformer_forward.1} parent=11 // pred_check
          %p527 = pneg %p89
        $region22: #{fire_transformer_forward.1} parent=11 // pred_check_branch
          %529 = sbr.rel (%p527) target = $region24
        $region23: #{fire_transformer_forward.1} parent=11 // pred_region
          _
        $region24: #{fire_transformer_forward.1} parent=11 // pred_fallthru
          _
        // Predicated region
        $region25: #{fire_transformer_forward.1} parent=11 // pred_check
          %p530 = pneg %p110
        $region26: #{fire_transformer_forward.1} parent=11 // pred_check_branch
          %532 = sbr.rel (%p530) target = $region28
        $region27: #{fire_transformer_forward.1} parent=11 // pred_region
          _
        $region28: #{fire_transformer_forward.1} parent=11 // pred_fallthru
          _
        // Predicated region
        $region29: #{fire_transformer_forward.1} parent=11 // pred_check
          %p533 = pneg %p131
        $region30: #{fire_transformer_forward.1} parent=11 // pred_check_branch
          %535 = sbr.rel (%p533) target = $region32
        $region31: #{fire_transformer_forward.1} parent=11 // pred_region
          _
        $region32: #{fire_transformer_forward.1} parent=11 // pred_fallthru
          _
        // Predicated region
        $region33: #{fire_transformer_forward.1} parent=11 // pred_check
          %p536 = pneg %p464
        $region34: #{fire_transformer_forward.1} parent=11 // pred_check_branch
          %538 = sbr.rel (%p536) target = $region36
        $region35: #{fire_transformer_forward.1} parent=11 // pred_region
          _
        $region36: #{fire_transformer_forward.1} parent=11 // pred_fallthru
          _
        // Predicated region
        $region37: #{fire_transformer_forward.1} parent=11 // pred_check
          %p539 = pneg %p485
        $region38: #{fire_transformer_forward.1} parent=11 // pred_check_branch
          %541 = sbr.rel (%p539) target = $region40
        $region39: #{fire_transformer_forward.1} parent=11 // pred_region
          _
        $region40: #{fire_transformer_forward.1} parent=11 // pred_fallthru
          _
      $region12: #{fire_transformer_forward.1} parent=5 // pred_fallthru
        _
      %p542 = scmp.lt.s32.totalorder %s26, 2
      // Predicated region
      $region41: #{fire_transformer_forward.1} parent=5 // pred_check
        %p543 = pneg %p542
      $region42: #{fire_transformer_forward.1} parent=5 // pred_check_branch
        %545 = sbr.rel (%p543) target = $region44
      $region43: #{fire_transformer_forward.1} parent=5 // pred_region
        // Predicated region
        $region45: #{fire_transformer_forward.1} parent=43 // pred_check
          %p546 = pneg %p151
        $region46: #{fire_transformer_forward.1} parent=43 // pred_check_branch
          %548 = sbr.rel (%p546) target = $region48
        $region47: #{fire_transformer_forward.1} parent=43 // pred_region
          %p549 = scmp.lt.s32.totalorder %s26, 1
          %s550 = scalar_select %p549, %s26, 1
          %s551 = smul.addr %s550, 4
          %s552 = smul.addr %s551, 4
          %s553 = scalar_lea.vmem %s5, %s552
        $region48: #{fire_transformer_forward.1} parent=43 // pred_fallthru
          _
        // Predicated region
        $region49: #{fire_transformer_forward.1} parent=43 // pred_check
          %p554 = pneg %p177
        $region50: #{fire_transformer_forward.1} parent=43 // pred_check_branch
          %556 = sbr.rel (%p554) target = $region52
        $region51: #{fire_transformer_forward.1} parent=43 // pred_region
          %p557 = scmp.lt.s32.totalorder %s26, 1
          %s558 = scalar_select %p557, %s26, 1
          %s559 = scalar_lea.vmem %s6, %s558
        $region52: #{fire_transformer_forward.1} parent=43 // pred_fallthru
          _
        // Predicated region
        $region53: #{fire_transformer_forward.1} parent=43 // pred_check
          %p560 = pneg %p203
        $region54: #{fire_transformer_forward.1} parent=43 // pred_check_branch
          %562 = sbr.rel (%p560) target = $region56
        $region55: #{fire_transformer_forward.1} parent=43 // pred_region
          %p563 = scmp.lt.s32.totalorder %s26, 1
          %s564 = scalar_select %p563, %s26, 1
          %s565 = smul.addr %s564, 4
          %s566 = smul.addr %s565, 4
          %s567 = scalar_lea.vmem %s7, %s566
        $region56: #{fire_transformer_forward.1} parent=43 // pred_fallthru
          _
        // Predicated region
        $region57: #{fire_transformer_forward.1} parent=43 // pred_check
          %p568 = pneg %p229
        $region58: #{fire_transformer_forward.1} parent=43 // pred_check_branch
          %570 = sbr.rel (%p568) target = $region60
        $region59: #{fire_transformer_forward.1} parent=43 // pred_region
          %p571 = scmp.lt.s32.totalorder %s26, 1
          %s572 = scalar_select %p571, %s26, 1
          %s573 = scalar_lea.vmem %s8, %s572
        $region60: #{fire_transformer_forward.1} parent=43 // pred_fallthru
          _
        // Predicated region
        $region61: #{fire_transformer_forward.1} parent=43 // pred_check
          %p574 = pneg %p255
        $region62: #{fire_transformer_forward.1} parent=43 // pred_check_branch
          %576 = sbr.rel (%p574) target = $region64
        $region63: #{fire_transformer_forward.1} parent=43 // pred_region
          %p577 = scmp.lt.s32.totalorder %s26, 1
          %s578 = scalar_select %p577, %s26, 1
          %s579 = scalar_lea.vmem %s9, %s578
        $region64: #{fire_transformer_forward.1} parent=43 // pred_fallthru
          _
        // Predicated region
        $region65: #{fire_transformer_forward.1} parent=43 // pred_check
          %p580 = pneg %p281
        $region66: #{fire_transformer_forward.1} parent=43 // pred_check_branch
          %582 = sbr.rel (%p580) target = $region68
        $region67: #{fire_transformer_forward.1} parent=43 // pred_region
          %p583 = scmp.lt.s32.totalorder %s26, 1
          %s584 = scalar_select %p583, %s26, 1
          %s585 = scalar_lea.vmem %s10, %s584
        $region68: #{fire_transformer_forward.1} parent=43 // pred_fallthru
          _
        // Predicated region
        $region69: #{fire_transformer_forward.1} parent=43 // pred_check
          %p586 = pneg %p307
        $region70: #{fire_transformer_forward.1} parent=43 // pred_check_branch
          %588 = sbr.rel (%p586) target = $region72
        $region71: #{fire_transformer_forward.1} parent=43 // pred_region
          %p589 = scmp.lt.s32.totalorder %s26, 1
          %s590 = scalar_select %p589, %s26, 1
          %s591 = smul.addr %s590, 64
          %s592 = smul.addr %s591, 4
          %s593 = scalar_lea.vmem %s11, %s592
        $region72: #{fire_transformer_forward.1} parent=43 // pred_fallthru
          _
        // Predicated region
        $region73: #{fire_transformer_forward.1} parent=43 // pred_check
          %p594 = pneg %p333
        $region74: #{fire_transformer_forward.1} parent=43 // pred_check_branch
          %596 = sbr.rel (%p594) target = $region76
        $region75: #{fire_transformer_forward.1} parent=43 // pred_region
          %p597 = scmp.lt.s32.totalorder %s26, 1
          %s598 = scalar_select %p597, %s26, 1
          %s599 = smul.addr %s598, 16
          %s600 = scalar_lea.vmem %s12, %s599
        $region76: #{fire_transformer_forward.1} parent=43 // pred_fallthru
          _
        // Predicated region
        $region77: #{fire_transformer_forward.1} parent=43 // pred_check
          %p601 = pneg %p359
        $region78: #{fire_transformer_forward.1} parent=43 // pred_check_branch
          %603 = sbr.rel (%p601) target = $region80
        $region79: #{fire_transformer_forward.1} parent=43 // pred_region
          %p604 = scmp.lt.s32.totalorder %s26, 1
          %s605 = scalar_select %p604, %s26, 1
          %s606 = smul.addr %s605, 256
          %s607 = smul.addr %s606, 4
          %s608 = scalar_lea.vmem %s13, %s607
        $region80: #{fire_transformer_forward.1} parent=43 // pred_fallthru
          _
        // Predicated region
        $region81: #{fire_transformer_forward.1} parent=43 // pred_check
          %p609 = pneg %p385
        $region82: #{fire_transformer_forward.1} parent=43 // pred_check_branch
          %611 = sbr.rel (%p609) target = $region84
        $region83: #{fire_transformer_forward.1} parent=43 // pred_region
          %p612 = scmp.lt.s32.totalorder %s26, 1
          %s613 = scalar_select %p612, %s26, 1
          %s614 = scalar_lea.vmem %s14, %s613
        $region84: #{fire_transformer_forward.1} parent=43 // pred_fallthru
          _
        // Predicated region
        $region85: #{fire_transformer_forward.1} parent=43 // pred_check
          %p615 = pneg %p411
        $region86: #{fire_transformer_forward.1} parent=43 // pred_check_branch
          %617 = sbr.rel (%p615) target = $region88
        $region87: #{fire_transformer_forward.1} parent=43 // pred_region
          %p618 = scmp.lt.s32.totalorder %s26, 1
          %s619 = scalar_select %p618, %s26, 1
          %s620 = scalar_lea.vmem %s15, %s619
        $region88: #{fire_transformer_forward.1} parent=43 // pred_fallthru
          _
        // Predicated region
        $region89: #{fire_transformer_forward.1} parent=43 // pred_check
          %p621 = pneg %p437
        $region90: #{fire_transformer_forward.1} parent=43 // pred_check_branch
          %623 = sbr.rel (%p621) target = $region92
        $region91: #{fire_transformer_forward.1} parent=43 // pred_region
          %p624 = scmp.lt.s32.totalorder %s26, 1
          %s625 = scalar_select %p624, %s26, 1
          %s626 = scalar_lea.vmem %s16, %s625
        $region92: #{fire_transformer_forward.1} parent=43 // pred_fallthru
          _
      $region44: #{fire_transformer_forward.1} parent=5 // pred_fallthru
        _
      %p627 = scmp.le.s32.totalorder 1, %s26
      %p628 = scmp.lt.s32.totalorder %s26, 3
      %p629 = pnand %p627, %p628
      %p630 = pneg %p629
      // Predicated region
      $region93: #{fire_transformer_forward.1} parent=5 // pred_check
        _
      $region94: #{fire_transformer_forward.1} parent=5 // pred_check_branch
        %632 = sbr.rel (%p629) target = $region96
      $region95: #{fire_transformer_forward.1} parent=5 // pred_region
        %s633 = ssub.s32 %s26, 1
        %p634 = pneg %p47
        %p635 = pneg %p44
        %p636 = pneg %p68
        %p637 = pneg %p65
        %p638 = pneg %p89
        %p639 = pneg %p86
        %p640 = pneg %p110
        %p641 = pneg %p107
        %p642 = pneg %p131
        %p643 = pneg %p128
        %p644 = scmp.lt.s32.totalorder %s31, 1
        %s645 = scalar_select %p644, %s31, 1
        %s646 = smul.addr %s645, 4
        %s647 = smul.addr %s646, 4
        %s648 = scalar_lea.vmem %s5, %s647
        %p649 = pneg %p157
        %p650 = pneg %p154
        %p651 = scmp.lt.s32.totalorder %s31, 1
        %s652 = scalar_select %p651, %s31, 1
        %s653 = scalar_lea.vmem %s6, %s652
        %p654 = pneg %p183
        %p655 = pneg %p180
        %p656 = scmp.lt.s32.totalorder %s31, 1
        %s657 = scalar_select %p656, %s31, 1
        %s658 = smul.addr %s657, 4
        %s659 = smul.addr %s658, 4
        %s660 = scalar_lea.vmem %s7, %s659
        %p661 = pneg %p209
        %p662 = pneg %p206
        %p663 = scmp.lt.s32.totalorder %s31, 1
        %s664 = scalar_select %p663, %s31, 1
        %s665 = scalar_lea.vmem %s8, %s664
        %p666 = pneg %p235
        %p667 = pneg %p232
        %p668 = scmp.lt.s32.totalorder %s31, 1
        %s669 = scalar_select %p668, %s31, 1
        %s670 = scalar_lea.vmem %s9, %s669
        %p671 = pneg %p261
        %p672 = pneg %p258
        %p673 = scmp.lt.s32.totalorder %s31, 1
        %s674 = scalar_select %p673, %s31, 1
        %s675 = scalar_lea.vmem %s10, %s674
        %p676 = pneg %p287
        %p677 = pneg %p284
        %p678 = scmp.lt.s32.totalorder %s31, 1
        %s679 = scalar_select %p678, %s31, 1
        %s680 = smul.addr %s679, 64
        %s681 = smul.addr %s680, 4
        %s682 = scalar_lea.vmem %s11, %s681
        %p683 = pneg %p313
        %p684 = pneg %p310
        %p685 = scmp.lt.s32.totalorder %s31, 1
        %s686 = scalar_select %p685, %s31, 1
        %s687 = smul.addr %s686, 16
        %s688 = scalar_lea.vmem %s12, %s687
        %p689 = pneg %p339
        %p690 = pneg %p336
        %p691 = scmp.lt.s32.totalorder %s31, 1
        %s692 = scalar_select %p691, %s31, 1
        %s693 = smul.addr %s692, 256
        %s694 = smul.addr %s693, 4
        %s695 = scalar_lea.vmem %s13, %s694
        %p696 = pneg %p365
        %p697 = pneg %p362
        %p698 = scmp.lt.s32.totalorder %s31, 1
        %s699 = scalar_select %p698, %s31, 1
        %s700 = scalar_lea.vmem %s14, %s699
        %p701 = pneg %p391
        %p702 = pneg %p388
        %p703 = scmp.lt.s32.totalorder %s31, 1
        %s704 = scalar_select %p703, %s31, 1
        %s705 = scalar_lea.vmem %s15, %s704
        %p706 = pneg %p417
        %p707 = pneg %p414
        %p708 = scmp.lt.s32.totalorder %s31, 1
        %s709 = scalar_select %p708, %s31, 1
        %s710 = scalar_lea.vmem %s16, %s709
        %p711 = pneg %p443
        %p712 = pneg %p440
        %p713 = pneg %p464
        %p714 = pneg %p461
        %p715 = pneg %p485
        %p716 = pneg %p482
        %p717 = pneg %p506
        %p718 = pneg %p503
        %p719 = scmp.lt.s32.totalorder %s31, 1
        %s720 = scalar_select %p719, %s31, 1
        %s721 = smul.addr %s720, 4
        %s722 = smul.addr %s721, 4
        %s723 = scalar_lea.vmem %s5, %s722
        %p724 = scmp.lt.s32.totalorder %s31, 1
        %s725 = scalar_select %p724, %s31, 1
        %s726 = scalar_lea.vmem %s6, %s725
        %p727 = scmp.lt.s32.totalorder %s31, 1
        %s728 = scalar_select %p727, %s31, 1
        %s729 = smul.addr %s728, 4
        %s730 = smul.addr %s729, 4
        %s731 = scalar_lea.vmem %s7, %s730
        %p732 = scmp.lt.s32.totalorder %s31, 1
        %s733 = scalar_select %p732, %s31, 1
        %s734 = scalar_lea.vmem %s8, %s733
        %p735 = scmp.lt.s32.totalorder %s31, 1
        %s736 = scalar_select %p735, %s31, 1
        %s737 = scalar_lea.vmem %s9, %s736
        %p738 = scmp.lt.s32.totalorder %s31, 1
        %s739 = scalar_select %p738, %s31, 1
        %s740 = scalar_lea.vmem %s10, %s739
        %p741 = scmp.lt.s32.totalorder %s31, 1
        %s742 = scalar_select %p741, %s31, 1
        %s743 = smul.addr %s742, 64
        %s744 = smul.addr %s743, 4
        %s745 = scalar_lea.vmem %s11, %s744
        %p746 = scmp.lt.s32.totalorder %s31, 1
        %s747 = scalar_select %p746, %s31, 1
        %s748 = smul.addr %s747, 16
        %s749 = scalar_lea.vmem %s12, %s748
        %p750 = scmp.lt.s32.totalorder %s31, 1
        %s751 = scalar_select %p750, %s31, 1
        %s752 = smul.addr %s751, 256
        %s753 = smul.addr %s752, 4
        %s754 = scalar_lea.vmem %s13, %s753
        %p755 = scmp.lt.s32.totalorder %s31, 1
        %s756 = scalar_select %p755, %s31, 1
        %s757 = scalar_lea.vmem %s14, %s756
        %p758 = scmp.lt.s32.totalorder %s31, 1
        %s759 = scalar_select %p758, %s31, 1
        %s760 = scalar_lea.vmem %s15, %s759
        %p761 = scmp.lt.s32.totalorder %s31, 1
        %s762 = scalar_select %p761, %s31, 1
        %s763 = scalar_lea.vmem %s16, %s762
        %p765 = scmp.eq.s32.totalorder %s31, 0
        // Predicated region
        $region97: #{fire_transformer_forward.1} parent=95 // pred_check
          %p766 = pneg %p765
        $region98: #{fire_transformer_forward.1} parent=95 // pred_check_branch
          %768 = sbr.rel (%p766) target = $region100
        $region99: #{fire_transformer_forward.1} parent=95 // pred_region
          %v769 = vld [vmem:[%s0] sm:$0xf]
          %v770 = vld [vmem:[%s0 + $0x4] sm:$0xf]
          %v771 = vld [vmem:[%s0 + $0x8] sm:$0xf]
          %v772 = vld [vmem:[%s0 + $0xc] sm:$0xf]
          %v773 = vld [vmem:[%s0 + $0x10] sm:$0xf]
          %v774 = vld [vmem:[%s0 + $0x14] sm:$0xf]
          %v775 = vld [vmem:[%s0 + $0x18] sm:$0xf]
          %v776 = vld [vmem:[%s0 + $0x1c] sm:$0xf]
          %v777 = vld [vmem:[%s0 + $0x20] sm:$0xf]
          %v778 = vld [vmem:[%s1] sm:$0xf]
          %v779 = vld [vmem:[%s1 + $0x4] sm:$0xf]
          %v780 = vld [vmem:[%s1 + $0x8] sm:$0xf]
          %v781 = vld [vmem:[%s1 + $0xc] sm:$0xf]
          %v782 = vld [vmem:[%s1 + $0x10] sm:$0xf]
          %v783 = vld [vmem:[%s1 + $0x14] sm:$0xf]
          %v784 = vld [vmem:[%s1 + $0x18] sm:$0xf]
          %v785 = vld [vmem:[%s1 + $0x1c] sm:$0xf]
          %v786 = vld [vmem:[%s1 + $0x20] sm:$0xf]
          %v787 = vld [vmem:[%s2] sm:$0xff]
          %v788 = vld [vmem:[%s2 + $0x8] sm:$0xff]
          %v789 = vld [vmem:[%s2 + $0x10] sm:$0xff]
          %v790 = vld [vmem:[%s2 + $0x18] sm:$0xff]
          %v791 = vld [vmem:[%s2 + $0x20] sm:$0xff]
          %v792 = vld [vmem:[%s2 + $0x28] sm:$0xff]
          %v793 = vld [vmem:[%s2 + $0x30] sm:$0xff]
          %v794 = vld [vmem:[%s2 + $0x38] sm:$0xff]
          %v795 = vld [vmem:[%s2 + $0x40] sm:$0xff]
          %v805 = vunpack.c.l.b16 %v769
          %v806 = vunpack.c.l.b16 %v770
          %v807 = vunpack.c.l.b16 %v771
          %v808 = vunpack.c.l.b16 %v772
          %v809 = vunpack.c.l.b16 %v773
          %v810 = vunpack.c.l.b16 %v774
          %v811 = vunpack.c.l.b16 %v775
          %v812 = vunpack.c.l.b16 %v776
          %v813 = vunpack.c.l.b16 %v777
          %v814 = vpack.c.b16 %v806, %v805
          %v815 = vpack.c.b16 %v808, %v807
          %v816 = vpack.c.b16 %v810, %v809
          %v817 = vpack.c.b16 %v812, %v811
          %v818 = vpack.c.b16 %v813, %v813
          %v828 = vunpack.c.l.b16 %v778
          %v829 = vunpack.c.l.b16 %v779
          %v830 = vunpack.c.l.b16 %v780
          %v831 = vunpack.c.l.b16 %v781
          %v832 = vunpack.c.l.b16 %v782
          %v833 = vunpack.c.l.b16 %v783
          %v834 = vunpack.c.l.b16 %v784
          %v835 = vunpack.c.l.b16 %v785
          %v836 = vunpack.c.l.b16 %v786
          %v837 = vpack.c.b16 %v829, %v828
          %v838 = vpack.c.b16 %v831, %v830
          %v839 = vpack.c.b16 %v833, %v832
          %v840 = vpack.c.b16 %v835, %v834
          %v841 = vpack.c.b16 %v836, %v836
          %vm846 = vcmask 588800
          %v848 = vsel %vm846, %v814, 0
          %v851 = vsel %vm846, %v815, 0
          %v854 = vsel %vm846, %v816, 0
          %v857 = vsel %vm846, %v817, 0
          %v860 = vsel %vm846, %v818, 0
          %vm862 = vcmask 1043456
          %v864 = vsel %vm862, %v841, 0
          %866 = vmatprep.subr.bf16.mxu0 0
          %867 = vmatpush1.bf16.msra.mxu0 0
          %868 = vmatprep.subr.bf16.mxu0 0
          %869 = vmatpush1.bf16.msra.mxu0 0
          %870 = vmatprep.subr.bf16.mxu0 0
          %871 = vmatpush1.bf16.msra.mxu0 0
          %872 = vmatprep.subr.bf16.mxu0 0
          %873 = vmatpush1.bf16.msra.mxu0 %v864
          %874 = vmatprep.subr.bf16.mxu0 0
          %875 = vmatpush1.bf16.msra.mxu0 %v840
          %876 = vmatprep.subr.bf16.mxu0 0
          %877 = vmatpush1.bf16.msra.mxu0 %v839
          %878 = vmatprep.subr.bf16.mxu0 0
          %879 = vmatpush1.bf16.msra.mxu0 %v838
          %880 = vmatprep.subr.bf16.mxu0 0
          %881 = vmatpush1.bf16.msra.mxu0 %v837
          %882 = vmatprep.subr.bf16.mxu0 0
          %883 = vmatpush2.bf16.msra.mxu0 0
          %884 = vmatprep.subr.bf16.mxu0 0
          %885 = vmatpush2.bf16.msra.mxu0 0
          %886 = vmatprep.subr.bf16.mxu0 0
          %887 = vmatpush2.bf16.msra.mxu0 0
          %888 = vmatprep.subr.bf16.mxu0 0
          %889 = vmatpush2.bf16.msra.mxu0 0
          %890 = vmatprep.subr.bf16.mxu0 0
          %891 = vmatpush2.bf16.msra.mxu0 0
          %892 = vmatprep.subr.bf16.mxu0 0
          %893 = vmatpush2.bf16.msra.mxu0 0
          %894 = vmatprep.subr.bf16.mxu0 0
          %895 = vmatpush2.bf16.msra.mxu0 0
          %896 = vmatprep.subr.bf16.mxu0 0
          %897 = vmatpush2.bf16.msra.mxu0 0
          %898 = vmatprep.mubr.bf16.mxu0 0
          %899 = vmatmul.mubr.bf16.gmra.mxu0 %v848
          %v900 = vpop.f32.mrf.mxu0
          %v901 = vadd.f32 %v787, %v900
          %v902 = vpop.f32.mrf.mxu0
          %v903 = vpop.f32.mrf.mxu0
          %v904 = vadd.f32 %v788, %v903
          %v905 = vpop.f32.mrf.mxu0
          %906 = vmatprep.mubr.bf16.mxu0 0
          %907 = vmatmul.mubr.bf16.gmra.mxu0 %v851
          %v908 = vpop.f32.mrf.mxu0
          %v909 = vadd.f32 %v789, %v908
          %v910 = vpop.f32.mrf.mxu0
          %v911 = vpop.f32.mrf.mxu0
          %v912 = vadd.f32 %v790, %v911
          %v913 = vpop.f32.mrf.mxu0
          %914 = vmatprep.mubr.bf16.mxu0 0
          %915 = vmatmul.mubr.bf16.gmra.mxu0 %v854
          %v916 = vpop.f32.mrf.mxu0
          %v917 = vadd.f32 %v791, %v916
          %v918 = vpop.f32.mrf.mxu0
          %v919 = vpop.f32.mrf.mxu0
          %v920 = vadd.f32 %v792, %v919
          %v921 = vpop.f32.mrf.mxu0
          %922 = vmatprep.mubr.bf16.mxu0 0
          %923 = vmatmul.mubr.bf16.gmra.mxu0 %v857
          %v924 = vpop.f32.mrf.mxu0
          %v925 = vadd.f32 %v793, %v924
          %v926 = vpop.f32.mrf.mxu0
          %v927 = vpop.f32.mrf.mxu0
          %v928 = vadd.f32 %v794, %v927
          %v929 = vpop.f32.mrf.mxu0
          %930 = vmatprep.mubr.bf16.mxu0 0
          %931 = vmatmul.mubr.bf16.gmra.mxu0 %v860
          %v932 = vpop.f32.mrf.mxu0
          %v933 = vadd.f32 %v795, %v932
          %v934 = vpop.f32.mrf.mxu0
          %v935 = vpop.f32.mrf.mxu0
          %v936 = vpop.f32.mrf.mxu0
          %937 = vdwg.mxu0
          %vm938 = vcmask 261120
          %939 = vst.msk [vmem:[#allocation2] sm:$0xff] %vm938, %v901
          %940 = vst.msk [vmem:[#allocation2 + $0x8] sm:$0xff] %vm938, %v904
          %941 = vst.msk [vmem:[#allocation2 + $0x10] sm:$0xff] %vm938, %v909
          %942 = vst.msk [vmem:[#allocation2 + $0x18] sm:$0xff] %vm938, %v912
          %943 = vst.msk [vmem:[#allocation2 + $0x20] sm:$0xff] %vm938, %v917
          %944 = vst.msk [vmem:[#allocation2 + $0x28] sm:$0xff] %vm938, %v920
          %945 = vst.msk [vmem:[#allocation2 + $0x30] sm:$0xff] %vm938, %v925
          %946 = vst.msk [vmem:[#allocation2 + $0x38] sm:$0xff] %vm938, %v928
          %947 = vst.msk [vmem:[#allocation2 + $0x40] sm:$0xff] %vm938, %v933
        $region100: #{fire_transformer_forward.1} parent=95 // pred_fallthru
          _
        %v948 = vld [vmem:[#allocation2] sm:$0xff]
        %v949 = vld [vmem:[#allocation2 + $0x8] sm:$0xff]
        %v950 = vld [vmem:[#allocation2 + $0x10] sm:$0xff]
        %v951 = vld [vmem:[#allocation2 + $0x18] sm:$0xff]
        %v952 = vld [vmem:[#allocation2 + $0x20] sm:$0xff]
        %v953 = vld [vmem:[#allocation2 + $0x28] sm:$0xff]
        %v954 = vld [vmem:[#allocation2 + $0x30] sm:$0xff]
        %v955 = vld [vmem:[#allocation2 + $0x38] sm:$0xff]
        %v956 = vld [vmem:[#allocation2 + $0x40] sm:$0xff]
        %v957 = vld [vmem:[%s3] sm:$0xff]
        %v958 = vld [vmem:[%s3 + $0x8] sm:$0xff]
        %v959 = vld [vmem:[%s3 + $0x10] sm:$0xff]
        %v960 = vld [vmem:[%s3 + $0x18] sm:$0xff]
        %v961 = vld [vmem:[%s3 + $0x20] sm:$0xff]
        %v962 = vld [vmem:[%s3 + $0x28] sm:$0xff]
        %v963 = vld [vmem:[%s3 + $0x30] sm:$0xff]
        %v964 = vld [vmem:[%s3 + $0x38] sm:$0xff]
        %v965 = vld [vmem:[%s3 + $0x40] sm:$0xff]
        %v966 = vpack.c.bf16 %v949, %v948
        %v967 = vpack.c.bf16 %v951, %v950
        %v968 = vpack.c.bf16 %v953, %v952
        %v969 = vpack.c.bf16 %v955, %v954
        %v970 = vpack.c.bf16 %v956, %v956
        %v971 = vld [vmem:[%s723] sm:$0xf]
        %v972 = vld [vmem:[%s723 + $0x4] sm:$0xf]
        %v973 = vld [vmem:[%s723 + $0x8] sm:$0xf]
        %v974 = vld [vmem:[%s723 + $0xc] sm:$0xf]
        %v975 = vld [vmem:[%s726] sm:$0x1]
        %v977 = vlaneseq
        %v978 = vshrl.u32 %v977, 7
        %v979 = vsub.s32 0, %v978
        %v980 = vrot.slane %v975, %v979
        %v986 = vunpack.c.l.b16 %v971
        %v987 = vunpack.c.l.b16 %v972
        %v988 = vunpack.c.l.b16 %v973
        %v989 = vunpack.c.l.b16 %v974
        %v990 = vpack.c.b16 %v987, %v986
        %v991 = vpack.c.b16 %v989, %v988
        %vm994 = vcmask 261120
        %v996 = vsel %vm994, %v966, 0
        %v999 = vsel %vm994, %v967, 0
        %v1002 = vsel %vm994, %v968, 0
        %v1005 = vsel %vm994, %v969, 0
        %v1008 = vsel %vm994, %v970, 0
        %1010 = vmatprep.subr.bf16.mxu0 0
        %1011 = vmatpush1.bf16.msra.mxu0 0
        %1012 = vmatprep.subr.bf16.mxu0 0
        %1013 = vmatpush1.bf16.msra.mxu0 0
        %1014 = vmatprep.subr.bf16.mxu0 0
        %1015 = vmatpush1.bf16.msra.mxu0 0
        %1016 = vmatprep.subr.bf16.mxu0 0
        %1017 = vmatpush1.bf16.msra.mxu0 0
        %1018 = vmatprep.subr.bf16.mxu0 0
        %1019 = vmatpush1.bf16.msra.mxu0 0
        %1020 = vmatprep.subr.bf16.mxu0 0
        %1021 = vmatpush1.bf16.msra.mxu0 0
        %1022 = vmatprep.subr.bf16.mxu0 0
        %1023 = vmatpush1.bf16.msra.mxu0 %v991
        %1024 = vmatprep.subr.bf16.mxu0 0
        %1025 = vmatpush1.bf16.msra.mxu0 %v990
        %1026 = vmatprep.subr.bf16.mxu0 0
        %1027 = vmatpush2.bf16.msra.mxu0 0
        %1028 = vmatprep.subr.bf16.mxu0 0
        %1029 = vmatpush2.bf16.msra.mxu0 0
        %1030 = vmatprep.subr.bf16.mxu0 0
        %1031 = vmatpush2.bf16.msra.mxu0 0
        %1032 = vmatprep.subr.bf16.mxu0 0
        %1033 = vmatpush2.bf16.msra.mxu0 0
        %1034 = vmatprep.subr.bf16.mxu0 0
        %1035 = vmatpush2.bf16.msra.mxu0 0
        %1036 = vmatprep.subr.bf16.mxu0 0
        %1037 = vmatpush2.bf16.msra.mxu0 0
        %1038 = vmatprep.subr.bf16.mxu0 0
        %1039 = vmatpush2.bf16.msra.mxu0 0
        %1040 = vmatprep.subr.bf16.mxu0 0
        %1041 = vmatpush2.bf16.msra.mxu0 0
        %1042 = vmatprep.mubr.bf16.mxu0 0
        %1043 = vmatmul.mubr.bf16.gmra.mxu0 %v996
        %v1044 = vpop.f32.mrf.mxu0
        %v1045 = vadd.f32 %v980, %v1044
        %v1046 = vpop.f32.mrf.mxu0
        %v1047 = vpop.f32.mrf.mxu0
        %v1048 = vadd.f32 %v980, %v1047
        %v1049 = vpop.f32.mrf.mxu0
        %1050 = vmatprep.mubr.bf16.mxu0 0
        %1051 = vmatmul.mubr.bf16.gmra.mxu0 %v999
        %v1052 = vpop.f32.mrf.mxu0
        %v1053 = vadd.f32 %v980, %v1052
        %v1054 = vpop.f32.mrf.mxu0
        %v1055 = vpop.f32.mrf.mxu0
        %v1056 = vadd.f32 %v980, %v1055
        %v1057 = vpop.f32.mrf.mxu0
        %1058 = vmatprep.mubr.bf16.mxu0 0
        %1059 = vmatmul.mubr.bf16.gmra.mxu0 %v1002
        %v1060 = vpop.f32.mrf.mxu0
        %v1061 = vadd.f32 %v980, %v1060
        %v1062 = vpop.f32.mrf.mxu0
        %v1063 = vpop.f32.mrf.mxu0
        %v1064 = vadd.f32 %v980, %v1063
        %v1065 = vpop.f32.mrf.mxu0
        %1066 = vmatprep.mubr.bf16.mxu0 0
        %1067 = vmatmul.mubr.bf16.gmra.mxu0 %v1005
        %v1068 = vpop.f32.mrf.mxu0
        %v1069 = vadd.f32 %v980, %v1068
        %v1070 = vpop.f32.mrf.mxu0
        %v1071 = vpop.f32.mrf.mxu0
        %v1072 = vadd.f32 %v980, %v1071
        %v1073 = vpop.f32.mrf.mxu0
        %1074 = vmatprep.mubr.bf16.mxu0 0
        %1075 = vmatmul.mubr.bf16.gmra.mxu0 %v1008
        %v1076 = vpop.f32.mrf.mxu0
        %v1077 = vadd.f32 %v980, %v1076
        %v1078 = vpop.f32.mrf.mxu0
        %v1079 = vpop.f32.mrf.mxu0
        %v1080 = vpop.f32.mrf.mxu0
        %1081 = vdwg.mxu0
        %v1082 = vmul.f32 %v1045, 0.35355338
        %v1083 = vmul.f32 %v1048, 0.35355338
        %v1084 = vmul.f32 %v1053, 0.35355338
        %v1085 = vmul.f32 %v1056, 0.35355338
        %v1086 = vmul.f32 %v1061, 0.35355338
        %v1087 = vmul.f32 %v1064, 0.35355338
        %v1088 = vmul.f32 %v1069, 0.35355338
        %v1089 = vmul.f32 %v1072, 0.35355338
        %v1090 = vmul.f32 %v1077, 0.35355338
        %v1091 = vpack.c.bf16 %v1083, %v1082
        %v1092 = vpack.c.bf16 %v1085, %v1084
        %v1093 = vpack.c.bf16 %v1087, %v1086
        %v1094 = vpack.c.bf16 %v1089, %v1088
        %v1095 = vpack.c.bf16 %v1090, %v1090
        %v1096 = vpack.c.bf16 %v1048, %v1045
        %v1097 = vpack.c.bf16 %v1056, %v1053
        %v1098 = vpack.c.bf16 %v1064, %v1061
        %v1099 = vpack.c.bf16 %v1072, %v1069
        %v1100 = vpack.c.bf16 %v1077, %v1077
        %1106 = vrot.lane.b32.xlu0 %v1096, 96
        %v1107 = vpop.permute.xlu0 %1106
        %1108 = vrot.lane.b32.xlu0 %v1097, 96
        %v1109 = vpop.permute.xlu0 %1108
        %1110 = vrot.lane.b32.xlu0 %v1098, 96
        %v1111 = vpop.permute.xlu0 %1110
        %1112 = vrot.lane.b32.xlu0 %v1099, 96
        %v1113 = vpop.permute.xlu0 %1112
        %1114 = vrot.lane.b32.xlu0 %v1100, 96
        %v1115 = vpop.permute.xlu0 %1114
        %vm1116 = vcmask 64512
        %v1118 = vsel %vm1116, %v1091, 0
        %v1121 = vsel %vm1116, %v1092, 0
        %v1124 = vsel %vm1116, %v1093, 0
        %v1127 = vsel %vm1116, %v1094, 0
        %v1130 = vsel %vm1116, %v1095, 0
        %v1133 = vsel %vm1116, %v1107, 0
        %v1136 = vsel %vm1116, %v1109, 0
        %v1139 = vsel %vm1116, %v1111, 0
        %v1142 = vsel %vm1116, %v1113, 0
        %v1145 = vsel %vm1116, %v1115, 0
        %1147 = vmatprep.subr.bf16.mxu0 0
        %1148 = vmatpush1.bf16.xpose.msra.mxu0 0
        %1149 = vmatprep.subr.bf16.mxu0 0
        %1150 = vmatpush1.bf16.xpose.msra.mxu0 0
        %1151 = vmatprep.subr.bf16.mxu0 0
        %1152 = vmatpush1.bf16.xpose.msra.mxu0 0
        %1153 = vmatprep.subr.bf16.mxu0 0
        %1154 = vmatpush1.bf16.xpose.msra.mxu0 %v1145
        %1155 = vmatprep.subr.bf16.mxu0 0
        %1156 = vmatpush1.bf16.xpose.msra.mxu0 %v1142
        %1157 = vmatprep.subr.bf16.mxu0 0
        %1158 = vmatpush1.bf16.xpose.msra.mxu0 %v1139
        %1159 = vmatprep.subr.bf16.mxu0 0
        %1160 = vmatpush1.bf16.xpose.msra.mxu0 %v1136
        %1161 = vmatprep.subr.bf16.mxu0 0
        %1162 = vmatpush1.bf16.xpose.msra.mxu0 %v1133
        %1163 = vmatprep.subr.bf16.mxu0 0
        %1164 = vmatpush2.bf16.xpose.msra.mxu0 0
        %1165 = vmatprep.subr.bf16.mxu0 0
        %1166 = vmatpush2.bf16.xpose.msra.mxu0 0
        %1167 = vmatprep.subr.bf16.mxu0 0
        %1168 = vmatpush2.bf16.xpose.msra.mxu0 0
        %1169 = vmatprep.subr.bf16.mxu0 0
        %1170 = vmatpush2.bf16.xpose.msra.mxu0 0
        %1171 = vmatprep.subr.bf16.mxu0 0
        %1172 = vmatpush2.bf16.xpose.msra.mxu0 0
        %1173 = vmatprep.subr.bf16.mxu0 0
        %1174 = vmatpush2.bf16.xpose.msra.mxu0 0
        %1175 = vmatprep.subr.bf16.mxu0 0
        %1176 = vmatpush2.bf16.xpose.msra.mxu0 0
        %1177 = vmatprep.subr.bf16.mxu0 0
        %1178 = vmatpush2.bf16.xpose.msra.mxu0 0
        %1179 = vmatprep.mubr.bf16.mxu0 0
        %1180 = vmatmul.mubr.bf16.gmra.mxu0 %v1118
        %v1181 = vpop.f32.mrf.mxu0
        %v1182 = vadd.f32 %v957, %v1181
        %v1183 = vpop.f32.mrf.mxu0
        %v1184 = vpop.f32.mrf.mxu0
        %v1185 = vadd.f32 %v958, %v1184
        %v1186 = vpop.f32.mrf.mxu0
        %1187 = vmatprep.mubr.bf16.mxu0 0
        %1188 = vmatmul.mubr.bf16.gmra.mxu0 %v1121
        %v1189 = vpop.f32.mrf.mxu0
        %v1190 = vadd.f32 %v959, %v1189
        %v1191 = vpop.f32.mrf.mxu0
        %v1192 = vpop.f32.mrf.mxu0
        %v1193 = vadd.f32 %v960, %v1192
        %v1194 = vpop.f32.mrf.mxu0
        %1195 = vmatprep.mubr.bf16.mxu0 0
        %1196 = vmatmul.mubr.bf16.gmra.mxu0 %v1124
        %v1197 = vpop.f32.mrf.mxu0
        %v1198 = vadd.f32 %v961, %v1197
        %v1199 = vpop.f32.mrf.mxu0
        %v1200 = vpop.f32.mrf.mxu0
        %v1201 = vadd.f32 %v962, %v1200
        %v1202 = vpop.f32.mrf.mxu0
        %1203 = vmatprep.mubr.bf16.mxu0 0
        %1204 = vmatmul.mubr.bf16.gmra.mxu0 %v1127
        %v1205 = vpop.f32.mrf.mxu0
        %v1206 = vadd.f32 %v963, %v1205
        %v1207 = vpop.f32.mrf.mxu0
        %v1208 = vpop.f32.mrf.mxu0
        %v1209 = vadd.f32 %v964, %v1208
        %v1210 = vpop.f32.mrf.mxu0
        %1211 = vmatprep.mubr.bf16.mxu0 0
        %1212 = vmatmul.mubr.bf16.gmra.mxu0 %v1130
        %v1213 = vpop.f32.mrf.mxu0
        %v1214 = vadd.f32 %v965, %v1213
        %v1215 = vpop.f32.mrf.mxu0
        %v1216 = vpop.f32.mrf.mxu0
        %v1217 = vpop.f32.mrf.mxu0
        %1218 = vdwg.mxu0
        %vm1219 = vcmask 588800
        %v1220 = vsel %vm1219, %v1182, -inf
        %1221 = vmax.xlane.f32.xlu0 %v1220
        %v1222 = vpop.xlane.xlu0 %1221
        %v1223 = vsel %vm1219, %v1185, -inf
        %1224 = vmax.xlane.f32.xlu0 %v1223
        %v1225 = vpop.xlane.xlu0 %1224
        %v1226 = vsel %vm1219, %v1190, -inf
        %1227 = vmax.xlane.f32.xlu0 %v1226
        %v1228 = vpop.xlane.xlu0 %1227
        %v1229 = vsel %vm1219, %v1193, -inf
        %1230 = vmax.xlane.f32.xlu0 %v1229
        %v1231 = vpop.xlane.xlu0 %1230
        %v1232 = vsel %vm1219, %v1198, -inf
        %1233 = vmax.xlane.f32.xlu0 %v1232
        %v1234 = vpop.xlane.xlu0 %1233
        %v1235 = vsel %vm1219, %v1201, -inf
        %1236 = vmax.xlane.f32.xlu0 %v1235
        %v1237 = vpop.xlane.xlu0 %1236
        %v1238 = vsel %vm1219, %v1206, -inf
        %1239 = vmax.xlane.f32.xlu0 %v1238
        %v1240 = vpop.xlane.xlu0 %1239
        %v1241 = vsel %vm1219, %v1209, -inf
        %1242 = vmax.xlane.f32.xlu0 %v1241
        %v1243 = vpop.xlane.xlu0 %1242
        %v1244 = vsel %vm1219, %v1214, -inf
        %1245 = vmax.xlane.f32.xlu0 %v1244
        %v1246 = vpop.xlane.xlu0 %1245
        %v1247 = vsub.f32 %v1182, %v1222
        %v1248 = vsub.f32 %v1185, %v1225
        %v1249 = vsub.f32 %v1190, %v1228
        %v1250 = vsub.f32 %v1193, %v1231
        %v1251 = vsub.f32 %v1198, %v1234
        %v1252 = vsub.f32 %v1201, %v1237
        %v1253 = vsub.f32 %v1206, %v1240
        %v1254 = vsub.f32 %v1209, %v1243
        %v1255 = vsub.f32 %v1214, %v1246
        %v1256 = vmul.f32 %v1247, 1.442695
        %v1257 = vpow.pop %v1256
        %v1258 = vmul.f32 %v1248, 1.442695
        %v1259 = vpow.pop %v1258
        %v1260 = vmul.f32 %v1249, 1.442695
        %v1261 = vpow.pop %v1260
        %v1262 = vmul.f32 %v1250, 1.442695
        %v1263 = vpow.pop %v1262
        %v1264 = vmul.f32 %v1251, 1.442695
        %v1265 = vpow.pop %v1264
        %v1266 = vmul.f32 %v1252, 1.442695
        %v1267 = vpow.pop %v1266
        %v1268 = vmul.f32 %v1253, 1.442695
        %v1269 = vpow.pop %v1268
        %v1270 = vmul.f32 %v1254, 1.442695
        %v1271 = vpow.pop %v1270
        %v1272 = vmul.f32 %v1255, 1.442695
        %v1273 = vpow.pop %v1272
        %v1274 = vsel %vm1219, %v1257, 0.0
        %1275 = vadd.xlane.f32.xlu0 %v1274
        %v1276 = vpop.xlane.xlu0 %1275
        %v1277 = vsel %vm1219, %v1259, 0.0
        %1278 = vadd.xlane.f32.xlu0 %v1277
        %v1279 = vpop.xlane.xlu0 %1278
        %v1280 = vsel %vm1219, %v1261, 0.0
        %1281 = vadd.xlane.f32.xlu0 %v1280
        %v1282 = vpop.xlane.xlu0 %1281
        %v1283 = vsel %vm1219, %v1263, 0.0
        %1284 = vadd.xlane.f32.xlu0 %v1283
        %v1285 = vpop.xlane.xlu0 %1284
        %v1286 = vsel %vm1219, %v1265, 0.0
        %1287 = vadd.xlane.f32.xlu0 %v1286
        %v1288 = vpop.xlane.xlu0 %1287
        %v1289 = vsel %vm1219, %v1267, 0.0
        %1290 = vadd.xlane.f32.xlu0 %v1289
        %v1291 = vpop.xlane.xlu0 %1290
        %v1292 = vsel %vm1219, %v1269, 0.0
        %1293 = vadd.xlane.f32.xlu0 %v1292
        %v1294 = vpop.xlane.xlu0 %1293
        %v1295 = vsel %vm1219, %v1271, 0.0
        %1296 = vadd.xlane.f32.xlu0 %v1295
        %v1297 = vpop.xlane.xlu0 %1296
        %v1298 = vsel %vm1219, %v1273, 0.0
        %1299 = vadd.xlane.f32.xlu0 %v1298
        %v1300 = vpop.xlane.xlu0 %1299
        %v1301 = vrcp.pop %v1276
        %v1302 = vrcp.pop %v1279
        %v1303 = vrcp.pop %v1282
        %v1304 = vrcp.pop %v1285
        %v1305 = vrcp.pop %v1288
        %v1306 = vrcp.pop %v1291
        %v1307 = vrcp.pop %v1294
        %v1308 = vrcp.pop %v1297
        %v1309 = vrcp.pop %v1300
        %v1310 = vpack.c.bf16 %v1259, %v1257
        %v1311 = vpack.c.bf16 %v1263, %v1261
        %v1312 = vpack.c.bf16 %v1267, %v1265
        %v1313 = vpack.c.bf16 %v1271, %v1269
        %v1314 = vpack.c.bf16 %v1273, %v1273
        %1315 = vrot.lane.b32.xlu0 %v1096, 64
        %v1316 = vpop.permute.xlu0 %1315
        %1317 = vrot.lane.b32.xlu0 %v1097, 64
        %v1318 = vpop.permute.xlu0 %1317
        %1319 = vrot.lane.b32.xlu0 %v1098, 64
        %v1320 = vpop.permute.xlu0 %1319
        %1321 = vrot.lane.b32.xlu0 %v1099, 64
        %v1322 = vpop.permute.xlu0 %1321
        %1323 = vrot.lane.b32.xlu0 %v1100, 64
        %v1324 = vpop.permute.xlu0 %1323
        %v1330 = vsel %vm1219, %v1310, 0
        %v1333 = vsel %vm1219, %v1311, 0
        %v1336 = vsel %vm1219, %v1312, 0
        %v1339 = vsel %vm1219, %v1313, 0
        %v1342 = vsel %vm1219, %v1314, 0
        %vm1344 = vcmask 1043456
        %v1346 = vsel %vm1344, %v1324, 0
        %1348 = vmatprep.subr.bf16.mxu0 0
        %1349 = vmatpush1.bf16.msra.mxu0 0
        %1350 = vmatprep.subr.bf16.mxu0 0
        %1351 = vmatpush1.bf16.msra.mxu0 0
        %1352 = vmatprep.subr.bf16.mxu0 0
        %1353 = vmatpush1.bf16.msra.mxu0 0
        %1354 = vmatprep.subr.bf16.mxu0 0
        %1355 = vmatpush1.bf16.msra.mxu0 %v1346
        %1356 = vmatprep.subr.bf16.mxu0 0
        %1357 = vmatpush1.bf16.msra.mxu0 %v1322
        %1358 = vmatprep.subr.bf16.mxu0 0
        %1359 = vmatpush1.bf16.msra.mxu0 %v1320
        %1360 = vmatprep.subr.bf16.mxu0 0
        %1361 = vmatpush1.bf16.msra.mxu0 %v1318
        %1362 = vmatprep.subr.bf16.mxu0 0
        %1363 = vmatpush1.bf16.msra.mxu0 %v1316
        %1364 = vmatprep.subr.bf16.mxu0 0
        %1365 = vmatpush2.bf16.msra.mxu0 0
        %1366 = vmatprep.subr.bf16.mxu0 0
        %1367 = vmatpush2.bf16.msra.mxu0 0
        %1368 = vmatprep.subr.bf16.mxu0 0
        %1369 = vmatpush2.bf16.msra.mxu0 0
        %1370 = vmatprep.subr.bf16.mxu0 0
        %1371 = vmatpush2.bf16.msra.mxu0 0
        %1372 = vmatprep.subr.bf16.mxu0 0
        %1373 = vmatpush2.bf16.msra.mxu0 0
        %1374 = vmatprep.subr.bf16.mxu0 0
        %1375 = vmatpush2.bf16.msra.mxu0 0
        %1376 = vmatprep.subr.bf16.mxu0 0
        %1377 = vmatpush2.bf16.msra.mxu0 0
        %1378 = vmatprep.subr.bf16.mxu0 0
        %1379 = vmatpush2.bf16.msra.mxu0 0
        %1380 = vmatprep.mubr.bf16.mxu0 0
        %1381 = vmatmul.mubr.bf16.gmra.mxu0 %v1330
        %v1382 = vpop.f32.mrf.mxu0
        %v1383 = vadd.f32 0.0, %v1382
        %v1384 = vpop.f32.mrf.mxu0
        %v1385 = vpop.f32.mrf.mxu0
        %v1386 = vadd.f32 0.0, %v1385
        %v1387 = vpop.f32.mrf.mxu0
        %1388 = vmatprep.mubr.bf16.mxu0 0
        %1389 = vmatmul.mubr.bf16.gmra.mxu0 %v1333
        %v1390 = vpop.f32.mrf.mxu0
        %v1391 = vadd.f32 0.0, %v1390
        %v1392 = vpop.f32.mrf.mxu0
        %v1393 = vpop.f32.mrf.mxu0
        %v1394 = vadd.f32 0.0, %v1393
        %v1395 = vpop.f32.mrf.mxu0
        %1396 = vmatprep.mubr.bf16.mxu0 0
        %1397 = vmatmul.mubr.bf16.gmra.mxu0 %v1336
        %v1398 = vpop.f32.mrf.mxu0
        %v1399 = vadd.f32 0.0, %v1398
        %v1400 = vpop.f32.mrf.mxu0
        %v1401 = vpop.f32.mrf.mxu0
        %v1402 = vadd.f32 0.0, %v1401
        %v1403 = vpop.f32.mrf.mxu0
        %1404 = vmatprep.mubr.bf16.mxu0 0
        %1405 = vmatmul.mubr.bf16.gmra.mxu0 %v1339
        %v1406 = vpop.f32.mrf.mxu0
        %v1407 = vadd.f32 0.0, %v1406
        %v1408 = vpop.f32.mrf.mxu0
        %v1409 = vpop.f32.mrf.mxu0
        %v1410 = vadd.f32 0.0, %v1409
        %v1411 = vpop.f32.mrf.mxu0
        %1412 = vmatprep.mubr.bf16.mxu0 0
        %1413 = vmatmul.mubr.bf16.gmra.mxu0 %v1342
        %v1414 = vpop.f32.mrf.mxu0
        %v1415 = vadd.f32 0.0, %v1414
        %v1416 = vpop.f32.mrf.mxu0
        %v1417 = vpop.f32.mrf.mxu0
        %v1418 = vpop.f32.mrf.mxu0
        %1419 = vdwg.mxu0
        %v1420 = vmul.f32 %v1383, %v1301
        %v1421 = vmul.f32 %v1386, %v1302
        %v1422 = vmul.f32 %v1391, %v1303
        %v1423 = vmul.f32 %v1394, %v1304
        %v1424 = vmul.f32 %v1399, %v1305
        %v1425 = vmul.f32 %v1402, %v1306
        %v1426 = vmul.f32 %v1407, %v1307
        %v1427 = vmul.f32 %v1410, %v1308
        %v1428 = vmul.f32 %v1415, %v1309
        %1434 = vrot.lane.b32.xlu0 %v1091, 120
        %v1435 = vpop.permute.xlu0 %1434
        %1436 = vrot.lane.b32.xlu0 %v1092, 120
        %v1437 = vpop.permute.xlu0 %1436
        %1438 = vrot.lane.b32.xlu0 %v1093, 120
        %v1439 = vpop.permute.xlu0 %1438
        %1440 = vrot.lane.b32.xlu0 %v1094, 120
        %v1441 = vpop.permute.xlu0 %1440
        %1442 = vrot.lane.b32.xlu0 %v1095, 120
        %v1443 = vpop.permute.xlu0 %1442
        %1444 = vrot.lane.b32.xlu0 %v1096, 88
        %v1445 = vpop.permute.xlu0 %1444
        %1446 = vrot.lane.b32.xlu0 %v1097, 88
        %v1447 = vpop.permute.xlu0 %1446
        %1448 = vrot.lane.b32.xlu0 %v1098, 88
        %v1449 = vpop.permute.xlu0 %1448
        %1450 = vrot.lane.b32.xlu0 %v1099, 88
        %v1451 = vpop.permute.xlu0 %1450
        %1452 = vrot.lane.b32.xlu0 %v1100, 88
        %v1453 = vpop.permute.xlu0 %1452
        %v1455 = vsel %vm1116, %v1435, 0
        %v1458 = vsel %vm1116, %v1437, 0
        %v1461 = vsel %vm1116, %v1439, 0
        %v1464 = vsel %vm1116, %v1441, 0
        %v1467 = vsel %vm1116, %v1443, 0
        %v1470 = vsel %vm1116, %v1445, 0
        %v1473 = vsel %vm1116, %v1447, 0
        %v1476 = vsel %vm1116, %v1449, 0
        %v1479 = vsel %vm1116, %v1451, 0
        %v1482 = vsel %vm1116, %v1453, 0
        %1484 = vmatprep.subr.bf16.mxu0 0
        %1485 = vmatpush1.bf16.xpose.msra.mxu0 0
        %1486 = vmatprep.subr.bf16.mxu0 0
        %1487 = vmatpush1.bf16.xpose.msra.mxu0 0
        %1488 = vmatprep.subr.bf16.mxu0 0
        %1489 = vmatpush1.bf16.xpose.msra.mxu0 0
        %1490 = vmatprep.subr.bf16.mxu0 0
        %1491 = vmatpush1.bf16.xpose.msra.mxu0 %v1482
        %1492 = vmatprep.subr.bf16.mxu0 0
        %1493 = vmatpush1.bf16.xpose.msra.mxu0 %v1479
        %1494 = vmatprep.subr.bf16.mxu0 0
        %1495 = vmatpush1.bf16.xpose.msra.mxu0 %v1476
        %1496 = vmatprep.subr.bf16.mxu0 0
        %1497 = vmatpush1.bf16.xpose.msra.mxu0 %v1473
        %1498 = vmatprep.subr.bf16.mxu0 0
        %1499 = vmatpush1.bf16.xpose.msra.mxu0 %v1470
        %1500 = vmatprep.subr.bf16.mxu0 0
        %1501 = vmatpush2.bf16.xpose.msra.mxu0 0
        %1502 = vmatprep.subr.bf16.mxu0 0
        %1503 = vmatpush2.bf16.xpose.msra.mxu0 0
        %1504 = vmatprep.subr.bf16.mxu0 0
        %1505 = vmatpush2.bf16.xpose.msra.mxu0 0
        %1506 = vmatprep.subr.bf16.mxu0 0
        %1507 = vmatpush2.bf16.xpose.msra.mxu0 0
        %1508 = vmatprep.subr.bf16.mxu0 0
        %1509 = vmatpush2.bf16.xpose.msra.mxu0 0
        %1510 = vmatprep.subr.bf16.mxu0 0
        %1511 = vmatpush2.bf16.xpose.msra.mxu0 0
        %1512 = vmatprep.subr.bf16.mxu0 0
        %1513 = vmatpush2.bf16.xpose.msra.mxu0 0
        %1514 = vmatprep.subr.bf16.mxu0 0
        %1515 = vmatpush2.bf16.xpose.msra.mxu0 0
        %1516 = vmatprep.mubr.bf16.mxu0 0
        %1517 = vmatmul.mubr.bf16.gmra.mxu0 %v1455
        %v1518 = vpop.f32.mrf.mxu0
        %v1519 = vadd.f32 %v957, %v1518
        %v1520 = vpop.f32.mrf.mxu0
        %v1521 = vpop.f32.mrf.mxu0
        %v1522 = vadd.f32 %v958, %v1521
        %v1523 = vpop.f32.mrf.mxu0
        %1524 = vmatprep.mubr.bf16.mxu0 0
        %1525 = vmatmul.mubr.bf16.gmra.mxu0 %v1458
        %v1526 = vpop.f32.mrf.mxu0
        %v1527 = vadd.f32 %v959, %v1526
        %v1528 = vpop.f32.mrf.mxu0
        %v1529 = vpop.f32.mrf.mxu0
        %v1530 = vadd.f32 %v960, %v1529
        %v1531 = vpop.f32.mrf.mxu0
        %1532 = vmatprep.mubr.bf16.mxu0 0
        %1533 = vmatmul.mubr.bf16.gmra.mxu0 %v1461
        %v1534 = vpop.f32.mrf.mxu0
        %v1535 = vadd.f32 %v961, %v1534
        %v1536 = vpop.f32.mrf.mxu0
        %v1537 = vpop.f32.mrf.mxu0
        %v1538 = vadd.f32 %v962, %v1537
        %v1539 = vpop.f32.mrf.mxu0
        %1540 = vmatprep.mubr.bf16.mxu0 0
        %1541 = vmatmul.mubr.bf16.gmra.mxu0 %v1464
        %v1542 = vpop.f32.mrf.mxu0
        %v1543 = vadd.f32 %v963, %v1542
        %v1544 = vpop.f32.mrf.mxu0
        %v1545 = vpop.f32.mrf.mxu0
        %v1546 = vadd.f32 %v964, %v1545
        %v1547 = vpop.f32.mrf.mxu0
        %1548 = vmatprep.mubr.bf16.mxu0 0
        %1549 = vmatmul.mubr.bf16.gmra.mxu0 %v1467
        %v1550 = vpop.f32.mrf.mxu0
        %v1551 = vadd.f32 %v965, %v1550
        %v1552 = vpop.f32.mrf.mxu0
        %v1553 = vpop.f32.mrf.mxu0
        %v1554 = vpop.f32.mrf.mxu0
        %1555 = vdwg.mxu0
        %v1556 = vsel %vm1219, %v1519, -inf
        %1557 = vmax.xlane.f32.xlu0 %v1556
        %v1558 = vpop.xlane.xlu0 %1557
        %v1559 = vsel %vm1219, %v1522, -inf
        %1560 = vmax.xlane.f32.xlu0 %v1559
        %v1561 = vpop.xlane.xlu0 %1560
        %v1562 = vsel %vm1219, %v1527, -inf
        %1563 = vmax.xlane.f32.xlu0 %v1562
        %v1564 = vpop.xlane.xlu0 %1563
        %v1565 = vsel %vm1219, %v1530, -inf
        %1566 = vmax.xlane.f32.xlu0 %v1565
        %v1567 = vpop.xlane.xlu0 %1566
        %v1568 = vsel %vm1219, %v1535, -inf
        %1569 = vmax.xlane.f32.xlu0 %v1568
        %v1570 = vpop.xlane.xlu0 %1569
        %v1571 = vsel %vm1219, %v1538, -inf
        %1572 = vmax.xlane.f32.xlu0 %v1571
        %v1573 = vpop.xlane.xlu0 %1572
        %v1574 = vsel %vm1219, %v1543, -inf
        %1575 = vmax.xlane.f32.xlu0 %v1574
        %v1576 = vpop.xlane.xlu0 %1575
        %v1577 = vsel %vm1219, %v1546, -inf
        %1578 = vmax.xlane.f32.xlu0 %v1577
        %v1579 = vpop.xlane.xlu0 %1578
        %v1580 = vsel %vm1219, %v1551, -inf
        %1581 = vmax.xlane.f32.xlu0 %v1580
        %v1582 = vpop.xlane.xlu0 %1581
        %v1583 = vsub.f32 %v1519, %v1558
        %v1584 = vsub.f32 %v1522, %v1561
        %v1585 = vsub.f32 %v1527, %v1564
        %v1586 = vsub.f32 %v1530, %v1567
        %v1587 = vsub.f32 %v1535, %v1570
        %v1588 = vsub.f32 %v1538, %v1573
        %v1589 = vsub.f32 %v1543, %v1576
        %v1590 = vsub.f32 %v1546, %v1579
        %v1591 = vsub.f32 %v1551, %v1582
        %v1592 = vmul.f32 %v1583, 1.442695
        %v1593 = vpow.pop %v1592
        %v1594 = vmul.f32 %v1584, 1.442695
        %v1595 = vpow.pop %v1594
        %v1596 = vmul.f32 %v1585, 1.442695
        %v1597 = vpow.pop %v1596
        %v1598 = vmul.f32 %v1586, 1.442695
        %v1599 = vpow.pop %v1598
        %v1600 = vmul.f32 %v1587, 1.442695
        %v1601 = vpow.pop %v1600
        %v1602 = vmul.f32 %v1588, 1.442695
        %v1603 = vpow.pop %v1602
        %v1604 = vmul.f32 %v1589, 1.442695
        %v1605 = vpow.pop %v1604
        %v1606 = vmul.f32 %v1590, 1.442695
        %v1607 = vpow.pop %v1606
        %v1608 = vmul.f32 %v1591, 1.442695
        %v1609 = vpow.pop %v1608
        %v1610 = vsel %vm1219, %v1593, 0.0
        %1611 = vadd.xlane.f32.xlu0 %v1610
        %v1612 = vpop.xlane.xlu0 %1611
        %v1613 = vsel %vm1219, %v1595, 0.0
        %1614 = vadd.xlane.f32.xlu0 %v1613
        %v1615 = vpop.xlane.xlu0 %1614
        %v1616 = vsel %vm1219, %v1597, 0.0
        %1617 = vadd.xlane.f32.xlu0 %v1616
        %v1618 = vpop.xlane.xlu0 %1617
        %v1619 = vsel %vm1219, %v1599, 0.0
        %1620 = vadd.xlane.f32.xlu0 %v1619
        %v1621 = vpop.xlane.xlu0 %1620
        %v1622 = vsel %vm1219, %v1601, 0.0
        %1623 = vadd.xlane.f32.xlu0 %v1622
        %v1624 = vpop.xlane.xlu0 %1623
        %v1625 = vsel %vm1219, %v1603, 0.0
        %1626 = vadd.xlane.f32.xlu0 %v1625
        %v1627 = vpop.xlane.xlu0 %1626
        %v1628 = vsel %vm1219, %v1605, 0.0
        %1629 = vadd.xlane.f32.xlu0 %v1628
        %v1630 = vpop.xlane.xlu0 %1629
        %v1631 = vsel %vm1219, %v1607, 0.0
        %1632 = vadd.xlane.f32.xlu0 %v1631
        %v1633 = vpop.xlane.xlu0 %1632
        %v1634 = vsel %vm1219, %v1609, 0.0
        %1635 = vadd.xlane.f32.xlu0 %v1634
        %v1636 = vpop.xlane.xlu0 %1635
        %v1637 = vrcp.pop %v1612
        %v1638 = vrcp.pop %v1615
        %v1639 = vrcp.pop %v1618
        %v1640 = vrcp.pop %v1621
        %v1641 = vrcp.pop %v1624
        %v1642 = vrcp.pop %v1627
        %v1643 = vrcp.pop %v1630
        %v1644 = vrcp.pop %v1633
        %v1645 = vrcp.pop %v1636
        %v1646 = vpack.c.bf16 %v1595, %v1593
        %v1647 = vpack.c.bf16 %v1599, %v1597
        %v1648 = vpack.c.bf16 %v1603, %v1601
        %v1649 = vpack.c.bf16 %v1607, %v1605
        %v1650 = vpack.c.bf16 %v1609, %v1609
        %1651 = vrot.lane.b32.xlu0 %v1096, 56
        %v1652 = vpop.permute.xlu0 %1651
        %1653 = vrot.lane.b32.xlu0 %v1097, 56
        %v1654 = vpop.permute.xlu0 %1653
        %1655 = vrot.lane.b32.xlu0 %v1098, 56
        %v1656 = vpop.permute.xlu0 %1655
        %1657 = vrot.lane.b32.xlu0 %v1099, 56
        %v1658 = vpop.permute.xlu0 %1657
        %1659 = vrot.lane.b32.xlu0 %v1100, 56
        %v1660 = vpop.permute.xlu0 %1659
        %v1666 = vsel %vm1219, %v1646, 0
        %v1669 = vsel %vm1219, %v1647, 0
        %v1672 = vsel %vm1219, %v1648, 0
        %v1675 = vsel %vm1219, %v1649, 0
        %v1678 = vsel %vm1219, %v1650, 0
        %v1681 = vsel %vm1344, %v1660, 0
        %1683 = vmatprep.subr.bf16.mxu0 0
        %1684 = vmatpush1.bf16.msra.mxu0 0
        %1685 = vmatprep.subr.bf16.mxu0 0
        %1686 = vmatpush1.bf16.msra.mxu0 0
        %1687 = vmatprep.subr.bf16.mxu0 0
        %1688 = vmatpush1.bf16.msra.mxu0 0
        %1689 = vmatprep.subr.bf16.mxu0 0
        %1690 = vmatpush1.bf16.msra.mxu0 %v1681
        %1691 = vmatprep.subr.bf16.mxu0 0
        %1692 = vmatpush1.bf16.msra.mxu0 %v1658
        %1693 = vmatprep.subr.bf16.mxu0 0
        %1694 = vmatpush1.bf16.msra.mxu0 %v1656
        %1695 = vmatprep.subr.bf16.mxu0 0
        %1696 = vmatpush1.bf16.msra.mxu0 %v1654
        %1697 = vmatprep.subr.bf16.mxu0 0
        %1698 = vmatpush1.bf16.msra.mxu0 %v1652
        %1699 = vmatprep.subr.bf16.mxu0 0
        %1700 = vmatpush2.bf16.msra.mxu0 0
        %1701 = vmatprep.subr.bf16.mxu0 0
        %1702 = vmatpush2.bf16.msra.mxu0 0
        %1703 = vmatprep.subr.bf16.mxu0 0
        %1704 = vmatpush2.bf16.msra.mxu0 0
        %1705 = vmatprep.subr.bf16.mxu0 0
        %1706 = vmatpush2.bf16.msra.mxu0 0
        %1707 = vmatprep.subr.bf16.mxu0 0
        %1708 = vmatpush2.bf16.msra.mxu0 0
        %1709 = vmatprep.subr.bf16.mxu0 0
        %1710 = vmatpush2.bf16.msra.mxu0 0
        %1711 = vmatprep.subr.bf16.mxu0 0
        %1712 = vmatpush2.bf16.msra.mxu0 0
        %1713 = vmatprep.subr.bf16.mxu0 0
        %1714 = vmatpush2.bf16.msra.mxu0 0
        %1715 = vmatprep.mubr.bf16.mxu0 0
        %1716 = vmatmul.mubr.bf16.gmra.mxu0 %v1666
        %v1717 = vpop.f32.mrf.mxu0
        %v1718 = vadd.f32 0.0, %v1717
        %v1719 = vpop.f32.mrf.mxu0
        %v1720 = vpop.f32.mrf.mxu0
        %v1721 = vadd.f32 0.0, %v1720
        %v1722 = vpop.f32.mrf.mxu0
        %1723 = vmatprep.mubr.bf16.mxu0 0
        %1724 = vmatmul.mubr.bf16.gmra.mxu0 %v1669
        %v1725 = vpop.f32.mrf.mxu0
        %v1726 = vadd.f32 0.0, %v1725
        %v1727 = vpop.f32.mrf.mxu0
        %v1728 = vpop.f32.mrf.mxu0
        %v1729 = vadd.f32 0.0, %v1728
        %v1730 = vpop.f32.mrf.mxu0
        %1731 = vmatprep.mubr.bf16.mxu0 0
        %1732 = vmatmul.mubr.bf16.gmra.mxu0 %v1672
        %v1733 = vpop.f32.mrf.mxu0
        %v1734 = vadd.f32 0.0, %v1733
        %v1735 = vpop.f32.mrf.mxu0
        %v1736 = vpop.f32.mrf.mxu0
        %v1737 = vadd.f32 0.0, %v1736
        %v1738 = vpop.f32.mrf.mxu0
        %1739 = vmatprep.mubr.bf16.mxu0 0
        %1740 = vmatmul.mubr.bf16.gmra.mxu0 %v1675
        %v1741 = vpop.f32.mrf.mxu0
        %v1742 = vadd.f32 0.0, %v1741
        %v1743 = vpop.f32.mrf.mxu0
        %v1744 = vpop.f32.mrf.mxu0
        %v1745 = vadd.f32 0.0, %v1744
        %v1746 = vpop.f32.mrf.mxu0
        %1747 = vmatprep.mubr.bf16.mxu0 0
        %1748 = vmatmul.mubr.bf16.gmra.mxu0 %v1678
        %v1749 = vpop.f32.mrf.mxu0
        %v1750 = vadd.f32 0.0, %v1749
        %v1751 = vpop.f32.mrf.mxu0
        %v1752 = vpop.f32.mrf.mxu0
        %v1753 = vpop.f32.mrf.mxu0
        %1754 = vdwg.mxu0
        %v1755 = vmul.f32 %v1718, %v1637
        %v1756 = vmul.f32 %v1721, %v1638
        %v1757 = vmul.f32 %v1726, %v1639
        %v1758 = vmul.f32 %v1729, %v1640
        %v1759 = vmul.f32 %v1734, %v1641
        %v1760 = vmul.f32 %v1737, %v1642
        %v1761 = vmul.f32 %v1742, %v1643
        %v1762 = vmul.f32 %v1745, %v1644
        %v1763 = vmul.f32 %v1750, %v1645
        %1764 = vrot.lane.b32.xlu0 %v1091, 112
        %v1765 = vpop.permute.xlu0 %1764
        %1766 = vrot.lane.b32.xlu0 %v1092, 112
        %v1767 = vpop.permute.xlu0 %1766
        %1768 = vrot.lane.b32.xlu0 %v1093, 112
        %v1769 = vpop.permute.xlu0 %1768
        %1770 = vrot.lane.b32.xlu0 %v1094, 112
        %v1771 = vpop.permute.xlu0 %1770
        %1772 = vrot.lane.b32.xlu0 %v1095, 112
        %v1773 = vpop.permute.xlu0 %1772
        %1774 = vrot.lane.b32.xlu0 %v1096, 80
        %v1775 = vpop.permute.xlu0 %1774
        %1776 = vrot.lane.b32.xlu0 %v1097, 80
        %v1777 = vpop.permute.xlu0 %1776
        %1778 = vrot.lane.b32.xlu0 %v1098, 80
        %v1779 = vpop.permute.xlu0 %1778
        %1780 = vrot.lane.b32.xlu0 %v1099, 80
        %v1781 = vpop.permute.xlu0 %1780
        %1782 = vrot.lane.b32.xlu0 %v1100, 80
        %v1783 = vpop.permute.xlu0 %1782
        %v1785 = vsel %vm1116, %v1765, 0
        %v1788 = vsel %vm1116, %v1767, 0
        %v1791 = vsel %vm1116, %v1769, 0
        %v1794 = vsel %vm1116, %v1771, 0
        %v1797 = vsel %vm1116, %v1773, 0
        %v1800 = vsel %vm1116, %v1775, 0
        %v1803 = vsel %vm1116, %v1777, 0
        %v1806 = vsel %vm1116, %v1779, 0
        %v1809 = vsel %vm1116, %v1781, 0
        %v1812 = vsel %vm1116, %v1783, 0
        %1814 = vmatprep.subr.bf16.mxu0 0
        %1815 = vmatpush1.bf16.xpose.msra.mxu0 0
        %1816 = vmatprep.subr.bf16.mxu0 0
        %1817 = vmatpush1.bf16.xpose.msra.mxu0 0
        %1818 = vmatprep.subr.bf16.mxu0 0
        %1819 = vmatpush1.bf16.xpose.msra.mxu0 0
        %1820 = vmatprep.subr.bf16.mxu0 0
        %1821 = vmatpush1.bf16.xpose.msra.mxu0 %v1812
        %1822 = vmatprep.subr.bf16.mxu0 0
        %1823 = vmatpush1.bf16.xpose.msra.mxu0 %v1809
        %1824 = vmatprep.subr.bf16.mxu0 0
        %1825 = vmatpush1.bf16.xpose.msra.mxu0 %v1806
        %1826 = vmatprep.subr.bf16.mxu0 0
        %1827 = vmatpush1.bf16.xpose.msra.mxu0 %v1803
        %1828 = vmatprep.subr.bf16.mxu0 0
        %1829 = vmatpush1.bf16.xpose.msra.mxu0 %v1800
        %1830 = vmatprep.subr.bf16.mxu0 0
        %1831 = vmatpush2.bf16.xpose.msra.mxu0 0
        %1832 = vmatprep.subr.bf16.mxu0 0
        %1833 = vmatpush2.bf16.xpose.msra.mxu0 0
        %1834 = vmatprep.subr.bf16.mxu0 0
        %1835 = vmatpush2.bf16.xpose.msra.mxu0 0
        %1836 = vmatprep.subr.bf16.mxu0 0
        %1837 = vmatpush2.bf16.xpose.msra.mxu0 0
        %1838 = vmatprep.subr.bf16.mxu0 0
        %1839 = vmatpush2.bf16.xpose.msra.mxu0 0
        %1840 = vmatprep.subr.bf16.mxu0 0
        %1841 = vmatpush2.bf16.xpose.msra.mxu0 0
        %1842 = vmatprep.subr.bf16.mxu0 0
        %1843 = vmatpush2.bf16.xpose.msra.mxu0 0
        %1844 = vmatprep.subr.bf16.mxu0 0
        %1845 = vmatpush2.bf16.xpose.msra.mxu0 0
        %1846 = vmatprep.mubr.bf16.mxu0 0
        %1847 = vmatmul.mubr.bf16.gmra.mxu0 %v1785
        %v1848 = vpop.f32.mrf.mxu0
        %v1849 = vadd.f32 %v957, %v1848
        %v1850 = vpop.f32.mrf.mxu0
        %v1851 = vpop.f32.mrf.mxu0
        %v1852 = vadd.f32 %v958, %v1851
        %v1853 = vpop.f32.mrf.mxu0
        %1854 = vmatprep.mubr.bf16.mxu0 0
        %1855 = vmatmul.mubr.bf16.gmra.mxu0 %v1788
        %v1856 = vpop.f32.mrf.mxu0
        %v1857 = vadd.f32 %v959, %v1856
        %v1858 = vpop.f32.mrf.mxu0
        %v1859 = vpop.f32.mrf.mxu0
        %v1860 = vadd.f32 %v960, %v1859
        %v1861 = vpop.f32.mrf.mxu0
        %1862 = vmatprep.mubr.bf16.mxu0 0
        %1863 = vmatmul.mubr.bf16.gmra.mxu0 %v1791
        %v1864 = vpop.f32.mrf.mxu0
        %v1865 = vadd.f32 %v961, %v1864
        %v1866 = vpop.f32.mrf.mxu0
        %v1867 = vpop.f32.mrf.mxu0
        %v1868 = vadd.f32 %v962, %v1867
        %v1869 = vpop.f32.mrf.mxu0
        %1870 = vmatprep.mubr.bf16.mxu0 0
        %1871 = vmatmul.mubr.bf16.gmra.mxu0 %v1794
        %v1872 = vpop.f32.mrf.mxu0
        %v1873 = vadd.f32 %v963, %v1872
        %v1874 = vpop.f32.mrf.mxu0
        %v1875 = vpop.f32.mrf.mxu0
        %v1876 = vadd.f32 %v964, %v1875
        %v1877 = vpop.f32.mrf.mxu0
        %1878 = vmatprep.mubr.bf16.mxu0 0
        %1879 = vmatmul.mubr.bf16.gmra.mxu0 %v1797
        %v1880 = vpop.f32.mrf.mxu0
        %v1881 = vadd.f32 %v965, %v1880
        %v1882 = vpop.f32.mrf.mxu0
        %v1883 = vpop.f32.mrf.mxu0
        %v1884 = vpop.f32.mrf.mxu0
        %1885 = vdwg.mxu0
        %v1886 = vsel %vm1219, %v1849, -inf
        %1887 = vmax.xlane.f32.xlu0 %v1886
        %v1888 = vpop.xlane.xlu0 %1887
        %v1889 = vsel %vm1219, %v1852, -inf
        %1890 = vmax.xlane.f32.xlu0 %v1889
        %v1891 = vpop.xlane.xlu0 %1890
        %v1892 = vsel %vm1219, %v1857, -inf
        %1893 = vmax.xlane.f32.xlu0 %v1892
        %v1894 = vpop.xlane.xlu0 %1893
        %v1895 = vsel %vm1219, %v1860, -inf
        %1896 = vmax.xlane.f32.xlu0 %v1895
        %v1897 = vpop.xlane.xlu0 %1896
        %v1898 = vsel %vm1219, %v1865, -inf
        %1899 = vmax.xlane.f32.xlu0 %v1898
        %v1900 = vpop.xlane.xlu0 %1899
        %v1901 = vsel %vm1219, %v1868, -inf
        %1902 = vmax.xlane.f32.xlu0 %v1901
        %v1903 = vpop.xlane.xlu0 %1902
        %v1904 = vsel %vm1219, %v1873, -inf
        %1905 = vmax.xlane.f32.xlu0 %v1904
        %v1906 = vpop.xlane.xlu0 %1905
        %v1907 = vsel %vm1219, %v1876, -inf
        %1908 = vmax.xlane.f32.xlu0 %v1907
        %v1909 = vpop.xlane.xlu0 %1908
        %v1910 = vsel %vm1219, %v1881, -inf
        %1911 = vmax.xlane.f32.xlu0 %v1910
        %v1912 = vpop.xlane.xlu0 %1911
        %v1913 = vsub.f32 %v1849, %v1888
        %v1914 = vsub.f32 %v1852, %v1891
        %v1915 = vsub.f32 %v1857, %v1894
        %v1916 = vsub.f32 %v1860, %v1897
        %v1917 = vsub.f32 %v1865, %v1900
        %v1918 = vsub.f32 %v1868, %v1903
        %v1919 = vsub.f32 %v1873, %v1906
        %v1920 = vsub.f32 %v1876, %v1909
        %v1921 = vsub.f32 %v1881, %v1912
        %v1922 = vmul.f32 %v1913, 1.442695
        %v1923 = vpow.pop %v1922
        %v1924 = vmul.f32 %v1914, 1.442695
        %v1925 = vpow.pop %v1924
        %v1926 = vmul.f32 %v1915, 1.442695
        %v1927 = vpow.pop %v1926
        %v1928 = vmul.f32 %v1916, 1.442695
        %v1929 = vpow.pop %v1928
        %v1930 = vmul.f32 %v1917, 1.442695
        %v1931 = vpow.pop %v1930
        %v1932 = vmul.f32 %v1918, 1.442695
        %v1933 = vpow.pop %v1932
        %v1934 = vmul.f32 %v1919, 1.442695
        %v1935 = vpow.pop %v1934
        %v1936 = vmul.f32 %v1920, 1.442695
        %v1937 = vpow.pop %v1936
        %v1938 = vmul.f32 %v1921, 1.442695
        %v1939 = vpow.pop %v1938
        %v1940 = vsel %vm1219, %v1923, 0.0
        %1941 = vadd.xlane.f32.xlu0 %v1940
        %v1942 = vpop.xlane.xlu0 %1941
        %v1943 = vsel %vm1219, %v1925, 0.0
        %1944 = vadd.xlane.f32.xlu0 %v1943
        %v1945 = vpop.xlane.xlu0 %1944
        %v1946 = vsel %vm1219, %v1927, 0.0
        %1947 = vadd.xlane.f32.xlu0 %v1946
        %v1948 = vpop.xlane.xlu0 %1947
        %v1949 = vsel %vm1219, %v1929, 0.0
        %1950 = vadd.xlane.f32.xlu0 %v1949
        %v1951 = vpop.xlane.xlu0 %1950
        %v1952 = vsel %vm1219, %v1931, 0.0
        %1953 = vadd.xlane.f32.xlu0 %v1952
        %v1954 = vpop.xlane.xlu0 %1953
        %v1955 = vsel %vm1219, %v1933, 0.0
        %1956 = vadd.xlane.f32.xlu0 %v1955
        %v1957 = vpop.xlane.xlu0 %1956
        %v1958 = vsel %vm1219, %v1935, 0.0
        %1959 = vadd.xlane.f32.xlu0 %v1958
        %v1960 = vpop.xlane.xlu0 %1959
        %v1961 = vsel %vm1219, %v1937, 0.0
        %1962 = vadd.xlane.f32.xlu0 %v1961
        %v1963 = vpop.xlane.xlu0 %1962
        %v1964 = vsel %vm1219, %v1939, 0.0
        %1965 = vadd.xlane.f32.xlu0 %v1964
        %v1966 = vpop.xlane.xlu0 %1965
        %v1967 = vrcp.pop %v1942
        %v1968 = vrcp.pop %v1945
        %v1969 = vrcp.pop %v1948
        %v1970 = vrcp.pop %v1951
        %v1971 = vrcp.pop %v1954
        %v1972 = vrcp.pop %v1957
        %v1973 = vrcp.pop %v1960
        %v1974 = vrcp.pop %v1963
        %v1975 = vrcp.pop %v1966
        %v1976 = vpack.c.bf16 %v1925, %v1923
        %v1977 = vpack.c.bf16 %v1929, %v1927
        %v1978 = vpack.c.bf16 %v1933, %v1931
        %v1979 = vpack.c.bf16 %v1937, %v1935
        %v1980 = vpack.c.bf16 %v1939, %v1939
        %1981 = vrot.lane.b32.xlu0 %v1096, 48
        %v1982 = vpop.permute.xlu0 %1981
        %1983 = vrot.lane.b32.xlu0 %v1097, 48
        %v1984 = vpop.permute.xlu0 %1983
        %1985 = vrot.lane.b32.xlu0 %v1098, 48
        %v1986 = vpop.permute.xlu0 %1985
        %1987 = vrot.lane.b32.xlu0 %v1099, 48
        %v1988 = vpop.permute.xlu0 %1987
        %1989 = vrot.lane.b32.xlu0 %v1100, 48
        %v1990 = vpop.permute.xlu0 %1989
        %v1996 = vsel %vm1219, %v1976, 0
        %v1999 = vsel %vm1219, %v1977, 0
        %v2002 = vsel %vm1219, %v1978, 0
        %v2005 = vsel %vm1219, %v1979, 0
        %v2008 = vsel %vm1219, %v1980, 0
        %v2011 = vsel %vm1344, %v1990, 0
        %2013 = vmatprep.subr.bf16.mxu0 0
        %2014 = vmatpush1.bf16.msra.mxu0 0
        %2015 = vmatprep.subr.bf16.mxu0 0
        %2016 = vmatpush1.bf16.msra.mxu0 0
        %2017 = vmatprep.subr.bf16.mxu0 0
        %2018 = vmatpush1.bf16.msra.mxu0 0
        %2019 = vmatprep.subr.bf16.mxu0 0
        %2020 = vmatpush1.bf16.msra.mxu0 %v2011
        %2021 = vmatprep.subr.bf16.mxu0 0
        %2022 = vmatpush1.bf16.msra.mxu0 %v1988
        %2023 = vmatprep.subr.bf16.mxu0 0
        %2024 = vmatpush1.bf16.msra.mxu0 %v1986
        %2025 = vmatprep.subr.bf16.mxu0 0
        %2026 = vmatpush1.bf16.msra.mxu0 %v1984
        %2027 = vmatprep.subr.bf16.mxu0 0
        %2028 = vmatpush1.bf16.msra.mxu0 %v1982
        %2029 = vmatprep.subr.bf16.mxu0 0
        %2030 = vmatpush2.bf16.msra.mxu0 0
        %2031 = vmatprep.subr.bf16.mxu0 0
        %2032 = vmatpush2.bf16.msra.mxu0 0
        %2033 = vmatprep.subr.bf16.mxu0 0
        %2034 = vmatpush2.bf16.msra.mxu0 0
        %2035 = vmatprep.subr.bf16.mxu0 0
        %2036 = vmatpush2.bf16.msra.mxu0 0
        %2037 = vmatprep.subr.bf16.mxu0 0
        %2038 = vmatpush2.bf16.msra.mxu0 0
        %2039 = vmatprep.subr.bf16.mxu0 0
        %2040 = vmatpush2.bf16.msra.mxu0 0
        %2041 = vmatprep.subr.bf16.mxu0 0
        %2042 = vmatpush2.bf16.msra.mxu0 0
        %2043 = vmatprep.subr.bf16.mxu0 0
        %2044 = vmatpush2.bf16.msra.mxu0 0
        %2045 = vmatprep.mubr.bf16.mxu0 0
        %2046 = vmatmul.mubr.bf16.gmra.mxu0 %v1996
        %v2047 = vpop.f32.mrf.mxu0
        %v2048 = vadd.f32 0.0, %v2047
        %v2049 = vpop.f32.mrf.mxu0
        %v2050 = vpop.f32.mrf.mxu0
        %v2051 = vadd.f32 0.0, %v2050
        %v2052 = vpop.f32.mrf.mxu0
        %2053 = vmatprep.mubr.bf16.mxu0 0
        %2054 = vmatmul.mubr.bf16.gmra.mxu0 %v1999
        %v2055 = vpop.f32.mrf.mxu0
        %v2056 = vadd.f32 0.0, %v2055
        %v2057 = vpop.f32.mrf.mxu0
        %v2058 = vpop.f32.mrf.mxu0
        %v2059 = vadd.f32 0.0, %v2058
        %v2060 = vpop.f32.mrf.mxu0
        %2061 = vmatprep.mubr.bf16.mxu0 0
        %2062 = vmatmul.mubr.bf16.gmra.mxu0 %v2002
        %v2063 = vpop.f32.mrf.mxu0
        %v2064 = vadd.f32 0.0, %v2063
        %v2065 = vpop.f32.mrf.mxu0
        %v2066 = vpop.f32.mrf.mxu0
        %v2067 = vadd.f32 0.0, %v2066
        %v2068 = vpop.f32.mrf.mxu0
        %2069 = vmatprep.mubr.bf16.mxu0 0
        %2070 = vmatmul.mubr.bf16.gmra.mxu0 %v2005
        %v2071 = vpop.f32.mrf.mxu0
        %v2072 = vadd.f32 0.0, %v2071
        %v2073 = vpop.f32.mrf.mxu0
        %v2074 = vpop.f32.mrf.mxu0
        %v2075 = vadd.f32 0.0, %v2074
        %v2076 = vpop.f32.mrf.mxu0
        %2077 = vmatprep.mubr.bf16.mxu0 0
        %2078 = vmatmul.mubr.bf16.gmra.mxu0 %v2008
        %v2079 = vpop.f32.mrf.mxu0
        %v2080 = vadd.f32 0.0, %v2079
        %v2081 = vpop.f32.mrf.mxu0
        %v2082 = vpop.f32.mrf.mxu0
        %v2083 = vpop.f32.mrf.mxu0
        %2084 = vdwg.mxu0
        %v2085 = vmul.f32 %v2048, %v1967
        %v2086 = vmul.f32 %v2051, %v1968
        %v2087 = vmul.f32 %v2056, %v1969
        %v2088 = vmul.f32 %v2059, %v1970
        %v2089 = vmul.f32 %v2064, %v1971
        %v2090 = vmul.f32 %v2067, %v1972
        %v2091 = vmul.f32 %v2072, %v1973
        %v2092 = vmul.f32 %v2075, %v1974
        %v2093 = vmul.f32 %v2080, %v1975
        %2094 = vrot.lane.b32.xlu0 %v1091, 104
        %v2095 = vpop.permute.xlu0 %2094
        %2096 = vrot.lane.b32.xlu0 %v1092, 104
        %v2097 = vpop.permute.xlu0 %2096
        %2098 = vrot.lane.b32.xlu0 %v1093, 104
        %v2099 = vpop.permute.xlu0 %2098
        %2100 = vrot.lane.b32.xlu0 %v1094, 104
        %v2101 = vpop.permute.xlu0 %2100
        %2102 = vrot.lane.b32.xlu0 %v1095, 104
        %v2103 = vpop.permute.xlu0 %2102
        %2104 = vrot.lane.b32.xlu0 %v1096, 72
        %v2105 = vpop.permute.xlu0 %2104
        %2106 = vrot.lane.b32.xlu0 %v1097, 72
        %v2107 = vpop.permute.xlu0 %2106
        %2108 = vrot.lane.b32.xlu0 %v1098, 72
        %v2109 = vpop.permute.xlu0 %2108
        %2110 = vrot.lane.b32.xlu0 %v1099, 72
        %v2111 = vpop.permute.xlu0 %2110
        %2112 = vrot.lane.b32.xlu0 %v1100, 72
        %v2113 = vpop.permute.xlu0 %2112
        %v2115 = vsel %vm1116, %v2095, 0
        %v2118 = vsel %vm1116, %v2097, 0
        %v2121 = vsel %vm1116, %v2099, 0
        %v2124 = vsel %vm1116, %v2101, 0
        %v2127 = vsel %vm1116, %v2103, 0
        %v2130 = vsel %vm1116, %v2105, 0
        %v2133 = vsel %vm1116, %v2107, 0
        %v2136 = vsel %vm1116, %v2109, 0
        %v2139 = vsel %vm1116, %v2111, 0
        %v2142 = vsel %vm1116, %v2113, 0
        %2144 = vmatprep.subr.bf16.mxu0 0
        %2145 = vmatpush1.bf16.xpose.msra.mxu0 0
        %2146 = vmatprep.subr.bf16.mxu0 0
        %2147 = vmatpush1.bf16.xpose.msra.mxu0 0
        %2148 = vmatprep.subr.bf16.mxu0 0
        %2149 = vmatpush1.bf16.xpose.msra.mxu0 0
        %2150 = vmatprep.subr.bf16.mxu0 0
        %2151 = vmatpush1.bf16.xpose.msra.mxu0 %v2142
        %2152 = vmatprep.subr.bf16.mxu0 0
        %2153 = vmatpush1.bf16.xpose.msra.mxu0 %v2139
        %2154 = vmatprep.subr.bf16.mxu0 0
        %2155 = vmatpush1.bf16.xpose.msra.mxu0 %v2136
        %2156 = vmatprep.subr.bf16.mxu0 0
        %2157 = vmatpush1.bf16.xpose.msra.mxu0 %v2133
        %2158 = vmatprep.subr.bf16.mxu0 0
        %2159 = vmatpush1.bf16.xpose.msra.mxu0 %v2130
        %2160 = vmatprep.subr.bf16.mxu0 0
        %2161 = vmatpush2.bf16.xpose.msra.mxu0 0
        %2162 = vmatprep.subr.bf16.mxu0 0
        %2163 = vmatpush2.bf16.xpose.msra.mxu0 0
        %2164 = vmatprep.subr.bf16.mxu0 0
        %2165 = vmatpush2.bf16.xpose.msra.mxu0 0
        %2166 = vmatprep.subr.bf16.mxu0 0
        %2167 = vmatpush2.bf16.xpose.msra.mxu0 0
        %2168 = vmatprep.subr.bf16.mxu0 0
        %2169 = vmatpush2.bf16.xpose.msra.mxu0 0
        %2170 = vmatprep.subr.bf16.mxu0 0
        %2171 = vmatpush2.bf16.xpose.msra.mxu0 0
        %2172 = vmatprep.subr.bf16.mxu0 0
        %2173 = vmatpush2.bf16.xpose.msra.mxu0 0
        %2174 = vmatprep.subr.bf16.mxu0 0
        %2175 = vmatpush2.bf16.xpose.msra.mxu0 0
        %2176 = vmatprep.mubr.bf16.mxu0 0
        %2177 = vmatmul.mubr.bf16.gmra.mxu0 %v2115
        %v2178 = vpop.f32.mrf.mxu0
        %v2179 = vadd.f32 %v957, %v2178
        %v2180 = vpop.f32.mrf.mxu0
        %v2181 = vpop.f32.mrf.mxu0
        %v2182 = vadd.f32 %v958, %v2181
        %v2183 = vpop.f32.mrf.mxu0
        %2184 = vmatprep.mubr.bf16.mxu0 0
        %2185 = vmatmul.mubr.bf16.gmra.mxu0 %v2118
        %v2186 = vpop.f32.mrf.mxu0
        %v2187 = vadd.f32 %v959, %v2186
        %v2188 = vpop.f32.mrf.mxu0
        %v2189 = vpop.f32.mrf.mxu0
        %v2190 = vadd.f32 %v960, %v2189
        %v2191 = vpop.f32.mrf.mxu0
        %2192 = vmatprep.mubr.bf16.mxu0 0
        %2193 = vmatmul.mubr.bf16.gmra.mxu0 %v2121
        %v2194 = vpop.f32.mrf.mxu0
        %v2195 = vadd.f32 %v961, %v2194
        %v2196 = vpop.f32.mrf.mxu0
        %v2197 = vpop.f32.mrf.mxu0
        %v2198 = vadd.f32 %v962, %v2197
        %v2199 = vpop.f32.mrf.mxu0
        %2200 = vmatprep.mubr.bf16.mxu0 0
        %2201 = vmatmul.mubr.bf16.gmra.mxu0 %v2124
        %v2202 = vpop.f32.mrf.mxu0
        %v2203 = vadd.f32 %v963, %v2202
        %v2204 = vpop.f32.mrf.mxu0
        %v2205 = vpop.f32.mrf.mxu0
        %v2206 = vadd.f32 %v964, %v2205
        %v2207 = vpop.f32.mrf.mxu0
        %2208 = vmatprep.mubr.bf16.mxu0 0
        %2209 = vmatmul.mubr.bf16.gmra.mxu0 %v2127
        %v2210 = vpop.f32.mrf.mxu0
        %v2211 = vadd.f32 %v965, %v2210
        %v2212 = vpop.f32.mrf.mxu0
        %v2213 = vpop.f32.mrf.mxu0
        %v2214 = vpop.f32.mrf.mxu0
        %2215 = vdwg.mxu0
        %v2216 = vsel %vm1219, %v2179, -inf
        %2217 = vmax.xlane.f32.xlu0 %v2216
        %v2218 = vpop.xlane.xlu0 %2217
        %v2219 = vsel %vm1219, %v2182, -inf
        %2220 = vmax.xlane.f32.xlu0 %v2219
        %v2221 = vpop.xlane.xlu0 %2220
        %v2222 = vsel %vm1219, %v2187, -inf
        %2223 = vmax.xlane.f32.xlu0 %v2222
        %v2224 = vpop.xlane.xlu0 %2223
        %v2225 = vsel %vm1219, %v2190, -inf
        %2226 = vmax.xlane.f32.xlu0 %v2225
        %v2227 = vpop.xlane.xlu0 %2226
        %v2228 = vsel %vm1219, %v2195, -inf
        %2229 = vmax.xlane.f32.xlu0 %v2228
        %v2230 = vpop.xlane.xlu0 %2229
        %v2231 = vsel %vm1219, %v2198, -inf
        %2232 = vmax.xlane.f32.xlu0 %v2231
        %v2233 = vpop.xlane.xlu0 %2232
        %v2234 = vsel %vm1219, %v2203, -inf
        %2235 = vmax.xlane.f32.xlu0 %v2234
        %v2236 = vpop.xlane.xlu0 %2235
        %v2237 = vsel %vm1219, %v2206, -inf
        %2238 = vmax.xlane.f32.xlu0 %v2237
        %v2239 = vpop.xlane.xlu0 %2238
        %v2240 = vsel %vm1219, %v2211, -inf
        %2241 = vmax.xlane.f32.xlu0 %v2240
        %v2242 = vpop.xlane.xlu0 %2241
        %v2243 = vsub.f32 %v2179, %v2218
        %v2244 = vsub.f32 %v2182, %v2221
        %v2245 = vsub.f32 %v2187, %v2224
        %v2246 = vsub.f32 %v2190, %v2227
        %v2247 = vsub.f32 %v2195, %v2230
        %v2248 = vsub.f32 %v2198, %v2233
        %v2249 = vsub.f32 %v2203, %v2236
        %v2250 = vsub.f32 %v2206, %v2239
        %v2251 = vsub.f32 %v2211, %v2242
        %v2252 = vmul.f32 %v2243, 1.442695
        %v2253 = vpow.pop %v2252
        %v2254 = vmul.f32 %v2244, 1.442695
        %v2255 = vpow.pop %v2254
        %v2256 = vmul.f32 %v2245, 1.442695
        %v2257 = vpow.pop %v2256
        %v2258 = vmul.f32 %v2246, 1.442695
        %v2259 = vpow.pop %v2258
        %v2260 = vmul.f32 %v2247, 1.442695
        %v2261 = vpow.pop %v2260
        %v2262 = vmul.f32 %v2248, 1.442695
        %v2263 = vpow.pop %v2262
        %v2264 = vmul.f32 %v2249, 1.442695
        %v2265 = vpow.pop %v2264
        %v2266 = vmul.f32 %v2250, 1.442695
        %v2267 = vpow.pop %v2266
        %v2268 = vmul.f32 %v2251, 1.442695
        %v2269 = vpow.pop %v2268
        %v2270 = vsel %vm1219, %v2253, 0.0
        %2271 = vadd.xlane.f32.xlu0 %v2270
        %v2272 = vpop.xlane.xlu0 %2271
        %v2273 = vsel %vm1219, %v2255, 0.0
        %2274 = vadd.xlane.f32.xlu0 %v2273
        %v2275 = vpop.xlane.xlu0 %2274
        %v2276 = vsel %vm1219, %v2257, 0.0
        %2277 = vadd.xlane.f32.xlu0 %v2276
        %v2278 = vpop.xlane.xlu0 %2277
        %v2279 = vsel %vm1219, %v2259, 0.0
        %2280 = vadd.xlane.f32.xlu0 %v2279
        %v2281 = vpop.xlane.xlu0 %2280
        %v2282 = vsel %vm1219, %v2261, 0.0
        %2283 = vadd.xlane.f32.xlu0 %v2282
        %v2284 = vpop.xlane.xlu0 %2283
        %v2285 = vsel %vm1219, %v2263, 0.0
        %2286 = vadd.xlane.f32.xlu0 %v2285
        %v2287 = vpop.xlane.xlu0 %2286
        %v2288 = vsel %vm1219, %v2265, 0.0
        %2289 = vadd.xlane.f32.xlu0 %v2288
        %v2290 = vpop.xlane.xlu0 %2289
        %v2291 = vsel %vm1219, %v2267, 0.0
        %2292 = vadd.xlane.f32.xlu0 %v2291
        %v2293 = vpop.xlane.xlu0 %2292
        %v2294 = vsel %vm1219, %v2269, 0.0
        %2295 = vadd.xlane.f32.xlu0 %v2294
        %v2296 = vpop.xlane.xlu0 %2295
        %v2297 = vrcp.pop %v2272
        %v2298 = vrcp.pop %v2275
        %v2299 = vrcp.pop %v2278
        %v2300 = vrcp.pop %v2281
        %v2301 = vrcp.pop %v2284
        %v2302 = vrcp.pop %v2287
        %v2303 = vrcp.pop %v2290
        %v2304 = vrcp.pop %v2293
        %v2305 = vrcp.pop %v2296
        %v2306 = vpack.c.bf16 %v2255, %v2253
        %v2307 = vpack.c.bf16 %v2259, %v2257
        %v2308 = vpack.c.bf16 %v2263, %v2261
        %v2309 = vpack.c.bf16 %v2267, %v2265
        %v2310 = vpack.c.bf16 %v2269, %v2269
        %2311 = vrot.lane.b32.xlu0 %v1096, 40
        %v2312 = vpop.permute.xlu0 %2311
        %2313 = vrot.lane.b32.xlu0 %v1097, 40
        %v2314 = vpop.permute.xlu0 %2313
        %2315 = vrot.lane.b32.xlu0 %v1098, 40
        %v2316 = vpop.permute.xlu0 %2315
        %2317 = vrot.lane.b32.xlu0 %v1099, 40
        %v2318 = vpop.permute.xlu0 %2317
        %2319 = vrot.lane.b32.xlu0 %v1100, 40
        %v2320 = vpop.permute.xlu0 %2319
        %v2326 = vsel %vm1219, %v2306, 0
        %v2329 = vsel %vm1219, %v2307, 0
        %v2332 = vsel %vm1219, %v2308, 0
        %v2335 = vsel %vm1219, %v2309, 0
        %v2338 = vsel %vm1219, %v2310, 0
        %v2341 = vsel %vm1344, %v2320, 0
        %2343 = vmatprep.subr.bf16.mxu0 0
        %2344 = vmatpush1.bf16.msra.mxu0 0
        %2345 = vmatprep.subr.bf16.mxu0 0
        %2346 = vmatpush1.bf16.msra.mxu0 0
        %2347 = vmatprep.subr.bf16.mxu0 0
        %2348 = vmatpush1.bf16.msra.mxu0 0
        %2349 = vmatprep.subr.bf16.mxu0 0
        %2350 = vmatpush1.bf16.msra.mxu0 %v2341
        %2351 = vmatprep.subr.bf16.mxu0 0
        %2352 = vmatpush1.bf16.msra.mxu0 %v2318
        %2353 = vmatprep.subr.bf16.mxu0 0
        %2354 = vmatpush1.bf16.msra.mxu0 %v2316
        %2355 = vmatprep.subr.bf16.mxu0 0
        %2356 = vmatpush1.bf16.msra.mxu0 %v2314
        %2357 = vmatprep.subr.bf16.mxu0 0
        %2358 = vmatpush1.bf16.msra.mxu0 %v2312
        %2359 = vmatprep.subr.bf16.mxu0 0
        %2360 = vmatpush2.bf16.msra.mxu0 0
        %2361 = vmatprep.subr.bf16.mxu0 0
        %2362 = vmatpush2.bf16.msra.mxu0 0
        %2363 = vmatprep.subr.bf16.mxu0 0
        %2364 = vmatpush2.bf16.msra.mxu0 0
        %2365 = vmatprep.subr.bf16.mxu0 0
        %2366 = vmatpush2.bf16.msra.mxu0 0
        %2367 = vmatprep.subr.bf16.mxu0 0
        %2368 = vmatpush2.bf16.msra.mxu0 0
        %2369 = vmatprep.subr.bf16.mxu0 0
        %2370 = vmatpush2.bf16.msra.mxu0 0
        %2371 = vmatprep.subr.bf16.mxu0 0
        %2372 = vmatpush2.bf16.msra.mxu0 0
        %2373 = vmatprep.subr.bf16.mxu0 0
        %2374 = vmatpush2.bf16.msra.mxu0 0
        %2375 = vmatprep.mubr.bf16.mxu0 0
        %2376 = vmatmul.mubr.bf16.gmra.mxu0 %v2326
        %v2377 = vpop.f32.mrf.mxu0
        %v2378 = vadd.f32 0.0, %v2377
        %v2379 = vpop.f32.mrf.mxu0
        %v2380 = vpop.f32.mrf.mxu0
        %v2381 = vadd.f32 0.0, %v2380
        %v2382 = vpop.f32.mrf.mxu0
        %2383 = vmatprep.mubr.bf16.mxu0 0
        %2384 = vmatmul.mubr.bf16.gmra.mxu0 %v2329
        %v2385 = vpop.f32.mrf.mxu0
        %v2386 = vadd.f32 0.0, %v2385
        %v2387 = vpop.f32.mrf.mxu0
        %v2388 = vpop.f32.mrf.mxu0
        %v2389 = vadd.f32 0.0, %v2388
        %v2390 = vpop.f32.mrf.mxu0
        %2391 = vmatprep.mubr.bf16.mxu0 0
        %2392 = vmatmul.mubr.bf16.gmra.mxu0 %v2332
        %v2393 = vpop.f32.mrf.mxu0
        %v2394 = vadd.f32 0.0, %v2393
        %v2395 = vpop.f32.mrf.mxu0
        %v2396 = vpop.f32.mrf.mxu0
        %v2397 = vadd.f32 0.0, %v2396
        %v2398 = vpop.f32.mrf.mxu0
        %2399 = vmatprep.mubr.bf16.mxu0 0
        %2400 = vmatmul.mubr.bf16.gmra.mxu0 %v2335
        %v2401 = vpop.f32.mrf.mxu0
        %v2402 = vadd.f32 0.0, %v2401
        %v2403 = vpop.f32.mrf.mxu0
        %v2404 = vpop.f32.mrf.mxu0
        %v2405 = vadd.f32 0.0, %v2404
        %v2406 = vpop.f32.mrf.mxu0
        %2407 = vmatprep.mubr.bf16.mxu0 0
        %2408 = vmatmul.mubr.bf16.gmra.mxu0 %v2338
        %v2409 = vpop.f32.mrf.mxu0
        %v2410 = vadd.f32 0.0, %v2409
        %v2411 = vpop.f32.mrf.mxu0
        %v2412 = vpop.f32.mrf.mxu0
        %v2413 = vpop.f32.mrf.mxu0
        %2414 = vdwg.mxu0
        %v2415 = vmul.f32 %v2378, %v2297
        %v2416 = vmul.f32 %v2381, %v2298
        %v2417 = vmul.f32 %v2386, %v2299
        %v2418 = vmul.f32 %v2389, %v2300
        %v2419 = vmul.f32 %v2394, %v2301
        %v2420 = vmul.f32 %v2397, %v2302
        %v2421 = vmul.f32 %v2402, %v2303
        %v2422 = vmul.f32 %v2405, %v2304
        %v2423 = vmul.f32 %v2410, %v2305
        %2433 = vrot.lane.b32.xlu0 %v1755, 8
        %v2434 = vpop.permute.xlu0 %2433
        %2435 = vrot.lane.b32.xlu0 %v1756, 8
        %v2436 = vpop.permute.xlu0 %2435
        %2437 = vrot.lane.b32.xlu0 %v1757, 8
        %v2438 = vpop.permute.xlu0 %2437
        %2439 = vrot.lane.b32.xlu0 %v1758, 8
        %v2440 = vpop.permute.xlu0 %2439
        %2441 = vrot.lane.b32.xlu0 %v1759, 8
        %v2442 = vpop.permute.xlu0 %2441
        %2443 = vrot.lane.b32.xlu0 %v1760, 8
        %v2444 = vpop.permute.xlu0 %2443
        %2445 = vrot.lane.b32.xlu0 %v1761, 8
        %v2446 = vpop.permute.xlu0 %2445
        %2447 = vrot.lane.b32.xlu0 %v1762, 8
        %v2448 = vpop.permute.xlu0 %2447
        %2449 = vrot.lane.b32.xlu0 %v1763, 8
        %v2450 = vpop.permute.xlu0 %2449
        %2469 = vrot.lane.b32.xlu0 %v2085, 16
        %v2470 = vpop.permute.xlu0 %2469
        %2471 = vrot.lane.b32.xlu0 %v2086, 16
        %v2472 = vpop.permute.xlu0 %2471
        %2473 = vrot.lane.b32.xlu0 %v2087, 16
        %v2474 = vpop.permute.xlu0 %2473
        %2475 = vrot.lane.b32.xlu0 %v2088, 16
        %v2476 = vpop.permute.xlu0 %2475
        %2477 = vrot.lane.b32.xlu0 %v2089, 16
        %v2478 = vpop.permute.xlu0 %2477
        %2479 = vrot.lane.b32.xlu0 %v2090, 16
        %v2480 = vpop.permute.xlu0 %2479
        %2481 = vrot.lane.b32.xlu0 %v2091, 16
        %v2482 = vpop.permute.xlu0 %2481
        %2483 = vrot.lane.b32.xlu0 %v2092, 16
        %v2484 = vpop.permute.xlu0 %2483
        %2485 = vrot.lane.b32.xlu0 %v2093, 16
        %v2486 = vpop.permute.xlu0 %2485
        %2505 = vrot.lane.b32.xlu0 %v2415, 24
        %v2506 = vpop.permute.xlu0 %2505
        %2507 = vrot.lane.b32.xlu0 %v2416, 24
        %v2508 = vpop.permute.xlu0 %2507
        %2509 = vrot.lane.b32.xlu0 %v2417, 24
        %v2510 = vpop.permute.xlu0 %2509
        %2511 = vrot.lane.b32.xlu0 %v2418, 24
        %v2512 = vpop.permute.xlu0 %2511
        %2513 = vrot.lane.b32.xlu0 %v2419, 24
        %v2514 = vpop.permute.xlu0 %2513
        %2515 = vrot.lane.b32.xlu0 %v2420, 24
        %v2516 = vpop.permute.xlu0 %2515
        %2517 = vrot.lane.b32.xlu0 %v2421, 24
        %v2518 = vpop.permute.xlu0 %2517
        %2519 = vrot.lane.b32.xlu0 %v2422, 24
        %v2520 = vpop.permute.xlu0 %2519
        %2521 = vrot.lane.b32.xlu0 %v2423, 24
        %v2522 = vpop.permute.xlu0 %2521
        %v2532 = vsel %vm1116, %v1420, %v2434
        %v2533 = vsel %vm1116, %v1421, %v2436
        %v2534 = vsel %vm1116, %v1422, %v2438
        %v2535 = vsel %vm1116, %v1423, %v2440
        %v2536 = vsel %vm1116, %v1424, %v2442
        %v2537 = vsel %vm1116, %v1425, %v2444
        %v2538 = vsel %vm1116, %v1426, %v2446
        %v2539 = vsel %vm1116, %v1427, %v2448
        %v2540 = vsel %vm1116, %v1428, %v2450
        %vm2541 = vcmask 130048
        %v2542 = vsel %vm2541, %v2532, %v2470
        %v2543 = vsel %vm2541, %v2533, %v2472
        %v2544 = vsel %vm2541, %v2534, %v2474
        %v2545 = vsel %vm2541, %v2535, %v2476
        %v2546 = vsel %vm2541, %v2536, %v2478
        %v2547 = vsel %vm2541, %v2537, %v2480
        %v2548 = vsel %vm2541, %v2538, %v2482
        %v2549 = vsel %vm2541, %v2539, %v2484
        %v2550 = vsel %vm2541, %v2540, %v2486
        %vm2551 = vcmask 195584
        %v2552 = vsel %vm2551, %v2542, %v2506
        %v2553 = vsel %vm2551, %v2543, %v2508
        %v2554 = vsel %vm2551, %v2544, %v2510
        %v2555 = vsel %vm2551, %v2545, %v2512
        %v2556 = vsel %vm2551, %v2546, %v2514
        %v2557 = vsel %vm2551, %v2547, %v2516
        %v2558 = vsel %vm2551, %v2548, %v2518
        %v2559 = vsel %vm2551, %v2549, %v2520
        %v2560 = vsel %vm2551, %v2550, %v2522
        %v2561 = vpack.c.bf16 %v2553, %v2552
        %v2562 = vpack.c.bf16 %v2555, %v2554
        %v2563 = vpack.c.bf16 %v2557, %v2556
        %v2564 = vpack.c.bf16 %v2559, %v2558
        %v2565 = vpack.c.bf16 %v2560, %v2560
        %v2566 = vld [vmem:[%s731] sm:$0xf]
        %v2567 = vld [vmem:[%s731 + $0x4] sm:$0xf]
        %v2568 = vld [vmem:[%s731 + $0x8] sm:$0xf]
        %v2569 = vld [vmem:[%s731 + $0xc] sm:$0xf]
        %v2570 = vld [vmem:[%s734] sm:$0x1]
        %v2572 = vlaneseq
        %v2573 = vshrl.u32 %v2572, 7
        %v2574 = vsub.s32 0, %v2573
        %v2575 = vrot.slane %v2570, %v2574
        %v2581 = vunpack.c.l.b16 %v2566
        %v2582 = vunpack.c.l.b16 %v2567
        %v2583 = vunpack.c.l.b16 %v2568
        %v2584 = vunpack.c.l.b16 %v2569
        %v2585 = vpack.c.b16 %v2582, %v2581
        %v2586 = vpack.c.b16 %v2584, %v2583
        %v2590 = vsel %vm994, %v2561, 0
        %v2593 = vsel %vm994, %v2562, 0
        %v2596 = vsel %vm994, %v2563, 0
        %v2599 = vsel %vm994, %v2564, 0
        %v2602 = vsel %vm994, %v2565, 0
        %2604 = vmatprep.subr.bf16.mxu0 0
        %2605 = vmatpush1.bf16.msra.mxu0 0
        %2606 = vmatprep.subr.bf16.mxu0 0
        %2607 = vmatpush1.bf16.msra.mxu0 0
        %2608 = vmatprep.subr.bf16.mxu0 0
        %2609 = vmatpush1.bf16.msra.mxu0 0
        %2610 = vmatprep.subr.bf16.mxu0 0
        %2611 = vmatpush1.bf16.msra.mxu0 0
        %2612 = vmatprep.subr.bf16.mxu0 0
        %2613 = vmatpush1.bf16.msra.mxu0 0
        %2614 = vmatprep.subr.bf16.mxu0 0
        %2615 = vmatpush1.bf16.msra.mxu0 0
        %2616 = vmatprep.subr.bf16.mxu0 0
        %2617 = vmatpush1.bf16.msra.mxu0 %v2586
        %2618 = vmatprep.subr.bf16.mxu0 0
        %2619 = vmatpush1.bf16.msra.mxu0 %v2585
        %2620 = vmatprep.subr.bf16.mxu0 0
        %2621 = vmatpush2.bf16.msra.mxu0 0
        %2622 = vmatprep.subr.bf16.mxu0 0
        %2623 = vmatpush2.bf16.msra.mxu0 0
        %2624 = vmatprep.subr.bf16.mxu0 0
        %2625 = vmatpush2.bf16.msra.mxu0 0
        %2626 = vmatprep.subr.bf16.mxu0 0
        %2627 = vmatpush2.bf16.msra.mxu0 0
        %2628 = vmatprep.subr.bf16.mxu0 0
        %2629 = vmatpush2.bf16.msra.mxu0 0
        %2630 = vmatprep.subr.bf16.mxu0 0
        %2631 = vmatpush2.bf16.msra.mxu0 0
        %2632 = vmatprep.subr.bf16.mxu0 0
        %2633 = vmatpush2.bf16.msra.mxu0 0
        %2634 = vmatprep.subr.bf16.mxu0 0
        %2635 = vmatpush2.bf16.msra.mxu0 0
        %2636 = vmatprep.mubr.bf16.mxu0 0
        %2637 = vmatmul.mubr.bf16.gmra.mxu0 %v2590
        %v2638 = vpop.f32.mrf.mxu0
        %v2639 = vadd.f32 %v2575, %v2638
        %v2640 = vpop.f32.mrf.mxu0
        %v2641 = vpop.f32.mrf.mxu0
        %v2642 = vadd.f32 %v2575, %v2641
        %v2643 = vpop.f32.mrf.mxu0
        %2644 = vmatprep.mubr.bf16.mxu0 0
        %2645 = vmatmul.mubr.bf16.gmra.mxu0 %v2593
        %v2646 = vpop.f32.mrf.mxu0
        %v2647 = vadd.f32 %v2575, %v2646
        %v2648 = vpop.f32.mrf.mxu0
        %v2649 = vpop.f32.mrf.mxu0
        %v2650 = vadd.f32 %v2575, %v2649
        %v2651 = vpop.f32.mrf.mxu0
        %2652 = vmatprep.mubr.bf16.mxu0 0
        %2653 = vmatmul.mubr.bf16.gmra.mxu0 %v2596
        %v2654 = vpop.f32.mrf.mxu0
        %v2655 = vadd.f32 %v2575, %v2654
        %v2656 = vpop.f32.mrf.mxu0
        %v2657 = vpop.f32.mrf.mxu0
        %v2658 = vadd.f32 %v2575, %v2657
        %v2659 = vpop.f32.mrf.mxu0
        %2660 = vmatprep.mubr.bf16.mxu0 0
        %2661 = vmatmul.mubr.bf16.gmra.mxu0 %v2599
        %v2662 = vpop.f32.mrf.mxu0
        %v2663 = vadd.f32 %v2575, %v2662
        %v2664 = vpop.f32.mrf.mxu0
        %v2665 = vpop.f32.mrf.mxu0
        %v2666 = vadd.f32 %v2575, %v2665
        %v2667 = vpop.f32.mrf.mxu0
        %2668 = vmatprep.mubr.bf16.mxu0 0
        %2669 = vmatmul.mubr.bf16.gmra.mxu0 %v2602
        %v2670 = vpop.f32.mrf.mxu0
        %v2671 = vadd.f32 %v2575, %v2670
        %v2672 = vpop.f32.mrf.mxu0
        %v2673 = vpop.f32.mrf.mxu0
        %v2674 = vpop.f32.mrf.mxu0
        %2675 = vdwg.mxu0
        %v2676 = vadd.f32 %v948, %v2639
        %v2677 = vadd.f32 %v949, %v2642
        %v2678 = vadd.f32 %v950, %v2647
        %v2679 = vadd.f32 %v951, %v2650
        %v2680 = vadd.f32 %v952, %v2655
        %v2681 = vadd.f32 %v953, %v2658
        %v2682 = vadd.f32 %v954, %v2663
        %v2683 = vadd.f32 %v955, %v2666
        %v2684 = vadd.f32 %v956, %v2671
        %v2685 = vsel %vm994, %v2676, 0.0
        %2686 = vadd.xlane.f32.xlu0 %v2685
        %v2687 = vpop.xlane.xlu0 %2686
        %v2688 = vsel %vm994, %v2677, 0.0
        %2689 = vadd.xlane.f32.xlu0 %v2688
        %v2690 = vpop.xlane.xlu0 %2689
        %v2691 = vsel %vm994, %v2678, 0.0
        %2692 = vadd.xlane.f32.xlu0 %v2691
        %v2693 = vpop.xlane.xlu0 %2692
        %v2694 = vsel %vm994, %v2679, 0.0
        %2695 = vadd.xlane.f32.xlu0 %v2694
        %v2696 = vpop.xlane.xlu0 %2695
        %v2697 = vsel %vm994, %v2680, 0.0
        %2698 = vadd.xlane.f32.xlu0 %v2697
        %v2699 = vpop.xlane.xlu0 %2698
        %v2700 = vsel %vm994, %v2681, 0.0
        %2701 = vadd.xlane.f32.xlu0 %v2700
        %v2702 = vpop.xlane.xlu0 %2701
        %v2703 = vsel %vm994, %v2682, 0.0
        %2704 = vadd.xlane.f32.xlu0 %v2703
        %v2705 = vpop.xlane.xlu0 %2704
        %v2706 = vsel %vm994, %v2683, 0.0
        %2707 = vadd.xlane.f32.xlu0 %v2706
        %v2708 = vpop.xlane.xlu0 %2707
        %v2709 = vsel %vm994, %v2684, 0.0
        %2710 = vadd.xlane.f32.xlu0 %v2709
        %v2711 = vpop.xlane.xlu0 %2710
        %v2712 = vrcp.pop 32.0
        %v2713 = vmul.f32 %v2687, %v2712
        %v2714 = vmul.f32 %v2690, %v2712
        %v2715 = vmul.f32 %v2693, %v2712
        %v2716 = vmul.f32 %v2696, %v2712
        %v2717 = vmul.f32 %v2699, %v2712
        %v2718 = vmul.f32 %v2702, %v2712
        %v2719 = vmul.f32 %v2705, %v2712
        %v2720 = vmul.f32 %v2708, %v2712
        %v2721 = vmul.f32 %v2711, %v2712
        %v2722 = vsub.f32 %v2676, %v2713
        %v2723 = vsub.f32 %v2677, %v2714
        %v2724 = vsub.f32 %v2678, %v2715
        %v2725 = vsub.f32 %v2679, %v2716
        %v2726 = vsub.f32 %v2680, %v2717
        %v2727 = vsub.f32 %v2681, %v2718
        %v2728 = vsub.f32 %v2682, %v2719
        %v2729 = vsub.f32 %v2683, %v2720
        %v2730 = vsub.f32 %v2684, %v2721
        %v2731 = vmul.f32 %v2722, %v2722
        %v2732 = vmul.f32 %v2723, %v2723
        %v2733 = vmul.f32 %v2724, %v2724
        %v2734 = vmul.f32 %v2725, %v2725
        %v2735 = vmul.f32 %v2726, %v2726
        %v2736 = vmul.f32 %v2727, %v2727
        %v2737 = vmul.f32 %v2728, %v2728
        %v2738 = vmul.f32 %v2729, %v2729
        %v2739 = vmul.f32 %v2730, %v2730
        %v2740 = vsel %vm994, %v2731, 0.0
        %2741 = vadd.xlane.f32.xlu0 %v2740
        %v2742 = vpop.xlane.xlu0 %2741
        %v2743 = vsel %vm994, %v2732, 0.0
        %2744 = vadd.xlane.f32.xlu0 %v2743
        %v2745 = vpop.xlane.xlu0 %2744
        %v2746 = vsel %vm994, %v2733, 0.0
        %2747 = vadd.xlane.f32.xlu0 %v2746
        %v2748 = vpop.xlane.xlu0 %2747
        %v2749 = vsel %vm994, %v2734, 0.0
        %2750 = vadd.xlane.f32.xlu0 %v2749
        %v2751 = vpop.xlane.xlu0 %2750
        %v2752 = vsel %vm994, %v2735, 0.0
        %2753 = vadd.xlane.f32.xlu0 %v2752
        %v2754 = vpop.xlane.xlu0 %2753
        %v2755 = vsel %vm994, %v2736, 0.0
        %2756 = vadd.xlane.f32.xlu0 %v2755
        %v2757 = vpop.xlane.xlu0 %2756
        %v2758 = vsel %vm994, %v2737, 0.0
        %2759 = vadd.xlane.f32.xlu0 %v2758
        %v2760 = vpop.xlane.xlu0 %2759
        %v2761 = vsel %vm994, %v2738, 0.0
        %2762 = vadd.xlane.f32.xlu0 %v2761
        %v2763 = vpop.xlane.xlu0 %2762
        %v2764 = vsel %vm994, %v2739, 0.0
        %2765 = vadd.xlane.f32.xlu0 %v2764
        %v2766 = vpop.xlane.xlu0 %2765
        %v2767 = vmul.f32 %v2742, %v2712
        %v2768 = vmul.f32 %v2745, %v2712
        %v2769 = vmul.f32 %v2748, %v2712
        %v2770 = vmul.f32 %v2751, %v2712
        %v2771 = vmul.f32 %v2754, %v2712
        %v2772 = vmul.f32 %v2757, %v2712
        %v2773 = vmul.f32 %v2760, %v2712
        %v2774 = vmul.f32 %v2763, %v2712
        %v2775 = vmul.f32 %v2766, %v2712
        %v2776 = vadd.f32 %v2767, 1e-05
        %v2777 = vadd.f32 %v2768, 1e-05
        %v2778 = vadd.f32 %v2769, 1e-05
        %v2779 = vadd.f32 %v2770, 1e-05
        %v2780 = vadd.f32 %v2771, 1e-05
        %v2781 = vadd.f32 %v2772, 1e-05
        %v2782 = vadd.f32 %v2773, 1e-05
        %v2783 = vadd.f32 %v2774, 1e-05
        %v2784 = vadd.f32 %v2775, 1e-05
        %v2785 = vrsqrt.pop %v2776
        %v2786 = vrsqrt.pop %v2777
        %v2787 = vrsqrt.pop %v2778
        %v2788 = vrsqrt.pop %v2779
        %v2789 = vrsqrt.pop %v2780
        %v2790 = vrsqrt.pop %v2781
        %v2791 = vrsqrt.pop %v2782
        %v2792 = vrsqrt.pop %v2783
        %v2793 = vrsqrt.pop %v2784
        %v2794 = vmul.f32 %v2722, %v2785
        %v2795 = vmul.f32 %v2723, %v2786
        %v2796 = vmul.f32 %v2724, %v2787
        %v2797 = vmul.f32 %v2725, %v2788
        %v2798 = vmul.f32 %v2726, %v2789
        %v2799 = vmul.f32 %v2727, %v2790
        %v2800 = vmul.f32 %v2728, %v2791
        %v2801 = vmul.f32 %v2729, %v2792
        %v2802 = vmul.f32 %v2730, %v2793
        %v2803 = vld [vmem:[%s737] sm:$0x1]
        %v2805 = vlaneseq
        %v2806 = vshrl.u32 %v2805, 7
        %v2807 = vsub.s32 0, %v2806
        %v2808 = vrot.slane %v2803, %v2807
        %v2810 = vmul.f32 %v2794, %v2808
        %v2811 = vmul.f32 %v2795, %v2808
        %v2812 = vmul.f32 %v2796, %v2808
        %v2813 = vmul.f32 %v2797, %v2808
        %v2814 = vmul.f32 %v2798, %v2808
        %v2815 = vmul.f32 %v2799, %v2808
        %v2816 = vmul.f32 %v2800, %v2808
        %v2817 = vmul.f32 %v2801, %v2808
        %v2818 = vmul.f32 %v2802, %v2808
        %v2819 = vld [vmem:[%s740] sm:$0x1]
        %v2821 = vlaneseq
        %v2822 = vshrl.u32 %v2821, 7
        %v2823 = vsub.s32 0, %v2822
        %v2824 = vrot.slane %v2819, %v2823
        %v2826 = vadd.f32 %v2810, %v2824
        %v2827 = vadd.f32 %v2811, %v2824
        %v2828 = vadd.f32 %v2812, %v2824
        %v2829 = vadd.f32 %v2813, %v2824
        %v2830 = vadd.f32 %v2814, %v2824
        %v2831 = vadd.f32 %v2815, %v2824
        %v2832 = vadd.f32 %v2816, %v2824
        %v2833 = vadd.f32 %v2817, %v2824
        %v2834 = vadd.f32 %v2818, %v2824
        %v2835 = vpack.c.bf16 %v2827, %v2826
        %v2836 = vpack.c.bf16 %v2829, %v2828
        %v2837 = vpack.c.bf16 %v2831, %v2830
        %v2838 = vpack.c.bf16 %v2833, %v2832
        %v2839 = vpack.c.bf16 %v2834, %v2834
        %v2840 = vld [vmem:[%s745] sm:$0xff]
        %v2841 = vld [vmem:[%s745 + $0x40] sm:$0xff]
        %v2842 = vld [vmem:[%s745 + $0x80] sm:$0xff]
        %v2843 = vld [vmem:[%s745 + $0xc0] sm:$0xff]
        %v2844 = vld [vmem:[%s749] sm:$0x3]
        %v2846 = vlaneseq
        %v2847 = vshrl.u32 %v2846, 7
        %v2848 = vsub.s32 0, %v2847
        %v2849 = vrot.slane %v2844, %v2848
        %v2850 = vlaneseq
        %v2851 = vshrl.u32 %v2850, 7
        %v2852 = vsub.s32 1, %v2851
        %v2853 = vrot.slane %v2844, %v2852
        %v2860 = vunpack.c.l.b16 %v2840
        %v2861 = vunpack.c.h.b16 %v2840
        %v2862 = vunpack.c.l.b16 %v2841
        %v2863 = vunpack.c.h.b16 %v2841
        %v2864 = vunpack.c.l.b16 %v2842
        %v2865 = vunpack.c.h.b16 %v2842
        %v2866 = vunpack.c.l.b16 %v2843
        %v2867 = vunpack.c.h.b16 %v2843
        %v2868 = vpack.c.b16 %v2862, %v2860
        %v2869 = vpack.c.b16 %v2863, %v2861
        %v2870 = vpack.c.b16 %v2866, %v2864
        %v2871 = vpack.c.b16 %v2867, %v2865
        %v2877 = vsel %vm994, %v2835, 0
        %v2880 = vsel %vm994, %v2836, 0
        %v2883 = vsel %vm994, %v2837, 0
        %v2886 = vsel %vm994, %v2838, 0
        %v2889 = vsel %vm994, %v2839, 0
        %2891 = vmatprep.subr.bf16.mxu0 0
        %2892 = vmatpush1.bf16.msra.mxu0 0
        %2893 = vmatprep.subr.bf16.mxu0 0
        %2894 = vmatpush1.bf16.msra.mxu0 0
        %2895 = vmatprep.subr.bf16.mxu0 0
        %2896 = vmatpush1.bf16.msra.mxu0 0
        %2897 = vmatprep.subr.bf16.mxu0 0
        %2898 = vmatpush1.bf16.msra.mxu0 0
        %2899 = vmatprep.subr.bf16.mxu0 0
        %2900 = vmatpush1.bf16.msra.mxu0 0
        %2901 = vmatprep.subr.bf16.mxu0 0
        %2902 = vmatpush1.bf16.msra.mxu0 0
        %2903 = vmatprep.subr.bf16.mxu0 %v2871
        %2904 = vmatpush1.bf16.msra.mxu0 %v2870
        %2905 = vmatprep.subr.bf16.mxu0 %v2869
        %2906 = vmatpush1.bf16.msra.mxu0 %v2868
        %2907 = vmatprep.subr.bf16.mxu0 0
        %2908 = vmatpush2.bf16.msra.mxu0 0
        %2909 = vmatprep.subr.bf16.mxu0 0
        %2910 = vmatpush2.bf16.msra.mxu0 0
        %2911 = vmatprep.subr.bf16.mxu0 0
        %2912 = vmatpush2.bf16.msra.mxu0 0
        %2913 = vmatprep.subr.bf16.mxu0 0
        %2914 = vmatpush2.bf16.msra.mxu0 0
        %2915 = vmatprep.subr.bf16.mxu0 0
        %2916 = vmatpush2.bf16.msra.mxu0 0
        %2917 = vmatprep.subr.bf16.mxu0 0
        %2918 = vmatpush2.bf16.msra.mxu0 0
        %2919 = vmatprep.subr.bf16.mxu0 0
        %2920 = vmatpush2.bf16.msra.mxu0 0
        %2921 = vmatprep.subr.bf16.mxu0 0
        %2922 = vmatpush2.bf16.msra.mxu0 0
        %2923 = vmatprep.mubr.bf16.mxu0 0
        %2924 = vmatmul.mubr.bf16.gmra.mxu0 %v2877
        %v2925 = vpop.f32.mrf.mxu0
        %v2926 = vadd.f32 %v2849, %v2925
        %v2927 = vpop.f32.mrf.mxu0
        %v2928 = vadd.f32 %v2853, %v2927
        %v2929 = vpop.f32.mrf.mxu0
        %v2930 = vadd.f32 %v2849, %v2929
        %v2931 = vpop.f32.mrf.mxu0
        %v2932 = vadd.f32 %v2853, %v2931
        %2933 = vmatprep.mubr.bf16.mxu0 0
        %2934 = vmatmul.mubr.bf16.gmra.mxu0 %v2880
        %v2935 = vpop.f32.mrf.mxu0
        %v2936 = vadd.f32 %v2849, %v2935
        %v2937 = vpop.f32.mrf.mxu0
        %v2938 = vadd.f32 %v2853, %v2937
        %v2939 = vpop.f32.mrf.mxu0
        %v2940 = vadd.f32 %v2849, %v2939
        %v2941 = vpop.f32.mrf.mxu0
        %v2942 = vadd.f32 %v2853, %v2941
        %2943 = vmatprep.mubr.bf16.mxu0 0
        %2944 = vmatmul.mubr.bf16.gmra.mxu0 %v2883
        %v2945 = vpop.f32.mrf.mxu0
        %v2946 = vadd.f32 %v2849, %v2945
        %v2947 = vpop.f32.mrf.mxu0
        %v2948 = vadd.f32 %v2853, %v2947
        %v2949 = vpop.f32.mrf.mxu0
        %v2950 = vadd.f32 %v2849, %v2949
        %v2951 = vpop.f32.mrf.mxu0
        %v2952 = vadd.f32 %v2853, %v2951
        %2953 = vmatprep.mubr.bf16.mxu0 0
        %2954 = vmatmul.mubr.bf16.gmra.mxu0 %v2886
        %v2955 = vpop.f32.mrf.mxu0
        %v2956 = vadd.f32 %v2849, %v2955
        %v2957 = vpop.f32.mrf.mxu0
        %v2958 = vadd.f32 %v2853, %v2957
        %v2959 = vpop.f32.mrf.mxu0
        %v2960 = vadd.f32 %v2849, %v2959
        %v2961 = vpop.f32.mrf.mxu0
        %v2962 = vadd.f32 %v2853, %v2961
        %2963 = vmatprep.mubr.bf16.mxu0 0
        %2964 = vmatmul.mubr.bf16.gmra.mxu0 %v2889
        %v2965 = vpop.f32.mrf.mxu0
        %v2966 = vadd.f32 %v2849, %v2965
        %v2967 = vpop.f32.mrf.mxu0
        %v2968 = vadd.f32 %v2853, %v2967
        %v2969 = vpop.f32.mrf.mxu0
        %v2970 = vpop.f32.mrf.mxu0
        %2971 = vdwg.mxu0
        %v2972 = vmax.f32 %v2926, 0.0
        %v2973 = vmax.f32 %v2928, 0.0
        %v2974 = vmax.f32 %v2930, 0.0
        %v2975 = vmax.f32 %v2932, 0.0
        %v2976 = vmax.f32 %v2936, 0.0
        %v2977 = vmax.f32 %v2938, 0.0
        %v2978 = vmax.f32 %v2940, 0.0
        %v2979 = vmax.f32 %v2942, 0.0
        %v2980 = vmax.f32 %v2946, 0.0
        %v2981 = vmax.f32 %v2948, 0.0
        %v2982 = vmax.f32 %v2950, 0.0
        %v2983 = vmax.f32 %v2952, 0.0
        %v2984 = vmax.f32 %v2956, 0.0
        %v2985 = vmax.f32 %v2958, 0.0
        %v2986 = vmax.f32 %v2960, 0.0
        %v2987 = vmax.f32 %v2962, 0.0
        %v2988 = vmax.f32 %v2966, 0.0
        %v2989 = vmax.f32 %v2968, 0.0
        %v2990 = vpack.c.bf16 %v2974, %v2972
        %v2991 = vpack.c.bf16 %v2975, %v2973
        %v2992 = vpack.c.bf16 %v2978, %v2976
        %v2993 = vpack.c.bf16 %v2979, %v2977
        %v2994 = vpack.c.bf16 %v2982, %v2980
        %v2995 = vpack.c.bf16 %v2983, %v2981
        %v2996 = vpack.c.bf16 %v2986, %v2984
        %v2997 = vpack.c.bf16 %v2987, %v2985
        %v2998 = vpack.c.bf16 %v2988, %v2988
        %v2999 = vpack.c.bf16 %v2989, %v2989
        %v3010 = vunpack.c.l.b16 %v2990
        %v3011 = vunpack.c.l.b16 %v2991
        %v3012 = vunpack.c.h.b16 %v2990
        %v3013 = vunpack.c.h.b16 %v2991
        %v3014 = vunpack.c.l.b16 %v2992
        %v3015 = vunpack.c.l.b16 %v2993
        %v3016 = vunpack.c.h.b16 %v2992
        %v3017 = vunpack.c.h.b16 %v2993
        %v3018 = vunpack.c.l.b16 %v2994
        %v3019 = vunpack.c.l.b16 %v2995
        %v3020 = vunpack.c.h.b16 %v2994
        %v3021 = vunpack.c.h.b16 %v2995
        %v3022 = vunpack.c.l.b16 %v2996
        %v3023 = vunpack.c.l.b16 %v2997
        %v3024 = vunpack.c.h.b16 %v2996
        %v3025 = vunpack.c.h.b16 %v2997
        %v3026 = vunpack.c.l.b16 %v2998
        %v3027 = vunpack.c.l.b16 %v2999
        %v3028 = vpack.c.b16 %v3011, %v3010
        %v3029 = vpack.c.b16 %v3013, %v3012
        %v3030 = vpack.c.b16 %v3015, %v3014
        %v3031 = vpack.c.b16 %v3017, %v3016
        %v3032 = vpack.c.b16 %v3019, %v3018
        %v3033 = vpack.c.b16 %v3021, %v3020
        %v3034 = vpack.c.b16 %v3023, %v3022
        %v3035 = vpack.c.b16 %v3025, %v3024
        %v3036 = vpack.c.b16 %v3027, %v3026
        %3046 = vst [vmem:[#allocation3] sm:$0xff] %v3028
        %3047 = vst [vmem:[#allocation3 + $0x40] sm:$0xff] %v3029
        %3048 = vst [vmem:[#allocation3 + $0x80] sm:$0xff] %v3030
        %3049 = vst [vmem:[#allocation3 + $0xc0] sm:$0xff] %v3031
        %3050 = vst [vmem:[#allocation3 + $0x100] sm:$0xff] %v3032
        %3051 = vst [vmem:[#allocation3 + $0x140] sm:$0xff] %v3033
        %3052 = vst [vmem:[#allocation3 + $0x180] sm:$0xff] %v3034
        %3053 = vst [vmem:[#allocation3 + $0x1c0] sm:$0xff] %v3035
        %3054 = vst [vmem:[#allocation3 + $0x200] sm:$0xff] %v3036
        %v3055 = vld [vmem:[%s745 + $0x8] sm:$0xff]
        %v3056 = vld [vmem:[%s745 + $0x48] sm:$0xff]
        %v3057 = vld [vmem:[%s745 + $0x88] sm:$0xff]
        %v3058 = vld [vmem:[%s745 + $0xc8] sm:$0xff]
        %v3059 = vld [vmem:[%s749 + $0x2] sm:$0x3]
        %v3061 = vlaneseq
        %v3062 = vshrl.u32 %v3061, 7
        %v3063 = vsub.s32 0, %v3062
        %v3064 = vrot.slane %v3059, %v3063
        %v3065 = vlaneseq
        %v3066 = vshrl.u32 %v3065, 7
        %v3067 = vsub.s32 1, %v3066
        %v3068 = vrot.slane %v3059, %v3067
        %v3075 = vunpack.c.l.b16 %v3055
        %v3076 = vunpack.c.h.b16 %v3055
        %v3077 = vunpack.c.l.b16 %v3056
        %v3078 = vunpack.c.h.b16 %v3056
        %v3079 = vunpack.c.l.b16 %v3057
        %v3080 = vunpack.c.h.b16 %v3057
        %v3081 = vunpack.c.l.b16 %v3058
        %v3082 = vunpack.c.h.b16 %v3058
        %v3083 = vpack.c.b16 %v3077, %v3075
        %v3084 = vpack.c.b16 %v3078, %v3076
        %v3085 = vpack.c.b16 %v3081, %v3079
        %v3086 = vpack.c.b16 %v3082, %v3080
        %3091 = vmatprep.subr.bf16.mxu0 0
        %3092 = vmatpush1.bf16.msra.mxu0 0
        %3093 = vmatprep.subr.bf16.mxu0 0
        %3094 = vmatpush1.bf16.msra.mxu0 0
        %3095 = vmatprep.subr.bf16.mxu0 0
        %3096 = vmatpush1.bf16.msra.mxu0 0
        %3097 = vmatprep.subr.bf16.mxu0 0
        %3098 = vmatpush1.bf16.msra.mxu0 0
        %3099 = vmatprep.subr.bf16.mxu0 0
        %3100 = vmatpush1.bf16.msra.mxu0 0
        %3101 = vmatprep.subr.bf16.mxu0 0
        %3102 = vmatpush1.bf16.msra.mxu0 0
        %3103 = vmatprep.subr.bf16.mxu0 %v3086
        %3104 = vmatpush1.bf16.msra.mxu0 %v3085
        %3105 = vmatprep.subr.bf16.mxu0 %v3084
        %3106 = vmatpush1.bf16.msra.mxu0 %v3083
        %3107 = vmatprep.subr.bf16.mxu0 0
        %3108 = vmatpush2.bf16.msra.mxu0 0
        %3109 = vmatprep.subr.bf16.mxu0 0
        %3110 = vmatpush2.bf16.msra.mxu0 0
        %3111 = vmatprep.subr.bf16.mxu0 0
        %3112 = vmatpush2.bf16.msra.mxu0 0
        %3113 = vmatprep.subr.bf16.mxu0 0
        %3114 = vmatpush2.bf16.msra.mxu0 0
        %3115 = vmatprep.subr.bf16.mxu0 0
        %3116 = vmatpush2.bf16.msra.mxu0 0
        %3117 = vmatprep.subr.bf16.mxu0 0
        %3118 = vmatpush2.bf16.msra.mxu0 0
        %3119 = vmatprep.subr.bf16.mxu0 0
        %3120 = vmatpush2.bf16.msra.mxu0 0
        %3121 = vmatprep.subr.bf16.mxu0 0
        %3122 = vmatpush2.bf16.msra.mxu0 0
        %3123 = vmatprep.mubr.bf16.mxu0 0
        %3124 = vmatmul.mubr.bf16.gmra.mxu0 %v2877
        %v3125 = vpop.f32.mrf.mxu0
        %v3126 = vadd.f32 %v3064, %v3125
        %v3127 = vpop.f32.mrf.mxu0
        %v3128 = vadd.f32 %v3068, %v3127
        %v3129 = vpop.f32.mrf.mxu0
        %v3130 = vadd.f32 %v3064, %v3129
        %v3131 = vpop.f32.mrf.mxu0
        %v3132 = vadd.f32 %v3068, %v3131
        %3133 = vmatprep.mubr.bf16.mxu0 0
        %3134 = vmatmul.mubr.bf16.gmra.mxu0 %v2880
        %v3135 = vpop.f32.mrf.mxu0
        %v3136 = vadd.f32 %v3064, %v3135
        %v3137 = vpop.f32.mrf.mxu0
        %v3138 = vadd.f32 %v3068, %v3137
        %v3139 = vpop.f32.mrf.mxu0
        %v3140 = vadd.f32 %v3064, %v3139
        %v3141 = vpop.f32.mrf.mxu0
        %v3142 = vadd.f32 %v3068, %v3141
        %3143 = vmatprep.mubr.bf16.mxu0 0
        %3144 = vmatmul.mubr.bf16.gmra.mxu0 %v2883
        %v3145 = vpop.f32.mrf.mxu0
        %v3146 = vadd.f32 %v3064, %v3145
        %v3147 = vpop.f32.mrf.mxu0
        %v3148 = vadd.f32 %v3068, %v3147
        %v3149 = vpop.f32.mrf.mxu0
        %v3150 = vadd.f32 %v3064, %v3149
        %v3151 = vpop.f32.mrf.mxu0
        %v3152 = vadd.f32 %v3068, %v3151
        %3153 = vmatprep.mubr.bf16.mxu0 0
        %3154 = vmatmul.mubr.bf16.gmra.mxu0 %v2886
        %v3155 = vpop.f32.mrf.mxu0
        %v3156 = vadd.f32 %v3064, %v3155
        %v3157 = vpop.f32.mrf.mxu0
        %v3158 = vadd.f32 %v3068, %v3157
        %v3159 = vpop.f32.mrf.mxu0
        %v3160 = vadd.f32 %v3064, %v3159
        %v3161 = vpop.f32.mrf.mxu0
        %v3162 = vadd.f32 %v3068, %v3161
        %3163 = vmatprep.mubr.bf16.mxu0 0
        %3164 = vmatmul.mubr.bf16.gmra.mxu0 %v2889
        %v3165 = vpop.f32.mrf.mxu0
        %v3166 = vadd.f32 %v3064, %v3165
        %v3167 = vpop.f32.mrf.mxu0
        %v3168 = vadd.f32 %v3068, %v3167
        %v3169 = vpop.f32.mrf.mxu0
        %v3170 = vpop.f32.mrf.mxu0
        %3171 = vdwg.mxu0
        %v3172 = vmax.f32 %v3126, 0.0
        %v3173 = vmax.f32 %v3128, 0.0
        %v3174 = vmax.f32 %v3130, 0.0
        %v3175 = vmax.f32 %v3132, 0.0
        %v3176 = vmax.f32 %v3136, 0.0
        %v3177 = vmax.f32 %v3138, 0.0
        %v3178 = vmax.f32 %v3140, 0.0
        %v3179 = vmax.f32 %v3142, 0.0
        %v3180 = vmax.f32 %v3146, 0.0
        %v3181 = vmax.f32 %v3148, 0.0
        %v3182 = vmax.f32 %v3150, 0.0
        %v3183 = vmax.f32 %v3152, 0.0
        %v3184 = vmax.f32 %v3156, 0.0
        %v3185 = vmax.f32 %v3158, 0.0
        %v3186 = vmax.f32 %v3160, 0.0
        %v3187 = vmax.f32 %v3162, 0.0
        %v3188 = vmax.f32 %v3166, 0.0
        %v3189 = vmax.f32 %v3168, 0.0
        %v3190 = vpack.c.bf16 %v3174, %v3172
        %v3191 = vpack.c.bf16 %v3175, %v3173
        %v3192 = vpack.c.bf16 %v3178, %v3176
        %v3193 = vpack.c.bf16 %v3179, %v3177
        %v3194 = vpack.c.bf16 %v3182, %v3180
        %v3195 = vpack.c.bf16 %v3183, %v3181
        %v3196 = vpack.c.bf16 %v3186, %v3184
        %v3197 = vpack.c.bf16 %v3187, %v3185
        %v3198 = vpack.c.bf16 %v3188, %v3188
        %v3199 = vpack.c.bf16 %v3189, %v3189
        %v3210 = vunpack.c.l.b16 %v3190
        %v3211 = vunpack.c.l.b16 %v3191
        %v3212 = vunpack.c.h.b16 %v3190
        %v3213 = vunpack.c.h.b16 %v3191
        %v3214 = vunpack.c.l.b16 %v3192
        %v3215 = vunpack.c.l.b16 %v3193
        %v3216 = vunpack.c.h.b16 %v3192
        %v3217 = vunpack.c.h.b16 %v3193
        %v3218 = vunpack.c.l.b16 %v3194
        %v3219 = vunpack.c.l.b16 %v3195
        %v3220 = vunpack.c.h.b16 %v3194
        %v3221 = vunpack.c.h.b16 %v3195
        %v3222 = vunpack.c.l.b16 %v3196
        %v3223 = vunpack.c.l.b16 %v3197
        %v3224 = vunpack.c.h.b16 %v3196
        %v3225 = vunpack.c.h.b16 %v3197
        %v3226 = vunpack.c.l.b16 %v3198
        %v3227 = vunpack.c.l.b16 %v3199
        %v3228 = vpack.c.b16 %v3211, %v3210
        %v3229 = vpack.c.b16 %v3213, %v3212
        %v3230 = vpack.c.b16 %v3215, %v3214
        %v3231 = vpack.c.b16 %v3217, %v3216
        %v3232 = vpack.c.b16 %v3219, %v3218
        %v3233 = vpack.c.b16 %v3221, %v3220
        %v3234 = vpack.c.b16 %v3223, %v3222
        %v3235 = vpack.c.b16 %v3225, %v3224
        %v3236 = vpack.c.b16 %v3227, %v3226
        %3246 = vst [vmem:[#allocation3 + $0x8] sm:$0xff] %v3228
        %3247 = vst [vmem:[#allocation3 + $0x48] sm:$0xff] %v3229
        %3248 = vst [vmem:[#allocation3 + $0x88] sm:$0xff] %v3230
        %3249 = vst [vmem:[#allocation3 + $0xc8] sm:$0xff] %v3231
        %3250 = vst [vmem:[#allocation3 + $0x108] sm:$0xff] %v3232
        %3251 = vst [vmem:[#allocation3 + $0x148] sm:$0xff] %v3233
        %3252 = vst [vmem:[#allocation3 + $0x188] sm:$0xff] %v3234
        %3253 = vst [vmem:[#allocation3 + $0x1c8] sm:$0xff] %v3235
        %3254 = vst [vmem:[#allocation3 + $0x208] sm:$0xff] %v3236
        %v3255 = vld [vmem:[%s745 + $0x10] sm:$0xff]
        %v3256 = vld [vmem:[%s745 + $0x50] sm:$0xff]
        %v3257 = vld [vmem:[%s745 + $0x90] sm:$0xff]
        %v3258 = vld [vmem:[%s745 + $0xd0] sm:$0xff]
        %v3259 = vld [vmem:[%s749 + $0x4] sm:$0x3]
        %v3261 = vlaneseq
        %v3262 = vshrl.u32 %v3261, 7
        %v3263 = vsub.s32 0, %v3262
        %v3264 = vrot.slane %v3259, %v3263
        %v3265 = vlaneseq
        %v3266 = vshrl.u32 %v3265, 7
        %v3267 = vsub.s32 1, %v3266
        %v3268 = vrot.slane %v3259, %v3267
        %v3275 = vunpack.c.l.b16 %v3255
        %v3276 = vunpack.c.h.b16 %v3255
        %v3277 = vunpack.c.l.b16 %v3256
        %v3278 = vunpack.c.h.b16 %v3256
        %v3279 = vunpack.c.l.b16 %v3257
        %v3280 = vunpack.c.h.b16 %v3257
        %v3281 = vunpack.c.l.b16 %v3258
        %v3282 = vunpack.c.h.b16 %v3258
        %v3283 = vpack.c.b16 %v3277, %v3275
        %v3284 = vpack.c.b16 %v3278, %v3276
        %v3285 = vpack.c.b16 %v3281, %v3279
        %v3286 = vpack.c.b16 %v3282, %v3280
        %3291 = vmatprep.subr.bf16.mxu0 0
        %3292 = vmatpush1.bf16.msra.mxu0 0
        %3293 = vmatprep.subr.bf16.mxu0 0
        %3294 = vmatpush1.bf16.msra.mxu0 0
        %3295 = vmatprep.subr.bf16.mxu0 0
        %3296 = vmatpush1.bf16.msra.mxu0 0
        %3297 = vmatprep.subr.bf16.mxu0 0
        %3298 = vmatpush1.bf16.msra.mxu0 0
        %3299 = vmatprep.subr.bf16.mxu0 0
        %3300 = vmatpush1.bf16.msra.mxu0 0
        %3301 = vmatprep.subr.bf16.mxu0 0
        %3302 = vmatpush1.bf16.msra.mxu0 0
        %3303 = vmatprep.subr.bf16.mxu0 %v3286
        %3304 = vmatpush1.bf16.msra.mxu0 %v3285
        %3305 = vmatprep.subr.bf16.mxu0 %v3284
        %3306 = vmatpush1.bf16.msra.mxu0 %v3283
        %3307 = vmatprep.subr.bf16.mxu0 0
        %3308 = vmatpush2.bf16.msra.mxu0 0
        %3309 = vmatprep.subr.bf16.mxu0 0
        %3310 = vmatpush2.bf16.msra.mxu0 0
        %3311 = vmatprep.subr.bf16.mxu0 0
        %3312 = vmatpush2.bf16.msra.mxu0 0
        %3313 = vmatprep.subr.bf16.mxu0 0
        %3314 = vmatpush2.bf16.msra.mxu0 0
        %3315 = vmatprep.subr.bf16.mxu0 0
        %3316 = vmatpush2.bf16.msra.mxu0 0
        %3317 = vmatprep.subr.bf16.mxu0 0
        %3318 = vmatpush2.bf16.msra.mxu0 0
        %3319 = vmatprep.subr.bf16.mxu0 0
        %3320 = vmatpush2.bf16.msra.mxu0 0
        %3321 = vmatprep.subr.bf16.mxu0 0
        %3322 = vmatpush2.bf16.msra.mxu0 0
        %3323 = vmatprep.mubr.bf16.mxu0 0
        %3324 = vmatmul.mubr.bf16.gmra.mxu0 %v2877
        %v3325 = vpop.f32.mrf.mxu0
        %v3326 = vadd.f32 %v3264, %v3325
        %v3327 = vpop.f32.mrf.mxu0
        %v3328 = vadd.f32 %v3268, %v3327
        %v3329 = vpop.f32.mrf.mxu0
        %v3330 = vadd.f32 %v3264, %v3329
        %v3331 = vpop.f32.mrf.mxu0
        %v3332 = vadd.f32 %v3268, %v3331
        %3333 = vmatprep.mubr.bf16.mxu0 0
        %3334 = vmatmul.mubr.bf16.gmra.mxu0 %v2880
        %v3335 = vpop.f32.mrf.mxu0
        %v3336 = vadd.f32 %v3264, %v3335
        %v3337 = vpop.f32.mrf.mxu0
        %v3338 = vadd.f32 %v3268, %v3337
        %v3339 = vpop.f32.mrf.mxu0
        %v3340 = vadd.f32 %v3264, %v3339
        %v3341 = vpop.f32.mrf.mxu0
        %v3342 = vadd.f32 %v3268, %v3341
        %3343 = vmatprep.mubr.bf16.mxu0 0
        %3344 = vmatmul.mubr.bf16.gmra.mxu0 %v2883
        %v3345 = vpop.f32.mrf.mxu0
        %v3346 = vadd.f32 %v3264, %v3345
        %v3347 = vpop.f32.mrf.mxu0
        %v3348 = vadd.f32 %v3268, %v3347
        %v3349 = vpop.f32.mrf.mxu0
        %v3350 = vadd.f32 %v3264, %v3349
        %v3351 = vpop.f32.mrf.mxu0
        %v3352 = vadd.f32 %v3268, %v3351
        %3353 = vmatprep.mubr.bf16.mxu0 0
        %3354 = vmatmul.mubr.bf16.gmra.mxu0 %v2886
        %v3355 = vpop.f32.mrf.mxu0
        %v3356 = vadd.f32 %v3264, %v3355
        %v3357 = vpop.f32.mrf.mxu0
        %v3358 = vadd.f32 %v3268, %v3357
        %v3359 = vpop.f32.mrf.mxu0
        %v3360 = vadd.f32 %v3264, %v3359
        %v3361 = vpop.f32.mrf.mxu0
        %v3362 = vadd.f32 %v3268, %v3361
        %3363 = vmatprep.mubr.bf16.mxu0 0
        %3364 = vmatmul.mubr.bf16.gmra.mxu0 %v2889
        %v3365 = vpop.f32.mrf.mxu0
        %v3366 = vadd.f32 %v3264, %v3365
        %v3367 = vpop.f32.mrf.mxu0
        %v3368 = vadd.f32 %v3268, %v3367
        %v3369 = vpop.f32.mrf.mxu0
        %v3370 = vpop.f32.mrf.mxu0
        %3371 = vdwg.mxu0
        %v3372 = vmax.f32 %v3326, 0.0
        %v3373 = vmax.f32 %v3328, 0.0
        %v3374 = vmax.f32 %v3330, 0.0
        %v3375 = vmax.f32 %v3332, 0.0
        %v3376 = vmax.f32 %v3336, 0.0
        %v3377 = vmax.f32 %v3338, 0.0
        %v3378 = vmax.f32 %v3340, 0.0
        %v3379 = vmax.f32 %v3342, 0.0
        %v3380 = vmax.f32 %v3346, 0.0
        %v3381 = vmax.f32 %v3348, 0.0
        %v3382 = vmax.f32 %v3350, 0.0
        %v3383 = vmax.f32 %v3352, 0.0
        %v3384 = vmax.f32 %v3356, 0.0
        %v3385 = vmax.f32 %v3358, 0.0
        %v3386 = vmax.f32 %v3360, 0.0
        %v3387 = vmax.f32 %v3362, 0.0
        %v3388 = vmax.f32 %v3366, 0.0
        %v3389 = vmax.f32 %v3368, 0.0
        %v3390 = vpack.c.bf16 %v3374, %v3372
        %v3391 = vpack.c.bf16 %v3375, %v3373
        %v3392 = vpack.c.bf16 %v3378, %v3376
        %v3393 = vpack.c.bf16 %v3379, %v3377
        %v3394 = vpack.c.bf16 %v3382, %v3380
        %v3395 = vpack.c.bf16 %v3383, %v3381
        %v3396 = vpack.c.bf16 %v3386, %v3384
        %v3397 = vpack.c.bf16 %v3387, %v3385
        %v3398 = vpack.c.bf16 %v3388, %v3388
        %v3399 = vpack.c.bf16 %v3389, %v3389
        %v3410 = vunpack.c.l.b16 %v3390
        %v3411 = vunpack.c.l.b16 %v3391
        %v3412 = vunpack.c.h.b16 %v3390
        %v3413 = vunpack.c.h.b16 %v3391
        %v3414 = vunpack.c.l.b16 %v3392
        %v3415 = vunpack.c.l.b16 %v3393
        %v3416 = vunpack.c.h.b16 %v3392
        %v3417 = vunpack.c.h.b16 %v3393
        %v3418 = vunpack.c.l.b16 %v3394
        %v3419 = vunpack.c.l.b16 %v3395
        %v3420 = vunpack.c.h.b16 %v3394
        %v3421 = vunpack.c.h.b16 %v3395
        %v3422 = vunpack.c.l.b16 %v3396
        %v3423 = vunpack.c.l.b16 %v3397
        %v3424 = vunpack.c.h.b16 %v3396
        %v3425 = vunpack.c.h.b16 %v3397
        %v3426 = vunpack.c.l.b16 %v3398
        %v3427 = vunpack.c.l.b16 %v3399
        %v3428 = vpack.c.b16 %v3411, %v3410
        %v3429 = vpack.c.b16 %v3413, %v3412
        %v3430 = vpack.c.b16 %v3415, %v3414
        %v3431 = vpack.c.b16 %v3417, %v3416
        %v3432 = vpack.c.b16 %v3419, %v3418
        %v3433 = vpack.c.b16 %v3421, %v3420
        %v3434 = vpack.c.b16 %v3423, %v3422
        %v3435 = vpack.c.b16 %v3425, %v3424
        %v3436 = vpack.c.b16 %v3427, %v3426
        %3446 = vst [vmem:[#allocation3 + $0x10] sm:$0xff] %v3428
        %3447 = vst [vmem:[#allocation3 + $0x50] sm:$0xff] %v3429
        %3448 = vst [vmem:[#allocation3 + $0x90] sm:$0xff] %v3430
        %3449 = vst [vmem:[#allocation3 + $0xd0] sm:$0xff] %v3431
        %3450 = vst [vmem:[#allocation3 + $0x110] sm:$0xff] %v3432
        %3451 = vst [vmem:[#allocation3 + $0x150] sm:$0xff] %v3433
        %3452 = vst [vmem:[#allocation3 + $0x190] sm:$0xff] %v3434
        %3453 = vst [vmem:[#allocation3 + $0x1d0] sm:$0xff] %v3435
        %3454 = vst [vmem:[#allocation3 + $0x210] sm:$0xff] %v3436
        %v3455 = vld [vmem:[%s745 + $0x18] sm:$0xff]
        %v3456 = vld [vmem:[%s745 + $0x58] sm:$0xff]
        %v3457 = vld [vmem:[%s745 + $0x98] sm:$0xff]
        %v3458 = vld [vmem:[%s745 + $0xd8] sm:$0xff]
        %v3459 = vld [vmem:[%s749 + $0x6] sm:$0x3]
        %v3461 = vlaneseq
        %v3462 = vshrl.u32 %v3461, 7
        %v3463 = vsub.s32 0, %v3462
        %v3464 = vrot.slane %v3459, %v3463
        %v3465 = vlaneseq
        %v3466 = vshrl.u32 %v3465, 7
        %v3467 = vsub.s32 1, %v3466
        %v3468 = vrot.slane %v3459, %v3467
        %v3475 = vunpack.c.l.b16 %v3455
        %v3476 = vunpack.c.h.b16 %v3455
        %v3477 = vunpack.c.l.b16 %v3456
        %v3478 = vunpack.c.h.b16 %v3456
        %v3479 = vunpack.c.l.b16 %v3457
        %v3480 = vunpack.c.h.b16 %v3457
        %v3481 = vunpack.c.l.b16 %v3458
        %v3482 = vunpack.c.h.b16 %v3458
        %v3483 = vpack.c.b16 %v3477, %v3475
        %v3484 = vpack.c.b16 %v3478, %v3476
        %v3485 = vpack.c.b16 %v3481, %v3479
        %v3486 = vpack.c.b16 %v3482, %v3480
        %3491 = vmatprep.subr.bf16.mxu0 0
        %3492 = vmatpush1.bf16.msra.mxu0 0
        %3493 = vmatprep.subr.bf16.mxu0 0
        %3494 = vmatpush1.bf16.msra.mxu0 0
        %3495 = vmatprep.subr.bf16.mxu0 0
        %3496 = vmatpush1.bf16.msra.mxu0 0
        %3497 = vmatprep.subr.bf16.mxu0 0
        %3498 = vmatpush1.bf16.msra.mxu0 0
        %3499 = vmatprep.subr.bf16.mxu0 0
        %3500 = vmatpush1.bf16.msra.mxu0 0
        %3501 = vmatprep.subr.bf16.mxu0 0
        %3502 = vmatpush1.bf16.msra.mxu0 0
        %3503 = vmatprep.subr.bf16.mxu0 %v3486
        %3504 = vmatpush1.bf16.msra.mxu0 %v3485
        %3505 = vmatprep.subr.bf16.mxu0 %v3484
        %3506 = vmatpush1.bf16.msra.mxu0 %v3483
        %3507 = vmatprep.subr.bf16.mxu0 0
        %3508 = vmatpush2.bf16.msra.mxu0 0
        %3509 = vmatprep.subr.bf16.mxu0 0
        %3510 = vmatpush2.bf16.msra.mxu0 0
        %3511 = vmatprep.subr.bf16.mxu0 0
        %3512 = vmatpush2.bf16.msra.mxu0 0
        %3513 = vmatprep.subr.bf16.mxu0 0
        %3514 = vmatpush2.bf16.msra.mxu0 0
        %3515 = vmatprep.subr.bf16.mxu0 0
        %3516 = vmatpush2.bf16.msra.mxu0 0
        %3517 = vmatprep.subr.bf16.mxu0 0
        %3518 = vmatpush2.bf16.msra.mxu0 0
        %3519 = vmatprep.subr.bf16.mxu0 0
        %3520 = vmatpush2.bf16.msra.mxu0 0
        %3521 = vmatprep.subr.bf16.mxu0 0
        %3522 = vmatpush2.bf16.msra.mxu0 0
        %3523 = vmatprep.mubr.bf16.mxu0 0
        %3524 = vmatmul.mubr.bf16.gmra.mxu0 %v2877
        %v3525 = vpop.f32.mrf.mxu0
        %v3526 = vadd.f32 %v3464, %v3525
        %v3527 = vpop.f32.mrf.mxu0
        %v3528 = vadd.f32 %v3468, %v3527
        %v3529 = vpop.f32.mrf.mxu0
        %v3530 = vadd.f32 %v3464, %v3529
        %v3531 = vpop.f32.mrf.mxu0
        %v3532 = vadd.f32 %v3468, %v3531
        %3533 = vmatprep.mubr.bf16.mxu0 0
        %3534 = vmatmul.mubr.bf16.gmra.mxu0 %v2880
        %v3535 = vpop.f32.mrf.mxu0
        %v3536 = vadd.f32 %v3464, %v3535
        %v3537 = vpop.f32.mrf.mxu0
        %v3538 = vadd.f32 %v3468, %v3537
        %v3539 = vpop.f32.mrf.mxu0
        %v3540 = vadd.f32 %v3464, %v3539
        %v3541 = vpop.f32.mrf.mxu0
        %v3542 = vadd.f32 %v3468, %v3541
        %3543 = vmatprep.mubr.bf16.mxu0 0
        %3544 = vmatmul.mubr.bf16.gmra.mxu0 %v2883
        %v3545 = vpop.f32.mrf.mxu0
        %v3546 = vadd.f32 %v3464, %v3545
        %v3547 = vpop.f32.mrf.mxu0
        %v3548 = vadd.f32 %v3468, %v3547
        %v3549 = vpop.f32.mrf.mxu0
        %v3550 = vadd.f32 %v3464, %v3549
        %v3551 = vpop.f32.mrf.mxu0
        %v3552 = vadd.f32 %v3468, %v3551
        %3553 = vmatprep.mubr.bf16.mxu0 0
        %3554 = vmatmul.mubr.bf16.gmra.mxu0 %v2886
        %v3555 = vpop.f32.mrf.mxu0
        %v3556 = vadd.f32 %v3464, %v3555
        %v3557 = vpop.f32.mrf.mxu0
        %v3558 = vadd.f32 %v3468, %v3557
        %v3559 = vpop.f32.mrf.mxu0
        %v3560 = vadd.f32 %v3464, %v3559
        %v3561 = vpop.f32.mrf.mxu0
        %v3562 = vadd.f32 %v3468, %v3561
        %3563 = vmatprep.mubr.bf16.mxu0 0
        %3564 = vmatmul.mubr.bf16.gmra.mxu0 %v2889
        %v3565 = vpop.f32.mrf.mxu0
        %v3566 = vadd.f32 %v3464, %v3565
        %v3567 = vpop.f32.mrf.mxu0
        %v3568 = vadd.f32 %v3468, %v3567
        %v3569 = vpop.f32.mrf.mxu0
        %v3570 = vpop.f32.mrf.mxu0
        %3571 = vdwg.mxu0
        %v3572 = vmax.f32 %v3526, 0.0
        %v3573 = vmax.f32 %v3528, 0.0
        %v3574 = vmax.f32 %v3530, 0.0
        %v3575 = vmax.f32 %v3532, 0.0
        %v3576 = vmax.f32 %v3536, 0.0
        %v3577 = vmax.f32 %v3538, 0.0
        %v3578 = vmax.f32 %v3540, 0.0
        %v3579 = vmax.f32 %v3542, 0.0
        %v3580 = vmax.f32 %v3546, 0.0
        %v3581 = vmax.f32 %v3548, 0.0
        %v3582 = vmax.f32 %v3550, 0.0
        %v3583 = vmax.f32 %v3552, 0.0
        %v3584 = vmax.f32 %v3556, 0.0
        %v3585 = vmax.f32 %v3558, 0.0
        %v3586 = vmax.f32 %v3560, 0.0
        %v3587 = vmax.f32 %v3562, 0.0
        %v3588 = vmax.f32 %v3566, 0.0
        %v3589 = vmax.f32 %v3568, 0.0
        %v3590 = vpack.c.bf16 %v3574, %v3572
        %v3591 = vpack.c.bf16 %v3575, %v3573
        %v3592 = vpack.c.bf16 %v3578, %v3576
        %v3593 = vpack.c.bf16 %v3579, %v3577
        %v3594 = vpack.c.bf16 %v3582, %v3580
        %v3595 = vpack.c.bf16 %v3583, %v3581
        %v3596 = vpack.c.bf16 %v3586, %v3584
        %v3597 = vpack.c.bf16 %v3587, %v3585
        %v3598 = vpack.c.bf16 %v3588, %v3588
        %v3599 = vpack.c.bf16 %v3589, %v3589
        %v3610 = vunpack.c.l.b16 %v3590
        %v3611 = vunpack.c.l.b16 %v3591
        %v3612 = vunpack.c.h.b16 %v3590
        %v3613 = vunpack.c.h.b16 %v3591
        %v3614 = vunpack.c.l.b16 %v3592
        %v3615 = vunpack.c.l.b16 %v3593
        %v3616 = vunpack.c.h.b16 %v3592
        %v3617 = vunpack.c.h.b16 %v3593
        %v3618 = vunpack.c.l.b16 %v3594
        %v3619 = vunpack.c.l.b16 %v3595
        %v3620 = vunpack.c.h.b16 %v3594
        %v3621 = vunpack.c.h.b16 %v3595
        %v3622 = vunpack.c.l.b16 %v3596
        %v3623 = vunpack.c.l.b16 %v3597
        %v3624 = vunpack.c.h.b16 %v3596
        %v3625 = vunpack.c.h.b16 %v3597
        %v3626 = vunpack.c.l.b16 %v3598
        %v3627 = vunpack.c.l.b16 %v3599
        %v3628 = vpack.c.b16 %v3611, %v3610
        %v3629 = vpack.c.b16 %v3613, %v3612
        %v3630 = vpack.c.b16 %v3615, %v3614
        %v3631 = vpack.c.b16 %v3617, %v3616
        %v3632 = vpack.c.b16 %v3619, %v3618
        %v3633 = vpack.c.b16 %v3621, %v3620
        %v3634 = vpack.c.b16 %v3623, %v3622
        %v3635 = vpack.c.b16 %v3625, %v3624
        %v3636 = vpack.c.b16 %v3627, %v3626
        %3646 = vst [vmem:[#allocation3 + $0x18] sm:$0xff] %v3628
        %3647 = vst [vmem:[#allocation3 + $0x58] sm:$0xff] %v3629
        %3648 = vst [vmem:[#allocation3 + $0x98] sm:$0xff] %v3630
        %3649 = vst [vmem:[#allocation3 + $0xd8] sm:$0xff] %v3631
        %3650 = vst [vmem:[#allocation3 + $0x118] sm:$0xff] %v3632
        %3651 = vst [vmem:[#allocation3 + $0x158] sm:$0xff] %v3633
        %3652 = vst [vmem:[#allocation3 + $0x198] sm:$0xff] %v3634
        %3653 = vst [vmem:[#allocation3 + $0x1d8] sm:$0xff] %v3635
        %3654 = vst [vmem:[#allocation3 + $0x218] sm:$0xff] %v3636
        %v3655 = vld [vmem:[%s745 + $0x20] sm:$0xff]
        %v3656 = vld [vmem:[%s745 + $0x60] sm:$0xff]
        %v3657 = vld [vmem:[%s745 + $0xa0] sm:$0xff]
        %v3658 = vld [vmem:[%s745 + $0xe0] sm:$0xff]
        %v3659 = vld [vmem:[%s749 + $0x8] sm:$0x3]
        %v3661 = vlaneseq
        %v3662 = vshrl.u32 %v3661, 7
        %v3663 = vsub.s32 0, %v3662
        %v3664 = vrot.slane %v3659, %v3663
        %v3665 = vlaneseq
        %v3666 = vshrl.u32 %v3665, 7
        %v3667 = vsub.s32 1, %v3666
        %v3668 = vrot.slane %v3659, %v3667
        %v3675 = vunpack.c.l.b16 %v3655
        %v3676 = vunpack.c.h.b16 %v3655
        %v3677 = vunpack.c.l.b16 %v3656
        %v3678 = vunpack.c.h.b16 %v3656
        %v3679 = vunpack.c.l.b16 %v3657
        %v3680 = vunpack.c.h.b16 %v3657
        %v3681 = vunpack.c.l.b16 %v3658
        %v3682 = vunpack.c.h.b16 %v3658
        %v3683 = vpack.c.b16 %v3677, %v3675
        %v3684 = vpack.c.b16 %v3678, %v3676
        %v3685 = vpack.c.b16 %v3681, %v3679
        %v3686 = vpack.c.b16 %v3682, %v3680
        %3691 = vmatprep.subr.bf16.mxu0 0
        %3692 = vmatpush1.bf16.msra.mxu0 0
        %3693 = vmatprep.subr.bf16.mxu0 0
        %3694 = vmatpush1.bf16.msra.mxu0 0
        %3695 = vmatprep.subr.bf16.mxu0 0
        %3696 = vmatpush1.bf16.msra.mxu0 0
        %3697 = vmatprep.subr.bf16.mxu0 0
        %3698 = vmatpush1.bf16.msra.mxu0 0
        %3699 = vmatprep.subr.bf16.mxu0 0
        %3700 = vmatpush1.bf16.msra.mxu0 0
        %3701 = vmatprep.subr.bf16.mxu0 0
        %3702 = vmatpush1.bf16.msra.mxu0 0
        %3703 = vmatprep.subr.bf16.mxu0 %v3686
        %3704 = vmatpush1.bf16.msra.mxu0 %v3685
        %3705 = vmatprep.subr.bf16.mxu0 %v3684
        %3706 = vmatpush1.bf16.msra.mxu0 %v3683
        %3707 = vmatprep.subr.bf16.mxu0 0
        %3708 = vmatpush2.bf16.msra.mxu0 0
        %3709 = vmatprep.subr.bf16.mxu0 0
        %3710 = vmatpush2.bf16.msra.mxu0 0
        %3711 = vmatprep.subr.bf16.mxu0 0
        %3712 = vmatpush2.bf16.msra.mxu0 0
        %3713 = vmatprep.subr.bf16.mxu0 0
        %3714 = vmatpush2.bf16.msra.mxu0 0
        %3715 = vmatprep.subr.bf16.mxu0 0
        %3716 = vmatpush2.bf16.msra.mxu0 0
        %3717 = vmatprep.subr.bf16.mxu0 0
        %3718 = vmatpush2.bf16.msra.mxu0 0
        %3719 = vmatprep.subr.bf16.mxu0 0
        %3720 = vmatpush2.bf16.msra.mxu0 0
        %3721 = vmatprep.subr.bf16.mxu0 0
        %3722 = vmatpush2.bf16.msra.mxu0 0
        %3723 = vmatprep.mubr.bf16.mxu0 0
        %3724 = vmatmul.mubr.bf16.gmra.mxu0 %v2877
        %v3725 = vpop.f32.mrf.mxu0
        %v3726 = vadd.f32 %v3664, %v3725
        %v3727 = vpop.f32.mrf.mxu0
        %v3728 = vadd.f32 %v3668, %v3727
        %v3729 = vpop.f32.mrf.mxu0
        %v3730 = vadd.f32 %v3664, %v3729
        %v3731 = vpop.f32.mrf.mxu0
        %v3732 = vadd.f32 %v3668, %v3731
        %3733 = vmatprep.mubr.bf16.mxu0 0
        %3734 = vmatmul.mubr.bf16.gmra.mxu0 %v2880
        %v3735 = vpop.f32.mrf.mxu0
        %v3736 = vadd.f32 %v3664, %v3735
        %v3737 = vpop.f32.mrf.mxu0
        %v3738 = vadd.f32 %v3668, %v3737
        %v3739 = vpop.f32.mrf.mxu0
        %v3740 = vadd.f32 %v3664, %v3739
        %v3741 = vpop.f32.mrf.mxu0
        %v3742 = vadd.f32 %v3668, %v3741
        %3743 = vmatprep.mubr.bf16.mxu0 0
        %3744 = vmatmul.mubr.bf16.gmra.mxu0 %v2883
        %v3745 = vpop.f32.mrf.mxu0
        %v3746 = vadd.f32 %v3664, %v3745
        %v3747 = vpop.f32.mrf.mxu0
        %v3748 = vadd.f32 %v3668, %v3747
        %v3749 = vpop.f32.mrf.mxu0
        %v3750 = vadd.f32 %v3664, %v3749
        %v3751 = vpop.f32.mrf.mxu0
        %v3752 = vadd.f32 %v3668, %v3751
        %3753 = vmatprep.mubr.bf16.mxu0 0
        %3754 = vmatmul.mubr.bf16.gmra.mxu0 %v2886
        %v3755 = vpop.f32.mrf.mxu0
        %v3756 = vadd.f32 %v3664, %v3755
        %v3757 = vpop.f32.mrf.mxu0
        %v3758 = vadd.f32 %v3668, %v3757
        %v3759 = vpop.f32.mrf.mxu0
        %v3760 = vadd.f32 %v3664, %v3759
        %v3761 = vpop.f32.mrf.mxu0
        %v3762 = vadd.f32 %v3668, %v3761
        %3763 = vmatprep.mubr.bf16.mxu0 0
        %3764 = vmatmul.mubr.bf16.gmra.mxu0 %v2889
        %v3765 = vpop.f32.mrf.mxu0
        %v3766 = vadd.f32 %v3664, %v3765
        %v3767 = vpop.f32.mrf.mxu0
        %v3768 = vadd.f32 %v3668, %v3767
        %v3769 = vpop.f32.mrf.mxu0
        %v3770 = vpop.f32.mrf.mxu0
        %3771 = vdwg.mxu0
        %v3772 = vmax.f32 %v3726, 0.0
        %v3773 = vmax.f32 %v3728, 0.0
        %v3774 = vmax.f32 %v3730, 0.0
        %v3775 = vmax.f32 %v3732, 0.0
        %v3776 = vmax.f32 %v3736, 0.0
        %v3777 = vmax.f32 %v3738, 0.0
        %v3778 = vmax.f32 %v3740, 0.0
        %v3779 = vmax.f32 %v3742, 0.0
        %v3780 = vmax.f32 %v3746, 0.0
        %v3781 = vmax.f32 %v3748, 0.0
        %v3782 = vmax.f32 %v3750, 0.0
        %v3783 = vmax.f32 %v3752, 0.0
        %v3784 = vmax.f32 %v3756, 0.0
        %v3785 = vmax.f32 %v3758, 0.0
        %v3786 = vmax.f32 %v3760, 0.0
        %v3787 = vmax.f32 %v3762, 0.0
        %v3788 = vmax.f32 %v3766, 0.0
        %v3789 = vmax.f32 %v3768, 0.0
        %v3790 = vpack.c.bf16 %v3774, %v3772
        %v3791 = vpack.c.bf16 %v3775, %v3773
        %v3792 = vpack.c.bf16 %v3778, %v3776
        %v3793 = vpack.c.bf16 %v3779, %v3777
        %v3794 = vpack.c.bf16 %v3782, %v3780
        %v3795 = vpack.c.bf16 %v3783, %v3781
        %v3796 = vpack.c.bf16 %v3786, %v3784
        %v3797 = vpack.c.bf16 %v3787, %v3785
        %v3798 = vpack.c.bf16 %v3788, %v3788
        %v3799 = vpack.c.bf16 %v3789, %v3789
        %v3810 = vunpack.c.l.b16 %v3790
        %v3811 = vunpack.c.l.b16 %v3791
        %v3812 = vunpack.c.h.b16 %v3790
        %v3813 = vunpack.c.h.b16 %v3791
        %v3814 = vunpack.c.l.b16 %v3792
        %v3815 = vunpack.c.l.b16 %v3793
        %v3816 = vunpack.c.h.b16 %v3792
        %v3817 = vunpack.c.h.b16 %v3793
        %v3818 = vunpack.c.l.b16 %v3794
        %v3819 = vunpack.c.l.b16 %v3795
        %v3820 = vunpack.c.h.b16 %v3794
        %v3821 = vunpack.c.h.b16 %v3795
        %v3822 = vunpack.c.l.b16 %v3796
        %v3823 = vunpack.c.l.b16 %v3797
        %v3824 = vunpack.c.h.b16 %v3796
        %v3825 = vunpack.c.h.b16 %v3797
        %v3826 = vunpack.c.l.b16 %v3798
        %v3827 = vunpack.c.l.b16 %v3799
        %v3828 = vpack.c.b16 %v3811, %v3810
        %v3829 = vpack.c.b16 %v3813, %v3812
        %v3830 = vpack.c.b16 %v3815, %v3814
        %v3831 = vpack.c.b16 %v3817, %v3816
        %v3832 = vpack.c.b16 %v3819, %v3818
        %v3833 = vpack.c.b16 %v3821, %v3820
        %v3834 = vpack.c.b16 %v3823, %v3822
        %v3835 = vpack.c.b16 %v3825, %v3824
        %v3836 = vpack.c.b16 %v3827, %v3826
        %3846 = vst [vmem:[#allocation3 + $0x20] sm:$0xff] %v3828
        %3847 = vst [vmem:[#allocation3 + $0x60] sm:$0xff] %v3829
        %3848 = vst [vmem:[#allocation3 + $0xa0] sm:$0xff] %v3830
        %3849 = vst [vmem:[#allocation3 + $0xe0] sm:$0xff] %v3831
        %3850 = vst [vmem:[#allocation3 + $0x120] sm:$0xff] %v3832
        %3851 = vst [vmem:[#allocation3 + $0x160] sm:$0xff] %v3833
        %3852 = vst [vmem:[#allocation3 + $0x1a0] sm:$0xff] %v3834
        %3853 = vst [vmem:[#allocation3 + $0x1e0] sm:$0xff] %v3835
        %3854 = vst [vmem:[#allocation3 + $0x220] sm:$0xff] %v3836
        %v3855 = vld [vmem:[%s745 + $0x28] sm:$0xff]
        %v3856 = vld [vmem:[%s745 + $0x68] sm:$0xff]
        %v3857 = vld [vmem:[%s745 + $0xa8] sm:$0xff]
        %v3858 = vld [vmem:[%s745 + $0xe8] sm:$0xff]
        %v3859 = vld [vmem:[%s749 + $0xa] sm:$0x3]
        %v3861 = vlaneseq
        %v3862 = vshrl.u32 %v3861, 7
        %v3863 = vsub.s32 0, %v3862
        %v3864 = vrot.slane %v3859, %v3863
        %v3865 = vlaneseq
        %v3866 = vshrl.u32 %v3865, 7
        %v3867 = vsub.s32 1, %v3866
        %v3868 = vrot.slane %v3859, %v3867
        %v3875 = vunpack.c.l.b16 %v3855
        %v3876 = vunpack.c.h.b16 %v3855
        %v3877 = vunpack.c.l.b16 %v3856
        %v3878 = vunpack.c.h.b16 %v3856
        %v3879 = vunpack.c.l.b16 %v3857
        %v3880 = vunpack.c.h.b16 %v3857
        %v3881 = vunpack.c.l.b16 %v3858
        %v3882 = vunpack.c.h.b16 %v3858
        %v3883 = vpack.c.b16 %v3877, %v3875
        %v3884 = vpack.c.b16 %v3878, %v3876
        %v3885 = vpack.c.b16 %v3881, %v3879
        %v3886 = vpack.c.b16 %v3882, %v3880
        %3891 = vmatprep.subr.bf16.mxu0 0
        %3892 = vmatpush1.bf16.msra.mxu0 0
        %3893 = vmatprep.subr.bf16.mxu0 0
        %3894 = vmatpush1.bf16.msra.mxu0 0
        %3895 = vmatprep.subr.bf16.mxu0 0
        %3896 = vmatpush1.bf16.msra.mxu0 0
        %3897 = vmatprep.subr.bf16.mxu0 0
        %3898 = vmatpush1.bf16.msra.mxu0 0
        %3899 = vmatprep.subr.bf16.mxu0 0
        %3900 = vmatpush1.bf16.msra.mxu0 0
        %3901 = vmatprep.subr.bf16.mxu0 0
        %3902 = vmatpush1.bf16.msra.mxu0 0
        %3903 = vmatprep.subr.bf16.mxu0 %v3886
        %3904 = vmatpush1.bf16.msra.mxu0 %v3885
        %3905 = vmatprep.subr.bf16.mxu0 %v3884
        %3906 = vmatpush1.bf16.msra.mxu0 %v3883
        %3907 = vmatprep.subr.bf16.mxu0 0
        %3908 = vmatpush2.bf16.msra.mxu0 0
        %3909 = vmatprep.subr.bf16.mxu0 0
        %3910 = vmatpush2.bf16.msra.mxu0 0
        %3911 = vmatprep.subr.bf16.mxu0 0
        %3912 = vmatpush2.bf16.msra.mxu0 0
        %3913 = vmatprep.subr.bf16.mxu0 0
        %3914 = vmatpush2.bf16.msra.mxu0 0
        %3915 = vmatprep.subr.bf16.mxu0 0
        %3916 = vmatpush2.bf16.msra.mxu0 0
        %3917 = vmatprep.subr.bf16.mxu0 0
        %3918 = vmatpush2.bf16.msra.mxu0 0
        %3919 = vmatprep.subr.bf16.mxu0 0
        %3920 = vmatpush2.bf16.msra.mxu0 0
        %3921 = vmatprep.subr.bf16.mxu0 0
        %3922 = vmatpush2.bf16.msra.mxu0 0
        %3923 = vmatprep.mubr.bf16.mxu0 0
        %3924 = vmatmul.mubr.bf16.gmra.mxu0 %v2877
        %v3925 = vpop.f32.mrf.mxu0
        %v3926 = vadd.f32 %v3864, %v3925
        %v3927 = vpop.f32.mrf.mxu0
        %v3928 = vadd.f32 %v3868, %v3927
        %v3929 = vpop.f32.mrf.mxu0
        %v3930 = vadd.f32 %v3864, %v3929
        %v3931 = vpop.f32.mrf.mxu0
        %v3932 = vadd.f32 %v3868, %v3931
        %3933 = vmatprep.mubr.bf16.mxu0 0
        %3934 = vmatmul.mubr.bf16.gmra.mxu0 %v2880
        %v3935 = vpop.f32.mrf.mxu0
        %v3936 = vadd.f32 %v3864, %v3935
        %v3937 = vpop.f32.mrf.mxu0
        %v3938 = vadd.f32 %v3868, %v3937
        %v3939 = vpop.f32.mrf.mxu0
        %v3940 = vadd.f32 %v3864, %v3939
        %v3941 = vpop.f32.mrf.mxu0
        %v3942 = vadd.f32 %v3868, %v3941
        %3943 = vmatprep.mubr.bf16.mxu0 0
        %3944 = vmatmul.mubr.bf16.gmra.mxu0 %v2883
        %v3945 = vpop.f32.mrf.mxu0
        %v3946 = vadd.f32 %v3864, %v3945
        %v3947 = vpop.f32.mrf.mxu0
        %v3948 = vadd.f32 %v3868, %v3947
        %v3949 = vpop.f32.mrf.mxu0
        %v3950 = vadd.f32 %v3864, %v3949
        %v3951 = vpop.f32.mrf.mxu0
        %v3952 = vadd.f32 %v3868, %v3951
        %3953 = vmatprep.mubr.bf16.mxu0 0
        %3954 = vmatmul.mubr.bf16.gmra.mxu0 %v2886
        %v3955 = vpop.f32.mrf.mxu0
        %v3956 = vadd.f32 %v3864, %v3955
        %v3957 = vpop.f32.mrf.mxu0
        %v3958 = vadd.f32 %v3868, %v3957
        %v3959 = vpop.f32.mrf.mxu0
        %v3960 = vadd.f32 %v3864, %v3959
        %v3961 = vpop.f32.mrf.mxu0
        %v3962 = vadd.f32 %v3868, %v3961
        %3963 = vmatprep.mubr.bf16.mxu0 0
        %3964 = vmatmul.mubr.bf16.gmra.mxu0 %v2889
        %v3965 = vpop.f32.mrf.mxu0
        %v3966 = vadd.f32 %v3864, %v3965
        %v3967 = vpop.f32.mrf.mxu0
        %v3968 = vadd.f32 %v3868, %v3967
        %v3969 = vpop.f32.mrf.mxu0
        %v3970 = vpop.f32.mrf.mxu0
        %3971 = vdwg.mxu0
        %v3972 = vmax.f32 %v3926, 0.0
        %v3973 = vmax.f32 %v3928, 0.0
        %v3974 = vmax.f32 %v3930, 0.0
        %v3975 = vmax.f32 %v3932, 0.0
        %v3976 = vmax.f32 %v3936, 0.0
        %v3977 = vmax.f32 %v3938, 0.0
        %v3978 = vmax.f32 %v3940, 0.0
        %v3979 = vmax.f32 %v3942, 0.0
        %v3980 = vmax.f32 %v3946, 0.0
        %v3981 = vmax.f32 %v3948, 0.0
        %v3982 = vmax.f32 %v3950, 0.0
        %v3983 = vmax.f32 %v3952, 0.0
        %v3984 = vmax.f32 %v3956, 0.0
        %v3985 = vmax.f32 %v3958, 0.0
        %v3986 = vmax.f32 %v3960, 0.0
        %v3987 = vmax.f32 %v3962, 0.0
        %v3988 = vmax.f32 %v3966, 0.0
        %v3989 = vmax.f32 %v3968, 0.0
        %v3990 = vpack.c.bf16 %v3974, %v3972
        %v3991 = vpack.c.bf16 %v3975, %v3973
        %v3992 = vpack.c.bf16 %v3978, %v3976
        %v3993 = vpack.c.bf16 %v3979, %v3977
        %v3994 = vpack.c.bf16 %v3982, %v3980
        %v3995 = vpack.c.bf16 %v3983, %v3981
        %v3996 = vpack.c.bf16 %v3986, %v3984
        %v3997 = vpack.c.bf16 %v3987, %v3985
        %v3998 = vpack.c.bf16 %v3988, %v3988
        %v3999 = vpack.c.bf16 %v3989, %v3989
        %v4010 = vunpack.c.l.b16 %v3990
        %v4011 = vunpack.c.l.b16 %v3991
        %v4012 = vunpack.c.h.b16 %v3990
        %v4013 = vunpack.c.h.b16 %v3991
        %v4014 = vunpack.c.l.b16 %v3992
        %v4015 = vunpack.c.l.b16 %v3993
        %v4016 = vunpack.c.h.b16 %v3992
        %v4017 = vunpack.c.h.b16 %v3993
        %v4018 = vunpack.c.l.b16 %v3994
        %v4019 = vunpack.c.l.b16 %v3995
        %v4020 = vunpack.c.h.b16 %v3994
        %v4021 = vunpack.c.h.b16 %v3995
        %v4022 = vunpack.c.l.b16 %v3996
        %v4023 = vunpack.c.l.b16 %v3997
        %v4024 = vunpack.c.h.b16 %v3996
        %v4025 = vunpack.c.h.b16 %v3997
        %v4026 = vunpack.c.l.b16 %v3998
        %v4027 = vunpack.c.l.b16 %v3999
        %v4028 = vpack.c.b16 %v4011, %v4010
        %v4029 = vpack.c.b16 %v4013, %v4012
        %v4030 = vpack.c.b16 %v4015, %v4014
        %v4031 = vpack.c.b16 %v4017, %v4016
        %v4032 = vpack.c.b16 %v4019, %v4018
        %v4033 = vpack.c.b16 %v4021, %v4020
        %v4034 = vpack.c.b16 %v4023, %v4022
        %v4035 = vpack.c.b16 %v4025, %v4024
        %v4036 = vpack.c.b16 %v4027, %v4026
        %4046 = vst [vmem:[#allocation3 + $0x28] sm:$0xff] %v4028
        %4047 = vst [vmem:[#allocation3 + $0x68] sm:$0xff] %v4029
        %4048 = vst [vmem:[#allocation3 + $0xa8] sm:$0xff] %v4030
        %4049 = vst [vmem:[#allocation3 + $0xe8] sm:$0xff] %v4031
        %4050 = vst [vmem:[#allocation3 + $0x128] sm:$0xff] %v4032
        %4051 = vst [vmem:[#allocation3 + $0x168] sm:$0xff] %v4033
        %4052 = vst [vmem:[#allocation3 + $0x1a8] sm:$0xff] %v4034
        %4053 = vst [vmem:[#allocation3 + $0x1e8] sm:$0xff] %v4035
        %4054 = vst [vmem:[#allocation3 + $0x228] sm:$0xff] %v4036
        %v4055 = vld [vmem:[%s745 + $0x30] sm:$0xff]
        %v4056 = vld [vmem:[%s745 + $0x70] sm:$0xff]
        %v4057 = vld [vmem:[%s745 + $0xb0] sm:$0xff]
        %v4058 = vld [vmem:[%s745 + $0xf0] sm:$0xff]
        %v4059 = vld [vmem:[%s749 + $0xc] sm:$0x3]
        %v4061 = vlaneseq
        %v4062 = vshrl.u32 %v4061, 7
        %v4063 = vsub.s32 0, %v4062
        %v4064 = vrot.slane %v4059, %v4063
        %v4065 = vlaneseq
        %v4066 = vshrl.u32 %v4065, 7
        %v4067 = vsub.s32 1, %v4066
        %v4068 = vrot.slane %v4059, %v4067
        %v4075 = vunpack.c.l.b16 %v4055
        %v4076 = vunpack.c.h.b16 %v4055
        %v4077 = vunpack.c.l.b16 %v4056
        %v4078 = vunpack.c.h.b16 %v4056
        %v4079 = vunpack.c.l.b16 %v4057
        %v4080 = vunpack.c.h.b16 %v4057
        %v4081 = vunpack.c.l.b16 %v4058
        %v4082 = vunpack.c.h.b16 %v4058
        %v4083 = vpack.c.b16 %v4077, %v4075
        %v4084 = vpack.c.b16 %v4078, %v4076
        %v4085 = vpack.c.b16 %v4081, %v4079
        %v4086 = vpack.c.b16 %v4082, %v4080
        %4091 = vmatprep.subr.bf16.mxu0 0
        %4092 = vmatpush1.bf16.msra.mxu0 0
        %4093 = vmatprep.subr.bf16.mxu0 0
        %4094 = vmatpush1.bf16.msra.mxu0 0
        %4095 = vmatprep.subr.bf16.mxu0 0
        %4096 = vmatpush1.bf16.msra.mxu0 0
        %4097 = vmatprep.subr.bf16.mxu0 0
        %4098 = vmatpush1.bf16.msra.mxu0 0
        %4099 = vmatprep.subr.bf16.mxu0 0
        %4100 = vmatpush1.bf16.msra.mxu0 0
        %4101 = vmatprep.subr.bf16.mxu0 0
        %4102 = vmatpush1.bf16.msra.mxu0 0
        %4103 = vmatprep.subr.bf16.mxu0 %v4086
        %4104 = vmatpush1.bf16.msra.mxu0 %v4085
        %4105 = vmatprep.subr.bf16.mxu0 %v4084
        %4106 = vmatpush1.bf16.msra.mxu0 %v4083
        %4107 = vmatprep.subr.bf16.mxu0 0
        %4108 = vmatpush2.bf16.msra.mxu0 0
        %4109 = vmatprep.subr.bf16.mxu0 0
        %4110 = vmatpush2.bf16.msra.mxu0 0
        %4111 = vmatprep.subr.bf16.mxu0 0
        %4112 = vmatpush2.bf16.msra.mxu0 0
        %4113 = vmatprep.subr.bf16.mxu0 0
        %4114 = vmatpush2.bf16.msra.mxu0 0
        %4115 = vmatprep.subr.bf16.mxu0 0
        %4116 = vmatpush2.bf16.msra.mxu0 0
        %4117 = vmatprep.subr.bf16.mxu0 0
        %4118 = vmatpush2.bf16.msra.mxu0 0
        %4119 = vmatprep.subr.bf16.mxu0 0
        %4120 = vmatpush2.bf16.msra.mxu0 0
        %4121 = vmatprep.subr.bf16.mxu0 0
        %4122 = vmatpush2.bf16.msra.mxu0 0
        %4123 = vmatprep.mubr.bf16.mxu0 0
        %4124 = vmatmul.mubr.bf16.gmra.mxu0 %v2877
        %v4125 = vpop.f32.mrf.mxu0
        %v4126 = vadd.f32 %v4064, %v4125
        %v4127 = vpop.f32.mrf.mxu0
        %v4128 = vadd.f32 %v4068, %v4127
        %v4129 = vpop.f32.mrf.mxu0
        %v4130 = vadd.f32 %v4064, %v4129
        %v4131 = vpop.f32.mrf.mxu0
        %v4132 = vadd.f32 %v4068, %v4131
        %4133 = vmatprep.mubr.bf16.mxu0 0
        %4134 = vmatmul.mubr.bf16.gmra.mxu0 %v2880
        %v4135 = vpop.f32.mrf.mxu0
        %v4136 = vadd.f32 %v4064, %v4135
        %v4137 = vpop.f32.mrf.mxu0
        %v4138 = vadd.f32 %v4068, %v4137
        %v4139 = vpop.f32.mrf.mxu0
        %v4140 = vadd.f32 %v4064, %v4139
        %v4141 = vpop.f32.mrf.mxu0
        %v4142 = vadd.f32 %v4068, %v4141
        %4143 = vmatprep.mubr.bf16.mxu0 0
        %4144 = vmatmul.mubr.bf16.gmra.mxu0 %v2883
        %v4145 = vpop.f32.mrf.mxu0
        %v4146 = vadd.f32 %v4064, %v4145
        %v4147 = vpop.f32.mrf.mxu0
        %v4148 = vadd.f32 %v4068, %v4147
        %v4149 = vpop.f32.mrf.mxu0
        %v4150 = vadd.f32 %v4064, %v4149
        %v4151 = vpop.f32.mrf.mxu0
        %v4152 = vadd.f32 %v4068, %v4151
        %4153 = vmatprep.mubr.bf16.mxu0 0
        %4154 = vmatmul.mubr.bf16.gmra.mxu0 %v2886
        %v4155 = vpop.f32.mrf.mxu0
        %v4156 = vadd.f32 %v4064, %v4155
        %v4157 = vpop.f32.mrf.mxu0
        %v4158 = vadd.f32 %v4068, %v4157
        %v4159 = vpop.f32.mrf.mxu0
        %v4160 = vadd.f32 %v4064, %v4159
        %v4161 = vpop.f32.mrf.mxu0
        %v4162 = vadd.f32 %v4068, %v4161
        %4163 = vmatprep.mubr.bf16.mxu0 0
        %4164 = vmatmul.mubr.bf16.gmra.mxu0 %v2889
        %v4165 = vpop.f32.mrf.mxu0
        %v4166 = vadd.f32 %v4064, %v4165
        %v4167 = vpop.f32.mrf.mxu0
        %v4168 = vadd.f32 %v4068, %v4167
        %v4169 = vpop.f32.mrf.mxu0
        %v4170 = vpop.f32.mrf.mxu0
        %4171 = vdwg.mxu0
        %v4172 = vmax.f32 %v4126, 0.0
        %v4173 = vmax.f32 %v4128, 0.0
        %v4174 = vmax.f32 %v4130, 0.0
        %v4175 = vmax.f32 %v4132, 0.0
        %v4176 = vmax.f32 %v4136, 0.0
        %v4177 = vmax.f32 %v4138, 0.0
        %v4178 = vmax.f32 %v4140, 0.0
        %v4179 = vmax.f32 %v4142, 0.0
        %v4180 = vmax.f32 %v4146, 0.0
        %v4181 = vmax.f32 %v4148, 0.0
        %v4182 = vmax.f32 %v4150, 0.0
        %v4183 = vmax.f32 %v4152, 0.0
        %v4184 = vmax.f32 %v4156, 0.0
        %v4185 = vmax.f32 %v4158, 0.0
        %v4186 = vmax.f32 %v4160, 0.0
        %v4187 = vmax.f32 %v4162, 0.0
        %v4188 = vmax.f32 %v4166, 0.0
        %v4189 = vmax.f32 %v4168, 0.0
        %v4190 = vpack.c.bf16 %v4174, %v4172
        %v4191 = vpack.c.bf16 %v4175, %v4173
        %v4192 = vpack.c.bf16 %v4178, %v4176
        %v4193 = vpack.c.bf16 %v4179, %v4177
        %v4194 = vpack.c.bf16 %v4182, %v4180
        %v4195 = vpack.c.bf16 %v4183, %v4181
        %v4196 = vpack.c.bf16 %v4186, %v4184
        %v4197 = vpack.c.bf16 %v4187, %v4185
        %v4198 = vpack.c.bf16 %v4188, %v4188
        %v4199 = vpack.c.bf16 %v4189, %v4189
        %v4210 = vunpack.c.l.b16 %v4190
        %v4211 = vunpack.c.l.b16 %v4191
        %v4212 = vunpack.c.h.b16 %v4190
        %v4213 = vunpack.c.h.b16 %v4191
        %v4214 = vunpack.c.l.b16 %v4192
        %v4215 = vunpack.c.l.b16 %v4193
        %v4216 = vunpack.c.h.b16 %v4192
        %v4217 = vunpack.c.h.b16 %v4193
        %v4218 = vunpack.c.l.b16 %v4194
        %v4219 = vunpack.c.l.b16 %v4195
        %v4220 = vunpack.c.h.b16 %v4194
        %v4221 = vunpack.c.h.b16 %v4195
        %v4222 = vunpack.c.l.b16 %v4196
        %v4223 = vunpack.c.l.b16 %v4197
        %v4224 = vunpack.c.h.b16 %v4196
        %v4225 = vunpack.c.h.b16 %v4197
        %v4226 = vunpack.c.l.b16 %v4198
        %v4227 = vunpack.c.l.b16 %v4199
        %v4228 = vpack.c.b16 %v4211, %v4210
        %v4229 = vpack.c.b16 %v4213, %v4212
        %v4230 = vpack.c.b16 %v4215, %v4214
        %v4231 = vpack.c.b16 %v4217, %v4216
        %v4232 = vpack.c.b16 %v4219, %v4218
        %v4233 = vpack.c.b16 %v4221, %v4220
        %v4234 = vpack.c.b16 %v4223, %v4222
        %v4235 = vpack.c.b16 %v4225, %v4224
        %v4236 = vpack.c.b16 %v4227, %v4226
        %4246 = vst [vmem:[#allocation3 + $0x30] sm:$0xff] %v4228
        %4247 = vst [vmem:[#allocation3 + $0x70] sm:$0xff] %v4229
        %4248 = vst [vmem:[#allocation3 + $0xb0] sm:$0xff] %v4230
        %4249 = vst [vmem:[#allocation3 + $0xf0] sm:$0xff] %v4231
        %4250 = vst [vmem:[#allocation3 + $0x130] sm:$0xff] %v4232
        %4251 = vst [vmem:[#allocation3 + $0x170] sm:$0xff] %v4233
        %4252 = vst [vmem:[#allocation3 + $0x1b0] sm:$0xff] %v4234
        %4253 = vst [vmem:[#allocation3 + $0x1f0] sm:$0xff] %v4235
        %4254 = vst [vmem:[#allocation3 + $0x230] sm:$0xff] %v4236
        %v4255 = vld [vmem:[%s745 + $0x38] sm:$0xff]
        %v4256 = vld [vmem:[%s745 + $0x78] sm:$0xff]
        %v4257 = vld [vmem:[%s745 + $0xb8] sm:$0xff]
        %v4258 = vld [vmem:[%s745 + $0xf8] sm:$0xff]
        %v4259 = vld [vmem:[%s749 + $0xe] sm:$0x3]
        %v4261 = vlaneseq
        %v4262 = vshrl.u32 %v4261, 7
        %v4263 = vsub.s32 0, %v4262
        %v4264 = vrot.slane %v4259, %v4263
        %v4265 = vlaneseq
        %v4266 = vshrl.u32 %v4265, 7
        %v4267 = vsub.s32 1, %v4266
        %v4268 = vrot.slane %v4259, %v4267
        %v4275 = vunpack.c.l.b16 %v4255
        %v4276 = vunpack.c.h.b16 %v4255
        %v4277 = vunpack.c.l.b16 %v4256
        %v4278 = vunpack.c.h.b16 %v4256
        %v4279 = vunpack.c.l.b16 %v4257
        %v4280 = vunpack.c.h.b16 %v4257
        %v4281 = vunpack.c.l.b16 %v4258
        %v4282 = vunpack.c.h.b16 %v4258
        %v4283 = vpack.c.b16 %v4277, %v4275
        %v4284 = vpack.c.b16 %v4278, %v4276
        %v4285 = vpack.c.b16 %v4281, %v4279
        %v4286 = vpack.c.b16 %v4282, %v4280
        %4291 = vmatprep.subr.bf16.mxu0 0
        %4292 = vmatpush1.bf16.msra.mxu0 0
        %4293 = vmatprep.subr.bf16.mxu0 0
        %4294 = vmatpush1.bf16.msra.mxu0 0
        %4295 = vmatprep.subr.bf16.mxu0 0
        %4296 = vmatpush1.bf16.msra.mxu0 0
        %4297 = vmatprep.subr.bf16.mxu0 0
        %4298 = vmatpush1.bf16.msra.mxu0 0
        %4299 = vmatprep.subr.bf16.mxu0 0
        %4300 = vmatpush1.bf16.msra.mxu0 0
        %4301 = vmatprep.subr.bf16.mxu0 0
        %4302 = vmatpush1.bf16.msra.mxu0 0
        %4303 = vmatprep.subr.bf16.mxu0 %v4286
        %4304 = vmatpush1.bf16.msra.mxu0 %v4285
        %4305 = vmatprep.subr.bf16.mxu0 %v4284
        %4306 = vmatpush1.bf16.msra.mxu0 %v4283
        %4307 = vmatprep.subr.bf16.mxu0 0
        %4308 = vmatpush2.bf16.msra.mxu0 0
        %4309 = vmatprep.subr.bf16.mxu0 0
        %4310 = vmatpush2.bf16.msra.mxu0 0
        %4311 = vmatprep.subr.bf16.mxu0 0
        %4312 = vmatpush2.bf16.msra.mxu0 0
        %4313 = vmatprep.subr.bf16.mxu0 0
        %4314 = vmatpush2.bf16.msra.mxu0 0
        %4315 = vmatprep.subr.bf16.mxu0 0
        %4316 = vmatpush2.bf16.msra.mxu0 0
        %4317 = vmatprep.subr.bf16.mxu0 0
        %4318 = vmatpush2.bf16.msra.mxu0 0
        %4319 = vmatprep.subr.bf16.mxu0 0
        %4320 = vmatpush2.bf16.msra.mxu0 0
        %4321 = vmatprep.subr.bf16.mxu0 0
        %4322 = vmatpush2.bf16.msra.mxu0 0
        %4323 = vmatprep.mubr.bf16.mxu0 0
        %4324 = vmatmul.mubr.bf16.gmra.mxu0 %v2877
        %v4325 = vpop.f32.mrf.mxu0
        %v4326 = vadd.f32 %v4264, %v4325
        %v4327 = vpop.f32.mrf.mxu0
        %v4328 = vadd.f32 %v4268, %v4327
        %v4329 = vpop.f32.mrf.mxu0
        %v4330 = vadd.f32 %v4264, %v4329
        %v4331 = vpop.f32.mrf.mxu0
        %v4332 = vadd.f32 %v4268, %v4331
        %4333 = vmatprep.mubr.bf16.mxu0 0
        %4334 = vmatmul.mubr.bf16.gmra.mxu0 %v2880
        %v4335 = vpop.f32.mrf.mxu0
        %v4336 = vadd.f32 %v4264, %v4335
        %v4337 = vpop.f32.mrf.mxu0
        %v4338 = vadd.f32 %v4268, %v4337
        %v4339 = vpop.f32.mrf.mxu0
        %v4340 = vadd.f32 %v4264, %v4339
        %v4341 = vpop.f32.mrf.mxu0
        %v4342 = vadd.f32 %v4268, %v4341
        %4343 = vmatprep.mubr.bf16.mxu0 0
        %4344 = vmatmul.mubr.bf16.gmra.mxu0 %v2883
        %v4345 = vpop.f32.mrf.mxu0
        %v4346 = vadd.f32 %v4264, %v4345
        %v4347 = vpop.f32.mrf.mxu0
        %v4348 = vadd.f32 %v4268, %v4347
        %v4349 = vpop.f32.mrf.mxu0
        %v4350 = vadd.f32 %v4264, %v4349
        %v4351 = vpop.f32.mrf.mxu0
        %v4352 = vadd.f32 %v4268, %v4351
        %4353 = vmatprep.mubr.bf16.mxu0 0
        %4354 = vmatmul.mubr.bf16.gmra.mxu0 %v2886
        %v4355 = vpop.f32.mrf.mxu0
        %v4356 = vadd.f32 %v4264, %v4355
        %v4357 = vpop.f32.mrf.mxu0
        %v4358 = vadd.f32 %v4268, %v4357
        %v4359 = vpop.f32.mrf.mxu0
        %v4360 = vadd.f32 %v4264, %v4359
        %v4361 = vpop.f32.mrf.mxu0
        %v4362 = vadd.f32 %v4268, %v4361
        %4363 = vmatprep.mubr.bf16.mxu0 0
        %4364 = vmatmul.mubr.bf16.gmra.mxu0 %v2889
        %v4365 = vpop.f32.mrf.mxu0
        %v4366 = vadd.f32 %v4264, %v4365
        %v4367 = vpop.f32.mrf.mxu0
        %v4368 = vadd.f32 %v4268, %v4367
        %v4369 = vpop.f32.mrf.mxu0
        %v4370 = vpop.f32.mrf.mxu0
        %4371 = vdwg.mxu0
        %v4372 = vmax.f32 %v4326, 0.0
        %v4373 = vmax.f32 %v4328, 0.0
        %v4374 = vmax.f32 %v4330, 0.0
        %v4375 = vmax.f32 %v4332, 0.0
        %v4376 = vmax.f32 %v4336, 0.0
        %v4377 = vmax.f32 %v4338, 0.0
        %v4378 = vmax.f32 %v4340, 0.0
        %v4379 = vmax.f32 %v4342, 0.0
        %v4380 = vmax.f32 %v4346, 0.0
        %v4381 = vmax.f32 %v4348, 0.0
        %v4382 = vmax.f32 %v4350, 0.0
        %v4383 = vmax.f32 %v4352, 0.0
        %v4384 = vmax.f32 %v4356, 0.0
        %v4385 = vmax.f32 %v4358, 0.0
        %v4386 = vmax.f32 %v4360, 0.0
        %v4387 = vmax.f32 %v4362, 0.0
        %v4388 = vmax.f32 %v4366, 0.0
        %v4389 = vmax.f32 %v4368, 0.0
        %v4390 = vpack.c.bf16 %v4374, %v4372
        %v4391 = vpack.c.bf16 %v4375, %v4373
        %v4392 = vpack.c.bf16 %v4378, %v4376
        %v4393 = vpack.c.bf16 %v4379, %v4377
        %v4394 = vpack.c.bf16 %v4382, %v4380
        %v4395 = vpack.c.bf16 %v4383, %v4381
        %v4396 = vpack.c.bf16 %v4386, %v4384
        %v4397 = vpack.c.bf16 %v4387, %v4385
        %v4398 = vpack.c.bf16 %v4388, %v4388
        %v4399 = vpack.c.bf16 %v4389, %v4389
        %v4410 = vunpack.c.l.b16 %v4390
        %v4411 = vunpack.c.l.b16 %v4391
        %v4412 = vunpack.c.h.b16 %v4390
        %v4413 = vunpack.c.h.b16 %v4391
        %v4414 = vunpack.c.l.b16 %v4392
        %v4415 = vunpack.c.l.b16 %v4393
        %v4416 = vunpack.c.h.b16 %v4392
        %v4417 = vunpack.c.h.b16 %v4393
        %v4418 = vunpack.c.l.b16 %v4394
        %v4419 = vunpack.c.l.b16 %v4395
        %v4420 = vunpack.c.h.b16 %v4394
        %v4421 = vunpack.c.h.b16 %v4395
        %v4422 = vunpack.c.l.b16 %v4396
        %v4423 = vunpack.c.l.b16 %v4397
        %v4424 = vunpack.c.h.b16 %v4396
        %v4425 = vunpack.c.h.b16 %v4397
        %v4426 = vunpack.c.l.b16 %v4398
        %v4427 = vunpack.c.l.b16 %v4399
        %v4428 = vpack.c.b16 %v4411, %v4410
        %v4429 = vpack.c.b16 %v4413, %v4412
        %v4430 = vpack.c.b16 %v4415, %v4414
        %v4431 = vpack.c.b16 %v4417, %v4416
        %v4432 = vpack.c.b16 %v4419, %v4418
        %v4433 = vpack.c.b16 %v4421, %v4420
        %v4434 = vpack.c.b16 %v4423, %v4422
        %v4435 = vpack.c.b16 %v4425, %v4424
        %v4436 = vpack.c.b16 %v4427, %v4426
        %4446 = vst [vmem:[#allocation3 + $0x38] sm:$0xff] %v4428
        %4447 = vst [vmem:[#allocation3 + $0x78] sm:$0xff] %v4429
        %4448 = vst [vmem:[#allocation3 + $0xb8] sm:$0xff] %v4430
        %4449 = vst [vmem:[#allocation3 + $0xf8] sm:$0xff] %v4431
        %4450 = vst [vmem:[#allocation3 + $0x138] sm:$0xff] %v4432
        %4451 = vst [vmem:[#allocation3 + $0x178] sm:$0xff] %v4433
        %4452 = vst [vmem:[#allocation3 + $0x1b8] sm:$0xff] %v4434
        %4453 = vst [vmem:[#allocation3 + $0x1f8] sm:$0xff] %v4435
        %4454 = vst [vmem:[#allocation3 + $0x238] sm:$0xff] %v4436
        %v4455 = vld [vmem:[#allocation3] sm:$0xff]
        %v4456 = vld [vmem:[#allocation3 + $0x8] sm:$0xff]
        %v4457 = vld [vmem:[#allocation3 + $0x10] sm:$0xff]
        %v4458 = vld [vmem:[#allocation3 + $0x18] sm:$0xff]
        %v4459 = vld [vmem:[#allocation3 + $0x20] sm:$0xff]
        %v4460 = vld [vmem:[#allocation3 + $0x28] sm:$0xff]
        %v4461 = vld [vmem:[#allocation3 + $0x30] sm:$0xff]
        %v4462 = vld [vmem:[#allocation3 + $0x38] sm:$0xff]
        %v4463 = vld [vmem:[#allocation3 + $0x40] sm:$0xff]
        %v4464 = vld [vmem:[#allocation3 + $0x48] sm:$0xff]
        %v4465 = vld [vmem:[#allocation3 + $0x50] sm:$0xff]
        %v4466 = vld [vmem:[#allocation3 + $0x58] sm:$0xff]
        %v4467 = vld [vmem:[#allocation3 + $0x60] sm:$0xff]
        %v4468 = vld [vmem:[#allocation3 + $0x68] sm:$0xff]
        %v4469 = vld [vmem:[#allocation3 + $0x70] sm:$0xff]
        %v4470 = vld [vmem:[#allocation3 + $0x78] sm:$0xff]
        %v4471 = vld [vmem:[#allocation3 + $0x80] sm:$0xff]
        %v4472 = vld [vmem:[#allocation3 + $0x88] sm:$0xff]
        %v4473 = vld [vmem:[#allocation3 + $0x90] sm:$0xff]
        %v4474 = vld [vmem:[#allocation3 + $0x98] sm:$0xff]
        %v4475 = vld [vmem:[#allocation3 + $0xa0] sm:$0xff]
        %v4476 = vld [vmem:[#allocation3 + $0xa8] sm:$0xff]
        %v4477 = vld [vmem:[#allocation3 + $0xb0] sm:$0xff]
        %v4478 = vld [vmem:[#allocation3 + $0xb8] sm:$0xff]
        %v4479 = vld [vmem:[#allocation3 + $0xc0] sm:$0xff]
        %v4480 = vld [vmem:[#allocation3 + $0xc8] sm:$0xff]
        %v4481 = vld [vmem:[#allocation3 + $0xd0] sm:$0xff]
        %v4482 = vld [vmem:[#allocation3 + $0xd8] sm:$0xff]
        %v4483 = vld [vmem:[#allocation3 + $0xe0] sm:$0xff]
        %v4484 = vld [vmem:[#allocation3 + $0xe8] sm:$0xff]
        %v4485 = vld [vmem:[#allocation3 + $0xf0] sm:$0xff]
        %v4486 = vld [vmem:[#allocation3 + $0xf8] sm:$0xff]
        %v4487 = vld [vmem:[#allocation3 + $0x100] sm:$0xff]
        %v4488 = vld [vmem:[#allocation3 + $0x108] sm:$0xff]
        %v4489 = vld [vmem:[#allocation3 + $0x110] sm:$0xff]
        %v4490 = vld [vmem:[#allocation3 + $0x118] sm:$0xff]
        %v4491 = vld [vmem:[#allocation3 + $0x120] sm:$0xff]
        %v4492 = vld [vmem:[#allocation3 + $0x128] sm:$0xff]
        %v4493 = vld [vmem:[#allocation3 + $0x130] sm:$0xff]
        %v4494 = vld [vmem:[#allocation3 + $0x138] sm:$0xff]
        %v4495 = vld [vmem:[#allocation3 + $0x140] sm:$0xff]
        %v4496 = vld [vmem:[#allocation3 + $0x148] sm:$0xff]
        %v4497 = vld [vmem:[#allocation3 + $0x150] sm:$0xff]
        %v4498 = vld [vmem:[#allocation3 + $0x158] sm:$0xff]
        %v4499 = vld [vmem:[#allocation3 + $0x160] sm:$0xff]
        %v4500 = vld [vmem:[#allocation3 + $0x168] sm:$0xff]
        %v4501 = vld [vmem:[#allocation3 + $0x170] sm:$0xff]
        %v4502 = vld [vmem:[#allocation3 + $0x178] sm:$0xff]
        %v4503 = vld [vmem:[#allocation3 + $0x180] sm:$0xff]
        %v4504 = vld [vmem:[#allocation3 + $0x188] sm:$0xff]
        %v4505 = vld [vmem:[#allocation3 + $0x190] sm:$0xff]
        %v4506 = vld [vmem:[#allocation3 + $0x198] sm:$0xff]
        %v4507 = vld [vmem:[#allocation3 + $0x1a0] sm:$0xff]
        %v4508 = vld [vmem:[#allocation3 + $0x1a8] sm:$0xff]
        %v4509 = vld [vmem:[#allocation3 + $0x1b0] sm:$0xff]
        %v4510 = vld [vmem:[#allocation3 + $0x1b8] sm:$0xff]
        %v4511 = vld [vmem:[#allocation3 + $0x1c0] sm:$0xff]
        %v4512 = vld [vmem:[#allocation3 + $0x1c8] sm:$0xff]
        %v4513 = vld [vmem:[#allocation3 + $0x1d0] sm:$0xff]
        %v4514 = vld [vmem:[#allocation3 + $0x1d8] sm:$0xff]
        %v4515 = vld [vmem:[#allocation3 + $0x1e0] sm:$0xff]
        %v4516 = vld [vmem:[#allocation3 + $0x1e8] sm:$0xff]
        %v4517 = vld [vmem:[#allocation3 + $0x1f0] sm:$0xff]
        %v4518 = vld [vmem:[#allocation3 + $0x1f8] sm:$0xff]
        %v4519 = vld [vmem:[#allocation3 + $0x200] sm:$0xff]
        %v4520 = vld [vmem:[#allocation3 + $0x208] sm:$0xff]
        %v4521 = vld [vmem:[#allocation3 + $0x210] sm:$0xff]
        %v4522 = vld [vmem:[#allocation3 + $0x218] sm:$0xff]
        %v4523 = vld [vmem:[#allocation3 + $0x220] sm:$0xff]
        %v4524 = vld [vmem:[#allocation3 + $0x228] sm:$0xff]
        %v4525 = vld [vmem:[#allocation3 + $0x230] sm:$0xff]
        %v4526 = vld [vmem:[#allocation3 + $0x238] sm:$0xff]
        %v4527 = vld [vmem:[%s754] sm:$0xf]
        %v4528 = vld [vmem:[%s754 + $0x4] sm:$0xf]
        %v4529 = vld [vmem:[%s754 + $0x8] sm:$0xf]
        %v4530 = vld [vmem:[%s754 + $0xc] sm:$0xf]
        %v4531 = vld [vmem:[%s754 + $0x10] sm:$0xf]
        %v4532 = vld [vmem:[%s754 + $0x14] sm:$0xf]
        %v4533 = vld [vmem:[%s754 + $0x18] sm:$0xf]
        %v4534 = vld [vmem:[%s754 + $0x1c] sm:$0xf]
        %v4535 = vld [vmem:[%s754 + $0x20] sm:$0xf]
        %v4536 = vld [vmem:[%s754 + $0x24] sm:$0xf]
        %v4537 = vld [vmem:[%s754 + $0x28] sm:$0xf]
        %v4538 = vld [vmem:[%s754 + $0x2c] sm:$0xf]
        %v4539 = vld [vmem:[%s754 + $0x30] sm:$0xf]
        %v4540 = vld [vmem:[%s754 + $0x34] sm:$0xf]
        %v4541 = vld [vmem:[%s754 + $0x38] sm:$0xf]
        %v4542 = vld [vmem:[%s754 + $0x3c] sm:$0xf]
        %v4543 = vld [vmem:[%s754 + $0x40] sm:$0xf]
        %v4544 = vld [vmem:[%s754 + $0x44] sm:$0xf]
        %v4545 = vld [vmem:[%s754 + $0x48] sm:$0xf]
        %v4546 = vld [vmem:[%s754 + $0x4c] sm:$0xf]
        %v4547 = vld [vmem:[%s754 + $0x50] sm:$0xf]
        %v4548 = vld [vmem:[%s754 + $0x54] sm:$0xf]
        %v4549 = vld [vmem:[%s754 + $0x58] sm:$0xf]
        %v4550 = vld [vmem:[%s754 + $0x5c] sm:$0xf]
        %v4551 = vld [vmem:[%s754 + $0x60] sm:$0xf]
        %v4552 = vld [vmem:[%s754 + $0x64] sm:$0xf]
        %v4553 = vld [vmem:[%s754 + $0x68] sm:$0xf]
        %v4554 = vld [vmem:[%s754 + $0x6c] sm:$0xf]
        %v4555 = vld [vmem:[%s754 + $0x70] sm:$0xf]
        %v4556 = vld [vmem:[%s754 + $0x74] sm:$0xf]
        %v4557 = vld [vmem:[%s754 + $0x78] sm:$0xf]
        %v4558 = vld [vmem:[%s754 + $0x7c] sm:$0xf]
        %v4559 = vld [vmem:[%s754 + $0x80] sm:$0xf]
        %v4560 = vld [vmem:[%s754 + $0x84] sm:$0xf]
        %v4561 = vld [vmem:[%s754 + $0x88] sm:$0xf]
        %v4562 = vld [vmem:[%s754 + $0x8c] sm:$0xf]
        %v4563 = vld [vmem:[%s754 + $0x90] sm:$0xf]
        %v4564 = vld [vmem:[%s754 + $0x94] sm:$0xf]
        %v4565 = vld [vmem:[%s754 + $0x98] sm:$0xf]
        %v4566 = vld [vmem:[%s754 + $0x9c] sm:$0xf]
        %v4567 = vld [vmem:[%s754 + $0xa0] sm:$0xf]
        %v4568 = vld [vmem:[%s754 + $0xa4] sm:$0xf]
        %v4569 = vld [vmem:[%s754 + $0xa8] sm:$0xf]
        %v4570 = vld [vmem:[%s754 + $0xac] sm:$0xf]
        %v4571 = vld [vmem:[%s754 + $0xb0] sm:$0xf]
        %v4572 = vld [vmem:[%s754 + $0xb4] sm:$0xf]
        %v4573 = vld [vmem:[%s754 + $0xb8] sm:$0xf]
        %v4574 = vld [vmem:[%s754 + $0xbc] sm:$0xf]
        %v4575 = vld [vmem:[%s754 + $0xc0] sm:$0xf]
        %v4576 = vld [vmem:[%s754 + $0xc4] sm:$0xf]
        %v4577 = vld [vmem:[%s754 + $0xc8] sm:$0xf]
        %v4578 = vld [vmem:[%s754 + $0xcc] sm:$0xf]
        %v4579 = vld [vmem:[%s754 + $0xd0] sm:$0xf]
        %v4580 = vld [vmem:[%s754 + $0xd4] sm:$0xf]
        %v4581 = vld [vmem:[%s754 + $0xd8] sm:$0xf]
        %v4582 = vld [vmem:[%s754 + $0xdc] sm:$0xf]
        %v4583 = vld [vmem:[%s754 + $0xe0] sm:$0xf]
        %v4584 = vld [vmem:[%s754 + $0xe4] sm:$0xf]
        %v4585 = vld [vmem:[%s754 + $0xe8] sm:$0xf]
        %v4586 = vld [vmem:[%s754 + $0xec] sm:$0xf]
        %v4587 = vld [vmem:[%s754 + $0xf0] sm:$0xf]
        %v4588 = vld [vmem:[%s754 + $0xf4] sm:$0xf]
        %v4589 = vld [vmem:[%s754 + $0xf8] sm:$0xf]
        %v4590 = vld [vmem:[%s754 + $0xfc] sm:$0xf]
        %v4591 = vld [vmem:[%s754 + $0x100] sm:$0xf]
        %v4592 = vld [vmem:[%s754 + $0x104] sm:$0xf]
        %v4593 = vld [vmem:[%s754 + $0x108] sm:$0xf]
        %v4594 = vld [vmem:[%s754 + $0x10c] sm:$0xf]
        %v4595 = vld [vmem:[%s754 + $0x110] sm:$0xf]
        %v4596 = vld [vmem:[%s754 + $0x114] sm:$0xf]
        %v4597 = vld [vmem:[%s754 + $0x118] sm:$0xf]
        %v4598 = vld [vmem:[%s754 + $0x11c] sm:$0xf]
        %v4599 = vld [vmem:[%s754 + $0x120] sm:$0xf]
        %v4600 = vld [vmem:[%s754 + $0x124] sm:$0xf]
        %v4601 = vld [vmem:[%s754 + $0x128] sm:$0xf]
        %v4602 = vld [vmem:[%s754 + $0x12c] sm:$0xf]
        %v4603 = vld [vmem:[%s754 + $0x130] sm:$0xf]
        %v4604 = vld [vmem:[%s754 + $0x134] sm:$0xf]
        %v4605 = vld [vmem:[%s754 + $0x138] sm:$0xf]
        %v4606 = vld [vmem:[%s754 + $0x13c] sm:$0xf]
        %v4607 = vld [vmem:[%s754 + $0x140] sm:$0xf]
        %v4608 = vld [vmem:[%s754 + $0x144] sm:$0xf]
        %v4609 = vld [vmem:[%s754 + $0x148] sm:$0xf]
        %v4610 = vld [vmem:[%s754 + $0x14c] sm:$0xf]
        %v4611 = vld [vmem:[%s754 + $0x150] sm:$0xf]
        %v4612 = vld [vmem:[%s754 + $0x154] sm:$0xf]
        %v4613 = vld [vmem:[%s754 + $0x158] sm:$0xf]
        %v4614 = vld [vmem:[%s754 + $0x15c] sm:$0xf]
        %v4615 = vld [vmem:[%s754 + $0x160] sm:$0xf]
        %v4616 = vld [vmem:[%s754 + $0x164] sm:$0xf]
        %v4617 = vld [vmem:[%s754 + $0x168] sm:$0xf]
        %v4618 = vld [vmem:[%s754 + $0x16c] sm:$0xf]
        %v4619 = vld [vmem:[%s754 + $0x170] sm:$0xf]
        %v4620 = vld [vmem:[%s754 + $0x174] sm:$0xf]
        %v4621 = vld [vmem:[%s754 + $0x178] sm:$0xf]
        %v4622 = vld [vmem:[%s754 + $0x17c] sm:$0xf]
        %v4623 = vld [vmem:[%s754 + $0x180] sm:$0xf]
        %v4624 = vld [vmem:[%s754 + $0x184] sm:$0xf]
        %v4625 = vld [vmem:[%s754 + $0x188] sm:$0xf]
        %v4626 = vld [vmem:[%s754 + $0x18c] sm:$0xf]
        %v4627 = vld [vmem:[%s754 + $0x190] sm:$0xf]
        %v4628 = vld [vmem:[%s754 + $0x194] sm:$0xf]
        %v4629 = vld [vmem:[%s754 + $0x198] sm:$0xf]
        %v4630 = vld [vmem:[%s754 + $0x19c] sm:$0xf]
        %v4631 = vld [vmem:[%s754 + $0x1a0] sm:$0xf]
        %v4632 = vld [vmem:[%s754 + $0x1a4] sm:$0xf]
        %v4633 = vld [vmem:[%s754 + $0x1a8] sm:$0xf]
        %v4634 = vld [vmem:[%s754 + $0x1ac] sm:$0xf]
        %v4635 = vld [vmem:[%s754 + $0x1b0] sm:$0xf]
        %v4636 = vld [vmem:[%s754 + $0x1b4] sm:$0xf]
        %v4637 = vld [vmem:[%s754 + $0x1b8] sm:$0xf]
        %v4638 = vld [vmem:[%s754 + $0x1bc] sm:$0xf]
        %v4639 = vld [vmem:[%s754 + $0x1c0] sm:$0xf]
        %v4640 = vld [vmem:[%s754 + $0x1c4] sm:$0xf]
        %v4641 = vld [vmem:[%s754 + $0x1c8] sm:$0xf]
        %v4642 = vld [vmem:[%s754 + $0x1cc] sm:$0xf]
        %v4643 = vld [vmem:[%s754 + $0x1d0] sm:$0xf]
        %v4644 = vld [vmem:[%s754 + $0x1d4] sm:$0xf]
        %v4645 = vld [vmem:[%s754 + $0x1d8] sm:$0xf]
        %v4646 = vld [vmem:[%s754 + $0x1dc] sm:$0xf]
        %v4647 = vld [vmem:[%s754 + $0x1e0] sm:$0xf]
        %v4648 = vld [vmem:[%s754 + $0x1e4] sm:$0xf]
        %v4649 = vld [vmem:[%s754 + $0x1e8] sm:$0xf]
        %v4650 = vld [vmem:[%s754 + $0x1ec] sm:$0xf]
        %v4651 = vld [vmem:[%s754 + $0x1f0] sm:$0xf]
        %v4652 = vld [vmem:[%s754 + $0x1f4] sm:$0xf]
        %v4653 = vld [vmem:[%s754 + $0x1f8] sm:$0xf]
        %v4654 = vld [vmem:[%s754 + $0x1fc] sm:$0xf]
        %v4655 = vld [vmem:[%s754 + $0x200] sm:$0xf]
        %v4656 = vld [vmem:[%s754 + $0x204] sm:$0xf]
        %v4657 = vld [vmem:[%s754 + $0x208] sm:$0xf]
        %v4658 = vld [vmem:[%s754 + $0x20c] sm:$0xf]
        %v4659 = vld [vmem:[%s754 + $0x210] sm:$0xf]
        %v4660 = vld [vmem:[%s754 + $0x214] sm:$0xf]
        %v4661 = vld [vmem:[%s754 + $0x218] sm:$0xf]
        %v4662 = vld [vmem:[%s754 + $0x21c] sm:$0xf]
        %v4663 = vld [vmem:[%s754 + $0x220] sm:$0xf]
        %v4664 = vld [vmem:[%s754 + $0x224] sm:$0xf]
        %v4665 = vld [vmem:[%s754 + $0x228] sm:$0xf]
        %v4666 = vld [vmem:[%s754 + $0x22c] sm:$0xf]
        %v4667 = vld [vmem:[%s754 + $0x230] sm:$0xf]
        %v4668 = vld [vmem:[%s754 + $0x234] sm:$0xf]
        %v4669 = vld [vmem:[%s754 + $0x238] sm:$0xf]
        %v4670 = vld [vmem:[%s754 + $0x23c] sm:$0xf]
        %v4671 = vld [vmem:[%s754 + $0x240] sm:$0xf]
        %v4672 = vld [vmem:[%s754 + $0x244] sm:$0xf]
        %v4673 = vld [vmem:[%s754 + $0x248] sm:$0xf]
        %v4674 = vld [vmem:[%s754 + $0x24c] sm:$0xf]
        %v4675 = vld [vmem:[%s754 + $0x250] sm:$0xf]
        %v4676 = vld [vmem:[%s754 + $0x254] sm:$0xf]
        %v4677 = vld [vmem:[%s754 + $0x258] sm:$0xf]
        %v4678 = vld [vmem:[%s754 + $0x25c] sm:$0xf]
        %v4679 = vld [vmem:[%s754 + $0x260] sm:$0xf]
        %v4680 = vld [vmem:[%s754 + $0x264] sm:$0xf]
        %v4681 = vld [vmem:[%s754 + $0x268] sm:$0xf]
        %v4682 = vld [vmem:[%s754 + $0x26c] sm:$0xf]
        %v4683 = vld [vmem:[%s754 + $0x270] sm:$0xf]
        %v4684 = vld [vmem:[%s754 + $0x274] sm:$0xf]
        %v4685 = vld [vmem:[%s754 + $0x278] sm:$0xf]
        %v4686 = vld [vmem:[%s754 + $0x27c] sm:$0xf]
        %v4687 = vld [vmem:[%s754 + $0x280] sm:$0xf]
        %v4688 = vld [vmem:[%s754 + $0x284] sm:$0xf]
        %v4689 = vld [vmem:[%s754 + $0x288] sm:$0xf]
        %v4690 = vld [vmem:[%s754 + $0x28c] sm:$0xf]
        %v4691 = vld [vmem:[%s754 + $0x290] sm:$0xf]
        %v4692 = vld [vmem:[%s754 + $0x294] sm:$0xf]
        %v4693 = vld [vmem:[%s754 + $0x298] sm:$0xf]
        %v4694 = vld [vmem:[%s754 + $0x29c] sm:$0xf]
        %v4695 = vld [vmem:[%s754 + $0x2a0] sm:$0xf]
        %v4696 = vld [vmem:[%s754 + $0x2a4] sm:$0xf]
        %v4697 = vld [vmem:[%s754 + $0x2a8] sm:$0xf]
        %v4698 = vld [vmem:[%s754 + $0x2ac] sm:$0xf]
        %v4699 = vld [vmem:[%s754 + $0x2b0] sm:$0xf]
        %v4700 = vld [vmem:[%s754 + $0x2b4] sm:$0xf]
        %v4701 = vld [vmem:[%s754 + $0x2b8] sm:$0xf]
        %v4702 = vld [vmem:[%s754 + $0x2bc] sm:$0xf]
        %v4703 = vld [vmem:[%s754 + $0x2c0] sm:$0xf]
        %v4704 = vld [vmem:[%s754 + $0x2c4] sm:$0xf]
        %v4705 = vld [vmem:[%s754 + $0x2c8] sm:$0xf]
        %v4706 = vld [vmem:[%s754 + $0x2cc] sm:$0xf]
        %v4707 = vld [vmem:[%s754 + $0x2d0] sm:$0xf]
        %v4708 = vld [vmem:[%s754 + $0x2d4] sm:$0xf]
        %v4709 = vld [vmem:[%s754 + $0x2d8] sm:$0xf]
        %v4710 = vld [vmem:[%s754 + $0x2dc] sm:$0xf]
        %v4711 = vld [vmem:[%s754 + $0x2e0] sm:$0xf]
        %v4712 = vld [vmem:[%s754 + $0x2e4] sm:$0xf]
        %v4713 = vld [vmem:[%s754 + $0x2e8] sm:$0xf]
        %v4714 = vld [vmem:[%s754 + $0x2ec] sm:$0xf]
        %v4715 = vld [vmem:[%s754 + $0x2f0] sm:$0xf]
        %v4716 = vld [vmem:[%s754 + $0x2f4] sm:$0xf]
        %v4717 = vld [vmem:[%s754 + $0x2f8] sm:$0xf]
        %v4718 = vld [vmem:[%s754 + $0x2fc] sm:$0xf]
        %v4719 = vld [vmem:[%s754 + $0x300] sm:$0xf]
        %v4720 = vld [vmem:[%s754 + $0x304] sm:$0xf]
        %v4721 = vld [vmem:[%s754 + $0x308] sm:$0xf]
        %v4722 = vld [vmem:[%s754 + $0x30c] sm:$0xf]
        %v4723 = vld [vmem:[%s754 + $0x310] sm:$0xf]
        %v4724 = vld [vmem:[%s754 + $0x314] sm:$0xf]
        %v4725 = vld [vmem:[%s754 + $0x318] sm:$0xf]
        %v4726 = vld [vmem:[%s754 + $0x31c] sm:$0xf]
        %v4727 = vld [vmem:[%s754 + $0x320] sm:$0xf]
        %v4728 = vld [vmem:[%s754 + $0x324] sm:$0xf]
        %v4729 = vld [vmem:[%s754 + $0x328] sm:$0xf]
        %v4730 = vld [vmem:[%s754 + $0x32c] sm:$0xf]
        %v4731 = vld [vmem:[%s754 + $0x330] sm:$0xf]
        %v4732 = vld [vmem:[%s754 + $0x334] sm:$0xf]
        %v4733 = vld [vmem:[%s754 + $0x338] sm:$0xf]
        %v4734 = vld [vmem:[%s754 + $0x33c] sm:$0xf]
        %v4735 = vld [vmem:[%s754 + $0x340] sm:$0xf]
        %v4736 = vld [vmem:[%s754 + $0x344] sm:$0xf]
        %v4737 = vld [vmem:[%s754 + $0x348] sm:$0xf]
        %v4738 = vld [vmem:[%s754 + $0x34c] sm:$0xf]
        %v4739 = vld [vmem:[%s754 + $0x350] sm:$0xf]
        %v4740 = vld [vmem:[%s754 + $0x354] sm:$0xf]
        %v4741 = vld [vmem:[%s754 + $0x358] sm:$0xf]
        %v4742 = vld [vmem:[%s754 + $0x35c] sm:$0xf]
        %v4743 = vld [vmem:[%s754 + $0x360] sm:$0xf]
        %v4744 = vld [vmem:[%s754 + $0x364] sm:$0xf]
        %v4745 = vld [vmem:[%s754 + $0x368] sm:$0xf]
        %v4746 = vld [vmem:[%s754 + $0x36c] sm:$0xf]
        %v4747 = vld [vmem:[%s754 + $0x370] sm:$0xf]
        %v4748 = vld [vmem:[%s754 + $0x374] sm:$0xf]
        %v4749 = vld [vmem:[%s754 + $0x378] sm:$0xf]
        %v4750 = vld [vmem:[%s754 + $0x37c] sm:$0xf]
        %v4751 = vld [vmem:[%s754 + $0x380] sm:$0xf]
        %v4752 = vld [vmem:[%s754 + $0x384] sm:$0xf]
        %v4753 = vld [vmem:[%s754 + $0x388] sm:$0xf]
        %v4754 = vld [vmem:[%s754 + $0x38c] sm:$0xf]
        %v4755 = vld [vmem:[%s754 + $0x390] sm:$0xf]
        %v4756 = vld [vmem:[%s754 + $0x394] sm:$0xf]
        %v4757 = vld [vmem:[%s754 + $0x398] sm:$0xf]
        %v4758 = vld [vmem:[%s754 + $0x39c] sm:$0xf]
        %v4759 = vld [vmem:[%s754 + $0x3a0] sm:$0xf]
        %v4760 = vld [vmem:[%s754 + $0x3a4] sm:$0xf]
        %v4761 = vld [vmem:[%s754 + $0x3a8] sm:$0xf]
        %v4762 = vld [vmem:[%s754 + $0x3ac] sm:$0xf]
        %v4763 = vld [vmem:[%s754 + $0x3b0] sm:$0xf]
        %v4764 = vld [vmem:[%s754 + $0x3b4] sm:$0xf]
        %v4765 = vld [vmem:[%s754 + $0x3b8] sm:$0xf]
        %v4766 = vld [vmem:[%s754 + $0x3bc] sm:$0xf]
        %v4767 = vld [vmem:[%s754 + $0x3c0] sm:$0xf]
        %v4768 = vld [vmem:[%s754 + $0x3c4] sm:$0xf]
        %v4769 = vld [vmem:[%s754 + $0x3c8] sm:$0xf]
        %v4770 = vld [vmem:[%s754 + $0x3cc] sm:$0xf]
        %v4771 = vld [vmem:[%s754 + $0x3d0] sm:$0xf]
        %v4772 = vld [vmem:[%s754 + $0x3d4] sm:$0xf]
        %v4773 = vld [vmem:[%s754 + $0x3d8] sm:$0xf]
        %v4774 = vld [vmem:[%s754 + $0x3dc] sm:$0xf]
        %v4775 = vld [vmem:[%s754 + $0x3e0] sm:$0xf]
        %v4776 = vld [vmem:[%s754 + $0x3e4] sm:$0xf]
        %v4777 = vld [vmem:[%s754 + $0x3e8] sm:$0xf]
        %v4778 = vld [vmem:[%s754 + $0x3ec] sm:$0xf]
        %v4779 = vld [vmem:[%s754 + $0x3f0] sm:$0xf]
        %v4780 = vld [vmem:[%s754 + $0x3f4] sm:$0xf]
        %v4781 = vld [vmem:[%s754 + $0x3f8] sm:$0xf]
        %v4782 = vld [vmem:[%s754 + $0x3fc] sm:$0xf]
        %v4855 = vunpack.c.l.b16 %v4455
        %v4856 = vunpack.c.h.b16 %v4455
        %v4857 = vunpack.c.l.b16 %v4456
        %v4858 = vunpack.c.h.b16 %v4456
        %v4859 = vunpack.c.l.b16 %v4457
        %v4860 = vunpack.c.h.b16 %v4457
        %v4861 = vunpack.c.l.b16 %v4458
        %v4862 = vunpack.c.h.b16 %v4458
        %v4863 = vunpack.c.l.b16 %v4459
        %v4864 = vunpack.c.h.b16 %v4459
        %v4865 = vunpack.c.l.b16 %v4460
        %v4866 = vunpack.c.h.b16 %v4460
        %v4867 = vunpack.c.l.b16 %v4461
        %v4868 = vunpack.c.h.b16 %v4461
        %v4869 = vunpack.c.l.b16 %v4462
        %v4870 = vunpack.c.h.b16 %v4462
        %v4871 = vunpack.c.l.b16 %v4463
        %v4872 = vunpack.c.h.b16 %v4463
        %v4873 = vunpack.c.l.b16 %v4464
        %v4874 = vunpack.c.h.b16 %v4464
        %v4875 = vunpack.c.l.b16 %v4465
        %v4876 = vunpack.c.h.b16 %v4465
        %v4877 = vunpack.c.l.b16 %v4466
        %v4878 = vunpack.c.h.b16 %v4466
        %v4879 = vunpack.c.l.b16 %v4467
        %v4880 = vunpack.c.h.b16 %v4467
        %v4881 = vunpack.c.l.b16 %v4468
        %v4882 = vunpack.c.h.b16 %v4468
        %v4883 = vunpack.c.l.b16 %v4469
        %v4884 = vunpack.c.h.b16 %v4469
        %v4885 = vunpack.c.l.b16 %v4470
        %v4886 = vunpack.c.h.b16 %v4470
        %v4887 = vunpack.c.l.b16 %v4471
        %v4888 = vunpack.c.h.b16 %v4471
        %v4889 = vunpack.c.l.b16 %v4472
        %v4890 = vunpack.c.h.b16 %v4472
        %v4891 = vunpack.c.l.b16 %v4473
        %v4892 = vunpack.c.h.b16 %v4473
        %v4893 = vunpack.c.l.b16 %v4474
        %v4894 = vunpack.c.h.b16 %v4474
        %v4895 = vunpack.c.l.b16 %v4475
        %v4896 = vunpack.c.h.b16 %v4475
        %v4897 = vunpack.c.l.b16 %v4476
        %v4898 = vunpack.c.h.b16 %v4476
        %v4899 = vunpack.c.l.b16 %v4477
        %v4900 = vunpack.c.h.b16 %v4477
        %v4901 = vunpack.c.l.b16 %v4478
        %v4902 = vunpack.c.h.b16 %v4478
        %v4903 = vunpack.c.l.b16 %v4479
        %v4904 = vunpack.c.h.b16 %v4479
        %v4905 = vunpack.c.l.b16 %v4480
        %v4906 = vunpack.c.h.b16 %v4480
        %v4907 = vunpack.c.l.b16 %v4481
        %v4908 = vunpack.c.h.b16 %v4481
        %v4909 = vunpack.c.l.b16 %v4482
        %v4910 = vunpack.c.h.b16 %v4482
        %v4911 = vunpack.c.l.b16 %v4483
        %v4912 = vunpack.c.h.b16 %v4483
        %v4913 = vunpack.c.l.b16 %v4484
        %v4914 = vunpack.c.h.b16 %v4484
        %v4915 = vunpack.c.l.b16 %v4485
        %v4916 = vunpack.c.h.b16 %v4485
        %v4917 = vunpack.c.l.b16 %v4486
        %v4918 = vunpack.c.h.b16 %v4486
        %v4919 = vunpack.c.l.b16 %v4487
        %v4920 = vunpack.c.h.b16 %v4487
        %v4921 = vunpack.c.l.b16 %v4488
        %v4922 = vunpack.c.h.b16 %v4488
        %v4923 = vunpack.c.l.b16 %v4489
        %v4924 = vunpack.c.h.b16 %v4489
        %v4925 = vunpack.c.l.b16 %v4490
        %v4926 = vunpack.c.h.b16 %v4490
        %v4927 = vunpack.c.l.b16 %v4491
        %v4928 = vunpack.c.h.b16 %v4491
        %v4929 = vunpack.c.l.b16 %v4492
        %v4930 = vunpack.c.h.b16 %v4492
        %v4931 = vunpack.c.l.b16 %v4493
        %v4932 = vunpack.c.h.b16 %v4493
        %v4933 = vunpack.c.l.b16 %v4494
        %v4934 = vunpack.c.h.b16 %v4494
        %v4935 = vunpack.c.l.b16 %v4495
        %v4936 = vunpack.c.h.b16 %v4495
        %v4937 = vunpack.c.l.b16 %v4496
        %v4938 = vunpack.c.h.b16 %v4496
        %v4939 = vunpack.c.l.b16 %v4497
        %v4940 = vunpack.c.h.b16 %v4497
        %v4941 = vunpack.c.l.b16 %v4498
        %v4942 = vunpack.c.h.b16 %v4498
        %v4943 = vunpack.c.l.b16 %v4499
        %v4944 = vunpack.c.h.b16 %v4499
        %v4945 = vunpack.c.l.b16 %v4500
        %v4946 = vunpack.c.h.b16 %v4500
        %v4947 = vunpack.c.l.b16 %v4501
        %v4948 = vunpack.c.h.b16 %v4501
        %v4949 = vunpack.c.l.b16 %v4502
        %v4950 = vunpack.c.h.b16 %v4502
        %v4951 = vunpack.c.l.b16 %v4503
        %v4952 = vunpack.c.h.b16 %v4503
        %v4953 = vunpack.c.l.b16 %v4504
        %v4954 = vunpack.c.h.b16 %v4504
        %v4955 = vunpack.c.l.b16 %v4505
        %v4956 = vunpack.c.h.b16 %v4505
        %v4957 = vunpack.c.l.b16 %v4506
        %v4958 = vunpack.c.h.b16 %v4506
        %v4959 = vunpack.c.l.b16 %v4507
        %v4960 = vunpack.c.h.b16 %v4507
        %v4961 = vunpack.c.l.b16 %v4508
        %v4962 = vunpack.c.h.b16 %v4508
        %v4963 = vunpack.c.l.b16 %v4509
        %v4964 = vunpack.c.h.b16 %v4509
        %v4965 = vunpack.c.l.b16 %v4510
        %v4966 = vunpack.c.h.b16 %v4510
        %v4967 = vunpack.c.l.b16 %v4511
        %v4968 = vunpack.c.h.b16 %v4511
        %v4969 = vunpack.c.l.b16 %v4512
        %v4970 = vunpack.c.h.b16 %v4512
        %v4971 = vunpack.c.l.b16 %v4513
        %v4972 = vunpack.c.h.b16 %v4513
        %v4973 = vunpack.c.l.b16 %v4514
        %v4974 = vunpack.c.h.b16 %v4514
        %v4975 = vunpack.c.l.b16 %v4515
        %v4976 = vunpack.c.h.b16 %v4515
        %v4977 = vunpack.c.l.b16 %v4516
        %v4978 = vunpack.c.h.b16 %v4516
        %v4979 = vunpack.c.l.b16 %v4517
        %v4980 = vunpack.c.h.b16 %v4517
        %v4981 = vunpack.c.l.b16 %v4518
        %v4982 = vunpack.c.h.b16 %v4518
        %v4983 = vunpack.c.l.b16 %v4519
        %v4984 = vunpack.c.h.b16 %v4519
        %v4985 = vunpack.c.l.b16 %v4520
        %v4986 = vunpack.c.h.b16 %v4520
        %v4987 = vunpack.c.l.b16 %v4521
        %v4988 = vunpack.c.h.b16 %v4521
        %v4989 = vunpack.c.l.b16 %v4522
        %v4990 = vunpack.c.h.b16 %v4522
        %v4991 = vunpack.c.l.b16 %v4523
        %v4992 = vunpack.c.h.b16 %v4523
        %v4993 = vunpack.c.l.b16 %v4524
        %v4994 = vunpack.c.h.b16 %v4524
        %v4995 = vunpack.c.l.b16 %v4525
        %v4996 = vunpack.c.h.b16 %v4525
        %v4997 = vunpack.c.l.b16 %v4526
        %v4998 = vunpack.c.h.b16 %v4526
        %v4999 = vpack.c.b16 %v4871, %v4855
        %v5000 = vpack.c.b16 %v4872, %v4856
        %v5001 = vpack.c.b16 %v4873, %v4857
        %v5002 = vpack.c.b16 %v4874, %v4858
        %v5003 = vpack.c.b16 %v4875, %v4859
        %v5004 = vpack.c.b16 %v4876, %v4860
        %v5005 = vpack.c.b16 %v4877, %v4861
        %v5006 = vpack.c.b16 %v4878, %v4862
        %v5007 = vpack.c.b16 %v4879, %v4863
        %v5008 = vpack.c.b16 %v4880, %v4864
        %v5009 = vpack.c.b16 %v4881, %v4865
        %v5010 = vpack.c.b16 %v4882, %v4866
        %v5011 = vpack.c.b16 %v4883, %v4867
        %v5012 = vpack.c.b16 %v4884, %v4868
        %v5013 = vpack.c.b16 %v4885, %v4869
        %v5014 = vpack.c.b16 %v4886, %v4870
        %v5015 = vpack.c.b16 %v4903, %v4887
        %v5016 = vpack.c.b16 %v4904, %v4888
        %v5017 = vpack.c.b16 %v4905, %v4889
        %v5018 = vpack.c.b16 %v4906, %v4890
        %v5019 = vpack.c.b16 %v4907, %v4891
        %v5020 = vpack.c.b16 %v4908, %v4892
        %v5021 = vpack.c.b16 %v4909, %v4893
        %v5022 = vpack.c.b16 %v4910, %v4894
        %v5023 = vpack.c.b16 %v4911, %v4895
        %v5024 = vpack.c.b16 %v4912, %v4896
        %v5025 = vpack.c.b16 %v4913, %v4897
        %v5026 = vpack.c.b16 %v4914, %v4898
        %v5027 = vpack.c.b16 %v4915, %v4899
        %v5028 = vpack.c.b16 %v4916, %v4900
        %v5029 = vpack.c.b16 %v4917, %v4901
        %v5030 = vpack.c.b16 %v4918, %v4902
        %v5031 = vpack.c.b16 %v4935, %v4919
        %v5032 = vpack.c.b16 %v4936, %v4920
        %v5033 = vpack.c.b16 %v4937, %v4921
        %v5034 = vpack.c.b16 %v4938, %v4922
        %v5035 = vpack.c.b16 %v4939, %v4923
        %v5036 = vpack.c.b16 %v4940, %v4924
        %v5037 = vpack.c.b16 %v4941, %v4925
        %v5038 = vpack.c.b16 %v4942, %v4926
        %v5039 = vpack.c.b16 %v4943, %v4927
        %v5040 = vpack.c.b16 %v4944, %v4928
        %v5041 = vpack.c.b16 %v4945, %v4929
        %v5042 = vpack.c.b16 %v4946, %v4930
        %v5043 = vpack.c.b16 %v4947, %v4931
        %v5044 = vpack.c.b16 %v4948, %v4932
        %v5045 = vpack.c.b16 %v4949, %v4933
        %v5046 = vpack.c.b16 %v4950, %v4934
        %v5047 = vpack.c.b16 %v4967, %v4951
        %v5048 = vpack.c.b16 %v4968, %v4952
        %v5049 = vpack.c.b16 %v4969, %v4953
        %v5050 = vpack.c.b16 %v4970, %v4954
        %v5051 = vpack.c.b16 %v4971, %v4955
        %v5052 = vpack.c.b16 %v4972, %v4956
        %v5053 = vpack.c.b16 %v4973, %v4957
        %v5054 = vpack.c.b16 %v4974, %v4958
        %v5055 = vpack.c.b16 %v4975, %v4959
        %v5056 = vpack.c.b16 %v4976, %v4960
        %v5057 = vpack.c.b16 %v4977, %v4961
        %v5058 = vpack.c.b16 %v4978, %v4962
        %v5059 = vpack.c.b16 %v4979, %v4963
        %v5060 = vpack.c.b16 %v4980, %v4964
        %v5061 = vpack.c.b16 %v4981, %v4965
        %v5062 = vpack.c.b16 %v4982, %v4966
        %v5063 = vpack.c.b16 %v4983, %v4983
        %v5064 = vpack.c.b16 %v4984, %v4984
        %v5065 = vpack.c.b16 %v4985, %v4985
        %v5066 = vpack.c.b16 %v4986, %v4986
        %v5067 = vpack.c.b16 %v4987, %v4987
        %v5068 = vpack.c.b16 %v4988, %v4988
        %v5069 = vpack.c.b16 %v4989, %v4989
        %v5070 = vpack.c.b16 %v4990, %v4990
        %v5071 = vpack.c.b16 %v4991, %v4991
        %v5072 = vpack.c.b16 %v4992, %v4992
        %v5073 = vpack.c.b16 %v4993, %v4993
        %v5074 = vpack.c.b16 %v4994, %v4994
        %v5075 = vpack.c.b16 %v4995, %v4995
        %v5076 = vpack.c.b16 %v4996, %v4996
        %v5077 = vpack.c.b16 %v4997, %v4997
        %v5078 = vpack.c.b16 %v4998, %v4998
        %v5415 = vunpack.c.l.b16 %v4527
        %v5416 = vunpack.c.l.b16 %v4528
        %v5417 = vunpack.c.l.b16 %v4529
        %v5418 = vunpack.c.l.b16 %v4530
        %v5419 = vunpack.c.l.b16 %v4531
        %v5420 = vunpack.c.l.b16 %v4532
        %v5421 = vunpack.c.l.b16 %v4533
        %v5422 = vunpack.c.l.b16 %v4534
        %v5423 = vunpack.c.l.b16 %v4535
        %v5424 = vunpack.c.l.b16 %v4536
        %v5425 = vunpack.c.l.b16 %v4537
        %v5426 = vunpack.c.l.b16 %v4538
        %v5427 = vunpack.c.l.b16 %v4539
        %v5428 = vunpack.c.l.b16 %v4540
        %v5429 = vunpack.c.l.b16 %v4541
        %v5430 = vunpack.c.l.b16 %v4542
        %v5431 = vunpack.c.l.b16 %v4543
        %v5432 = vunpack.c.l.b16 %v4544
        %v5433 = vunpack.c.l.b16 %v4545
        %v5434 = vunpack.c.l.b16 %v4546
        %v5435 = vunpack.c.l.b16 %v4547
        %v5436 = vunpack.c.l.b16 %v4548
        %v5437 = vunpack.c.l.b16 %v4549
        %v5438 = vunpack.c.l.b16 %v4550
        %v5439 = vunpack.c.l.b16 %v4551
        %v5440 = vunpack.c.l.b16 %v4552
        %v5441 = vunpack.c.l.b16 %v4553
        %v5442 = vunpack.c.l.b16 %v4554
        %v5443 = vunpack.c.l.b16 %v4555
        %v5444 = vunpack.c.l.b16 %v4556
        %v5445 = vunpack.c.l.b16 %v4557
        %v5446 = vunpack.c.l.b16 %v4558
        %v5447 = vunpack.c.l.b16 %v4559
        %v5448 = vunpack.c.l.b16 %v4560
        %v5449 = vunpack.c.l.b16 %v4561
        %v5450 = vunpack.c.l.b16 %v4562
        %v5451 = vunpack.c.l.b16 %v4563
        %v5452 = vunpack.c.l.b16 %v4564
        %v5453 = vunpack.c.l.b16 %v4565
        %v5454 = vunpack.c.l.b16 %v4566
        %v5455 = vunpack.c.l.b16 %v4567
        %v5456 = vunpack.c.l.b16 %v4568
        %v5457 = vunpack.c.l.b16 %v4569
        %v5458 = vunpack.c.l.b16 %v4570
        %v5459 = vunpack.c.l.b16 %v4571
        %v5460 = vunpack.c.l.b16 %v4572
        %v5461 = vunpack.c.l.b16 %v4573
        %v5462 = vunpack.c.l.b16 %v4574
        %v5463 = vunpack.c.l.b16 %v4575
        %v5464 = vunpack.c.l.b16 %v4576
        %v5465 = vunpack.c.l.b16 %v4577
        %v5466 = vunpack.c.l.b16 %v4578
        %v5467 = vunpack.c.l.b16 %v4579
        %v5468 = vunpack.c.l.b16 %v4580
        %v5469 = vunpack.c.l.b16 %v4581
        %v5470 = vunpack.c.l.b16 %v4582
        %v5471 = vunpack.c.l.b16 %v4583
        %v5472 = vunpack.c.l.b16 %v4584
        %v5473 = vunpack.c.l.b16 %v4585
        %v5474 = vunpack.c.l.b16 %v4586
        %v5475 = vunpack.c.l.b16 %v4587
        %v5476 = vunpack.c.l.b16 %v4588
        %v5477 = vunpack.c.l.b16 %v4589
        %v5478 = vunpack.c.l.b16 %v4590
        %v5479 = vunpack.c.l.b16 %v4591
        %v5480 = vunpack.c.l.b16 %v4592
        %v5481 = vunpack.c.l.b16 %v4593
        %v5482 = vunpack.c.l.b16 %v4594
        %v5483 = vunpack.c.l.b16 %v4595
        %v5484 = vunpack.c.l.b16 %v4596
        %v5485 = vunpack.c.l.b16 %v4597
        %v5486 = vunpack.c.l.b16 %v4598
        %v5487 = vunpack.c.l.b16 %v4599
        %v5488 = vunpack.c.l.b16 %v4600
        %v5489 = vunpack.c.l.b16 %v4601
        %v5490 = vunpack.c.l.b16 %v4602
        %v5491 = vunpack.c.l.b16 %v4603
        %v5492 = vunpack.c.l.b16 %v4604
        %v5493 = vunpack.c.l.b16 %v4605
        %v5494 = vunpack.c.l.b16 %v4606
        %v5495 = vunpack.c.l.b16 %v4607
        %v5496 = vunpack.c.l.b16 %v4608
        %v5497 = vunpack.c.l.b16 %v4609
        %v5498 = vunpack.c.l.b16 %v4610
        %v5499 = vunpack.c.l.b16 %v4611
        %v5500 = vunpack.c.l.b16 %v4612
        %v5501 = vunpack.c.l.b16 %v4613
        %v5502 = vunpack.c.l.b16 %v4614
        %v5503 = vunpack.c.l.b16 %v4615
        %v5504 = vunpack.c.l.b16 %v4616
        %v5505 = vunpack.c.l.b16 %v4617
        %v5506 = vunpack.c.l.b16 %v4618
        %v5507 = vunpack.c.l.b16 %v4619
        %v5508 = vunpack.c.l.b16 %v4620
        %v5509 = vunpack.c.l.b16 %v4621
        %v5510 = vunpack.c.l.b16 %v4622
        %v5511 = vunpack.c.l.b16 %v4623
        %v5512 = vunpack.c.l.b16 %v4624
        %v5513 = vunpack.c.l.b16 %v4625
        %v5514 = vunpack.c.l.b16 %v4626
        %v5515 = vunpack.c.l.b16 %v4627
        %v5516 = vunpack.c.l.b16 %v4628
        %v5517 = vunpack.c.l.b16 %v4629
        %v5518 = vunpack.c.l.b16 %v4630
        %v5519 = vunpack.c.l.b16 %v4631
        %v5520 = vunpack.c.l.b16 %v4632
        %v5521 = vunpack.c.l.b16 %v4633
        %v5522 = vunpack.c.l.b16 %v4634
        %v5523 = vunpack.c.l.b16 %v4635
        %v5524 = vunpack.c.l.b16 %v4636
        %v5525 = vunpack.c.l.b16 %v4637
        %v5526 = vunpack.c.l.b16 %v4638
        %v5527 = vunpack.c.l.b16 %v4639
        %v5528 = vunpack.c.l.b16 %v4640
        %v5529 = vunpack.c.l.b16 %v4641
        %v5530 = vunpack.c.l.b16 %v4642
        %v5531 = vunpack.c.l.b16 %v4643
        %v5532 = vunpack.c.l.b16 %v4644
        %v5533 = vunpack.c.l.b16 %v4645
        %v5534 = vunpack.c.l.b16 %v4646
        %v5535 = vunpack.c.l.b16 %v4647
        %v5536 = vunpack.c.l.b16 %v4648
        %v5537 = vunpack.c.l.b16 %v4649
        %v5538 = vunpack.c.l.b16 %v4650
        %v5539 = vunpack.c.l.b16 %v4651
        %v5540 = vunpack.c.l.b16 %v4652
        %v5541 = vunpack.c.l.b16 %v4653
        %v5542 = vunpack.c.l.b16 %v4654
        %v5543 = vunpack.c.l.b16 %v4655
        %v5544 = vunpack.c.l.b16 %v4656
        %v5545 = vunpack.c.l.b16 %v4657
        %v5546 = vunpack.c.l.b16 %v4658
        %v5547 = vunpack.c.l.b16 %v4659
        %v5548 = vunpack.c.l.b16 %v4660
        %v5549 = vunpack.c.l.b16 %v4661
        %v5550 = vunpack.c.l.b16 %v4662
        %v5551 = vunpack.c.l.b16 %v4663
        %v5552 = vunpack.c.l.b16 %v4664
        %v5553 = vunpack.c.l.b16 %v4665
        %v5554 = vunpack.c.l.b16 %v4666
        %v5555 = vunpack.c.l.b16 %v4667
        %v5556 = vunpack.c.l.b16 %v4668
        %v5557 = vunpack.c.l.b16 %v4669
        %v5558 = vunpack.c.l.b16 %v4670
        %v5559 = vunpack.c.l.b16 %v4671
        %v5560 = vunpack.c.l.b16 %v4672
        %v5561 = vunpack.c.l.b16 %v4673
        %v5562 = vunpack.c.l.b16 %v4674
        %v5563 = vunpack.c.l.b16 %v4675
        %v5564 = vunpack.c.l.b16 %v4676
        %v5565 = vunpack.c.l.b16 %v4677
        %v5566 = vunpack.c.l.b16 %v4678
        %v5567 = vunpack.c.l.b16 %v4679
        %v5568 = vunpack.c.l.b16 %v4680
        %v5569 = vunpack.c.l.b16 %v4681
        %v5570 = vunpack.c.l.b16 %v4682
        %v5571 = vunpack.c.l.b16 %v4683
        %v5572 = vunpack.c.l.b16 %v4684
        %v5573 = vunpack.c.l.b16 %v4685
        %v5574 = vunpack.c.l.b16 %v4686
        %v5575 = vunpack.c.l.b16 %v4687
        %v5576 = vunpack.c.l.b16 %v4688
        %v5577 = vunpack.c.l.b16 %v4689
        %v5578 = vunpack.c.l.b16 %v4690
        %v5579 = vunpack.c.l.b16 %v4691
        %v5580 = vunpack.c.l.b16 %v4692
        %v5581 = vunpack.c.l.b16 %v4693
        %v5582 = vunpack.c.l.b16 %v4694
        %v5583 = vunpack.c.l.b16 %v4695
        %v5584 = vunpack.c.l.b16 %v4696
        %v5585 = vunpack.c.l.b16 %v4697
        %v5586 = vunpack.c.l.b16 %v4698
        %v5587 = vunpack.c.l.b16 %v4699
        %v5588 = vunpack.c.l.b16 %v4700
        %v5589 = vunpack.c.l.b16 %v4701
        %v5590 = vunpack.c.l.b16 %v4702
        %v5591 = vunpack.c.l.b16 %v4703
        %v5592 = vunpack.c.l.b16 %v4704
        %v5593 = vunpack.c.l.b16 %v4705
        %v5594 = vunpack.c.l.b16 %v4706
        %v5595 = vunpack.c.l.b16 %v4707
        %v5596 = vunpack.c.l.b16 %v4708
        %v5597 = vunpack.c.l.b16 %v4709
        %v5598 = vunpack.c.l.b16 %v4710
        %v5599 = vunpack.c.l.b16 %v4711
        %v5600 = vunpack.c.l.b16 %v4712
        %v5601 = vunpack.c.l.b16 %v4713
        %v5602 = vunpack.c.l.b16 %v4714
        %v5603 = vunpack.c.l.b16 %v4715
        %v5604 = vunpack.c.l.b16 %v4716
        %v5605 = vunpack.c.l.b16 %v4717
        %v5606 = vunpack.c.l.b16 %v4718
        %v5607 = vunpack.c.l.b16 %v4719
        %v5608 = vunpack.c.l.b16 %v4720
        %v5609 = vunpack.c.l.b16 %v4721
        %v5610 = vunpack.c.l.b16 %v4722
        %v5611 = vunpack.c.l.b16 %v4723
        %v5612 = vunpack.c.l.b16 %v4724
        %v5613 = vunpack.c.l.b16 %v4725
        %v5614 = vunpack.c.l.b16 %v4726
        %v5615 = vunpack.c.l.b16 %v4727
        %v5616 = vunpack.c.l.b16 %v4728
        %v5617 = vunpack.c.l.b16 %v4729
        %v5618 = vunpack.c.l.b16 %v4730
        %v5619 = vunpack.c.l.b16 %v4731
        %v5620 = vunpack.c.l.b16 %v4732
        %v5621 = vunpack.c.l.b16 %v4733
        %v5622 = vunpack.c.l.b16 %v4734
        %v5623 = vunpack.c.l.b16 %v4735
        %v5624 = vunpack.c.l.b16 %v4736
        %v5625 = vunpack.c.l.b16 %v4737
        %v5626 = vunpack.c.l.b16 %v4738
        %v5627 = vunpack.c.l.b16 %v4739
        %v5628 = vunpack.c.l.b16 %v4740
        %v5629 = vunpack.c.l.b16 %v4741
        %v5630 = vunpack.c.l.b16 %v4742
        %v5631 = vunpack.c.l.b16 %v4743
        %v5632 = vunpack.c.l.b16 %v4744
        %v5633 = vunpack.c.l.b16 %v4745
        %v5634 = vunpack.c.l.b16 %v4746
        %v5635 = vunpack.c.l.b16 %v4747
        %v5636 = vunpack.c.l.b16 %v4748
        %v5637 = vunpack.c.l.b16 %v4749
        %v5638 = vunpack.c.l.b16 %v4750
        %v5639 = vunpack.c.l.b16 %v4751
        %v5640 = vunpack.c.l.b16 %v4752
        %v5641 = vunpack.c.l.b16 %v4753
        %v5642 = vunpack.c.l.b16 %v4754
        %v5643 = vunpack.c.l.b16 %v4755
        %v5644 = vunpack.c.l.b16 %v4756
        %v5645 = vunpack.c.l.b16 %v4757
        %v5646 = vunpack.c.l.b16 %v4758
        %v5647 = vunpack.c.l.b16 %v4759
        %v5648 = vunpack.c.l.b16 %v4760
        %v5649 = vunpack.c.l.b16 %v4761
        %v5650 = vunpack.c.l.b16 %v4762
        %v5651 = vunpack.c.l.b16 %v4763
        %v5652 = vunpack.c.l.b16 %v4764
        %v5653 = vunpack.c.l.b16 %v4765
        %v5654 = vunpack.c.l.b16 %v4766
        %v5655 = vunpack.c.l.b16 %v4767
        %v5656 = vunpack.c.l.b16 %v4768
        %v5657 = vunpack.c.l.b16 %v4769
        %v5658 = vunpack.c.l.b16 %v4770
        %v5659 = vunpack.c.l.b16 %v4771
        %v5660 = vunpack.c.l.b16 %v4772
        %v5661 = vunpack.c.l.b16 %v4773
        %v5662 = vunpack.c.l.b16 %v4774
        %v5663 = vunpack.c.l.b16 %v4775
        %v5664 = vunpack.c.l.b16 %v4776
        %v5665 = vunpack.c.l.b16 %v4777
        %v5666 = vunpack.c.l.b16 %v4778
        %v5667 = vunpack.c.l.b16 %v4779
        %v5668 = vunpack.c.l.b16 %v4780
        %v5669 = vunpack.c.l.b16 %v4781
        %v5670 = vunpack.c.l.b16 %v4782
        %v5671 = vpack.c.b16 %v5416, %v5415
        %v5672 = vpack.c.b16 %v5418, %v5417
        %v5673 = vpack.c.b16 %v5420, %v5419
        %v5674 = vpack.c.b16 %v5422, %v5421
        %v5675 = vpack.c.b16 %v5424, %v5423
        %v5676 = vpack.c.b16 %v5426, %v5425
        %v5677 = vpack.c.b16 %v5428, %v5427
        %v5678 = vpack.c.b16 %v5430, %v5429
        %v5679 = vpack.c.b16 %v5432, %v5431
        %v5680 = vpack.c.b16 %v5434, %v5433
        %v5681 = vpack.c.b16 %v5436, %v5435
        %v5682 = vpack.c.b16 %v5438, %v5437
        %v5683 = vpack.c.b16 %v5440, %v5439
        %v5684 = vpack.c.b16 %v5442, %v5441
        %v5685 = vpack.c.b16 %v5444, %v5443
        %v5686 = vpack.c.b16 %v5446, %v5445
        %v5687 = vpack.c.b16 %v5448, %v5447
        %v5688 = vpack.c.b16 %v5450, %v5449
        %v5689 = vpack.c.b16 %v5452, %v5451
        %v5690 = vpack.c.b16 %v5454, %v5453
        %v5691 = vpack.c.b16 %v5456, %v5455
        %v5692 = vpack.c.b16 %v5458, %v5457
        %v5693 = vpack.c.b16 %v5460, %v5459
        %v5694 = vpack.c.b16 %v5462, %v5461
        %v5695 = vpack.c.b16 %v5464, %v5463
        %v5696 = vpack.c.b16 %v5466, %v5465
        %v5697 = vpack.c.b16 %v5468, %v5467
        %v5698 = vpack.c.b16 %v5470, %v5469
        %v5699 = vpack.c.b16 %v5472, %v5471
        %v5700 = vpack.c.b16 %v5474, %v5473
        %v5701 = vpack.c.b16 %v5476, %v5475
        %v5702 = vpack.c.b16 %v5478, %v5477
        %v5703 = vpack.c.b16 %v5480, %v5479
        %v5704 = vpack.c.b16 %v5482, %v5481
        %v5705 = vpack.c.b16 %v5484, %v5483
        %v5706 = vpack.c.b16 %v5486, %v5485
        %v5707 = vpack.c.b16 %v5488, %v5487
        %v5708 = vpack.c.b16 %v5490, %v5489
        %v5709 = vpack.c.b16 %v5492, %v5491
        %v5710 = vpack.c.b16 %v5494, %v5493
        %v5711 = vpack.c.b16 %v5496, %v5495
        %v5712 = vpack.c.b16 %v5498, %v5497
        %v5713 = vpack.c.b16 %v5500, %v5499
        %v5714 = vpack.c.b16 %v5502, %v5501
        %v5715 = vpack.c.b16 %v5504, %v5503
        %v5716 = vpack.c.b16 %v5506, %v5505
        %v5717 = vpack.c.b16 %v5508, %v5507
        %v5718 = vpack.c.b16 %v5510, %v5509
        %v5719 = vpack.c.b16 %v5512, %v5511
        %v5720 = vpack.c.b16 %v5514, %v5513
        %v5721 = vpack.c.b16 %v5516, %v5515
        %v5722 = vpack.c.b16 %v5518, %v5517
        %v5723 = vpack.c.b16 %v5520, %v5519
        %v5724 = vpack.c.b16 %v5522, %v5521
        %v5725 = vpack.c.b16 %v5524, %v5523
        %v5726 = vpack.c.b16 %v5526, %v5525
        %v5727 = vpack.c.b16 %v5528, %v5527
        %v5728 = vpack.c.b16 %v5530, %v5529
        %v5729 = vpack.c.b16 %v5532, %v5531
        %v5730 = vpack.c.b16 %v5534, %v5533
        %v5731 = vpack.c.b16 %v5536, %v5535
        %v5732 = vpack.c.b16 %v5538, %v5537
        %v5733 = vpack.c.b16 %v5540, %v5539
        %v5734 = vpack.c.b16 %v5542, %v5541
        %v5735 = vpack.c.b16 %v5544, %v5543
        %v5736 = vpack.c.b16 %v5546, %v5545
        %v5737 = vpack.c.b16 %v5548, %v5547
        %v5738 = vpack.c.b16 %v5550, %v5549
        %v5739 = vpack.c.b16 %v5552, %v5551
        %v5740 = vpack.c.b16 %v5554, %v5553
        %v5741 = vpack.c.b16 %v5556, %v5555
        %v5742 = vpack.c.b16 %v5558, %v5557
        %v5743 = vpack.c.b16 %v5560, %v5559
        %v5744 = vpack.c.b16 %v5562, %v5561
        %v5745 = vpack.c.b16 %v5564, %v5563
        %v5746 = vpack.c.b16 %v5566, %v5565
        %v5747 = vpack.c.b16 %v5568, %v5567
        %v5748 = vpack.c.b16 %v5570, %v5569
        %v5749 = vpack.c.b16 %v5572, %v5571
        %v5750 = vpack.c.b16 %v5574, %v5573
        %v5751 = vpack.c.b16 %v5576, %v5575
        %v5752 = vpack.c.b16 %v5578, %v5577
        %v5753 = vpack.c.b16 %v5580, %v5579
        %v5754 = vpack.c.b16 %v5582, %v5581
        %v5755 = vpack.c.b16 %v5584, %v5583
        %v5756 = vpack.c.b16 %v5586, %v5585
        %v5757 = vpack.c.b16 %v5588, %v5587
        %v5758 = vpack.c.b16 %v5590, %v5589
        %v5759 = vpack.c.b16 %v5592, %v5591
        %v5760 = vpack.c.b16 %v5594, %v5593
        %v5761 = vpack.c.b16 %v5596, %v5595
        %v5762 = vpack.c.b16 %v5598, %v5597
        %v5763 = vpack.c.b16 %v5600, %v5599
        %v5764 = vpack.c.b16 %v5602, %v5601
        %v5765 = vpack.c.b16 %v5604, %v5603
        %v5766 = vpack.c.b16 %v5606, %v5605
        %v5767 = vpack.c.b16 %v5608, %v5607
        %v5768 = vpack.c.b16 %v5610, %v5609
        %v5769 = vpack.c.b16 %v5612, %v5611
        %v5770 = vpack.c.b16 %v5614, %v5613
        %v5771 = vpack.c.b16 %v5616, %v5615
        %v5772 = vpack.c.b16 %v5618, %v5617
        %v5773 = vpack.c.b16 %v5620, %v5619
        %v5774 = vpack.c.b16 %v5622, %v5621
        %v5775 = vpack.c.b16 %v5624, %v5623
        %v5776 = vpack.c.b16 %v5626, %v5625
        %v5777 = vpack.c.b16 %v5628, %v5627
        %v5778 = vpack.c.b16 %v5630, %v5629
        %v5779 = vpack.c.b16 %v5632, %v5631
        %v5780 = vpack.c.b16 %v5634, %v5633
        %v5781 = vpack.c.b16 %v5636, %v5635
        %v5782 = vpack.c.b16 %v5638, %v5637
        %v5783 = vpack.c.b16 %v5640, %v5639
        %v5784 = vpack.c.b16 %v5642, %v5641
        %v5785 = vpack.c.b16 %v5644, %v5643
        %v5786 = vpack.c.b16 %v5646, %v5645
        %v5787 = vpack.c.b16 %v5648, %v5647
        %v5788 = vpack.c.b16 %v5650, %v5649
        %v5789 = vpack.c.b16 %v5652, %v5651
        %v5790 = vpack.c.b16 %v5654, %v5653
        %v5791 = vpack.c.b16 %v5656, %v5655
        %v5792 = vpack.c.b16 %v5658, %v5657
        %v5793 = vpack.c.b16 %v5660, %v5659
        %v5794 = vpack.c.b16 %v5662, %v5661
        %v5795 = vpack.c.b16 %v5664, %v5663
        %v5796 = vpack.c.b16 %v5666, %v5665
        %v5797 = vpack.c.b16 %v5668, %v5667
        %v5798 = vpack.c.b16 %v5670, %v5669
        %5927 = vmatprep.subr.bf16.mxu0 0
        %5928 = vmatpush1.bf16.msra.mxu0 %v5678
        %5929 = vmatprep.subr.bf16.mxu0 0
        %5930 = vmatpush1.bf16.msra.mxu0 %v5677
        %5931 = vmatprep.subr.bf16.mxu0 0
        %5932 = vmatpush1.bf16.msra.mxu0 %v5676
        %5933 = vmatprep.subr.bf16.mxu0 0
        %5934 = vmatpush1.bf16.msra.mxu0 %v5675
        %5935 = vmatprep.subr.bf16.mxu0 0
        %5936 = vmatpush1.bf16.msra.mxu0 %v5674
        %5937 = vmatprep.subr.bf16.mxu0 0
        %5938 = vmatpush1.bf16.msra.mxu0 %v5673
        %5939 = vmatprep.subr.bf16.mxu0 0
        %5940 = vmatpush1.bf16.msra.mxu0 %v5672
        %5941 = vmatprep.subr.bf16.mxu0 0
        %5942 = vmatpush1.bf16.msra.mxu0 %v5671
        %5943 = vmatprep.subr.bf16.mxu0 0
        %5944 = vmatpush2.bf16.msra.mxu0 %v5686
        %5945 = vmatprep.subr.bf16.mxu0 0
        %5946 = vmatpush2.bf16.msra.mxu0 %v5685
        %5947 = vmatprep.subr.bf16.mxu0 0
        %5948 = vmatpush2.bf16.msra.mxu0 %v5684
        %5949 = vmatprep.subr.bf16.mxu0 0
        %5950 = vmatpush2.bf16.msra.mxu0 %v5683
        %5951 = vmatprep.subr.bf16.mxu0 0
        %5952 = vmatpush2.bf16.msra.mxu0 %v5682
        %5953 = vmatprep.subr.bf16.mxu0 0
        %5954 = vmatpush2.bf16.msra.mxu0 %v5681
        %5955 = vmatprep.subr.bf16.mxu0 0
        %5956 = vmatpush2.bf16.msra.mxu0 %v5680
        %5957 = vmatprep.subr.bf16.mxu0 0
        %5958 = vmatpush2.bf16.msra.mxu0 %v5679
        %5959 = vmatprep.mubr.bf16.mxu0 %v5000
        %5960 = vmatmul.mubr.bf16.gmra.mxu0 %v4999
        %v5961 = vpop.f32.mrf.mxu0
        %v5962 = vadd.f32 0.0, %v5961
        %v5963 = vpop.f32.mrf.mxu0
        %v5964 = vpop.f32.mrf.mxu0
        %v5965 = vadd.f32 0.0, %v5964
        %v5966 = vpop.f32.mrf.mxu0
        %5967 = vmatprep.mubr.bf16.mxu0 %v5016
        %5968 = vmatmul.mubr.bf16.gmra.mxu0 %v5015
        %v5969 = vpop.f32.mrf.mxu0
        %v5970 = vadd.f32 0.0, %v5969
        %v5971 = vpop.f32.mrf.mxu0
        %v5972 = vpop.f32.mrf.mxu0
        %v5973 = vadd.f32 0.0, %v5972
        %v5974 = vpop.f32.mrf.mxu0
        %5975 = vmatprep.mubr.bf16.mxu0 %v5032
        %5976 = vmatmul.mubr.bf16.gmra.mxu0 %v5031
        %v5977 = vpop.f32.mrf.mxu0
        %v5978 = vadd.f32 0.0, %v5977
        %v5979 = vpop.f32.mrf.mxu0
        %v5980 = vpop.f32.mrf.mxu0
        %v5981 = vadd.f32 0.0, %v5980
        %v5982 = vpop.f32.mrf.mxu0
        %5983 = vmatprep.mubr.bf16.mxu0 %v5048
        %5984 = vmatmul.mubr.bf16.gmra.mxu0 %v5047
        %v5985 = vpop.f32.mrf.mxu0
        %v5986 = vadd.f32 0.0, %v5985
        %v5987 = vpop.f32.mrf.mxu0
        %v5988 = vpop.f32.mrf.mxu0
        %v5989 = vadd.f32 0.0, %v5988
        %v5990 = vpop.f32.mrf.mxu0
        %5991 = vmatprep.mubr.bf16.mxu0 %v5064
        %5992 = vmatmul.mubr.bf16.gmra.mxu0 %v5063
        %v5993 = vpop.f32.mrf.mxu0
        %v5994 = vadd.f32 0.0, %v5993
        %v5995 = vpop.f32.mrf.mxu0
        %v5996 = vpop.f32.mrf.mxu0
        %v5997 = vpop.f32.mrf.mxu0
        %5998 = vdwg.mxu0
        %5999 = vmatprep.subr.bf16.mxu0 0
        %6000 = vmatpush1.bf16.msra.mxu0 %v5694
        %6001 = vmatprep.subr.bf16.mxu0 0
        %6002 = vmatpush1.bf16.msra.mxu0 %v5693
        %6003 = vmatprep.subr.bf16.mxu0 0
        %6004 = vmatpush1.bf16.msra.mxu0 %v5692
        %6005 = vmatprep.subr.bf16.mxu0 0
        %6006 = vmatpush1.bf16.msra.mxu0 %v5691
        %6007 = vmatprep.subr.bf16.mxu0 0
        %6008 = vmatpush1.bf16.msra.mxu0 %v5690
        %6009 = vmatprep.subr.bf16.mxu0 0
        %6010 = vmatpush1.bf16.msra.mxu0 %v5689
        %6011 = vmatprep.subr.bf16.mxu0 0
        %6012 = vmatpush1.bf16.msra.mxu0 %v5688
        %6013 = vmatprep.subr.bf16.mxu0 0
        %6014 = vmatpush1.bf16.msra.mxu0 %v5687
        %6015 = vmatprep.subr.bf16.mxu0 0
        %6016 = vmatpush2.bf16.msra.mxu0 %v5702
        %6017 = vmatprep.subr.bf16.mxu0 0
        %6018 = vmatpush2.bf16.msra.mxu0 %v5701
        %6019 = vmatprep.subr.bf16.mxu0 0
        %6020 = vmatpush2.bf16.msra.mxu0 %v5700
        %6021 = vmatprep.subr.bf16.mxu0 0
        %6022 = vmatpush2.bf16.msra.mxu0 %v5699
        %6023 = vmatprep.subr.bf16.mxu0 0
        %6024 = vmatpush2.bf16.msra.mxu0 %v5698
        %6025 = vmatprep.subr.bf16.mxu0 0
        %6026 = vmatpush2.bf16.msra.mxu0 %v5697
        %6027 = vmatprep.subr.bf16.mxu0 0
        %6028 = vmatpush2.bf16.msra.mxu0 %v5696
        %6029 = vmatprep.subr.bf16.mxu0 0
        %6030 = vmatpush2.bf16.msra.mxu0 %v5695
        %6031 = vmatprep.mubr.bf16.mxu0 %v5002
        %6032 = vmatmul.mubr.bf16.gmra.mxu0 %v5001
        %v6033 = vpop.f32.mrf.mxu0
        %v6034 = vadd.f32 %v5962, %v6033
        %v6035 = vpop.f32.mrf.mxu0
        %v6036 = vpop.f32.mrf.mxu0
        %v6037 = vadd.f32 %v5965, %v6036
        %v6038 = vpop.f32.mrf.mxu0
        %6039 = vmatprep.mubr.bf16.mxu0 %v5018
        %6040 = vmatmul.mubr.bf16.gmra.mxu0 %v5017
        %v6041 = vpop.f32.mrf.mxu0
        %v6042 = vadd.f32 %v5970, %v6041
        %v6043 = vpop.f32.mrf.mxu0
        %v6044 = vpop.f32.mrf.mxu0
        %v6045 = vadd.f32 %v5973, %v6044
        %v6046 = vpop.f32.mrf.mxu0
        %6047 = vmatprep.mubr.bf16.mxu0 %v5034
        %6048 = vmatmul.mubr.bf16.gmra.mxu0 %v5033
        %v6049 = vpop.f32.mrf.mxu0
        %v6050 = vadd.f32 %v5978, %v6049
        %v6051 = vpop.f32.mrf.mxu0
        %v6052 = vpop.f32.mrf.mxu0
        %v6053 = vadd.f32 %v5981, %v6052
        %v6054 = vpop.f32.mrf.mxu0
        %6055 = vmatprep.mubr.bf16.mxu0 %v5050
        %6056 = vmatmul.mubr.bf16.gmra.mxu0 %v5049
        %v6057 = vpop.f32.mrf.mxu0
        %v6058 = vadd.f32 %v5986, %v6057
        %v6059 = vpop.f32.mrf.mxu0
        %v6060 = vpop.f32.mrf.mxu0
        %v6061 = vadd.f32 %v5989, %v6060
        %v6062 = vpop.f32.mrf.mxu0
        %6063 = vmatprep.mubr.bf16.mxu0 %v5066
        %6064 = vmatmul.mubr.bf16.gmra.mxu0 %v5065
        %v6065 = vpop.f32.mrf.mxu0
        %v6066 = vadd.f32 %v5994, %v6065
        %v6067 = vpop.f32.mrf.mxu0
        %v6068 = vpop.f32.mrf.mxu0
        %v6069 = vpop.f32.mrf.mxu0
        %6070 = vdwg.mxu0
        %6071 = vmatprep.subr.bf16.mxu0 0
        %6072 = vmatpush1.bf16.msra.mxu0 %v5710
        %6073 = vmatprep.subr.bf16.mxu0 0
        %6074 = vmatpush1.bf16.msra.mxu0 %v5709
        %6075 = vmatprep.subr.bf16.mxu0 0
        %6076 = vmatpush1.bf16.msra.mxu0 %v5708
        %6077 = vmatprep.subr.bf16.mxu0 0
        %6078 = vmatpush1.bf16.msra.mxu0 %v5707
        %6079 = vmatprep.subr.bf16.mxu0 0
        %6080 = vmatpush1.bf16.msra.mxu0 %v5706
        %6081 = vmatprep.subr.bf16.mxu0 0
        %6082 = vmatpush1.bf16.msra.mxu0 %v5705
        %6083 = vmatprep.subr.bf16.mxu0 0
        %6084 = vmatpush1.bf16.msra.mxu0 %v5704
        %6085 = vmatprep.subr.bf16.mxu0 0
        %6086 = vmatpush1.bf16.msra.mxu0 %v5703
        %6087 = vmatprep.subr.bf16.mxu0 0
        %6088 = vmatpush2.bf16.msra.mxu0 %v5718
        %6089 = vmatprep.subr.bf16.mxu0 0
        %6090 = vmatpush2.bf16.msra.mxu0 %v5717
        %6091 = vmatprep.subr.bf16.mxu0 0
        %6092 = vmatpush2.bf16.msra.mxu0 %v5716
        %6093 = vmatprep.subr.bf16.mxu0 0
        %6094 = vmatpush2.bf16.msra.mxu0 %v5715
        %6095 = vmatprep.subr.bf16.mxu0 0
        %6096 = vmatpush2.bf16.msra.mxu0 %v5714
        %6097 = vmatprep.subr.bf16.mxu0 0
        %6098 = vmatpush2.bf16.msra.mxu0 %v5713
        %6099 = vmatprep.subr.bf16.mxu0 0
        %6100 = vmatpush2.bf16.msra.mxu0 %v5712
        %6101 = vmatprep.subr.bf16.mxu0 0
        %6102 = vmatpush2.bf16.msra.mxu0 %v5711
        %6103 = vmatprep.mubr.bf16.mxu0 %v5004
        %6104 = vmatmul.mubr.bf16.gmra.mxu0 %v5003
        %v6105 = vpop.f32.mrf.mxu0
        %v6106 = vadd.f32 %v6034, %v6105
        %v6107 = vpop.f32.mrf.mxu0
        %v6108 = vpop.f32.mrf.mxu0
        %v6109 = vadd.f32 %v6037, %v6108
        %v6110 = vpop.f32.mrf.mxu0
        %6111 = vmatprep.mubr.bf16.mxu0 %v5020
        %6112 = vmatmul.mubr.bf16.gmra.mxu0 %v5019
        %v6113 = vpop.f32.mrf.mxu0
        %v6114 = vadd.f32 %v6042, %v6113
        %v6115 = vpop.f32.mrf.mxu0
        %v6116 = vpop.f32.mrf.mxu0
        %v6117 = vadd.f32 %v6045, %v6116
        %v6118 = vpop.f32.mrf.mxu0
        %6119 = vmatprep.mubr.bf16.mxu0 %v5036
        %6120 = vmatmul.mubr.bf16.gmra.mxu0 %v5035
        %v6121 = vpop.f32.mrf.mxu0
        %v6122 = vadd.f32 %v6050, %v6121
        %v6123 = vpop.f32.mrf.mxu0
        %v6124 = vpop.f32.mrf.mxu0
        %v6125 = vadd.f32 %v6053, %v6124
        %v6126 = vpop.f32.mrf.mxu0
        %6127 = vmatprep.mubr.bf16.mxu0 %v5052
        %6128 = vmatmul.mubr.bf16.gmra.mxu0 %v5051
        %v6129 = vpop.f32.mrf.mxu0
        %v6130 = vadd.f32 %v6058, %v6129
        %v6131 = vpop.f32.mrf.mxu0
        %v6132 = vpop.f32.mrf.mxu0
        %v6133 = vadd.f32 %v6061, %v6132
        %v6134 = vpop.f32.mrf.mxu0
        %6135 = vmatprep.mubr.bf16.mxu0 %v5068
        %6136 = vmatmul.mubr.bf16.gmra.mxu0 %v5067
        %v6137 = vpop.f32.mrf.mxu0
        %v6138 = vadd.f32 %v6066, %v6137
        %v6139 = vpop.f32.mrf.mxu0
        %v6140 = vpop.f32.mrf.mxu0
        %v6141 = vpop.f32.mrf.mxu0
        %6142 = vdwg.mxu0
        %6143 = vmatprep.subr.bf16.mxu0 0
        %6144 = vmatpush1.bf16.msra.mxu0 %v5726
        %6145 = vmatprep.subr.bf16.mxu0 0
        %6146 = vmatpush1.bf16.msra.mxu0 %v5725
        %6147 = vmatprep.subr.bf16.mxu0 0
        %6148 = vmatpush1.bf16.msra.mxu0 %v5724
        %6149 = vmatprep.subr.bf16.mxu0 0
        %6150 = vmatpush1.bf16.msra.mxu0 %v5723
        %6151 = vmatprep.subr.bf16.mxu0 0
        %6152 = vmatpush1.bf16.msra.mxu0 %v5722
        %6153 = vmatprep.subr.bf16.mxu0 0
        %6154 = vmatpush1.bf16.msra.mxu0 %v5721
        %6155 = vmatprep.subr.bf16.mxu0 0
        %6156 = vmatpush1.bf16.msra.mxu0 %v5720
        %6157 = vmatprep.subr.bf16.mxu0 0
        %6158 = vmatpush1.bf16.msra.mxu0 %v5719
        %6159 = vmatprep.subr.bf16.mxu0 0
        %6160 = vmatpush2.bf16.msra.mxu0 %v5734
        %6161 = vmatprep.subr.bf16.mxu0 0
        %6162 = vmatpush2.bf16.msra.mxu0 %v5733
        %6163 = vmatprep.subr.bf16.mxu0 0
        %6164 = vmatpush2.bf16.msra.mxu0 %v5732
        %6165 = vmatprep.subr.bf16.mxu0 0
        %6166 = vmatpush2.bf16.msra.mxu0 %v5731
        %6167 = vmatprep.subr.bf16.mxu0 0
        %6168 = vmatpush2.bf16.msra.mxu0 %v5730
        %6169 = vmatprep.subr.bf16.mxu0 0
        %6170 = vmatpush2.bf16.msra.mxu0 %v5729
        %6171 = vmatprep.subr.bf16.mxu0 0
        %6172 = vmatpush2.bf16.msra.mxu0 %v5728
        %6173 = vmatprep.subr.bf16.mxu0 0
        %6174 = vmatpush2.bf16.msra.mxu0 %v5727
        %6175 = vmatprep.mubr.bf16.mxu0 %v5006
        %6176 = vmatmul.mubr.bf16.gmra.mxu0 %v5005
        %v6177 = vpop.f32.mrf.mxu0
        %v6178 = vadd.f32 %v6106, %v6177
        %v6179 = vpop.f32.mrf.mxu0
        %v6180 = vpop.f32.mrf.mxu0
        %v6181 = vadd.f32 %v6109, %v6180
        %v6182 = vpop.f32.mrf.mxu0
        %6183 = vmatprep.mubr.bf16.mxu0 %v5022
        %6184 = vmatmul.mubr.bf16.gmra.mxu0 %v5021
        %v6185 = vpop.f32.mrf.mxu0
        %v6186 = vadd.f32 %v6114, %v6185
        %v6187 = vpop.f32.mrf.mxu0
        %v6188 = vpop.f32.mrf.mxu0
        %v6189 = vadd.f32 %v6117, %v6188
        %v6190 = vpop.f32.mrf.mxu0
        %6191 = vmatprep.mubr.bf16.mxu0 %v5038
        %6192 = vmatmul.mubr.bf16.gmra.mxu0 %v5037
        %v6193 = vpop.f32.mrf.mxu0
        %v6194 = vadd.f32 %v6122, %v6193
        %v6195 = vpop.f32.mrf.mxu0
        %v6196 = vpop.f32.mrf.mxu0
        %v6197 = vadd.f32 %v6125, %v6196
        %v6198 = vpop.f32.mrf.mxu0
        %6199 = vmatprep.mubr.bf16.mxu0 %v5054
        %6200 = vmatmul.mubr.bf16.gmra.mxu0 %v5053
        %v6201 = vpop.f32.mrf.mxu0
        %v6202 = vadd.f32 %v6130, %v6201
        %v6203 = vpop.f32.mrf.mxu0
        %v6204 = vpop.f32.mrf.mxu0
        %v6205 = vadd.f32 %v6133, %v6204
        %v6206 = vpop.f32.mrf.mxu0
        %6207 = vmatprep.mubr.bf16.mxu0 %v5070
        %6208 = vmatmul.mubr.bf16.gmra.mxu0 %v5069
        %v6209 = vpop.f32.mrf.mxu0
        %v6210 = vadd.f32 %v6138, %v6209
        %v6211 = vpop.f32.mrf.mxu0
        %v6212 = vpop.f32.mrf.mxu0
        %v6213 = vpop.f32.mrf.mxu0
        %6214 = vdwg.mxu0
        %6215 = vmatprep.subr.bf16.mxu0 0
        %6216 = vmatpush1.bf16.msra.mxu0 %v5742
        %6217 = vmatprep.subr.bf16.mxu0 0
        %6218 = vmatpush1.bf16.msra.mxu0 %v5741
        %6219 = vmatprep.subr.bf16.mxu0 0
        %6220 = vmatpush1.bf16.msra.mxu0 %v5740
        %6221 = vmatprep.subr.bf16.mxu0 0
        %6222 = vmatpush1.bf16.msra.mxu0 %v5739
        %6223 = vmatprep.subr.bf16.mxu0 0
        %6224 = vmatpush1.bf16.msra.mxu0 %v5738
        %6225 = vmatprep.subr.bf16.mxu0 0
        %6226 = vmatpush1.bf16.msra.mxu0 %v5737
        %6227 = vmatprep.subr.bf16.mxu0 0
        %6228 = vmatpush1.bf16.msra.mxu0 %v5736
        %6229 = vmatprep.subr.bf16.mxu0 0
        %6230 = vmatpush1.bf16.msra.mxu0 %v5735
        %6231 = vmatprep.subr.bf16.mxu0 0
        %6232 = vmatpush2.bf16.msra.mxu0 %v5750
        %6233 = vmatprep.subr.bf16.mxu0 0
        %6234 = vmatpush2.bf16.msra.mxu0 %v5749
        %6235 = vmatprep.subr.bf16.mxu0 0
        %6236 = vmatpush2.bf16.msra.mxu0 %v5748
        %6237 = vmatprep.subr.bf16.mxu0 0
        %6238 = vmatpush2.bf16.msra.mxu0 %v5747
        %6239 = vmatprep.subr.bf16.mxu0 0
        %6240 = vmatpush2.bf16.msra.mxu0 %v5746
        %6241 = vmatprep.subr.bf16.mxu0 0
        %6242 = vmatpush2.bf16.msra.mxu0 %v5745
        %6243 = vmatprep.subr.bf16.mxu0 0
        %6244 = vmatpush2.bf16.msra.mxu0 %v5744
        %6245 = vmatprep.subr.bf16.mxu0 0
        %6246 = vmatpush2.bf16.msra.mxu0 %v5743
        %6247 = vmatprep.mubr.bf16.mxu0 %v5008
        %6248 = vmatmul.mubr.bf16.gmra.mxu0 %v5007
        %v6249 = vpop.f32.mrf.mxu0
        %v6250 = vadd.f32 %v6178, %v6249
        %v6251 = vpop.f32.mrf.mxu0
        %v6252 = vpop.f32.mrf.mxu0
        %v6253 = vadd.f32 %v6181, %v6252
        %v6254 = vpop.f32.mrf.mxu0
        %6255 = vmatprep.mubr.bf16.mxu0 %v5024
        %6256 = vmatmul.mubr.bf16.gmra.mxu0 %v5023
        %v6257 = vpop.f32.mrf.mxu0
        %v6258 = vadd.f32 %v6186, %v6257
        %v6259 = vpop.f32.mrf.mxu0
        %v6260 = vpop.f32.mrf.mxu0
        %v6261 = vadd.f32 %v6189, %v6260
        %v6262 = vpop.f32.mrf.mxu0
        %6263 = vmatprep.mubr.bf16.mxu0 %v5040
        %6264 = vmatmul.mubr.bf16.gmra.mxu0 %v5039
        %v6265 = vpop.f32.mrf.mxu0
        %v6266 = vadd.f32 %v6194, %v6265
        %v6267 = vpop.f32.mrf.mxu0
        %v6268 = vpop.f32.mrf.mxu0
        %v6269 = vadd.f32 %v6197, %v6268
        %v6270 = vpop.f32.mrf.mxu0
        %6271 = vmatprep.mubr.bf16.mxu0 %v5056
        %6272 = vmatmul.mubr.bf16.gmra.mxu0 %v5055
        %v6273 = vpop.f32.mrf.mxu0
        %v6274 = vadd.f32 %v6202, %v6273
        %v6275 = vpop.f32.mrf.mxu0
        %v6276 = vpop.f32.mrf.mxu0
        %v6277 = vadd.f32 %v6205, %v6276
        %v6278 = vpop.f32.mrf.mxu0
        %6279 = vmatprep.mubr.bf16.mxu0 %v5072
        %6280 = vmatmul.mubr.bf16.gmra.mxu0 %v5071
        %v6281 = vpop.f32.mrf.mxu0
        %v6282 = vadd.f32 %v6210, %v6281
        %v6283 = vpop.f32.mrf.mxu0
        %v6284 = vpop.f32.mrf.mxu0
        %v6285 = vpop.f32.mrf.mxu0
        %6286 = vdwg.mxu0
        %6287 = vmatprep.subr.bf16.mxu0 0
        %6288 = vmatpush1.bf16.msra.mxu0 %v5758
        %6289 = vmatprep.subr.bf16.mxu0 0
        %6290 = vmatpush1.bf16.msra.mxu0 %v5757
        %6291 = vmatprep.subr.bf16.mxu0 0
        %6292 = vmatpush1.bf16.msra.mxu0 %v5756
        %6293 = vmatprep.subr.bf16.mxu0 0
        %6294 = vmatpush1.bf16.msra.mxu0 %v5755
        %6295 = vmatprep.subr.bf16.mxu0 0
        %6296 = vmatpush1.bf16.msra.mxu0 %v5754
        %6297 = vmatprep.subr.bf16.mxu0 0
        %6298 = vmatpush1.bf16.msra.mxu0 %v5753
        %6299 = vmatprep.subr.bf16.mxu0 0
        %6300 = vmatpush1.bf16.msra.mxu0 %v5752
        %6301 = vmatprep.subr.bf16.mxu0 0
        %6302 = vmatpush1.bf16.msra.mxu0 %v5751
        %6303 = vmatprep.subr.bf16.mxu0 0
        %6304 = vmatpush2.bf16.msra.mxu0 %v5766
        %6305 = vmatprep.subr.bf16.mxu0 0
        %6306 = vmatpush2.bf16.msra.mxu0 %v5765
        %6307 = vmatprep.subr.bf16.mxu0 0
        %6308 = vmatpush2.bf16.msra.mxu0 %v5764
        %6309 = vmatprep.subr.bf16.mxu0 0
        %6310 = vmatpush2.bf16.msra.mxu0 %v5763
        %6311 = vmatprep.subr.bf16.mxu0 0
        %6312 = vmatpush2.bf16.msra.mxu0 %v5762
        %6313 = vmatprep.subr.bf16.mxu0 0
        %6314 = vmatpush2.bf16.msra.mxu0 %v5761
        %6315 = vmatprep.subr.bf16.mxu0 0
        %6316 = vmatpush2.bf16.msra.mxu0 %v5760
        %6317 = vmatprep.subr.bf16.mxu0 0
        %6318 = vmatpush2.bf16.msra.mxu0 %v5759
        %6319 = vmatprep.mubr.bf16.mxu0 %v5010
        %6320 = vmatmul.mubr.bf16.gmra.mxu0 %v5009
        %v6321 = vpop.f32.mrf.mxu0
        %v6322 = vadd.f32 %v6250, %v6321
        %v6323 = vpop.f32.mrf.mxu0
        %v6324 = vpop.f32.mrf.mxu0
        %v6325 = vadd.f32 %v6253, %v6324
        %v6326 = vpop.f32.mrf.mxu0
        %6327 = vmatprep.mubr.bf16.mxu0 %v5026
        %6328 = vmatmul.mubr.bf16.gmra.mxu0 %v5025
        %v6329 = vpop.f32.mrf.mxu0
        %v6330 = vadd.f32 %v6258, %v6329
        %v6331 = vpop.f32.mrf.mxu0
        %v6332 = vpop.f32.mrf.mxu0
        %v6333 = vadd.f32 %v6261, %v6332
        %v6334 = vpop.f32.mrf.mxu0
        %6335 = vmatprep.mubr.bf16.mxu0 %v5042
        %6336 = vmatmul.mubr.bf16.gmra.mxu0 %v5041
        %v6337 = vpop.f32.mrf.mxu0
        %v6338 = vadd.f32 %v6266, %v6337
        %v6339 = vpop.f32.mrf.mxu0
        %v6340 = vpop.f32.mrf.mxu0
        %v6341 = vadd.f32 %v6269, %v6340
        %v6342 = vpop.f32.mrf.mxu0
        %6343 = vmatprep.mubr.bf16.mxu0 %v5058
        %6344 = vmatmul.mubr.bf16.gmra.mxu0 %v5057
        %v6345 = vpop.f32.mrf.mxu0
        %v6346 = vadd.f32 %v6274, %v6345
        %v6347 = vpop.f32.mrf.mxu0
        %v6348 = vpop.f32.mrf.mxu0
        %v6349 = vadd.f32 %v6277, %v6348
        %v6350 = vpop.f32.mrf.mxu0
        %6351 = vmatprep.mubr.bf16.mxu0 %v5074
        %6352 = vmatmul.mubr.bf16.gmra.mxu0 %v5073
        %v6353 = vpop.f32.mrf.mxu0
        %v6354 = vadd.f32 %v6282, %v6353
        %v6355 = vpop.f32.mrf.mxu0
        %v6356 = vpop.f32.mrf.mxu0
        %v6357 = vpop.f32.mrf.mxu0
        %6358 = vdwg.mxu0
        %6359 = vmatprep.subr.bf16.mxu0 0
        %6360 = vmatpush1.bf16.msra.mxu0 %v5774
        %6361 = vmatprep.subr.bf16.mxu0 0
        %6362 = vmatpush1.bf16.msra.mxu0 %v5773
        %6363 = vmatprep.subr.bf16.mxu0 0
        %6364 = vmatpush1.bf16.msra.mxu0 %v5772
        %6365 = vmatprep.subr.bf16.mxu0 0
        %6366 = vmatpush1.bf16.msra.mxu0 %v5771
        %6367 = vmatprep.subr.bf16.mxu0 0
        %6368 = vmatpush1.bf16.msra.mxu0 %v5770
        %6369 = vmatprep.subr.bf16.mxu0 0
        %6370 = vmatpush1.bf16.msra.mxu0 %v5769
        %6371 = vmatprep.subr.bf16.mxu0 0
        %6372 = vmatpush1.bf16.msra.mxu0 %v5768
        %6373 = vmatprep.subr.bf16.mxu0 0
        %6374 = vmatpush1.bf16.msra.mxu0 %v5767
        %6375 = vmatprep.subr.bf16.mxu0 0
        %6376 = vmatpush2.bf16.msra.mxu0 %v5782
        %6377 = vmatprep.subr.bf16.mxu0 0
        %6378 = vmatpush2.bf16.msra.mxu0 %v5781
        %6379 = vmatprep.subr.bf16.mxu0 0
        %6380 = vmatpush2.bf16.msra.mxu0 %v5780
        %6381 = vmatprep.subr.bf16.mxu0 0
        %6382 = vmatpush2.bf16.msra.mxu0 %v5779
        %6383 = vmatprep.subr.bf16.mxu0 0
        %6384 = vmatpush2.bf16.msra.mxu0 %v5778
        %6385 = vmatprep.subr.bf16.mxu0 0
        %6386 = vmatpush2.bf16.msra.mxu0 %v5777
        %6387 = vmatprep.subr.bf16.mxu0 0
        %6388 = vmatpush2.bf16.msra.mxu0 %v5776
        %6389 = vmatprep.subr.bf16.mxu0 0
        %6390 = vmatpush2.bf16.msra.mxu0 %v5775
        %6391 = vmatprep.mubr.bf16.mxu0 %v5012
        %6392 = vmatmul.mubr.bf16.gmra.mxu0 %v5011
        %v6393 = vpop.f32.mrf.mxu0
        %v6394 = vadd.f32 %v6322, %v6393
        %v6395 = vpop.f32.mrf.mxu0
        %v6396 = vpop.f32.mrf.mxu0
        %v6397 = vadd.f32 %v6325, %v6396
        %v6398 = vpop.f32.mrf.mxu0
        %6399 = vmatprep.mubr.bf16.mxu0 %v5028
        %6400 = vmatmul.mubr.bf16.gmra.mxu0 %v5027
        %v6401 = vpop.f32.mrf.mxu0
        %v6402 = vadd.f32 %v6330, %v6401
        %v6403 = vpop.f32.mrf.mxu0
        %v6404 = vpop.f32.mrf.mxu0
        %v6405 = vadd.f32 %v6333, %v6404
        %v6406 = vpop.f32.mrf.mxu0
        %6407 = vmatprep.mubr.bf16.mxu0 %v5044
        %6408 = vmatmul.mubr.bf16.gmra.mxu0 %v5043
        %v6409 = vpop.f32.mrf.mxu0
        %v6410 = vadd.f32 %v6338, %v6409
        %v6411 = vpop.f32.mrf.mxu0
        %v6412 = vpop.f32.mrf.mxu0
        %v6413 = vadd.f32 %v6341, %v6412
        %v6414 = vpop.f32.mrf.mxu0
        %6415 = vmatprep.mubr.bf16.mxu0 %v5060
        %6416 = vmatmul.mubr.bf16.gmra.mxu0 %v5059
        %v6417 = vpop.f32.mrf.mxu0
        %v6418 = vadd.f32 %v6346, %v6417
        %v6419 = vpop.f32.mrf.mxu0
        %v6420 = vpop.f32.mrf.mxu0
        %v6421 = vadd.f32 %v6349, %v6420
        %v6422 = vpop.f32.mrf.mxu0
        %6423 = vmatprep.mubr.bf16.mxu0 %v5076
        %6424 = vmatmul.mubr.bf16.gmra.mxu0 %v5075
        %v6425 = vpop.f32.mrf.mxu0
        %v6426 = vadd.f32 %v6354, %v6425
        %v6427 = vpop.f32.mrf.mxu0
        %v6428 = vpop.f32.mrf.mxu0
        %v6429 = vpop.f32.mrf.mxu0
        %6430 = vdwg.mxu0
        %6431 = vmatprep.subr.bf16.mxu0 0
        %6432 = vmatpush1.bf16.msra.mxu0 %v5790
        %6433 = vmatprep.subr.bf16.mxu0 0
        %6434 = vmatpush1.bf16.msra.mxu0 %v5789
        %6435 = vmatprep.subr.bf16.mxu0 0
        %6436 = vmatpush1.bf16.msra.mxu0 %v5788
        %6437 = vmatprep.subr.bf16.mxu0 0
        %6438 = vmatpush1.bf16.msra.mxu0 %v5787
        %6439 = vmatprep.subr.bf16.mxu0 0
        %6440 = vmatpush1.bf16.msra.mxu0 %v5786
        %6441 = vmatprep.subr.bf16.mxu0 0
        %6442 = vmatpush1.bf16.msra.mxu0 %v5785
        %6443 = vmatprep.subr.bf16.mxu0 0
        %6444 = vmatpush1.bf16.msra.mxu0 %v5784
        %6445 = vmatprep.subr.bf16.mxu0 0
        %6446 = vmatpush1.bf16.msra.mxu0 %v5783
        %6447 = vmatprep.subr.bf16.mxu0 0
        %6448 = vmatpush2.bf16.msra.mxu0 %v5798
        %6449 = vmatprep.subr.bf16.mxu0 0
        %6450 = vmatpush2.bf16.msra.mxu0 %v5797
        %6451 = vmatprep.subr.bf16.mxu0 0
        %6452 = vmatpush2.bf16.msra.mxu0 %v5796
        %6453 = vmatprep.subr.bf16.mxu0 0
        %6454 = vmatpush2.bf16.msra.mxu0 %v5795
        %6455 = vmatprep.subr.bf16.mxu0 0
        %6456 = vmatpush2.bf16.msra.mxu0 %v5794
        %6457 = vmatprep.subr.bf16.mxu0 0
        %6458 = vmatpush2.bf16.msra.mxu0 %v5793
        %6459 = vmatprep.subr.bf16.mxu0 0
        %6460 = vmatpush2.bf16.msra.mxu0 %v5792
        %6461 = vmatprep.subr.bf16.mxu0 0
        %6462 = vmatpush2.bf16.msra.mxu0 %v5791
        %6463 = vmatprep.mubr.bf16.mxu0 %v5014
        %6464 = vmatmul.mubr.bf16.gmra.mxu0 %v5013
        %v6465 = vpop.f32.mrf.mxu0
        %v6466 = vadd.f32 %v6394, %v6465
        %v6467 = vpop.f32.mrf.mxu0
        %v6468 = vpop.f32.mrf.mxu0
        %v6469 = vadd.f32 %v6397, %v6468
        %v6470 = vpop.f32.mrf.mxu0
        %6471 = vmatprep.mubr.bf16.mxu0 %v5030
        %6472 = vmatmul.mubr.bf16.gmra.mxu0 %v5029
        %v6473 = vpop.f32.mrf.mxu0
        %v6474 = vadd.f32 %v6402, %v6473
        %v6475 = vpop.f32.mrf.mxu0
        %v6476 = vpop.f32.mrf.mxu0
        %v6477 = vadd.f32 %v6405, %v6476
        %v6478 = vpop.f32.mrf.mxu0
        %6479 = vmatprep.mubr.bf16.mxu0 %v5046
        %6480 = vmatmul.mubr.bf16.gmra.mxu0 %v5045
        %v6481 = vpop.f32.mrf.mxu0
        %v6482 = vadd.f32 %v6410, %v6481
        %v6483 = vpop.f32.mrf.mxu0
        %v6484 = vpop.f32.mrf.mxu0
        %v6485 = vadd.f32 %v6413, %v6484
        %v6486 = vpop.f32.mrf.mxu0
        %6487 = vmatprep.mubr.bf16.mxu0 %v5062
        %6488 = vmatmul.mubr.bf16.gmra.mxu0 %v5061
        %v6489 = vpop.f32.mrf.mxu0
        %v6490 = vadd.f32 %v6418, %v6489
        %v6491 = vpop.f32.mrf.mxu0
        %v6492 = vpop.f32.mrf.mxu0
        %v6493 = vadd.f32 %v6421, %v6492
        %v6494 = vpop.f32.mrf.mxu0
        %6495 = vmatprep.mubr.bf16.mxu0 %v5078
        %6496 = vmatmul.mubr.bf16.gmra.mxu0 %v5077
        %v6497 = vpop.f32.mrf.mxu0
        %v6498 = vadd.f32 %v6426, %v6497
        %v6499 = vpop.f32.mrf.mxu0
        %v6500 = vpop.f32.mrf.mxu0
        %v6501 = vpop.f32.mrf.mxu0
        %6502 = vdwg.mxu0
        %v6503 = vadd.f32 %v2826, %v6466
        %v6504 = vadd.f32 %v2827, %v6469
        %v6505 = vadd.f32 %v2828, %v6474
        %v6506 = vadd.f32 %v2829, %v6477
        %v6507 = vadd.f32 %v2830, %v6482
        %v6508 = vadd.f32 %v2831, %v6485
        %v6509 = vadd.f32 %v2832, %v6490
        %v6510 = vadd.f32 %v2833, %v6493
        %v6511 = vadd.f32 %v2834, %v6498
        %v6512 = vld [vmem:[%s757] sm:$0x1]
        %v6514 = vlaneseq
        %v6515 = vshrl.u32 %v6514, 7
        %v6516 = vsub.s32 0, %v6515
        %v6517 = vrot.slane %v6512, %v6516
        %v6519 = vadd.f32 %v6503, %v6517
        %v6520 = vadd.f32 %v6504, %v6517
        %v6521 = vadd.f32 %v6505, %v6517
        %v6522 = vadd.f32 %v6506, %v6517
        %v6523 = vadd.f32 %v6507, %v6517
        %v6524 = vadd.f32 %v6508, %v6517
        %v6525 = vadd.f32 %v6509, %v6517
        %v6526 = vadd.f32 %v6510, %v6517
        %v6527 = vadd.f32 %v6511, %v6517
        %v6528 = vsel %vm994, %v6519, 0.0
        %6529 = vadd.xlane.f32.xlu0 %v6528
        %v6530 = vpop.xlane.xlu0 %6529
        %v6531 = vsel %vm994, %v6520, 0.0
        %6532 = vadd.xlane.f32.xlu0 %v6531
        %v6533 = vpop.xlane.xlu0 %6532
        %v6534 = vsel %vm994, %v6521, 0.0
        %6535 = vadd.xlane.f32.xlu0 %v6534
        %v6536 = vpop.xlane.xlu0 %6535
        %v6537 = vsel %vm994, %v6522, 0.0
        %6538 = vadd.xlane.f32.xlu0 %v6537
        %v6539 = vpop.xlane.xlu0 %6538
        %v6540 = vsel %vm994, %v6523, 0.0
        %6541 = vadd.xlane.f32.xlu0 %v6540
        %v6542 = vpop.xlane.xlu0 %6541
        %v6543 = vsel %vm994, %v6524, 0.0
        %6544 = vadd.xlane.f32.xlu0 %v6543
        %v6545 = vpop.xlane.xlu0 %6544
        %v6546 = vsel %vm994, %v6525, 0.0
        %6547 = vadd.xlane.f32.xlu0 %v6546
        %v6548 = vpop.xlane.xlu0 %6547
        %v6549 = vsel %vm994, %v6526, 0.0
        %6550 = vadd.xlane.f32.xlu0 %v6549
        %v6551 = vpop.xlane.xlu0 %6550
        %v6552 = vsel %vm994, %v6527, 0.0
        %6553 = vadd.xlane.f32.xlu0 %v6552
        %v6554 = vpop.xlane.xlu0 %6553
        %v6555 = vmul.f32 %v6530, %v2712
        %v6556 = vmul.f32 %v6533, %v2712
        %v6557 = vmul.f32 %v6536, %v2712
        %v6558 = vmul.f32 %v6539, %v2712
        %v6559 = vmul.f32 %v6542, %v2712
        %v6560 = vmul.f32 %v6545, %v2712
        %v6561 = vmul.f32 %v6548, %v2712
        %v6562 = vmul.f32 %v6551, %v2712
        %v6563 = vmul.f32 %v6554, %v2712
        %v6564 = vsub.f32 %v6519, %v6555
        %v6565 = vsub.f32 %v6520, %v6556
        %v6566 = vsub.f32 %v6521, %v6557
        %v6567 = vsub.f32 %v6522, %v6558
        %v6568 = vsub.f32 %v6523, %v6559
        %v6569 = vsub.f32 %v6524, %v6560
        %v6570 = vsub.f32 %v6525, %v6561
        %v6571 = vsub.f32 %v6526, %v6562
        %v6572 = vsub.f32 %v6527, %v6563
        %v6573 = vmul.f32 %v6564, %v6564
        %v6574 = vmul.f32 %v6565, %v6565
        %v6575 = vmul.f32 %v6566, %v6566
        %v6576 = vmul.f32 %v6567, %v6567
        %v6577 = vmul.f32 %v6568, %v6568
        %v6578 = vmul.f32 %v6569, %v6569
        %v6579 = vmul.f32 %v6570, %v6570
        %v6580 = vmul.f32 %v6571, %v6571
        %v6581 = vmul.f32 %v6572, %v6572
        %v6582 = vsel %vm994, %v6573, 0.0
        %6583 = vadd.xlane.f32.xlu0 %v6582
        %v6584 = vpop.xlane.xlu0 %6583
        %v6585 = vsel %vm994, %v6574, 0.0
        %6586 = vadd.xlane.f32.xlu0 %v6585
        %v6587 = vpop.xlane.xlu0 %6586
        %v6588 = vsel %vm994, %v6575, 0.0
        %6589 = vadd.xlane.f32.xlu0 %v6588
        %v6590 = vpop.xlane.xlu0 %6589
        %v6591 = vsel %vm994, %v6576, 0.0
        %6592 = vadd.xlane.f32.xlu0 %v6591
        %v6593 = vpop.xlane.xlu0 %6592
        %v6594 = vsel %vm994, %v6577, 0.0
        %6595 = vadd.xlane.f32.xlu0 %v6594
        %v6596 = vpop.xlane.xlu0 %6595
        %v6597 = vsel %vm994, %v6578, 0.0
        %6598 = vadd.xlane.f32.xlu0 %v6597
        %v6599 = vpop.xlane.xlu0 %6598
        %v6600 = vsel %vm994, %v6579, 0.0
        %6601 = vadd.xlane.f32.xlu0 %v6600
        %v6602 = vpop.xlane.xlu0 %6601
        %v6603 = vsel %vm994, %v6580, 0.0
        %6604 = vadd.xlane.f32.xlu0 %v6603
        %v6605 = vpop.xlane.xlu0 %6604
        %v6606 = vsel %vm994, %v6581, 0.0
        %6607 = vadd.xlane.f32.xlu0 %v6606
        %v6608 = vpop.xlane.xlu0 %6607
        %v6609 = vmul.f32 %v6584, %v2712
        %v6610 = vmul.f32 %v6587, %v2712
        %v6611 = vmul.f32 %v6590, %v2712
        %v6612 = vmul.f32 %v6593, %v2712
        %v6613 = vmul.f32 %v6596, %v2712
        %v6614 = vmul.f32 %v6599, %v2712
        %v6615 = vmul.f32 %v6602, %v2712
        %v6616 = vmul.f32 %v6605, %v2712
        %v6617 = vmul.f32 %v6608, %v2712
        %v6618 = vadd.f32 %v6609, 1e-05
        %v6619 = vadd.f32 %v6610, 1e-05
        %v6620 = vadd.f32 %v6611, 1e-05
        %v6621 = vadd.f32 %v6612, 1e-05
        %v6622 = vadd.f32 %v6613, 1e-05
        %v6623 = vadd.f32 %v6614, 1e-05
        %v6624 = vadd.f32 %v6615, 1e-05
        %v6625 = vadd.f32 %v6616, 1e-05
        %v6626 = vadd.f32 %v6617, 1e-05
        %v6627 = vrsqrt.pop %v6618
        %v6628 = vrsqrt.pop %v6619
        %v6629 = vrsqrt.pop %v6620
        %v6630 = vrsqrt.pop %v6621
        %v6631 = vrsqrt.pop %v6622
        %v6632 = vrsqrt.pop %v6623
        %v6633 = vrsqrt.pop %v6624
        %v6634 = vrsqrt.pop %v6625
        %v6635 = vrsqrt.pop %v6626
        %v6636 = vmul.f32 %v6564, %v6627
        %v6637 = vmul.f32 %v6565, %v6628
        %v6638 = vmul.f32 %v6566, %v6629
        %v6639 = vmul.f32 %v6567, %v6630
        %v6640 = vmul.f32 %v6568, %v6631
        %v6641 = vmul.f32 %v6569, %v6632
        %v6642 = vmul.f32 %v6570, %v6633
        %v6643 = vmul.f32 %v6571, %v6634
        %v6644 = vmul.f32 %v6572, %v6635
        %v6645 = vld [vmem:[%s760] sm:$0x1]
        %v6647 = vlaneseq
        %v6648 = vshrl.u32 %v6647, 7
        %v6649 = vsub.s32 0, %v6648
        %v6650 = vrot.slane %v6645, %v6649
        %v6652 = vmul.f32 %v6636, %v6650
        %v6653 = vmul.f32 %v6637, %v6650
        %v6654 = vmul.f32 %v6638, %v6650
        %v6655 = vmul.f32 %v6639, %v6650
        %v6656 = vmul.f32 %v6640, %v6650
        %v6657 = vmul.f32 %v6641, %v6650
        %v6658 = vmul.f32 %v6642, %v6650
        %v6659 = vmul.f32 %v6643, %v6650
        %v6660 = vmul.f32 %v6644, %v6650
        %v6661 = vld [vmem:[%s763] sm:$0x1]
        %v6663 = vlaneseq
        %v6664 = vshrl.u32 %v6663, 7
        %v6665 = vsub.s32 0, %v6664
        %v6666 = vrot.slane %v6661, %v6665
        %v6668 = vadd.f32 %v6652, %v6666
        %v6669 = vadd.f32 %v6653, %v6666
        %v6670 = vadd.f32 %v6654, %v6666
        %v6671 = vadd.f32 %v6655, %v6666
        %v6672 = vadd.f32 %v6656, %v6666
        %v6673 = vadd.f32 %v6657, %v6666
        %v6674 = vadd.f32 %v6658, %v6666
        %v6675 = vadd.f32 %v6659, %v6666
        %v6676 = vadd.f32 %v6660, %v6666
        %6677 = vst.msk [vmem:[#allocation2] sm:$0xff] %vm994, %v6668
        %6678 = vst.msk [vmem:[#allocation2 + $0x8] sm:$0xff] %vm994, %v6669
        %6679 = vst.msk [vmem:[#allocation2 + $0x10] sm:$0xff] %vm994, %v6670
        %6680 = vst.msk [vmem:[#allocation2 + $0x18] sm:$0xff] %vm994, %v6671
        %6681 = vst.msk [vmem:[#allocation2 + $0x20] sm:$0xff] %vm994, %v6672
        %6682 = vst.msk [vmem:[#allocation2 + $0x28] sm:$0xff] %vm994, %v6673
        %6683 = vst.msk [vmem:[#allocation2 + $0x30] sm:$0xff] %vm994, %v6674
        %6684 = vst.msk [vmem:[#allocation2 + $0x38] sm:$0xff] %vm994, %v6675
        %6685 = vst.msk [vmem:[#allocation2 + $0x40] sm:$0xff] %vm994, %v6676
        %p6686 = scmp.eq.s32.totalorder %s31, 1
        // Predicated region
        $region101: #{fire_transformer_forward.1} parent=95 // pred_check
          %p6687 = pneg %p6686
        $region102: #{fire_transformer_forward.1} parent=95 // pred_check_branch
          %6689 = sbr.rel (%p6687) target = $region104
        $region103: #{fire_transformer_forward.1} parent=95 // pred_region
          %v6690 = vld [vmem:[%s4] sm:$0x3]
          %v6692 = vsel %vm1219, %v6690, 0
          %6694 = vmatprep.subr.mxu0 0.0
          %6695 = vmatpush1.msra.mxu0 0.0
          %6696 = vmatprep.subr.mxu0 0.0
          %6697 = vmatpush1.msra.mxu0 0.0
          %6698 = vmatprep.subr.mxu0 0.0
          %6699 = vmatpush1.msra.mxu0 0.0
          %6700 = vmatprep.subr.mxu0 0.0
          %6701 = vmatpush1.msra.mxu0 0.0
          %6702 = vmatprep.subr.mxu0 0.0
          %6703 = vmatpush1.msra.mxu0 0.0
          %6704 = vmatprep.subr.mxu0 0.0
          %6705 = vmatpush1.msra.mxu0 0.0
          %6706 = vmatprep.subr.mxu0 0.0
          %6707 = vmatpush1.msra.mxu0 0.0
          %6708 = vmatprep.subr.mxu0 0.0
          %6709 = vmatpush1.msra.mxu0 %v6676
          %6710 = vmatprep.subr.mxu0 0.0
          %6711 = vmatpush1.msra.mxu0 %v6675
          %6712 = vmatprep.subr.mxu0 0.0
          %6713 = vmatpush1.msra.mxu0 %v6674
          %6714 = vmatprep.subr.mxu0 0.0
          %6715 = vmatpush1.msra.mxu0 %v6673
          %6716 = vmatprep.subr.mxu0 0.0
          %6717 = vmatpush1.msra.mxu0 %v6672
          %6718 = vmatprep.subr.mxu0 0.0
          %6719 = vmatpush1.msra.mxu0 %v6671
          %6720 = vmatprep.subr.mxu0 0.0
          %6721 = vmatpush1.msra.mxu0 %v6670
          %6722 = vmatprep.subr.mxu0 0.0
          %6723 = vmatpush1.msra.mxu0 %v6669
          %6724 = vmatprep.subr.mxu0 0.0
          %6725 = vmatpush1.msra.mxu0 %v6668
          %6726 = vmatprep.subr.mxu0 0.0
          %6727 = vmatpush2.msra.mxu0 0.0
          %6728 = vmatprep.subr.mxu0 0.0
          %6729 = vmatpush2.msra.mxu0 0.0
          %6730 = vmatprep.subr.mxu0 0.0
          %6731 = vmatpush2.msra.mxu0 0.0
          %6732 = vmatprep.subr.mxu0 0.0
          %6733 = vmatpush2.msra.mxu0 0.0
          %6734 = vmatprep.subr.mxu0 0.0
          %6735 = vmatpush2.msra.mxu0 0.0
          %6736 = vmatprep.subr.mxu0 0.0
          %6737 = vmatpush2.msra.mxu0 0.0
          %6738 = vmatprep.subr.mxu0 0.0
          %6739 = vmatpush2.msra.mxu0 0.0
          %6740 = vmatprep.subr.mxu0 0.0
          %6741 = vmatpush2.msra.mxu0 0.0
          %6742 = vmatprep.subr.mxu0 0.0
          %6743 = vmatpush2.msra.mxu0 0.0
          %6744 = vmatprep.subr.mxu0 0.0
          %6745 = vmatpush2.msra.mxu0 0.0
          %6746 = vmatprep.subr.mxu0 0.0
          %6747 = vmatpush2.msra.mxu0 0.0
          %6748 = vmatprep.subr.mxu0 0.0
          %6749 = vmatpush2.msra.mxu0 0.0
          %6750 = vmatprep.subr.mxu0 0.0
          %6751 = vmatpush2.msra.mxu0 0.0
          %6752 = vmatprep.subr.mxu0 0.0
          %6753 = vmatpush2.msra.mxu0 0.0
          %6754 = vmatprep.subr.mxu0 0.0
          %6755 = vmatpush2.msra.mxu0 0.0
          %6756 = vmatprep.subr.mxu0 0.0
          %6757 = vmatpush2.msra.mxu0 0.0
          %6758 = vmatprep.mubr.f32.mxu0 0.0
          %6759 = vmatmul.mubr.f32.gmra.mxu0 %v6692
          %v6760 = vpop.f32.mrf.mxu0
          %v6761 = vadd.f32 0.0, %v6760
          %v6762 = vpop.f32.mrf.mxu0
          %6763 = vdwg.mxu0
          %v6764 = vpack.c.bf16 %v6761, %v6761
          %v6765 = vld [vmem:[%s17] sm:$0xf]
          %v6766 = vld [vmem:[%s17 + $0x4] sm:$0xf]
          %v6767 = vld [vmem:[%s17 + $0x8] sm:$0xf]
          %v6768 = vld [vmem:[%s17 + $0xc] sm:$0xf]
          %v6769 = vld [vmem:[%s18] sm:$0x1]
          %v6771 = vlaneseq
          %v6772 = vshrl.u32 %v6771, 7
          %v6773 = vsub.s32 0, %v6772
          %v6774 = vrot.slane %v6769, %v6773
          %v6780 = vunpack.c.l.b16 %v6765
          %v6781 = vunpack.c.l.b16 %v6766
          %v6782 = vunpack.c.l.b16 %v6767
          %v6783 = vunpack.c.l.b16 %v6768
          %v6784 = vpack.c.b16 %v6781, %v6780
          %v6785 = vpack.c.b16 %v6783, %v6782
          %v6789 = vsel %vm994, %v6764, 0
          %6791 = vmatprep.subr.bf16.mxu0 0
          %6792 = vmatpush1.bf16.msra.mxu0 0
          %6793 = vmatprep.subr.bf16.mxu0 0
          %6794 = vmatpush1.bf16.msra.mxu0 0
          %6795 = vmatprep.subr.bf16.mxu0 0
          %6796 = vmatpush1.bf16.msra.mxu0 0
          %6797 = vmatprep.subr.bf16.mxu0 0
          %6798 = vmatpush1.bf16.msra.mxu0 0
          %6799 = vmatprep.subr.bf16.mxu0 0
          %6800 = vmatpush1.bf16.msra.mxu0 0
          %6801 = vmatprep.subr.bf16.mxu0 0
          %6802 = vmatpush1.bf16.msra.mxu0 0
          %6803 = vmatprep.subr.bf16.mxu0 0
          %6804 = vmatpush1.bf16.msra.mxu0 %v6785
          %6805 = vmatprep.subr.bf16.mxu0 0
          %6806 = vmatpush1.bf16.msra.mxu0 %v6784
          %6807 = vmatprep.subr.bf16.mxu0 0
          %6808 = vmatpush2.bf16.msra.mxu0 0
          %6809 = vmatprep.subr.bf16.mxu0 0
          %6810 = vmatpush2.bf16.msra.mxu0 0
          %6811 = vmatprep.subr.bf16.mxu0 0
          %6812 = vmatpush2.bf16.msra.mxu0 0
          %6813 = vmatprep.subr.bf16.mxu0 0
          %6814 = vmatpush2.bf16.msra.mxu0 0
          %6815 = vmatprep.subr.bf16.mxu0 0
          %6816 = vmatpush2.bf16.msra.mxu0 0
          %6817 = vmatprep.subr.bf16.mxu0 0
          %6818 = vmatpush2.bf16.msra.mxu0 0
          %6819 = vmatprep.subr.bf16.mxu0 0
          %6820 = vmatpush2.bf16.msra.mxu0 0
          %6821 = vmatprep.subr.bf16.mxu0 0
          %6822 = vmatpush2.bf16.msra.mxu0 0
          %6823 = vmatprep.mubr.bf16.mxu0 0
          %6824 = vmatmul.mubr.bf16.gmra.mxu0 %v6789
          %v6825 = vpop.f32.mrf.mxu0
          %v6826 = vadd.f32 %v6774, %v6825
          %v6827 = vpop.f32.mrf.mxu0
          %v6828 = vpop.f32.mrf.mxu0
          %v6829 = vpop.f32.mrf.mxu0
          %6830 = vdwg.mxu0
          %6831 = vst [vmem:[#allocation4] sm:$0x3] %v6826
        $region104: #{fire_transformer_forward.1} parent=95 // pred_fallthru
          _
        // Predicated region
        $region105: #{fire_transformer_forward.1} parent=95 // pred_check
          %p6832 = pneg %p503
        $region106: #{fire_transformer_forward.1} parent=95 // pred_check_branch
          %6834 = sbr.rel (%p6832) target = $region108
        $region107: #{fire_transformer_forward.1} parent=95 // pred_region
          %s6836 = ssub.s32 32, 32
          %6837 = vsyncadd [#allocation5], %s6836
          %s6839 = sshll.u32 [#allocation4], 4
          %s6840 = int_to_ptr.vmem [resolvable:$true] %s6839
          %6842 = dma.vmem_to_hbm [thread:$0]  %s6840, 32, %s19, [#allocation5]
        $region108: #{fire_transformer_forward.1} parent=95 // pred_fallthru
          _
        // Predicated region
        $region109: #{fire_transformer_forward.1} parent=95 // pred_check
          %p6843 = pneg %p503
        $region110: #{fire_transformer_forward.1} parent=95 // pred_check_branch
          %6845 = sbr.rel (%p6843) target = $region112
        $region111: #{fire_transformer_forward.1} parent=95 // pred_region
          %6846 = dma.done [#allocation5], 32
        $region112: #{fire_transformer_forward.1} parent=95 // pred_fallthru
          _
      $region96: #{fire_transformer_forward.1} parent=5 // pred_fallthru
        _
      %p6847 = scmp.le.s32.totalorder 2, %s26
      // Predicated region
      $region113: #{fire_transformer_forward.1} parent=5 // pred_check
        %p6848 = pneg %p6847
      $region114: #{fire_transformer_forward.1} parent=5 // pred_check_branch
        %6850 = sbr.rel (%p6848) target = $region116
      $region115: #{fire_transformer_forward.1} parent=5 // pred_region
        %s6851 = ssub.s32 %s26, 2
      $region116: #{fire_transformer_forward.1} parent=5 // pred_fallthru
        _
    $region6: #{fire_transformer_forward.1} parent=1 // loop_footer
      %s30 = sadd.s32 1, %s26
    $region7: #{fire_transformer_forward.1} parent=1 // loop_footer_branch
      %25 = sbr.rel target = $region3
    $region8: #{fire_transformer_forward.1} parent=1 // loop_exit
      _
    %6852 = vsyncpa [#allocation5], 1
    %s6853 = scalar_lea.sflag [#allocation5], 1
    %6854 = vsyncpa %s6853, 1

</llo_original>
